<compile_context>
chip_gen: v5e
topology: v5e:2x2
jax: 0.10.0
libtpu: 0.0.40
codegen_flags: <defaults>
</compile_context>

<pallas_src>
import functools

import jax
import jax.numpy as jnp
from jax.experimental import pallas as pl
from jax.experimental.pallas import tpu as pltpu


_LANE_MARGIN = 128   # scratch margin in front of / behind the tile (corner taps)


# --------------------------------------------------------------------------- #
# Fused RDB kernel: one (batch, H-tile) grid step computes the whole block.
# --------------------------------------------------------------------------- #
def _make_rdb_kernel(*, C, G0, G, tile_h, W, cdtype, off):
    Wp = W + 2                     # width incl. the SAME zero-pad columns
    Hs = tile_h + 2 * C            # tile rows incl. the C-row halo per side
    L = Hs * Wp                    # flattened padded tile (lane extent)
    Lo = tile_h * Wp               # flattened output rows (padded width kept)
    prec = (jax.lax.Precision.HIGHEST
            if jnp.dtype(cdtype) == jnp.dtype(jnp.float32) else None)

    def kernel(x_ref, mask_ref, *rest):
        conv_wb = rest[:2 * C]                 # (w_taps, b) per dense stage
        w_lff_ref = rest[2 * C]                # (G0, G0 + C*G)
        b_lff_ref = rest[2 * C + 1]            # (G0, 1) f32
        o_ref = rest[2 * C + 2]                # (1, 1, G0, Lo) padded output slab
        feat = rest[2 * C + 3]                 # VMEM (Ctot, off + L + margin) scratch

        zg0 = jnp.zeros((G0, 1), cdtype)
        zg = jnp.zeros((G, 1), cdtype)

        # 1) Land the (auto-pipelined, double-buffered) halo'd input tile in channels
        #    [0, G0) of the feature scratch.  Zero the 1-lane borders the first stage's
        #    corner taps touch so stale VMEM can never leak into the result.
        feat[0:G0, off:off + L] = x_ref[0, 0]
        feat[0:G0, off - 1:off] = zg0
        feat[0:G0, off + L:off + L + 1] = zg0

        # 2) Dense stages: conv3x3 + bias + ReLU.  Each stage is 9 accumulated MXU
        #    matmuls over lane-shifted views of the scratch (no im2col staging); the
        #    result is written into its channel slice (this *is* torch.cat((x, out), 1)).
        for s in range(1, C + 1):              # static unroll over stages
            cin = G0 + (s - 1) * G             # input channels == channel write offset
            rows = Hs - 2 * s                  # valid rows shrink by 1/side per stage
            Ls = rows * Wp
            base = off + s * Wp                # flat start of this stage's region
            w_ref = conv_wb[2 * (s - 1)]       # (9, G, cin) per-tap weights
            b = conv_wb[2 * (s - 1) + 1][...]  # (G, 1) f32
            acc = None
            for idx in range(9):               # static unroll over the 3x3 taps
                ky, kx = idx // 3, idx % 3
                st = base + (ky - 1) * Wp + (kx - 1)
                d = jnp.dot(w_ref[idx], feat[0:cin, st:st + Ls],
                            preferred_element_type=jnp.float32, precision=prec)
                acc = d if acc is None else acc + d
            acc = jnp.maximum(acc + b, 0.0)
            # Zero pad columns / out-of-image rows (0/1 mask multiply) so the next
            # stage's implicit SAME zero padding matches the reference exactly.
            acc = acc * mask_ref[0, :, s * Wp:s * Wp + Ls]
            feat[cin:cin + G, base:base + Ls] = acc.astype(cdtype)
            # Zero the 1-lane borders read by the *next* stage's corner taps.
            feat[cin:cin + G, base - 1:base] = zg
            feat[cin:cin + G, base + Ls:base + Ls + 1] = zg

        # 3) LFF 1x1 conv + residual over the tile's tile_h output rows, stored as ONE
        #    slab (the SAME-pad columns are stripped outside the pallas_call).
        ob = off + C * Wp
        y = jnp.dot(w_lff_ref[...], feat[:, ob:ob + Lo],
                    preferred_element_type=jnp.float32, precision=prec)
        y = y + b_lff_ref[...]
        # NOTE: in bf16 mode the residual uses the bf16-rounded copy of x held in the
        # scratch; use compute_dtype=float32 if tighter accuracy is required.
        y = y + feat[0:G0, ob:ob + Lo].astype(jnp.float32)
        o_ref[0, 0] = y.astype(o_ref.dtype)

    return kernel


# --------------------------------------------------------------------------- #
# Generation-aware tiling / VMEM budgeting
# --------------------------------------------------------------------------- #
@functools.lru_cache(maxsize=None)
def _vmem_capacity_bytes():
    """Per-core VMEM capacity; conservative 64 MiB (v7x per-TC) fallback."""
    try:
        cap = int(pltpu.get_tpu_info().vmem_capacity_bytes)
        if cap > 0:
            return cap
    except Exception:
        pass
    return 64 << 20


def _pick_tile_h(H, W, C, G0, G, itemsize, budget_bytes):
    """Largest H-tile (divisor of H) whose footprint -- feature scratch, f32
    accumulators and double-buffered pipeline blocks -- fits the VMEM budget."""
    Ctot = G0 + C * G
    Wp = W + 2
    best = 1
    for th in range(1, H + 1):
        if H % th:
            continue
        Hs, L, Lo = th + 2 * C, (th + 2 * C) * Wp, th * Wp
        scratch = Ctot * (L + 2 * _LANE_MARGIN) * itemsize
        accum = 2 * max(G, G0) * max((Hs - 2) * Wp, Lo) * 4
        blocks = 2 * (G0 * L * itemsize + L * 4 + G0 * Lo * 4)
        if scratch + accum + blocks <= budget_bytes:
            best = th
    # TODO(synk): prefer tile_h that makes N*nT even so both v7x TensorCores balance.
    return best


# --------------------------------------------------------------------------- #
# Wrapper around pallas_call
# --------------------------------------------------------------------------- #
@functools.partial(jax.jit, static_argnames=("compute_dtype", "tile_h"))
def rdb_forward(x, params, *, compute_dtype=jnp.bfloat16, tile_h=None):
    """RDB forward.  x: (N, G0, H, W) NCHW float32 -> (N, G0, H, W)."""
    N, G0, H, W = x.shape
    convs = params["convs"]
    C = len(convs)
    G = convs[0][1].shape[0]
    Ctot = G0 + C * G
    cdt = jnp.dtype(compute_dtype)
    itemsize = cdt.itemsize
    Wp = W + 2

    vmem_cap = _vmem_capacity_bytes()
    th = (tile_h if tile_h is not None
          else _pick_tile_h(H, W, C, G0, G, itemsize, int(0.42 * vmem_cap)))
    assert H % th == 0, "tile_h must divide H"
    nT = H // th
    Hs = th + 2 * C
    L = Hs * Wp
    Lo = th * Wp
    OFF = _LANE_MARGIN
    scr_w = OFF + L + _LANE_MARGIN

    # Single zero pad of the (small) input (C halo rows + 1 SAME column per side), then
    # pre-slice the per-tile halo'd windows so a plain BlockSpec auto-pipelines
    # (double-buffers) the input DMA -- replaces the serializing in-kernel sync_copy.
    xp = jnp.pad(x, ((0, 0), (0, 0), (C, C), (1, 1))).astype(cdt)   # (N, G0, H+2C, Wp)
    xt = jnp.stack([xp[:, :, t * th:t * th + Hs, :] for t in range(nT)], axis=1)
    xt = xt.reshape(N, nT, G0, L)

    # Per-tile 0/1 validity mask: 1 = real image pixel, 0 = pad column / halo row
    # outside the image (emulates the reference's SAME zero padding between stages).
    r = jnp.arange(Hs)[:, None]
    c = jnp.arange(Wp)[None, :]
    col_ok = (c >= 1) & (c <= W)
    mask = jnp.stack(
        [(((t * th + r) >= C) & ((t * th + r) < C + H) & col_ok)
         .astype(jnp.float32).reshape(1, L) for t in range(nT)], axis=0)   # (nT, 1, L)

    inputs = [xt, mask]
    in_specs = [pl.BlockSpec((1, 1, G0, L), lambda n, t: (n, t, 0, 0)),
                pl.BlockSpec((1, 1, L), lambda n, t: (t, 0, 0))]
    for (w, b) in convs:
        cin = w.shape[2]
        # (3,3,Cin,G) HWIO -> per-tap (9, G, Cin); tap order matches the kernel offsets.
        wt = jnp.transpose(w, (0, 1, 3, 2)).reshape(9, G, cin).astype(cdt)
        bf = b.reshape(G, 1).astype(jnp.float32)
        inputs += [wt, bf]
        in_specs += [pl.BlockSpec((9, G, cin), lambda n, t: (0, 0, 0)),
                     pl.BlockSpec((G, 1), lambda n, t: (0, 0))]
    wl, bl = params["lff"]
    inputs += [wl.T.astype(cdt), bl.reshape(G0, 1).astype(jnp.float32)]
    in_specs += [pl.BlockSpec((G0, Ctot), lambda n, t: (0, 0)),
                 pl.BlockSpec((G0, 1), lambda n, t: (0, 0))]

    out_spec = pl.BlockSpec((1, 1, G0, Lo), lambda n, t: (n, t, 0, 0))
    kernel = _make_rdb_kernel(C=C, G0=G0, G=G, tile_h=th, W=W, cdtype=cdt, off=OFF)

    # Explicit, generation-aware VMEM limit: never request more than ~72% of physical
    # capacity (v7x has only 64 MiB per TensorCore; v5e/v6e have 128 MiB).
    wt_bytes = sum(int(a.size) * a.dtype.itemsize for a in inputs[2:])
    est = (Ctot * scr_w * itemsize
           + 2 * max(G, G0) * max((Hs - 2) * Wp, Lo) * 4
           + 2 * (G0 * L * itemsize + L * 4 + G0 * Lo * 4 + wt_bytes))
    vmem_limit = int(min(max(2 * est, 16 << 20), int(0.72 * vmem_cap)))

    y = pl.pallas_call(
        kernel,
        out_shape=jax.ShapeDtypeStruct((N, nT, G0, Lo), x.dtype),
        grid_spec=pltpu.PrefetchScalarGridSpec(
            num_scalar_prefetch=0,
            grid=(N, nT),
            in_specs=in_specs,
            out_specs=out_spec,
            scratch_shapes=[pltpu.VMEM((Ctot, scr_w), cdt)],
        ),
        compiler_params=pltpu.CompilerParams(
            dimension_semantics=("parallel", "parallel"),
            vmem_limit_bytes=vmem_limit,
        ),
    )(*inputs)

    # Strip the SAME-pad columns with one cheap XLA slice and put the H-tiles back in
    # image order (the kernel emits one lane-dense padded slab per tile instead of
    # tile_h separate W-wide masked stores).
    y = y.reshape(N, nT, G0, th, Wp)[:, :, :, :, 1:1 + W]
    return jnp.transpose(y, (0, 2, 1, 3, 4)).reshape(N, G0, H, W)


# --------------------------------------------------------------------------- #
# Parameter init (matches the PyTorch module's structure) + pure-JAX reference
# --------------------------------------------------------------------------- #
def init_rdb_params(key, G0, C, G, ksize=3):
    params = {"convs": []}
    for i in range(C):
        cin = G0 + i * G
        key, k1, k2 = jax.random.split(key, 3)
        fan_in = cin * ksize * ksize
        w = jax.random.normal(k1, (ksize, ksize, cin, G), jnp.float32) / jnp.sqrt(fan_in)
        b = 0.01 * jax.random.normal(k2, (G,), jnp.float32)
        params["convs"].append((w, b))
    cin = G0 + C * G
    key, k1, k2 = jax.random.split(key, 3)
    wl = jax.random.normal(k1, (cin, G0), jnp.float32) / jnp.sqrt(cin)
    bl = 0.01 * jax.random.normal(k2, (G0,), jnp.float32)
    params["lff"] = (wl, bl)
    return params


def rdb_forward_ref(x_nchw, params):
    prec = jax.lax.Precision.HIGHEST
    feat = x_nchw
    for (w, b) in params["convs"]:
        out = jax.lax.conv_general_dilated(
            feat, w, (1, 1), "SAME",
            dimension_numbers=("NCHW", "HWIO", "NCHW"), precision=prec)
        out = jax.nn.relu(out + b[None, :, None, None])
        feat = jnp.concatenate([feat, out], axis=1)
    wl, bl = params["lff"]
    lff = jax.lax.conv_general_dilated(
        feat, wl[None, None, :, :], (1, 1), "SAME",
        dimension_numbers=("NCHW", "HWIO", "NCHW"), precision=prec)
    lff = lff + bl[None, :, None, None]
    return lff + x_nchw


# --------------------------------------------------------------------------- #
if __name__ == "__main__":
    G0, C, G = 8, 3, 4            # RDB(G0=8, C=3, G=4)
    N, H, W = 2, 16, 16

    key = jax.random.PRNGKey(0)
    key, kx = jax.random.split(key)
    x = jax.random.normal(kx, (N, G0, H, W), jnp.float32)   # NCHW like PyTorch
    params = init_rdb_params(key, G0, C, G)

    y_ref = jax.block_until_ready(rdb_forward_ref(x, params))

    # f32 compute path, 2 H-tiles per image: exercises halo handling + boundary mask.
    y32 = jax.block_until_ready(
        rdb_forward(x, params, compute_dtype=jnp.float32, tile_h=8))
    assert y32.shape == (N, G0, H, W)
    assert jnp.allclose(y32, y_ref, atol=2e-3, rtol=2e-3)

    # Default bf16 MXU path (generation-aware auto tile): looser tolerance for bf16.
    ybf = jax.block_until_ready(rdb_forward(x, params))
    assert ybf.shape == (N, G0, H, W)
    assert jnp.allclose(ybf, y_ref, atol=5e-2, rtol=5e-2)

    print("KERNEL_OK")
</pallas_src>

<mosaic_0001>
module attributes {stable_mosaic.version = 11 : i64} {
  func.func @kernel(%arg0: i32, %arg1: i32, %arg2: memref<1x1x8x252xf32, #tpu.memory_space<vmem>>, %arg3: memref<1x1x252xf32, #tpu.memory_space<vmem>>, %arg4: memref<9x4x8xf32, #tpu.memory_space<vmem>>, %arg5: memref<4x1xf32, #tpu.memory_space<vmem>>, %arg6: memref<9x4x12xf32, #tpu.memory_space<vmem>>, %arg7: memref<4x1xf32, #tpu.memory_space<vmem>>, %arg8: memref<9x4x16xf32, #tpu.memory_space<vmem>>, %arg9: memref<4x1xf32, #tpu.memory_space<vmem>>, %arg10: memref<8x20xf32, #tpu.memory_space<vmem>>, %arg11: memref<8x1xf32, #tpu.memory_space<vmem>>, %arg12: memref<1x1x8x144xf32, #tpu.memory_space<vmem>>, %arg13: memref<20x508xf32, #tpu.memory_space<vmem>>) attributes {dimension_semantics = [#tpu.dimension_semantics<parallel>, #tpu.dimension_semantics<parallel>], iteration_bounds = array<i64: 2, 2>, scalar_prefetch = 0 : i64, scratch_operands = 1 : i64, tpu.core_type = #tpu.core_type<tc>, window_params = [{transform_indices = @transform_0, window_bounds = array<i64: 1, 1, 8, 252>}, {transform_indices = @transform_1, window_bounds = array<i64: 1, 1, 252>}, {pipeline_mode = #tpu.pipeline_mode<synchronous>, transform_indices = @transform_2, window_bounds = array<i64: 9, 4, 8>}, {pipeline_mode = #tpu.pipeline_mode<synchronous>, transform_indices = @transform_3, window_bounds = array<i64: 4, 1>}, {pipeline_mode = #tpu.pipeline_mode<synchronous>, transform_indices = @transform_4, window_bounds = array<i64: 9, 4, 12>}, {pipeline_mode = #tpu.pipeline_mode<synchronous>, transform_indices = @transform_5, window_bounds = array<i64: 4, 1>}, {pipeline_mode = #tpu.pipeline_mode<synchronous>, transform_indices = @transform_6, window_bounds = array<i64: 9, 4, 16>}, {pipeline_mode = #tpu.pipeline_mode<synchronous>, transform_indices = @transform_7, window_bounds = array<i64: 4, 1>}, {pipeline_mode = #tpu.pipeline_mode<synchronous>, transform_indices = @transform_8, window_bounds = array<i64: 8, 20>}, {pipeline_mode = #tpu.pipeline_mode<synchronous>, transform_indices = @transform_9, window_bounds = array<i64: 8, 1>}, {transform_indices = @transform_10, window_bounds = array<i64: 1, 1, 8, 144>}]} {
    %cst = arith.constant 0.000000e+00 : f32
    %0 = vector.broadcast %cst : f32 to vector<8x1xf32>
    %cst_0 = arith.constant 0.000000e+00 : f32
    %1 = vector.broadcast %cst_0 : f32 to vector<4x1xf32>
    %c0 = arith.constant 0 : index
    %c0_1 = arith.constant 0 : index
    %c0_2 = arith.constant 0 : index
    %c0_3 = arith.constant 0 : index
    %2 = vector.load %arg2[%c0, %c0_1, %c0_2, %c0_3] : memref<1x1x8x252xf32, #tpu.memory_space<vmem>>, vector<1x1x8x252xf32>
    %3 = vector.shape_cast %2 : vector<1x1x8x252xf32> to vector<8x252xf32>
    %c0_4 = arith.constant 0 : index
    %c128 = arith.constant 128 : index
    %4 = vector.load %arg13[%c0_4, %c128] : memref<20x508xf32, #tpu.memory_space<vmem>>, vector<8x252xf32>
    tpu.vector_store %arg13[%c0_4, %c128], %3 {strides = array<i32>} : memref<20x508xf32, #tpu.memory_space<vmem>>, vector<8x252xf32>,
    %c0_5 = arith.constant 0 : index
    %c127 = arith.constant 127 : index
    %5 = vector.load %arg13[%c0_5, %c127] : memref<20x508xf32, #tpu.memory_space<vmem>>, vector<8x1xf32>
    tpu.vector_store %arg13[%c0_5, %c127], %0 {strides = array<i32>} : memref<20x508xf32, #tpu.memory_space<vmem>>, vector<8x1xf32>,
    %c0_6 = arith.constant 0 : index
    %c380 = arith.constant 380 : index
    %6 = vector.load %arg13[%c0_6, %c380] : memref<20x508xf32, #tpu.memory_space<vmem>>, vector<8x1xf32>
    tpu.vector_store %arg13[%c0_6, %c380], %0 {strides = array<i32>} : memref<20x508xf32, #tpu.memory_space<vmem>>, vector<8x1xf32>,
    %c0_7 = arith.constant 0 : index
    %c0_8 = arith.constant 0 : index
    %7 = vector.load %arg5[%c0_7, %c0_8] : memref<4x1xf32, #tpu.memory_space<vmem>>, vector<4x1xf32>
    %c0_9 = arith.constant 0 : index
    %c0_10 = arith.constant 0 : index
    %c0_11 = arith.constant 0 : index
    %8 = vector.load %arg4[%c0_9, %c0_10, %c0_11] : memref<9x4x8xf32, #tpu.memory_space<vmem>>, vector<1x4x8xf32>
    %9 = vector.shape_cast %8 : vector<1x4x8xf32> to vector<4x8xf32>
    %c0_12 = arith.constant 0 : index
    %c127_13 = arith.constant 127 : index
    %10 = vector.load %arg13[%c0_12, %c127_13] : memref<20x508xf32, #tpu.memory_space<vmem>>, vector<8x216xf32>
    %cst_14 = arith.constant dense<0.000000e+00> : vector<4x216xf32>
    %11 = tpu.matmul %9, %10, %cst_14 {dimension_numbers = #tpu.dot_dimension_numbers<[1], [0], [0], [1], [0, 0, 1, 1], [], []>, precision = #tpu.contract_precision<fp32>} : vector<4x8xf32>, vector<8x216xf32>, vector<4x216xf32> -> vector<4x216xf32>
    %c1 = arith.constant 1 : index
    %c0_15 = arith.constant 0 : index
    %c0_16 = arith.constant 0 : index
    %12 = vector.load %arg4[%c1, %c0_15, %c0_16] : memref<9x4x8xf32, #tpu.memory_space<vmem>>, vector<1x4x8xf32>
    %13 = vector.shape_cast %12 : vector<1x4x8xf32> to vector<4x8xf32>
    %c0_17 = arith.constant 0 : index
    %c128_18 = arith.constant 128 : index
    %14 = vector.load %arg13[%c0_17, %c128_18] : memref<20x508xf32, #tpu.memory_space<vmem>>, vector<8x216xf32>
    %cst_19 = arith.constant dense<0.000000e+00> : vector<4x216xf32>
    %15 = tpu.matmul %13, %14, %cst_19 {dimension_numbers = #tpu.dot_dimension_numbers<[1], [0], [0], [1], [0, 0, 1, 1], [], []>, precision = #tpu.contract_precision<fp32>} : vector<4x8xf32>, vector<8x216xf32>, vector<4x216xf32> -> vector<4x216xf32>
    %16 = arith.addf %11, %15 : vector<4x216xf32>
    %c2 = arith.constant 2 : index
    %c0_20 = arith.constant 0 : index
    %c0_21 = arith.constant 0 : index
    %17 = vector.load %arg4[%c2, %c0_20, %c0_21] : memref<9x4x8xf32, #tpu.memory_space<vmem>>, vector<1x4x8xf32>
    %18 = vector.shape_cast %17 : vector<1x4x8xf32> to vector<4x8xf32>
    %c0_22 = arith.constant 0 : index
    %c129 = arith.constant 129 : index
    %19 = vector.load %arg13[%c0_22, %c129] : memref<20x508xf32, #tpu.memory_space<vmem>>, vector<8x216xf32>
    %cst_23 = arith.constant dense<0.000000e+00> : vector<4x216xf32>
    %20 = tpu.matmul %18, %19, %cst_23 {dimension_numbers = #tpu.dot_dimension_numbers<[1], [0], [0], [1], [0, 0, 1, 1], [], []>, precision = #tpu.contract_precision<fp32>} : vector<4x8xf32>, vector<8x216xf32>, vector<4x216xf32> -> vector<4x216xf32>
    %21 = arith.addf %16, %20 : vector<4x216xf32>
    %c3 = arith.constant 3 : index
    %c0_24 = arith.constant 0 : index
    %c0_25 = arith.constant 0 : index
    %22 = vector.load %arg4[%c3, %c0_24, %c0_25] : memref<9x4x8xf32, #tpu.memory_space<vmem>>, vector<1x4x8xf32>
    %23 = vector.shape_cast %22 : vector<1x4x8xf32> to vector<4x8xf32>
    %c0_26 = arith.constant 0 : index
    %c145 = arith.constant 145 : index
    %24 = vector.load %arg13[%c0_26, %c145] : memref<20x508xf32, #tpu.memory_space<vmem>>, vector<8x216xf32>
    %cst_27 = arith.constant dense<0.000000e+00> : vector<4x216xf32>
    %25 = tpu.matmul %23, %24, %cst_27 {dimension_numbers = #tpu.dot_dimension_numbers<[1], [0], [0], [1], [0, 0, 1, 1], [], []>, precision = #tpu.contract_precision<fp32>} : vector<4x8xf32>, vector<8x216xf32>, vector<4x216xf32> -> vector<4x216xf32>
    %26 = arith.addf %21, %25 : vector<4x216xf32>
    %c4 = arith.constant 4 : index
    %c0_28 = arith.constant 0 : index
    %c0_29 = arith.constant 0 : index
    %27 = vector.load %arg4[%c4, %c0_28, %c0_29] : memref<9x4x8xf32, #tpu.memory_space<vmem>>, vector<1x4x8xf32>
    %28 = vector.shape_cast %27 : vector<1x4x8xf32> to vector<4x8xf32>
    %c0_30 = arith.constant 0 : index
    %c146 = arith.constant 146 : index
    %29 = vector.load %arg13[%c0_30, %c146] : memref<20x508xf32, #tpu.memory_space<vmem>>, vector<8x216xf32>
    %cst_31 = arith.constant dense<0.000000e+00> : vector<4x216xf32>
    %30 = tpu.matmul %28, %29, %cst_31 {dimension_numbers = #tpu.dot_dimension_numbers<[1], [0], [0], [1], [0, 0, 1, 1], [], []>, precision = #tpu.contract_precision<fp32>} : vector<4x8xf32>, vector<8x216xf32>, vector<4x216xf32> -> vector<4x216xf32>
    %31 = arith.addf %26, %30 : vector<4x216xf32>
    %c5 = arith.constant 5 : index
    %c0_32 = arith.constant 0 : index
    %c0_33 = arith.constant 0 : index
    %32 = vector.load %arg4[%c5, %c0_32, %c0_33] : memref<9x4x8xf32, #tpu.memory_space<vmem>>, vector<1x4x8xf32>
    %33 = vector.shape_cast %32 : vector<1x4x8xf32> to vector<4x8xf32>
    %c0_34 = arith.constant 0 : index
    %c147 = arith.constant 147 : index
    %34 = vector.load %arg13[%c0_34, %c147] : memref<20x508xf32, #tpu.memory_space<vmem>>, vector<8x216xf32>
    %cst_35 = arith.constant dense<0.000000e+00> : vector<4x216xf32>
    %35 = tpu.matmul %33, %34, %cst_35 {dimension_numbers = #tpu.dot_dimension_numbers<[1], [0], [0], [1], [0, 0, 1, 1], [], []>, precision = #tpu.contract_precision<fp32>} : vector<4x8xf32>, vector<8x216xf32>, vector<4x216xf32> -> vector<4x216xf32>
    %36 = arith.addf %31, %35 : vector<4x216xf32>
    %c6 = arith.constant 6 : index
    %c0_36 = arith.constant 0 : index
    %c0_37 = arith.constant 0 : index
    %37 = vector.load %arg4[%c6, %c0_36, %c0_37] : memref<9x4x8xf32, #tpu.memory_space<vmem>>, vector<1x4x8xf32>
    %38 = vector.shape_cast %37 : vector<1x4x8xf32> to vector<4x8xf32>
    %c0_38 = arith.constant 0 : index
    %c163 = arith.constant 163 : index
    %39 = vector.load %arg13[%c0_38, %c163] : memref<20x508xf32, #tpu.memory_space<vmem>>, vector<8x216xf32>
    %cst_39 = arith.constant dense<0.000000e+00> : vector<4x216xf32>
    %40 = tpu.matmul %38, %39, %cst_39 {dimension_numbers = #tpu.dot_dimension_numbers<[1], [0], [0], [1], [0, 0, 1, 1], [], []>, precision = #tpu.contract_precision<fp32>} : vector<4x8xf32>, vector<8x216xf32>, vector<4x216xf32> -> vector<4x216xf32>
    %41 = arith.addf %36, %40 : vector<4x216xf32>
    %c7 = arith.constant 7 : index
    %c0_40 = arith.constant 0 : index
    %c0_41 = arith.constant 0 : index
    %42 = vector.load %arg4[%c7, %c0_40, %c0_41] : memref<9x4x8xf32, #tpu.memory_space<vmem>>, vector<1x4x8xf32>
    %43 = vector.shape_cast %42 : vector<1x4x8xf32> to vector<4x8xf32>
    %c0_42 = arith.constant 0 : index
    %c164 = arith.constant 164 : index
    %44 = vector.load %arg13[%c0_42, %c164] : memref<20x508xf32, #tpu.memory_space<vmem>>, vector<8x216xf32>
    %cst_43 = arith.constant dense<0.000000e+00> : vector<4x216xf32>
    %45 = tpu.matmul %43, %44, %cst_43 {dimension_numbers = #tpu.dot_dimension_numbers<[1], [0], [0], [1], [0, 0, 1, 1], [], []>, precision = #tpu.contract_precision<fp32>} : vector<4x8xf32>, vector<8x216xf32>, vector<4x216xf32> -> vector<4x216xf32>
    %46 = arith.addf %41, %45 : vector<4x216xf32>
    %c8 = arith.constant 8 : index
    %c0_44 = arith.constant 0 : index
    %c0_45 = arith.constant 0 : index
    %47 = vector.load %arg4[%c8, %c0_44, %c0_45] : memref<9x4x8xf32, #tpu.memory_space<vmem>>, vector<1x4x8xf32>
    %48 = vector.shape_cast %47 : vector<1x4x8xf32> to vector<4x8xf32>
    %c0_46 = arith.constant 0 : index
    %c165 = arith.constant 165 : index
    %49 = vector.load %arg13[%c0_46, %c165] : memref<20x508xf32, #tpu.memory_space<vmem>>, vector<8x216xf32>
    %cst_47 = arith.constant dense<0.000000e+00> : vector<4x216xf32>
    %50 = tpu.matmul %48, %49, %cst_47 {dimension_numbers = #tpu.dot_dimension_numbers<[1], [0], [0], [1], [0, 0, 1, 1], [], []>, precision = #tpu.contract_precision<fp32>} : vector<4x8xf32>, vector<8x216xf32>, vector<4x216xf32> -> vector<4x216xf32>
    %51 = arith.addf %46, %50 : vector<4x216xf32>
    %52 = vector.broadcast %7 : vector<4x1xf32> to vector<4x216xf32>
    %53 = arith.addf %51, %52 : vector<4x216xf32>
    %cst_48 = arith.constant 0.000000e+00 : f32
    %54 = vector.broadcast %cst_48 : f32 to vector<4x216xf32>
    %55 = arith.maximumf %53, %54 : vector<4x216xf32>
    %c0_49 = arith.constant 0 : index
    %c0_50 = arith.constant 0 : index
    %c18 = arith.constant 18 : index
    %56 = vector.load %arg3[%c0_49, %c0_50, %c18] : memref<1x1x252xf32, #tpu.memory_space<vmem>>, vector<1x1x216xf32>
    %57 = vector.shape_cast %56 : vector<1x1x216xf32> to vector<1x216xf32>
    %58 = vector.broadcast %57 : vector<1x216xf32> to vector<4x216xf32>
    %59 = arith.mulf %55, %58 : vector<4x216xf32>
    %c8_51 = arith.constant 8 : index
    %c146_52 = arith.constant 146 : index
    %60 = vector.load %arg13[%c8_51, %c146_52] : memref<20x508xf32, #tpu.memory_space<vmem>>, vector<4x216xf32>
    tpu.vector_store %arg13[%c8_51, %c146_52], %59 {strides = array<i32>} : memref<20x508xf32, #tpu.memory_space<vmem>>, vector<4x216xf32>,
    %c8_53 = arith.constant 8 : index
    %c145_54 = arith.constant 145 : index
    %61 = vector.load %arg13[%c8_53, %c145_54] : memref<20x508xf32, #tpu.memory_space<vmem>>, vector<4x1xf32>
    tpu.vector_store %arg13[%c8_53, %c145_54], %1 {strides = array<i32>} : memref<20x508xf32, #tpu.memory_space<vmem>>, vector<4x1xf32>,
    %c8_55 = arith.constant 8 : index
    %c362 = arith.constant 362 : index
    %62 = vector.load %arg13[%c8_55, %c362] : memref<20x508xf32, #tpu.memory_space<vmem>>, vector<4x1xf32>
    tpu.vector_store %arg13[%c8_55, %c362], %1 {strides = array<i32>} : memref<20x508xf32, #tpu.memory_space<vmem>>, vector<4x1xf32>,
    %c0_56 = arith.constant 0 : index
    %c0_57 = arith.constant 0 : index
    %63 = vector.load %arg7[%c0_56, %c0_57] : memref<4x1xf32, #tpu.memory_space<vmem>>, vector<4x1xf32>
    %c0_58 = arith.constant 0 : index
    %c0_59 = arith.constant 0 : index
    %c0_60 = arith.constant 0 : index
    %64 = vector.load %arg6[%c0_58, %c0_59, %c0_60] : memref<9x4x12xf32, #tpu.memory_space<vmem>>, vector<1x4x12xf32>
    %65 = vector.shape_cast %64 : vector<1x4x12xf32> to vector<4x12xf32>
    %c0_61 = arith.constant 0 : index
    %c145_62 = arith.constant 145 : index
    %66 = vector.load %arg13[%c0_61, %c145_62] : memref<20x508xf32, #tpu.memory_space<vmem>>, vector<12x180xf32>
    %cst_63 = arith.constant dense<0.000000e+00> : vector<4x180xf32>
    %67 = tpu.matmul %65, %66, %cst_63 {dimension_numbers = #tpu.dot_dimension_numbers<[1], [0], [0], [1], [0, 0, 1, 1], [], []>, precision = #tpu.contract_precision<fp32>} : vector<4x12xf32>, vector<12x180xf32>, vector<4x180xf32> -> vector<4x180xf32>
    %c1_64 = arith.constant 1 : index
    %c0_65 = arith.constant 0 : index
    %c0_66 = arith.constant 0 : index
    %68 = vector.load %arg6[%c1_64, %c0_65, %c0_66] : memref<9x4x12xf32, #tpu.memory_space<vmem>>, vector<1x4x12xf32>
    %69 = vector.shape_cast %68 : vector<1x4x12xf32> to vector<4x12xf32>
    %c0_67 = arith.constant 0 : index
    %c146_68 = arith.constant 146 : index
    %70 = vector.load %arg13[%c0_67, %c146_68] : memref<20x508xf32, #tpu.memory_space<vmem>>, vector<12x180xf32>
    %cst_69 = arith.constant dense<0.000000e+00> : vector<4x180xf32>
    %71 = tpu.matmul %69, %70, %cst_69 {dimension_numbers = #tpu.dot_dimension_numbers<[1], [0], [0], [1], [0, 0, 1, 1], [], []>, precision = #tpu.contract_precision<fp32>} : vector<4x12xf32>, vector<12x180xf32>, vector<4x180xf32> -> vector<4x180xf32>
    %72 = arith.addf %67, %71 : vector<4x180xf32>
    %c2_70 = arith.constant 2 : index
    %c0_71 = arith.constant 0 : index
    %c0_72 = arith.constant 0 : index
    %73 = vector.load %arg6[%c2_70, %c0_71, %c0_72] : memref<9x4x12xf32, #tpu.memory_space<vmem>>, vector<1x4x12xf32>
    %74 = vector.shape_cast %73 : vector<1x4x12xf32> to vector<4x12xf32>
    %c0_73 = arith.constant 0 : index
    %c147_74 = arith.constant 147 : index
    %75 = vector.load %arg13[%c0_73, %c147_74] : memref<20x508xf32, #tpu.memory_space<vmem>>, vector<12x180xf32>
    %cst_75 = arith.constant dense<0.000000e+00> : vector<4x180xf32>
    %76 = tpu.matmul %74, %75, %cst_75 {dimension_numbers = #tpu.dot_dimension_numbers<[1], [0], [0], [1], [0, 0, 1, 1], [], []>, precision = #tpu.contract_precision<fp32>} : vector<4x12xf32>, vector<12x180xf32>, vector<4x180xf32> -> vector<4x180xf32>
    %77 = arith.addf %72, %76 : vector<4x180xf32>
    %c3_76 = arith.constant 3 : index
    %c0_77 = arith.constant 0 : index
    %c0_78 = arith.constant 0 : index
    %78 = vector.load %arg6[%c3_76, %c0_77, %c0_78] : memref<9x4x12xf32, #tpu.memory_space<vmem>>, vector<1x4x12xf32>
    %79 = vector.shape_cast %78 : vector<1x4x12xf32> to vector<4x12xf32>
    %c0_79 = arith.constant 0 : index
    %c163_80 = arith.constant 163 : index
    %80 = vector.load %arg13[%c0_79, %c163_80] : memref<20x508xf32, #tpu.memory_space<vmem>>, vector<12x180xf32>
    %cst_81 = arith.constant dense<0.000000e+00> : vector<4x180xf32>
    %81 = tpu.matmul %79, %80, %cst_81 {dimension_numbers = #tpu.dot_dimension_numbers<[1], [0], [0], [1], [0, 0, 1, 1], [], []>, precision = #tpu.contract_precision<fp32>} : vector<4x12xf32>, vector<12x180xf32>, vector<4x180xf32> -> vector<4x180xf32>
    %82 = arith.addf %77, %81 : vector<4x180xf32>
    %c4_82 = arith.constant 4 : index
    %c0_83 = arith.constant 0 : index
    %c0_84 = arith.constant 0 : index
    %83 = vector.load %arg6[%c4_82, %c0_83, %c0_84] : memref<9x4x12xf32, #tpu.memory_space<vmem>>, vector<1x4x12xf32>
    %84 = vector.shape_cast %83 : vector<1x4x12xf32> to vector<4x12xf32>
    %c0_85 = arith.constant 0 : index
    %c164_86 = arith.constant 164 : index
    %85 = vector.load %arg13[%c0_85, %c164_86] : memref<20x508xf32, #tpu.memory_space<vmem>>, vector<12x180xf32>
    %cst_87 = arith.constant dense<0.000000e+00> : vector<4x180xf32>
    %86 = tpu.matmul %84, %85, %cst_87 {dimension_numbers = #tpu.dot_dimension_numbers<[1], [0], [0], [1], [0, 0, 1, 1], [], []>, precision = #tpu.contract_precision<fp32>} : vector<4x12xf32>, vector<12x180xf32>, vector<4x180xf32> -> vector<4x180xf32>
    %87 = arith.addf %82, %86 : vector<4x180xf32>
    %c5_88 = arith.constant 5 : index
    %c0_89 = arith.constant 0 : index
    %c0_90 = arith.constant 0 : index
    %88 = vector.load %arg6[%c5_88, %c0_89, %c0_90] : memref<9x4x12xf32, #tpu.memory_space<vmem>>, vector<1x4x12xf32>
    %89 = vector.shape_cast %88 : vector<1x4x12xf32> to vector<4x12xf32>
    %c0_91 = arith.constant 0 : index
    %c165_92 = arith.constant 165 : index
    %90 = vector.load %arg13[%c0_91, %c165_92] : memref<20x508xf32, #tpu.memory_space<vmem>>, vector<12x180xf32>
    %cst_93 = arith.constant dense<0.000000e+00> : vector<4x180xf32>
    %91 = tpu.matmul %89, %90, %cst_93 {dimension_numbers = #tpu.dot_dimension_numbers<[1], [0], [0], [1], [0, 0, 1, 1], [], []>, precision = #tpu.contract_precision<fp32>} : vector<4x12xf32>, vector<12x180xf32>, vector<4x180xf32> -> vector<4x180xf32>
    %92 = arith.addf %87, %91 : vector<4x180xf32>
    %c6_94 = arith.constant 6 : index
    %c0_95 = arith.constant 0 : index
    %c0_96 = arith.constant 0 : index
    %93 = vector.load %arg6[%c6_94, %c0_95, %c0_96] : memref<9x4x12xf32, #tpu.memory_space<vmem>>, vector<1x4x12xf32>
    %94 = vector.shape_cast %93 : vector<1x4x12xf32> to vector<4x12xf32>
    %c0_97 = arith.constant 0 : index
    %c181 = arith.constant 181 : index
    %95 = vector.load %arg13[%c0_97, %c181] : memref<20x508xf32, #tpu.memory_space<vmem>>, vector<12x180xf32>
    %cst_98 = arith.constant dense<0.000000e+00> : vector<4x180xf32>
    %96 = tpu.matmul %94, %95, %cst_98 {dimension_numbers = #tpu.dot_dimension_numbers<[1], [0], [0], [1], [0, 0, 1, 1], [], []>, precision = #tpu.contract_precision<fp32>} : vector<4x12xf32>, vector<12x180xf32>, vector<4x180xf32> -> vector<4x180xf32>
    %97 = arith.addf %92, %96 : vector<4x180xf32>
    %c7_99 = arith.constant 7 : index
    %c0_100 = arith.constant 0 : index
    %c0_101 = arith.constant 0 : index
    %98 = vector.load %arg6[%c7_99, %c0_100, %c0_101] : memref<9x4x12xf32, #tpu.memory_space<vmem>>, vector<1x4x12xf32>
    %99 = vector.shape_cast %98 : vector<1x4x12xf32> to vector<4x12xf32>
    %c0_102 = arith.constant 0 : index
    %c182 = arith.constant 182 : index
    %100 = vector.load %arg13[%c0_102, %c182] : memref<20x508xf32, #tpu.memory_space<vmem>>, vector<12x180xf32>
    %cst_103 = arith.constant dense<0.000000e+00> : vector<4x180xf32>
    %101 = tpu.matmul %99, %100, %cst_103 {dimension_numbers = #tpu.dot_dimension_numbers<[1], [0], [0], [1], [0, 0, 1, 1], [], []>, precision = #tpu.contract_precision<fp32>} : vector<4x12xf32>, vector<12x180xf32>, vector<4x180xf32> -> vector<4x180xf32>
    %102 = arith.addf %97, %101 : vector<4x180xf32>
    %c8_104 = arith.constant 8 : index
    %c0_105 = arith.constant 0 : index
    %c0_106 = arith.constant 0 : index
    %103 = vector.load %arg6[%c8_104, %c0_105, %c0_106] : memref<9x4x12xf32, #tpu.memory_space<vmem>>, vector<1x4x12xf32>
    %104 = vector.shape_cast %103 : vector<1x4x12xf32> to vector<4x12xf32>
    %c0_107 = arith.constant 0 : index
    %c183 = arith.constant 183 : index
    %105 = vector.load %arg13[%c0_107, %c183] : memref<20x508xf32, #tpu.memory_space<vmem>>, vector<12x180xf32>
    %cst_108 = arith.constant dense<0.000000e+00> : vector<4x180xf32>
    %106 = tpu.matmul %104, %105, %cst_108 {dimension_numbers = #tpu.dot_dimension_numbers<[1], [0], [0], [1], [0, 0, 1, 1], [], []>, precision = #tpu.contract_precision<fp32>} : vector<4x12xf32>, vector<12x180xf32>, vector<4x180xf32> -> vector<4x180xf32>
    %107 = arith.addf %102, %106 : vector<4x180xf32>
    %108 = vector.broadcast %63 : vector<4x1xf32> to vector<4x180xf32>
    %109 = arith.addf %107, %108 : vector<4x180xf32>
    %cst_109 = arith.constant 0.000000e+00 : f32
    %110 = vector.broadcast %cst_109 : f32 to vector<4x180xf32>
    %111 = arith.maximumf %109, %110 : vector<4x180xf32>
    %c0_110 = arith.constant 0 : index
    %c0_111 = arith.constant 0 : index
    %c36 = arith.constant 36 : index
    %112 = vector.load %arg3[%c0_110, %c0_111, %c36] : memref<1x1x252xf32, #tpu.memory_space<vmem>>, vector<1x1x180xf32>
    %113 = vector.shape_cast %112 : vector<1x1x180xf32> to vector<1x180xf32>
    %114 = vector.broadcast %113 : vector<1x180xf32> to vector<4x180xf32>
    %115 = arith.mulf %111, %114 : vector<4x180xf32>
    %c12 = arith.constant 12 : index
    %c164_112 = arith.constant 164 : index
    %116 = vector.load %arg13[%c12, %c164_112] : memref<20x508xf32, #tpu.memory_space<vmem>>, vector<4x180xf32>
    tpu.vector_store %arg13[%c12, %c164_112], %115 {strides = array<i32>} : memref<20x508xf32, #tpu.memory_space<vmem>>, vector<4x180xf32>,
    %c12_113 = arith.constant 12 : index
    %c163_114 = arith.constant 163 : index
    %117 = vector.load %arg13[%c12_113, %c163_114] : memref<20x508xf32, #tpu.memory_space<vmem>>, vector<4x1xf32>
    tpu.vector_store %arg13[%c12_113, %c163_114], %1 {strides = array<i32>} : memref<20x508xf32, #tpu.memory_space<vmem>>, vector<4x1xf32>,
    %c12_115 = arith.constant 12 : index
    %c344 = arith.constant 344 : index
    %118 = vector.load %arg13[%c12_115, %c344] : memref<20x508xf32, #tpu.memory_space<vmem>>, vector<4x1xf32>
    tpu.vector_store %arg13[%c12_115, %c344], %1 {strides = array<i32>} : memref<20x508xf32, #tpu.memory_space<vmem>>, vector<4x1xf32>,
    %c0_116 = arith.constant 0 : index
    %c0_117 = arith.constant 0 : index
    %119 = vector.load %arg9[%c0_116, %c0_117] : memref<4x1xf32, #tpu.memory_space<vmem>>, vector<4x1xf32>
    %c0_118 = arith.constant 0 : index
    %c0_119 = arith.constant 0 : index
    %c0_120 = arith.constant 0 : index
    %120 = vector.load %arg8[%c0_118, %c0_119, %c0_120] : memref<9x4x16xf32, #tpu.memory_space<vmem>>, vector<1x4x16xf32>
    %121 = vector.shape_cast %120 : vector<1x4x16xf32> to vector<4x16xf32>
    %c0_121 = arith.constant 0 : index
    %c163_122 = arith.constant 163 : index
    %122 = vector.load %arg13[%c0_121, %c163_122] : memref<20x508xf32, #tpu.memory_space<vmem>>, vector<16x144xf32>
    %cst_123 = arith.constant dense<0.000000e+00> : vector<4x144xf32>
    %123 = tpu.matmul %121, %122, %cst_123 {dimension_numbers = #tpu.dot_dimension_numbers<[1], [0], [0], [1], [0, 0, 1, 1], [], []>, precision = #tpu.contract_precision<fp32>} : vector<4x16xf32>, vector<16x144xf32>, vector<4x144xf32> -> vector<4x144xf32>
    %c1_124 = arith.constant 1 : index
    %c0_125 = arith.constant 0 : index
    %c0_126 = arith.constant 0 : index
    %124 = vector.load %arg8[%c1_124, %c0_125, %c0_126] : memref<9x4x16xf32, #tpu.memory_space<vmem>>, vector<1x4x16xf32>
    %125 = vector.shape_cast %124 : vector<1x4x16xf32> to vector<4x16xf32>
    %c0_127 = arith.constant 0 : index
    %c164_128 = arith.constant 164 : index
    %126 = vector.load %arg13[%c0_127, %c164_128] : memref<20x508xf32, #tpu.memory_space<vmem>>, vector<16x144xf32>
    %cst_129 = arith.constant dense<0.000000e+00> : vector<4x144xf32>
    %127 = tpu.matmul %125, %126, %cst_129 {dimension_numbers = #tpu.dot_dimension_numbers<[1], [0], [0], [1], [0, 0, 1, 1], [], []>, precision = #tpu.contract_precision<fp32>} : vector<4x16xf32>, vector<16x144xf32>, vector<4x144xf32> -> vector<4x144xf32>
    %128 = arith.addf %123, %127 : vector<4x144xf32>
    %c2_130 = arith.constant 2 : index
    %c0_131 = arith.constant 0 : index
    %c0_132 = arith.constant 0 : index
    %129 = vector.load %arg8[%c2_130, %c0_131, %c0_132] : memref<9x4x16xf32, #tpu.memory_space<vmem>>, vector<1x4x16xf32>
    %130 = vector.shape_cast %129 : vector<1x4x16xf32> to vector<4x16xf32>
    %c0_133 = arith.constant 0 : index
    %c165_134 = arith.constant 165 : index
    %131 = vector.load %arg13[%c0_133, %c165_134] : memref<20x508xf32, #tpu.memory_space<vmem>>, vector<16x144xf32>
    %cst_135 = arith.constant dense<0.000000e+00> : vector<4x144xf32>
    %132 = tpu.matmul %130, %131, %cst_135 {dimension_numbers = #tpu.dot_dimension_numbers<[1], [0], [0], [1], [0, 0, 1, 1], [], []>, precision = #tpu.contract_precision<fp32>} : vector<4x16xf32>, vector<16x144xf32>, vector<4x144xf32> -> vector<4x144xf32>
    %133 = arith.addf %128, %132 : vector<4x144xf32>
    %c3_136 = arith.constant 3 : index
    %c0_137 = arith.constant 0 : index
    %c0_138 = arith.constant 0 : index
    %134 = vector.load %arg8[%c3_136, %c0_137, %c0_138] : memref<9x4x16xf32, #tpu.memory_space<vmem>>, vector<1x4x16xf32>
    %135 = vector.shape_cast %134 : vector<1x4x16xf32> to vector<4x16xf32>
    %c0_139 = arith.constant 0 : index
    %c181_140 = arith.constant 181 : index
    %136 = vector.load %arg13[%c0_139, %c181_140] : memref<20x508xf32, #tpu.memory_space<vmem>>, vector<16x144xf32>
    %cst_141 = arith.constant dense<0.000000e+00> : vector<4x144xf32>
    %137 = tpu.matmul %135, %136, %cst_141 {dimension_numbers = #tpu.dot_dimension_numbers<[1], [0], [0], [1], [0, 0, 1, 1], [], []>, precision = #tpu.contract_precision<fp32>} : vector<4x16xf32>, vector<16x144xf32>, vector<4x144xf32> -> vector<4x144xf32>
    %138 = arith.addf %133, %137 : vector<4x144xf32>
    %c4_142 = arith.constant 4 : index
    %c0_143 = arith.constant 0 : index
    %c0_144 = arith.constant 0 : index
    %139 = vector.load %arg8[%c4_142, %c0_143, %c0_144] : memref<9x4x16xf32, #tpu.memory_space<vmem>>, vector<1x4x16xf32>
    %140 = vector.shape_cast %139 : vector<1x4x16xf32> to vector<4x16xf32>
    %c0_145 = arith.constant 0 : index
    %c182_146 = arith.constant 182 : index
    %141 = vector.load %arg13[%c0_145, %c182_146] : memref<20x508xf32, #tpu.memory_space<vmem>>, vector<16x144xf32>
    %cst_147 = arith.constant dense<0.000000e+00> : vector<4x144xf32>
    %142 = tpu.matmul %140, %141, %cst_147 {dimension_numbers = #tpu.dot_dimension_numbers<[1], [0], [0], [1], [0, 0, 1, 1], [], []>, precision = #tpu.contract_precision<fp32>} : vector<4x16xf32>, vector<16x144xf32>, vector<4x144xf32> -> vector<4x144xf32>
    %143 = arith.addf %138, %142 : vector<4x144xf32>
    %c5_148 = arith.constant 5 : index
    %c0_149 = arith.constant 0 : index
    %c0_150 = arith.constant 0 : index
    %144 = vector.load %arg8[%c5_148, %c0_149, %c0_150] : memref<9x4x16xf32, #tpu.memory_space<vmem>>, vector<1x4x16xf32>
    %145 = vector.shape_cast %144 : vector<1x4x16xf32> to vector<4x16xf32>
    %c0_151 = arith.constant 0 : index
    %c183_152 = arith.constant 183 : index
    %146 = vector.load %arg13[%c0_151, %c183_152] : memref<20x508xf32, #tpu.memory_space<vmem>>, vector<16x144xf32>
    %cst_153 = arith.constant dense<0.000000e+00> : vector<4x144xf32>
    %147 = tpu.matmul %145, %146, %cst_153 {dimension_numbers = #tpu.dot_dimension_numbers<[1], [0], [0], [1], [0, 0, 1, 1], [], []>, precision = #tpu.contract_precision<fp32>} : vector<4x16xf32>, vector<16x144xf32>, vector<4x144xf32> -> vector<4x144xf32>
    %148 = arith.addf %143, %147 : vector<4x144xf32>
    %c6_154 = arith.constant 6 : index
    %c0_155 = arith.constant 0 : index
    %c0_156 = arith.constant 0 : index
    %149 = vector.load %arg8[%c6_154, %c0_155, %c0_156] : memref<9x4x16xf32, #tpu.memory_space<vmem>>, vector<1x4x16xf32>
    %150 = vector.shape_cast %149 : vector<1x4x16xf32> to vector<4x16xf32>
    %c0_157 = arith.constant 0 : index
    %c199 = arith.constant 199 : index
    %151 = vector.load %arg13[%c0_157, %c199] : memref<20x508xf32, #tpu.memory_space<vmem>>, vector<16x144xf32>
    %cst_158 = arith.constant dense<0.000000e+00> : vector<4x144xf32>
    %152 = tpu.matmul %150, %151, %cst_158 {dimension_numbers = #tpu.dot_dimension_numbers<[1], [0], [0], [1], [0, 0, 1, 1], [], []>, precision = #tpu.contract_precision<fp32>} : vector<4x16xf32>, vector<16x144xf32>, vector<4x144xf32> -> vector<4x144xf32>
    %153 = arith.addf %148, %152 : vector<4x144xf32>
    %c7_159 = arith.constant 7 : index
    %c0_160 = arith.constant 0 : index
    %c0_161 = arith.constant 0 : index
    %154 = vector.load %arg8[%c7_159, %c0_160, %c0_161] : memref<9x4x16xf32, #tpu.memory_space<vmem>>, vector<1x4x16xf32>
    %155 = vector.shape_cast %154 : vector<1x4x16xf32> to vector<4x16xf32>
    %c0_162 = arith.constant 0 : index
    %c200 = arith.constant 200 : index
    %156 = vector.load %arg13[%c0_162, %c200] : memref<20x508xf32, #tpu.memory_space<vmem>>, vector<16x144xf32>
    %cst_163 = arith.constant dense<0.000000e+00> : vector<4x144xf32>
    %157 = tpu.matmul %155, %156, %cst_163 {dimension_numbers = #tpu.dot_dimension_numbers<[1], [0], [0], [1], [0, 0, 1, 1], [], []>, precision = #tpu.contract_precision<fp32>} : vector<4x16xf32>, vector<16x144xf32>, vector<4x144xf32> -> vector<4x144xf32>
    %158 = arith.addf %153, %157 : vector<4x144xf32>
    %c8_164 = arith.constant 8 : index
    %c0_165 = arith.constant 0 : index
    %c0_166 = arith.constant 0 : index
    %159 = vector.load %arg8[%c8_164, %c0_165, %c0_166] : memref<9x4x16xf32, #tpu.memory_space<vmem>>, vector<1x4x16xf32>
    %160 = vector.shape_cast %159 : vector<1x4x16xf32> to vector<4x16xf32>
    %c0_167 = arith.constant 0 : index
    %c201 = arith.constant 201 : index
    %161 = vector.load %arg13[%c0_167, %c201] : memref<20x508xf32, #tpu.memory_space<vmem>>, vector<16x144xf32>
    %cst_168 = arith.constant dense<0.000000e+00> : vector<4x144xf32>
    %162 = tpu.matmul %160, %161, %cst_168 {dimension_numbers = #tpu.dot_dimension_numbers<[1], [0], [0], [1], [0, 0, 1, 1], [], []>, precision = #tpu.contract_precision<fp32>} : vector<4x16xf32>, vector<16x144xf32>, vector<4x144xf32> -> vector<4x144xf32>
    %163 = arith.addf %158, %162 : vector<4x144xf32>
    %164 = vector.broadcast %119 : vector<4x1xf32> to vector<4x144xf32>
    %165 = arith.addf %163, %164 : vector<4x144xf32>
    %cst_169 = arith.constant 0.000000e+00 : f32
    %166 = vector.broadcast %cst_169 : f32 to vector<4x144xf32>
    %167 = arith.maximumf %165, %166 : vector<4x144xf32>
    %c0_170 = arith.constant 0 : index
    %c0_171 = arith.constant 0 : index
    %c54 = arith.constant 54 : index
    %168 = vector.load %arg3[%c0_170, %c0_171, %c54] : memref<1x1x252xf32, #tpu.memory_space<vmem>>, vector<1x1x144xf32>
    %169 = vector.shape_cast %168 : vector<1x1x144xf32> to vector<1x144xf32>
    %170 = vector.broadcast %169 : vector<1x144xf32> to vector<4x144xf32>
    %171 = arith.mulf %167, %170 : vector<4x144xf32>
    %c16 = arith.constant 16 : index
    %c182_172 = arith.constant 182 : index
    %172 = vector.load %arg13[%c16, %c182_172] : memref<20x508xf32, #tpu.memory_space<vmem>>, vector<4x144xf32>
    tpu.vector_store %arg13[%c16, %c182_172], %171 {strides = array<i32>} : memref<20x508xf32, #tpu.memory_space<vmem>>, vector<4x144xf32>,
    %c16_173 = arith.constant 16 : index
    %c181_174 = arith.constant 181 : index
    %173 = vector.load %arg13[%c16_173, %c181_174] : memref<20x508xf32, #tpu.memory_space<vmem>>, vector<4x1xf32>
    tpu.vector_store %arg13[%c16_173, %c181_174], %1 {strides = array<i32>} : memref<20x508xf32, #tpu.memory_space<vmem>>, vector<4x1xf32>,
    %c16_175 = arith.constant 16 : index
    %c326 = arith.constant 326 : index
    %174 = vector.load %arg13[%c16_175, %c326] : memref<20x508xf32, #tpu.memory_space<vmem>>, vector<4x1xf32>
    tpu.vector_store %arg13[%c16_175, %c326], %1 {strides = array<i32>} : memref<20x508xf32, #tpu.memory_space<vmem>>, vector<4x1xf32>,
    %c0_176 = arith.constant 0 : index
    %c0_177 = arith.constant 0 : index
    %175 = vector.load %arg10[%c0_176, %c0_177] : memref<8x20xf32, #tpu.memory_space<vmem>>, vector<8x20xf32>
    %c0_178 = arith.constant 0 : index
    %c182_179 = arith.constant 182 : index
    %176 = vector.load %arg13[%c0_178, %c182_179] : memref<20x508xf32, #tpu.memory_space<vmem>>, vector<20x144xf32>
    %cst_180 = arith.constant dense<0.000000e+00> : vector<8x144xf32>
    %177 = tpu.matmul %175, %176, %cst_180 {dimension_numbers = #tpu.dot_dimension_numbers<[1], [0], [0], [1], [0, 0, 1, 1], [], []>, precision = #tpu.contract_precision<fp32>} : vector<8x20xf32>, vector<20x144xf32>, vector<8x144xf32> -> vector<8x144xf32>
    %c0_181 = arith.constant 0 : index
    %c0_182 = arith.constant 0 : index
    %178 = vector.load %arg11[%c0_181, %c0_182] : memref<8x1xf32, #tpu.memory_space<vmem>>, vector<8x1xf32>
    %179 = vector.broadcast %178 : vector<8x1xf32> to vector<8x144xf32>
    %180 = arith.addf %177, %179 : vector<8x144xf32>
    %c0_183 = arith.constant 0 : index
    %c182_184 = arith.constant 182 : index
    %181 = vector.load %arg13[%c0_183, %c182_184] : memref<20x508xf32, #tpu.memory_space<vmem>>, vector<8x144xf32>
    %182 = arith.addf %180, %181 : vector<8x144xf32>
    %c0_185 = arith.constant 0 : index
    %c0_186 = arith.constant 0 : index
    %c0_187 = arith.constant 0 : index
    %c0_188 = arith.constant 0 : index
    %183 = vector.load %arg12[%c0_185, %c0_186, %c0_187, %c0_188] : memref<1x1x8x144xf32, #tpu.memory_space<vmem>>, vector<1x1x8x144xf32>
    %184 = vector.shape_cast %183 : vector<1x1x8x144xf32> to vector<8x144xf32>
    %185 = vector.shape_cast %182 : vector<8x144xf32> to vector<1x1x8x144xf32>
    tpu.vector_store %arg12[%c0_185, %c0_186, %c0_187, %c0_188], %185 {strides = array<i32>} : memref<1x1x8x144xf32, #tpu.memory_space<vmem>>, vector<1x1x8x144xf32>,
    return
  }
  func.func @transform_0(%arg0: i32, %arg1: i32) -> (i32, i32, i32, i32) {
    %c0_i32 = arith.constant 0 : i32
    %c0_i32_0 = arith.constant 0 : i32
    %c0_i32_1 = arith.constant 0 : i32
    return %arg0, %arg1, %c0_i32, %c0_i32_0 : i32, i32, i32, i32
  }
  func.func @transform_1(%arg0: i32, %arg1: i32) -> (i32, i32, i32) {
    %c0_i32 = arith.constant 0 : i32
    %c0_i32_0 = arith.constant 0 : i32
    %c0_i32_1 = arith.constant 0 : i32
    return %arg1, %c0_i32, %c0_i32_0 : i32, i32, i32
  }
  func.func @transform_2(%arg0: i32, %arg1: i32) -> (i32, i32, i32) {
    %c0_i32 = arith.constant 0 : i32
    %c0_i32_0 = arith.constant 0 : i32
    %c0_i32_1 = arith.constant 0 : i32
    %c0_i32_2 = arith.constant 0 : i32
    return %c0_i32, %c0_i32_0, %c0_i32_1 : i32, i32, i32
  }
  func.func @transform_3(%arg0: i32, %arg1: i32) -> (i32, i32) {
    %c0_i32 = arith.constant 0 : i32
    %c0_i32_0 = arith.constant 0 : i32
    %c0_i32_1 = arith.constant 0 : i32
    return %c0_i32, %c0_i32_0 : i32, i32
  }
  func.func @transform_4(%arg0: i32, %arg1: i32) -> (i32, i32, i32) {
    %c0_i32 = arith.constant 0 : i32
    %c0_i32_0 = arith.constant 0 : i32
    %c0_i32_1 = arith.constant 0 : i32
    %c0_i32_2 = arith.constant 0 : i32
    return %c0_i32, %c0_i32_0, %c0_i32_1 : i32, i32, i32
  }
  func.func @transform_5(%arg0: i32, %arg1: i32) -> (i32, i32) {
    %c0_i32 = arith.constant 0 : i32
    %c0_i32_0 = arith.constant 0 : i32
    %c0_i32_1 = arith.constant 0 : i32
    return %c0_i32, %c0_i32_0 : i32, i32
  }
  func.func @transform_6(%arg0: i32, %arg1: i32) -> (i32, i32, i32) {
    %c0_i32 = arith.constant 0 : i32
    %c0_i32_0 = arith.constant 0 : i32
    %c0_i32_1 = arith.constant 0 : i32
    %c0_i32_2 = arith.constant 0 : i32
    return %c0_i32, %c0_i32_0, %c0_i32_1 : i32, i32, i32
  }
  func.func @transform_7(%arg0: i32, %arg1: i32) -> (i32, i32) {
    %c0_i32 = arith.constant 0 : i32
    %c0_i32_0 = arith.constant 0 : i32
    %c0_i32_1 = arith.constant 0 : i32
    return %c0_i32, %c0_i32_0 : i32, i32
  }
  func.func @transform_8(%arg0: i32, %arg1: i32) -> (i32, i32) {
    %c0_i32 = arith.constant 0 : i32
    %c0_i32_0 = arith.constant 0 : i32
    %c0_i32_1 = arith.constant 0 : i32
    return %c0_i32, %c0_i32_0 : i32, i32
  }
  func.func @transform_9(%arg0: i32, %arg1: i32) -> (i32, i32) {
    %c0_i32 = arith.constant 0 : i32
    %c0_i32_0 = arith.constant 0 : i32
    %c0_i32_1 = arith.constant 0 : i32
    return %c0_i32, %c0_i32_0 : i32, i32
  }
  func.func @transform_10(%arg0: i32, %arg1: i32) -> (i32, i32, i32, i32) {
    %c0_i32 = arith.constant 0 : i32
    %c0_i32_0 = arith.constant 0 : i32
    %c0_i32_1 = arith.constant 0 : i32
    return %arg0, %arg1, %c0_i32, %c0_i32_0 : i32, i32, i32, i32
  }
}

</mosaic_0001>

<llo_original>
// kernel: rdb_forward.1
$region0: #{rdb_forward.1}
  #allocation0 [shape = 'u32[]', space=smem, size = 0x4, offset = 0x4, fixed_abs, tag = 'smem constant byte address 0x4 - core index']
  #allocation1 [shape = 'u32[72,128]{1,0:T(1,128)}', space=vmem, size = 0x9000, scoped, tag = 'internal scratch']
  #allocation2 [shape = 'f32[20,508]{1,0:T(8,128)}', space=vmem, size = 0xc000, scoped, tag = 'scratch operand']
  %s0 = inlined_call_operand.vmem [shape: f32[2,2,8,252], index: 0, kind: input, shape index: {}]
  %s1 = inlined_call_operand.vmem [shape: f32[2,1,252], index: 1, kind: input, shape index: {}]
  %s2 = inlined_call_operand.vmem [shape: f32[9,4,8], index: 2, kind: input, shape index: {}]
  %s3 = inlined_call_operand.vmem [shape: f32[4,1], index: 3, kind: input, shape index: {}]
  %s4 = inlined_call_operand.vmem [shape: f32[9,4,12], index: 4, kind: input, shape index: {}]
  %s5 = inlined_call_operand.vmem [shape: f32[4,1], index: 5, kind: input, shape index: {}]
  %s6 = inlined_call_operand.vmem [shape: f32[9,4,16], index: 6, kind: input, shape index: {}]
  %s7 = inlined_call_operand.vmem [shape: f32[4,1], index: 7, kind: input, shape index: {}]
  %s8 = inlined_call_operand.vmem [shape: f32[8,20], index: 8, kind: input, shape index: {}]
  %s9 = inlined_call_operand.vmem [shape: f32[8,1], index: 9, kind: input, shape index: {}]
  %s10 = inlined_call_operand.vmem [shape: f32[2,2,8,144], index: 10, kind: output, shape index: {}]
  %s11 = sld [smem:[#allocation0]]
  $region73: #{rdb_forward.1} parent=0
    _
  %s13 = ssub.s32 1, %s11
  %s14 = scalar_select 0, %s13, %s11
  loop: start=0, step=1, limit=6
  $region2: #{rdb_forward.1} parent=0 // loop_pre_header
    _
  $region3: #{rdb_forward.1} parent=0 // loop_header
    %s16 = sphi 0, %s20
    %p17 = scmp.ge.s32.totalorder %s16, 6
    %s23 = sphi 0, %s35
    %s24 = sphi 0, %s31
    %s25 = sphi 0, %s23
    %s26 = sphi 0, %s24
    %s27 = sphi 0, %s25
    %s28 = sphi 0, %s26
    %s40 = sphi 0, %s42
    %s43 = sphi 0, %s40
    %s44 = sphi 0, %s43
    %s60 = sphi 0, %s44
    %s66 = sphi 0, %s68
    %s69 = sphi 0, %s66
    %s70 = sphi 0, %s69
    %s86 = sphi 0, %s70
    %s90 = sphi 0, %s90
    %s92 = sphi 0, %s90
    %s93 = sphi 0, %s92
    %s107 = sphi 0, %s93
    %s111 = sphi 0, %s111
    %s113 = sphi 0, %s111
    %s114 = sphi 0, %s113
    %s128 = sphi 0, %s114
    %s132 = sphi 0, %s132
    %s134 = sphi 0, %s132
    %s135 = sphi 0, %s134
    %s149 = sphi 0, %s135
    %s153 = sphi 0, %s153
    %s155 = sphi 0, %s153
    %s156 = sphi 0, %s155
    %s170 = sphi 0, %s156
    %s174 = sphi 0, %s174
    %s176 = sphi 0, %s174
    %s177 = sphi 0, %s176
    %s191 = sphi 0, %s177
    %s195 = sphi 0, %s195
    %s197 = sphi 0, %s195
    %s198 = sphi 0, %s197
    %s212 = sphi 0, %s198
    %s216 = sphi 0, %s216
    %s218 = sphi 0, %s216
    %s219 = sphi 0, %s218
    %s233 = sphi 0, %s219
    %s237 = sphi 0, %s237
    %s239 = sphi 0, %s237
    %s240 = sphi 0, %s239
    %s254 = sphi 0, %s240
    %s262 = sphi 0, %s264
    %s265 = sphi 0, %s262
    %s266 = sphi 0, %s265
    %s282 = sphi 0, %s266
  $region4: #{rdb_forward.1} parent=0 // loop_header_branch
    %19 = sbr.rel (%p17) target = $region8
  $region5: #{rdb_forward.1} parent=0 // loop_body
    %s21 = ssub.s32 %s16, 1
    %s22 = ssub.s32 %s16, 2
    %s29 = sadd.s32 1, %s24
    %p30 = scmp.ge.s32.totalorder %s29, 2
    %s31 = scalar_select %p30, 0, %s29
    %s32 = sadd.s32 1, %s23
    %s33 = scalar_select %p30, %s32, %s23
    %p34 = scmp.ge.s32.totalorder %s33, 2
    %s35 = scalar_select %p34, 0, %s33
    %s36 = ssub.s32 %s23, %s35
    %s37 = ssub.s32 %s24, %s31
    %s38 = sor.u32 %s36, %s37
    %p39 = scmp.eq.s32.totalorder %s38, 0
    %s41 = sadd.s32 %s40, 1
    %s42 = scalar_select %p39, %s40, %s41
    %p45 = pneg %p39
    %p46 = scmp.eq.s32.totalorder %s16, 3
    %p47 = por %p45, %p46
    %p48 = scmp.ne.s32.totalorder %s40, %s43
    %p49 = scmp.eq.s32.totalorder %s16, 0
    %p50 = por %p48, %p49
    %p51 = scmp.ne.s32.totalorder %s40, %s43
    %p52 = scmp.eq.s32.totalorder %s21, 3
    %p53 = por %p51, %p52
    %p54 = scmp.ne.s32.totalorder %s43, %s44
    %p55 = scmp.eq.s32.totalorder %s21, 0
    %p56 = por %p54, %p55
    %p57 = scmp.ne.s32.totalorder %s43, %s44
    %p58 = scmp.eq.s32.totalorder %s22, 3
    %p59 = por %p57, %p58
    %p61 = scmp.ne.s32.totalorder %s44, %s60
    %p62 = scmp.eq.s32.totalorder %s22, 0
    %p63 = por %p61, %p62
    %s64 = ssub.s32 %s24, %s31
    %p65 = scmp.eq.s32.totalorder %s64, 0
    %s67 = sadd.s32 %s66, 1
    %s68 = scalar_select %p65, %s66, %s67
    %p71 = pneg %p65
    %p72 = scmp.eq.s32.totalorder %s16, 3
    %p73 = por %p71, %p72
    %p74 = scmp.ne.s32.totalorder %s66, %s69
    %p75 = scmp.eq.s32.totalorder %s16, 0
    %p76 = por %p74, %p75
    %p77 = scmp.ne.s32.totalorder %s66, %s69
    %p78 = scmp.eq.s32.totalorder %s21, 3
    %p79 = por %p77, %p78
    %p80 = scmp.ne.s32.totalorder %s69, %s70
    %p81 = scmp.eq.s32.totalorder %s21, 0
    %p82 = por %p80, %p81
    %p83 = scmp.ne.s32.totalorder %s69, %s70
    %p84 = scmp.eq.s32.totalorder %s22, 3
    %p85 = por %p83, %p84
    %p87 = scmp.ne.s32.totalorder %s70, %s86
    %p88 = scmp.eq.s32.totalorder %s22, 0
    %p89 = por %p87, %p88
    %s91 = sadd.s32 %s90, 1
    %p94 = scmp.eq.s32.totalorder %s16, 3
    %p95 = scmp.ne.s32.totalorder %s90, %s92
    %p96 = scmp.eq.s32.totalorder %s16, 0
    %p97 = por %p95, %p96
    %p98 = scmp.ne.s32.totalorder %s90, %s92
    %p99 = scmp.eq.s32.totalorder %s21, 3
    %p100 = por %p98, %p99
    %p101 = scmp.ne.s32.totalorder %s92, %s93
    %p102 = scmp.eq.s32.totalorder %s21, 0
    %p103 = por %p101, %p102
    %p104 = scmp.ne.s32.totalorder %s92, %s93
    %p105 = scmp.eq.s32.totalorder %s22, 3
    %p106 = por %p104, %p105
    %p108 = scmp.ne.s32.totalorder %s93, %s107
    %p109 = scmp.eq.s32.totalorder %s22, 0
    %p110 = por %p108, %p109
    %s112 = sadd.s32 %s111, 1
    %p115 = scmp.eq.s32.totalorder %s16, 3
    %p116 = scmp.ne.s32.totalorder %s111, %s113
    %p117 = scmp.eq.s32.totalorder %s16, 0
    %p118 = por %p116, %p117
    %p119 = scmp.ne.s32.totalorder %s111, %s113
    %p120 = scmp.eq.s32.totalorder %s21, 3
    %p121 = por %p119, %p120
    %p122 = scmp.ne.s32.totalorder %s113, %s114
    %p123 = scmp.eq.s32.totalorder %s21, 0
    %p124 = por %p122, %p123
    %p125 = scmp.ne.s32.totalorder %s113, %s114
    %p126 = scmp.eq.s32.totalorder %s22, 3
    %p127 = por %p125, %p126
    %p129 = scmp.ne.s32.totalorder %s114, %s128
    %p130 = scmp.eq.s32.totalorder %s22, 0
    %p131 = por %p129, %p130
    %s133 = sadd.s32 %s132, 1
    %p136 = scmp.eq.s32.totalorder %s16, 3
    %p137 = scmp.ne.s32.totalorder %s132, %s134
    %p138 = scmp.eq.s32.totalorder %s16, 0
    %p139 = por %p137, %p138
    %p140 = scmp.ne.s32.totalorder %s132, %s134
    %p141 = scmp.eq.s32.totalorder %s21, 3
    %p142 = por %p140, %p141
    %p143 = scmp.ne.s32.totalorder %s134, %s135
    %p144 = scmp.eq.s32.totalorder %s21, 0
    %p145 = por %p143, %p144
    %p146 = scmp.ne.s32.totalorder %s134, %s135
    %p147 = scmp.eq.s32.totalorder %s22, 3
    %p148 = por %p146, %p147
    %p150 = scmp.ne.s32.totalorder %s135, %s149
    %p151 = scmp.eq.s32.totalorder %s22, 0
    %p152 = por %p150, %p151
    %s154 = sadd.s32 %s153, 1
    %p157 = scmp.eq.s32.totalorder %s16, 3
    %p158 = scmp.ne.s32.totalorder %s153, %s155
    %p159 = scmp.eq.s32.totalorder %s16, 0
    %p160 = por %p158, %p159
    %p161 = scmp.ne.s32.totalorder %s153, %s155
    %p162 = scmp.eq.s32.totalorder %s21, 3
    %p163 = por %p161, %p162
    %p164 = scmp.ne.s32.totalorder %s155, %s156
    %p165 = scmp.eq.s32.totalorder %s21, 0
    %p166 = por %p164, %p165
    %p167 = scmp.ne.s32.totalorder %s155, %s156
    %p168 = scmp.eq.s32.totalorder %s22, 3
    %p169 = por %p167, %p168
    %p171 = scmp.ne.s32.totalorder %s156, %s170
    %p172 = scmp.eq.s32.totalorder %s22, 0
    %p173 = por %p171, %p172
    %s175 = sadd.s32 %s174, 1
    %p178 = scmp.eq.s32.totalorder %s16, 3
    %p179 = scmp.ne.s32.totalorder %s174, %s176
    %p180 = scmp.eq.s32.totalorder %s16, 0
    %p181 = por %p179, %p180
    %p182 = scmp.ne.s32.totalorder %s174, %s176
    %p183 = scmp.eq.s32.totalorder %s21, 3
    %p184 = por %p182, %p183
    %p185 = scmp.ne.s32.totalorder %s176, %s177
    %p186 = scmp.eq.s32.totalorder %s21, 0
    %p187 = por %p185, %p186
    %p188 = scmp.ne.s32.totalorder %s176, %s177
    %p189 = scmp.eq.s32.totalorder %s22, 3
    %p190 = por %p188, %p189
    %p192 = scmp.ne.s32.totalorder %s177, %s191
    %p193 = scmp.eq.s32.totalorder %s22, 0
    %p194 = por %p192, %p193
    %s196 = sadd.s32 %s195, 1
    %p199 = scmp.eq.s32.totalorder %s16, 3
    %p200 = scmp.ne.s32.totalorder %s195, %s197
    %p201 = scmp.eq.s32.totalorder %s16, 0
    %p202 = por %p200, %p201
    %p203 = scmp.ne.s32.totalorder %s195, %s197
    %p204 = scmp.eq.s32.totalorder %s21, 3
    %p205 = por %p203, %p204
    %p206 = scmp.ne.s32.totalorder %s197, %s198
    %p207 = scmp.eq.s32.totalorder %s21, 0
    %p208 = por %p206, %p207
    %p209 = scmp.ne.s32.totalorder %s197, %s198
    %p210 = scmp.eq.s32.totalorder %s22, 3
    %p211 = por %p209, %p210
    %p213 = scmp.ne.s32.totalorder %s198, %s212
    %p214 = scmp.eq.s32.totalorder %s22, 0
    %p215 = por %p213, %p214
    %s217 = sadd.s32 %s216, 1
    %p220 = scmp.eq.s32.totalorder %s16, 3
    %p221 = scmp.ne.s32.totalorder %s216, %s218
    %p222 = scmp.eq.s32.totalorder %s16, 0
    %p223 = por %p221, %p222
    %p224 = scmp.ne.s32.totalorder %s216, %s218
    %p225 = scmp.eq.s32.totalorder %s21, 3
    %p226 = por %p224, %p225
    %p227 = scmp.ne.s32.totalorder %s218, %s219
    %p228 = scmp.eq.s32.totalorder %s21, 0
    %p229 = por %p227, %p228
    %p230 = scmp.ne.s32.totalorder %s218, %s219
    %p231 = scmp.eq.s32.totalorder %s22, 3
    %p232 = por %p230, %p231
    %p234 = scmp.ne.s32.totalorder %s219, %s233
    %p235 = scmp.eq.s32.totalorder %s22, 0
    %p236 = por %p234, %p235
    %s238 = sadd.s32 %s237, 1
    %p241 = scmp.eq.s32.totalorder %s16, 3
    %p242 = scmp.ne.s32.totalorder %s237, %s239
    %p243 = scmp.eq.s32.totalorder %s16, 0
    %p244 = por %p242, %p243
    %p245 = scmp.ne.s32.totalorder %s237, %s239
    %p246 = scmp.eq.s32.totalorder %s21, 3
    %p247 = por %p245, %p246
    %p248 = scmp.ne.s32.totalorder %s239, %s240
    %p249 = scmp.eq.s32.totalorder %s21, 0
    %p250 = por %p248, %p249
    %p251 = scmp.ne.s32.totalorder %s239, %s240
    %p252 = scmp.eq.s32.totalorder %s22, 3
    %p253 = por %p251, %p252
    %p255 = scmp.ne.s32.totalorder %s240, %s254
    %p256 = scmp.eq.s32.totalorder %s22, 0
    %p257 = por %p255, %p256
    %s258 = ssub.s32 %s23, %s35
    %s259 = ssub.s32 %s24, %s31
    %s260 = sor.u32 %s258, %s259
    %p261 = scmp.eq.s32.totalorder %s260, 0
    %s263 = sadd.s32 %s262, 1
    %s264 = scalar_select %p261, %s262, %s263
    %p267 = pneg %p261
    %p268 = scmp.eq.s32.totalorder %s16, 3
    %p269 = por %p267, %p268
    %p270 = scmp.ne.s32.totalorder %s262, %s265
    %p271 = scmp.eq.s32.totalorder %s16, 0
    %p272 = por %p270, %p271
    %p273 = scmp.ne.s32.totalorder %s262, %s265
    %p274 = scmp.eq.s32.totalorder %s21, 3
    %p275 = por %p273, %p274
    %p276 = scmp.ne.s32.totalorder %s265, %s266
    %p277 = scmp.eq.s32.totalorder %s21, 0
    %p278 = por %p276, %p277
    %p279 = scmp.ne.s32.totalorder %s265, %s266
    %p280 = scmp.eq.s32.totalorder %s22, 3
    %p281 = por %p279, %p280
    %p283 = scmp.ne.s32.totalorder %s266, %s282
    %p284 = scmp.eq.s32.totalorder %s22, 0
    %p285 = por %p283, %p284
    %p286 = scmp.le.s32.totalorder 1, %s16
    %p287 = scmp.lt.s32.totalorder %s16, 5
    %p288 = pnand %p286, %p287
    %p289 = pneg %p288
    // Predicated region
    $region9: #{rdb_forward.1} parent=5 // pred_check
      _
    $region10: #{rdb_forward.1} parent=5 // pred_check_branch
      %291 = sbr.rel (%p288) target = $region12
    $region11: #{rdb_forward.1} parent=5 // pred_region
      %s292 = ssub.s32 %s16, 1
      // Predicated region
      $region13: #{rdb_forward.1} parent=11 // pred_check
        %p293 = pneg %p103
      $region14: #{rdb_forward.1} parent=11 // pred_check_branch
        %295 = sbr.rel (%p293) target = $region16
      $region15: #{rdb_forward.1} parent=11 // pred_region
        _
      $region16: #{rdb_forward.1} parent=11 // pred_fallthru
        _
      // Predicated region
      $region17: #{rdb_forward.1} parent=11 // pred_check
        %p296 = pneg %p124
      $region18: #{rdb_forward.1} parent=11 // pred_check_branch
        %298 = sbr.rel (%p296) target = $region20
      $region19: #{rdb_forward.1} parent=11 // pred_region
        _
      $region20: #{rdb_forward.1} parent=11 // pred_fallthru
        _
      // Predicated region
      $region21: #{rdb_forward.1} parent=11 // pred_check
        %p299 = pneg %p145
      $region22: #{rdb_forward.1} parent=11 // pred_check_branch
        %301 = sbr.rel (%p299) target = $region24
      $region23: #{rdb_forward.1} parent=11 // pred_region
        _
      $region24: #{rdb_forward.1} parent=11 // pred_fallthru
        _
      // Predicated region
      $region25: #{rdb_forward.1} parent=11 // pred_check
        %p302 = pneg %p166
      $region26: #{rdb_forward.1} parent=11 // pred_check_branch
        %304 = sbr.rel (%p302) target = $region28
      $region27: #{rdb_forward.1} parent=11 // pred_region
        _
      $region28: #{rdb_forward.1} parent=11 // pred_fallthru
        _
      // Predicated region
      $region29: #{rdb_forward.1} parent=11 // pred_check
        %p305 = pneg %p187
      $region30: #{rdb_forward.1} parent=11 // pred_check_branch
        %307 = sbr.rel (%p305) target = $region32
      $region31: #{rdb_forward.1} parent=11 // pred_region
        _
      $region32: #{rdb_forward.1} parent=11 // pred_fallthru
        _
      // Predicated region
      $region33: #{rdb_forward.1} parent=11 // pred_check
        %p308 = pneg %p208
      $region34: #{rdb_forward.1} parent=11 // pred_check_branch
        %310 = sbr.rel (%p308) target = $region36
      $region35: #{rdb_forward.1} parent=11 // pred_region
        _
      $region36: #{rdb_forward.1} parent=11 // pred_fallthru
        _
      // Predicated region
      $region37: #{rdb_forward.1} parent=11 // pred_check
        %p311 = pneg %p229
      $region38: #{rdb_forward.1} parent=11 // pred_check_branch
        %313 = sbr.rel (%p311) target = $region40
      $region39: #{rdb_forward.1} parent=11 // pred_region
        _
      $region40: #{rdb_forward.1} parent=11 // pred_fallthru
        _
      // Predicated region
      $region41: #{rdb_forward.1} parent=11 // pred_check
        %p314 = pneg %p250
      $region42: #{rdb_forward.1} parent=11 // pred_check_branch
        %316 = sbr.rel (%p314) target = $region44
      $region43: #{rdb_forward.1} parent=11 // pred_region
        _
      $region44: #{rdb_forward.1} parent=11 // pred_fallthru
        _
    $region12: #{rdb_forward.1} parent=5 // pred_fallthru
      _
    %p317 = scmp.lt.s32.totalorder %s16, 4
    // Predicated region
    $region45: #{rdb_forward.1} parent=5 // pred_check
      %p318 = pneg %p317
    $region46: #{rdb_forward.1} parent=5 // pred_check_branch
      %320 = sbr.rel (%p318) target = $region48
    $region47: #{rdb_forward.1} parent=5 // pred_region
      // Predicated region
      $region49: #{rdb_forward.1} parent=47 // pred_check
        %p321 = pneg %p50
      $region50: #{rdb_forward.1} parent=47 // pred_check_branch
        %323 = sbr.rel (%p321) target = $region52
      $region51: #{rdb_forward.1} parent=47 // pred_region
        %p324 = scmp.lt.s32.totalorder %s23, 1
        %s325 = scalar_select %p324, %s23, 1
        %p326 = scmp.lt.s32.totalorder %s24, 1
        %s327 = scalar_select %p326, %s24, 1
        %s328 = smul.addr %s327, 2
        %s329 = smul.addr %s325, 4
        %s330 = sadd.s32 %s328, %s329
        %s331 = smul.addr %s330, 8
        %s332 = scalar_lea.vmem %s0, %s331
      $region52: #{rdb_forward.1} parent=47 // pred_fallthru
        _
      // Predicated region
      $region53: #{rdb_forward.1} parent=47 // pred_check
        %p333 = pneg %p76
      $region54: #{rdb_forward.1} parent=47 // pred_check_branch
        %335 = sbr.rel (%p333) target = $region56
      $region55: #{rdb_forward.1} parent=47 // pred_region
        %p336 = scmp.lt.s32.totalorder %s24, 1
        %s337 = scalar_select %p336, %s24, 1
        %s338 = smul.addr %s337, 2
        %s339 = scalar_lea.vmem %s1, %s338
      $region56: #{rdb_forward.1} parent=47 // pred_fallthru
        _
    $region48: #{rdb_forward.1} parent=5 // pred_fallthru
      _
    %p340 = scmp.le.s32.totalorder 1, %s16
    %p341 = scmp.lt.s32.totalorder %s16, 5
    %p342 = pnand %p340, %p341
    %p343 = pneg %p342
    // Predicated region
    $region57: #{rdb_forward.1} parent=5 // pred_check
      _
    $region58: #{rdb_forward.1} parent=5 // pred_check_branch
      %345 = sbr.rel (%p342) target = $region60
    $region59: #{rdb_forward.1} parent=5 // pred_region
      %s346 = ssub.s32 %s16, 1
      %p347 = scmp.lt.s32.totalorder %s25, 1
      %s348 = scalar_select %p347, %s25, 1
      %p349 = scmp.lt.s32.totalorder %s26, 1
      %s350 = scalar_select %p349, %s26, 1
      %s351 = smul.addr %s350, 2
      %s352 = smul.addr %s348, 4
      %s353 = sadd.s32 %s351, %s352
      %s354 = smul.addr %s353, 8
      %s355 = scalar_lea.vmem %s0, %s354
      %p356 = pneg %p56
      %p357 = pneg %p53
      %p358 = scmp.lt.s32.totalorder %s26, 1
      %s359 = scalar_select %p358, %s26, 1
      %s360 = smul.addr %s359, 2
      %s361 = scalar_lea.vmem %s1, %s360
      %p362 = pneg %p82
      %p363 = pneg %p79
      %p364 = pneg %p103
      %p365 = pneg %p100
      %p366 = pneg %p124
      %p367 = pneg %p121
      %p368 = pneg %p145
      %p369 = pneg %p142
      %p370 = pneg %p166
      %p371 = pneg %p163
      %p372 = pneg %p187
      %p373 = pneg %p184
      %p374 = pneg %p208
      %p375 = pneg %p205
      %p376 = pneg %p229
      %p377 = pneg %p226
      %p378 = pneg %p250
      %p379 = pneg %p247
      %p380 = pneg %p278
      %p381 = pneg %p275
      %p382 = scmp.lt.s32.totalorder %s25, 1
      %s383 = scalar_select %p382, %s25, 1
      %p384 = scmp.lt.s32.totalorder %s26, 1
      %s385 = scalar_select %p384, %s26, 1
      %s386 = smul.addr %s385, 2
      %s387 = smul.addr %s383, 4
      %s388 = sadd.s32 %s386, %s387
      %s389 = smul.addr %s388, 8
      %s390 = scalar_lea.vmem %s10, %s389
      %p391 = scmp.lt.s32.totalorder %s25, 1
      %s392 = scalar_select %p391, %s25, 1
      %p393 = scmp.lt.s32.totalorder %s26, 1
      %s394 = scalar_select %p393, %s26, 1
      %s395 = smul.addr %s394, 2
      %s396 = smul.addr %s392, 4
      %s397 = sadd.s32 %s395, %s396
      %s398 = smul.addr %s397, 8
      %s399 = scalar_lea.vmem %s0, %s398
      %p400 = scmp.lt.s32.totalorder %s26, 1
      %s401 = scalar_select %p400, %s26, 1
      %s402 = smul.addr %s401, 2
      %s403 = scalar_lea.vmem %s1, %s402
      %p404 = scmp.lt.s32.totalorder %s25, 1
      %s405 = scalar_select %p404, %s25, 1
      %p406 = scmp.lt.s32.totalorder %s26, 1
      %s407 = scalar_select %p406, %s26, 1
      %s408 = smul.addr %s407, 2
      %s409 = smul.addr %s405, 4
      %s410 = sadd.s32 %s408, %s409
      %s411 = smul.addr %s410, 8
      %s412 = scalar_lea.vmem %s10, %s411
      %v413 = vld [vmem:[%s399] sm:$0xff]
      %v414 = vld [vmem:[%s399 + $0x8] sm:$0xff]
      %415 = vst [vmem:[#allocation2 + $0x8] sm:$0xff] %v413
      %vm416 = vcmask 1014784
      %417 = vst.msk [vmem:[#allocation2 + $0x10] sm:$0xff] %vm416, %v414
      %vm418 = vcmask 1048568
      %419 = vst.msk [vmem:[#allocation2] sm:$0xff] %vm418, 0.0
      %vm420 = vcmask 1023968
      %421 = vst.msk [vmem:[#allocation2 + $0x10] sm:$0xff] %vm420, 0.0
      %v422 = vld [vmem:[%s3] sm:$0xf]
      %v423 = vld [vmem:[%s2] sm:$0xf]
      %v424 = vld [vmem:[#allocation2] sm:$0xff]
      %v425 = vld [vmem:[#allocation2 + $0x8] sm:$0xff]
      %v426 = vld [vmem:[#allocation2 + $0x10] sm:$0xff]
      %s427 = scalar_lea.vmem %s2, 4
      %v428 = vld [vmem:[%s427] sm:$0xf]
      %vm429 = vcmask 64512
      %v431 = vsel %vm429, %v428, 0
      %433 = vmatpush.msra.mxu0 0.0
      %434 = vmatpush.msra.mxu0 0.0
      %435 = vmatpush.msra.mxu0 0.0
      %436 = vmatpush.msra.mxu0 0.0
      %437 = vmatpush.msra.mxu0 0.0
      %438 = vmatpush.msra.mxu0 0.0
      %439 = vmatpush.msra.mxu0 0.0
      %440 = vmatpush.msra.mxu0 0.0
      %441 = vmatpush.msra.mxu0 0.0
      %442 = vmatpush.msra.mxu0 0.0
      %443 = vmatpush.msra.mxu0 0.0
      %444 = vmatpush.msra.mxu0 0.0
      %445 = vmatpush.msra.mxu0 0.0
      %446 = vmatpush.msra.mxu0 0.0
      %447 = vmatpush.msra.mxu0 0.0
      %v448 = vand.u32 %v425, 4294901760
      %449 = vmatpush.msra.mxu0 %v448
      %v450 = vand.u32 %v431, 4294901760
      %v451 = vsub.f32 %v431, %v450
      %v452 = vand.u32 %v451, 4294901760
      %v453 = vsub.f32 %v451, %v452
      %v454 = vand.u32 %v453, 4294901760
      %455 = vmatmul.f32.gmra.mxu0 %v454
      %v456 = vpop.f32.mrf.mxu0
      %v457 = vadd.f32 0.0, %v456
      %458 = vdwg.mxu0
      %459 = vmatpush.msra.mxu0 0.0
      %460 = vmatpush.msra.mxu0 0.0
      %461 = vmatpush.msra.mxu0 0.0
      %462 = vmatpush.msra.mxu0 0.0
      %463 = vmatpush.msra.mxu0 0.0
      %464 = vmatpush.msra.mxu0 0.0
      %465 = vmatpush.msra.mxu0 0.0
      %466 = vmatpush.msra.mxu0 0.0
      %467 = vmatpush.msra.mxu0 0.0
      %468 = vmatpush.msra.mxu0 0.0
      %469 = vmatpush.msra.mxu0 0.0
      %470 = vmatpush.msra.mxu0 0.0
      %471 = vmatpush.msra.mxu0 0.0
      %472 = vmatpush.msra.mxu0 0.0
      %473 = vmatpush.msra.mxu0 0.0
      %v474 = vand.u32 %v425, 4294901760
      %v475 = vsub.f32 %v425, %v474
      %v476 = vand.u32 %v475, 4294901760
      %v477 = vsub.f32 %v475, %v476
      %v478 = vand.u32 %v477, 4294901760
      %479 = vmatpush.msra.mxu0 %v478
      %v480 = vand.u32 %v431, 4294901760
      %481 = vmatmul.f32.gmra.mxu0 %v480
      %v482 = vpop.f32.mrf.mxu0
      %v483 = vadd.f32 %v457, %v482
      %484 = vdwg.mxu0
      %485 = vmatpush.msra.mxu0 0.0
      %486 = vmatpush.msra.mxu0 0.0
      %487 = vmatpush.msra.mxu0 0.0
      %488 = vmatpush.msra.mxu0 0.0
      %489 = vmatpush.msra.mxu0 0.0
      %490 = vmatpush.msra.mxu0 0.0
      %491 = vmatpush.msra.mxu0 0.0
      %492 = vmatpush.msra.mxu0 0.0
      %493 = vmatpush.msra.mxu0 0.0
      %494 = vmatpush.msra.mxu0 0.0
      %495 = vmatpush.msra.mxu0 0.0
      %496 = vmatpush.msra.mxu0 0.0
      %497 = vmatpush.msra.mxu0 0.0
      %498 = vmatpush.msra.mxu0 0.0
      %499 = vmatpush.msra.mxu0 0.0
      %v500 = vand.u32 %v425, 4294901760
      %v501 = vsub.f32 %v425, %v500
      %502 = vmatpush.msra.mxu0 %v501
      %v503 = vand.u32 %v431, 4294901760
      %v504 = vsub.f32 %v431, %v503
      %505 = vmatmul.f32.gmra.mxu0 %v504
      %v506 = vpop.f32.mrf.mxu0
      %v507 = vadd.f32 %v483, %v506
      %508 = vdwg.mxu0
      %509 = vmatpush.msra.mxu0 0.0
      %510 = vmatpush.msra.mxu0 0.0
      %511 = vmatpush.msra.mxu0 0.0
      %512 = vmatpush.msra.mxu0 0.0
      %513 = vmatpush.msra.mxu0 0.0
      %514 = vmatpush.msra.mxu0 0.0
      %515 = vmatpush.msra.mxu0 0.0
      %516 = vmatpush.msra.mxu0 0.0
      %517 = vmatpush.msra.mxu0 0.0
      %518 = vmatpush.msra.mxu0 0.0
      %519 = vmatpush.msra.mxu0 0.0
      %520 = vmatpush.msra.mxu0 0.0
      %521 = vmatpush.msra.mxu0 0.0
      %522 = vmatpush.msra.mxu0 0.0
      %523 = vmatpush.msra.mxu0 0.0
      %v524 = vand.u32 %v425, 4294901760
      %525 = vmatpush.msra.mxu0 %v524
      %v526 = vand.u32 %v431, 4294901760
      %v527 = vsub.f32 %v431, %v526
      %v528 = vand.u32 %v527, 4294901760
      %529 = vmatmul.f32.gmra.mxu0 %v528
      %v530 = vpop.f32.mrf.mxu0
      %v531 = vadd.f32 %v507, %v530
      %532 = vdwg.mxu0
      %533 = vmatpush.msra.mxu0 0.0
      %534 = vmatpush.msra.mxu0 0.0
      %535 = vmatpush.msra.mxu0 0.0
      %536 = vmatpush.msra.mxu0 0.0
      %537 = vmatpush.msra.mxu0 0.0
      %538 = vmatpush.msra.mxu0 0.0
      %539 = vmatpush.msra.mxu0 0.0
      %540 = vmatpush.msra.mxu0 0.0
      %541 = vmatpush.msra.mxu0 0.0
      %542 = vmatpush.msra.mxu0 0.0
      %543 = vmatpush.msra.mxu0 0.0
      %544 = vmatpush.msra.mxu0 0.0
      %545 = vmatpush.msra.mxu0 0.0
      %546 = vmatpush.msra.mxu0 0.0
      %547 = vmatpush.msra.mxu0 0.0
      %v548 = vand.u32 %v425, 4294901760
      %v549 = vsub.f32 %v425, %v548
      %v550 = vand.u32 %v549, 4294901760
      %551 = vmatpush.msra.mxu0 %v550
      %v552 = vand.u32 %v431, 4294901760
      %553 = vmatmul.f32.gmra.mxu0 %v552
      %v554 = vpop.f32.mrf.mxu0
      %v555 = vadd.f32 %v531, %v554
      %556 = vdwg.mxu0
      %557 = vmatpush.msra.mxu0 0.0
      %558 = vmatpush.msra.mxu0 0.0
      %559 = vmatpush.msra.mxu0 0.0
      %560 = vmatpush.msra.mxu0 0.0
      %561 = vmatpush.msra.mxu0 0.0
      %562 = vmatpush.msra.mxu0 0.0
      %563 = vmatpush.msra.mxu0 0.0
      %564 = vmatpush.msra.mxu0 0.0
      %565 = vmatpush.msra.mxu0 0.0
      %566 = vmatpush.msra.mxu0 0.0
      %567 = vmatpush.msra.mxu0 0.0
      %568 = vmatpush.msra.mxu0 0.0
      %569 = vmatpush.msra.mxu0 0.0
      %570 = vmatpush.msra.mxu0 0.0
      %571 = vmatpush.msra.mxu0 0.0
      %v572 = vand.u32 %v425, 4294901760
      %573 = vmatpush.msra.mxu0 %v572
      %v574 = vand.u32 %v431, 4294901760
      %575 = vmatmul.f32.gmra.mxu0 %v574
      %v576 = vpop.f32.mrf.mxu0
      %v577 = vadd.f32 %v555, %v576
      %578 = vdwg.mxu0
      %579 = vmatpush.msra.mxu0 0.0
      %580 = vmatpush.msra.mxu0 0.0
      %581 = vmatpush.msra.mxu0 0.0
      %582 = vmatpush.msra.mxu0 0.0
      %583 = vmatpush.msra.mxu0 0.0
      %584 = vmatpush.msra.mxu0 0.0
      %585 = vmatpush.msra.mxu0 0.0
      %586 = vmatpush.msra.mxu0 0.0
      %587 = vmatpush.msra.mxu0 0.0
      %588 = vmatpush.msra.mxu0 0.0
      %589 = vmatpush.msra.mxu0 0.0
      %590 = vmatpush.msra.mxu0 0.0
      %591 = vmatpush.msra.mxu0 0.0
      %592 = vmatpush.msra.mxu0 0.0
      %593 = vmatpush.msra.mxu0 0.0
      %v594 = vand.u32 %v426, 4294901760
      %595 = vmatpush.msra.mxu0 %v594
      %v596 = vand.u32 %v431, 4294901760
      %v597 = vsub.f32 %v431, %v596
      %v598 = vand.u32 %v597, 4294901760
      %v599 = vsub.f32 %v597, %v598
      %v600 = vand.u32 %v599, 4294901760
      %601 = vmatmul.f32.gmra.mxu0 %v600
      %v602 = vpop.f32.mrf.mxu0
      %v603 = vadd.f32 0.0, %v602
      %604 = vdwg.mxu0
      %605 = vmatpush.msra.mxu0 0.0
      %606 = vmatpush.msra.mxu0 0.0
      %607 = vmatpush.msra.mxu0 0.0
      %608 = vmatpush.msra.mxu0 0.0
      %609 = vmatpush.msra.mxu0 0.0
      %610 = vmatpush.msra.mxu0 0.0
      %611 = vmatpush.msra.mxu0 0.0
      %612 = vmatpush.msra.mxu0 0.0
      %613 = vmatpush.msra.mxu0 0.0
      %614 = vmatpush.msra.mxu0 0.0
      %615 = vmatpush.msra.mxu0 0.0
      %616 = vmatpush.msra.mxu0 0.0
      %617 = vmatpush.msra.mxu0 0.0
      %618 = vmatpush.msra.mxu0 0.0
      %619 = vmatpush.msra.mxu0 0.0
      %v620 = vand.u32 %v426, 4294901760
      %v621 = vsub.f32 %v426, %v620
      %v622 = vand.u32 %v621, 4294901760
      %v623 = vsub.f32 %v621, %v622
      %v624 = vand.u32 %v623, 4294901760
      %625 = vmatpush.msra.mxu0 %v624
      %v626 = vand.u32 %v431, 4294901760
      %627 = vmatmul.f32.gmra.mxu0 %v626
      %v628 = vpop.f32.mrf.mxu0
      %v629 = vadd.f32 %v603, %v628
      %630 = vdwg.mxu0
      %631 = vmatpush.msra.mxu0 0.0
      %632 = vmatpush.msra.mxu0 0.0
      %633 = vmatpush.msra.mxu0 0.0
      %634 = vmatpush.msra.mxu0 0.0
      %635 = vmatpush.msra.mxu0 0.0
      %636 = vmatpush.msra.mxu0 0.0
      %637 = vmatpush.msra.mxu0 0.0
      %638 = vmatpush.msra.mxu0 0.0
      %639 = vmatpush.msra.mxu0 0.0
      %640 = vmatpush.msra.mxu0 0.0
      %641 = vmatpush.msra.mxu0 0.0
      %642 = vmatpush.msra.mxu0 0.0
      %643 = vmatpush.msra.mxu0 0.0
      %644 = vmatpush.msra.mxu0 0.0
      %645 = vmatpush.msra.mxu0 0.0
      %v646 = vand.u32 %v426, 4294901760
      %v647 = vsub.f32 %v426, %v646
      %648 = vmatpush.msra.mxu0 %v647
      %v649 = vand.u32 %v431, 4294901760
      %v650 = vsub.f32 %v431, %v649
      %651 = vmatmul.f32.gmra.mxu0 %v650
      %v652 = vpop.f32.mrf.mxu0
      %v653 = vadd.f32 %v629, %v652
      %654 = vdwg.mxu0
      %655 = vmatpush.msra.mxu0 0.0
      %656 = vmatpush.msra.mxu0 0.0
      %657 = vmatpush.msra.mxu0 0.0
      %658 = vmatpush.msra.mxu0 0.0
      %659 = vmatpush.msra.mxu0 0.0
      %660 = vmatpush.msra.mxu0 0.0
      %661 = vmatpush.msra.mxu0 0.0
      %662 = vmatpush.msra.mxu0 0.0
      %663 = vmatpush.msra.mxu0 0.0
      %664 = vmatpush.msra.mxu0 0.0
      %665 = vmatpush.msra.mxu0 0.0
      %666 = vmatpush.msra.mxu0 0.0
      %667 = vmatpush.msra.mxu0 0.0
      %668 = vmatpush.msra.mxu0 0.0
      %669 = vmatpush.msra.mxu0 0.0
      %v670 = vand.u32 %v426, 4294901760
      %671 = vmatpush.msra.mxu0 %v670
      %v672 = vand.u32 %v431, 4294901760
      %v673 = vsub.f32 %v431, %v672
      %v674 = vand.u32 %v673, 4294901760
      %675 = vmatmul.f32.gmra.mxu0 %v674
      %v676 = vpop.f32.mrf.mxu0
      %v677 = vadd.f32 %v653, %v676
      %678 = vdwg.mxu0
      %679 = vmatpush.msra.mxu0 0.0
      %680 = vmatpush.msra.mxu0 0.0
      %681 = vmatpush.msra.mxu0 0.0
      %682 = vmatpush.msra.mxu0 0.0
      %683 = vmatpush.msra.mxu0 0.0
      %684 = vmatpush.msra.mxu0 0.0
      %685 = vmatpush.msra.mxu0 0.0
      %686 = vmatpush.msra.mxu0 0.0
      %687 = vmatpush.msra.mxu0 0.0
      %688 = vmatpush.msra.mxu0 0.0
      %689 = vmatpush.msra.mxu0 0.0
      %690 = vmatpush.msra.mxu0 0.0
      %691 = vmatpush.msra.mxu0 0.0
      %692 = vmatpush.msra.mxu0 0.0
      %693 = vmatpush.msra.mxu0 0.0
      %v694 = vand.u32 %v426, 4294901760
      %v695 = vsub.f32 %v426, %v694
      %v696 = vand.u32 %v695, 4294901760
      %697 = vmatpush.msra.mxu0 %v696
      %v698 = vand.u32 %v431, 4294901760
      %699 = vmatmul.f32.gmra.mxu0 %v698
      %v700 = vpop.f32.mrf.mxu0
      %v701 = vadd.f32 %v677, %v700
      %702 = vdwg.mxu0
      %703 = vmatpush.msra.mxu0 0.0
      %704 = vmatpush.msra.mxu0 0.0
      %705 = vmatpush.msra.mxu0 0.0
      %706 = vmatpush.msra.mxu0 0.0
      %707 = vmatpush.msra.mxu0 0.0
      %708 = vmatpush.msra.mxu0 0.0
      %709 = vmatpush.msra.mxu0 0.0
      %710 = vmatpush.msra.mxu0 0.0
      %711 = vmatpush.msra.mxu0 0.0
      %712 = vmatpush.msra.mxu0 0.0
      %713 = vmatpush.msra.mxu0 0.0
      %714 = vmatpush.msra.mxu0 0.0
      %715 = vmatpush.msra.mxu0 0.0
      %716 = vmatpush.msra.mxu0 0.0
      %717 = vmatpush.msra.mxu0 0.0
      %v718 = vand.u32 %v426, 4294901760
      %719 = vmatpush.msra.mxu0 %v718
      %v720 = vand.u32 %v431, 4294901760
      %721 = vmatmul.f32.gmra.mxu0 %v720
      %v722 = vpop.f32.mrf.mxu0
      %v723 = vadd.f32 %v701, %v722
      %724 = vdwg.mxu0
      %728 = vrot.lane.b32.xlu0 %v424, 1
      %v729 = vpop.permute.xlu0 %728
      %730 = vrot.lane.b32.xlu0 %v425, 1
      %v731 = vpop.permute.xlu0 %730
      %732 = vrot.lane.b32.xlu0 %v426, 1
      %v733 = vpop.permute.xlu0 %732
      %vm734 = vcmask 7168
      %v735 = vsel %vm734, %v729, %v731
      %v736 = vsel %vm734, %v731, %v733
      %v740 = vsel %vm429, %v423, 0
      %742 = vmatpush.msra.mxu0 0.0
      %743 = vmatpush.msra.mxu0 0.0
      %744 = vmatpush.msra.mxu0 0.0
      %745 = vmatpush.msra.mxu0 0.0
      %746 = vmatpush.msra.mxu0 0.0
      %747 = vmatpush.msra.mxu0 0.0
      %748 = vmatpush.msra.mxu0 0.0
      %749 = vmatpush.msra.mxu0 0.0
      %750 = vmatpush.msra.mxu0 0.0
      %751 = vmatpush.msra.mxu0 0.0
      %752 = vmatpush.msra.mxu0 0.0
      %753 = vmatpush.msra.mxu0 0.0
      %754 = vmatpush.msra.mxu0 0.0
      %755 = vmatpush.msra.mxu0 0.0
      %756 = vmatpush.msra.mxu0 0.0
      %v757 = vand.u32 %v735, 4294901760
      %758 = vmatpush.msra.mxu0 %v757
      %v759 = vand.u32 %v740, 4294901760
      %v760 = vsub.f32 %v740, %v759
      %v761 = vand.u32 %v760, 4294901760
      %v762 = vsub.f32 %v760, %v761
      %v763 = vand.u32 %v762, 4294901760
      %764 = vmatmul.f32.gmra.mxu0 %v763
      %v765 = vpop.f32.mrf.mxu0
      %v766 = vadd.f32 %v577, %v765
      %767 = vdwg.mxu0
      %768 = vmatpush.msra.mxu0 0.0
      %769 = vmatpush.msra.mxu0 0.0
      %770 = vmatpush.msra.mxu0 0.0
      %771 = vmatpush.msra.mxu0 0.0
      %772 = vmatpush.msra.mxu0 0.0
      %773 = vmatpush.msra.mxu0 0.0
      %774 = vmatpush.msra.mxu0 0.0
      %775 = vmatpush.msra.mxu0 0.0
      %776 = vmatpush.msra.mxu0 0.0
      %777 = vmatpush.msra.mxu0 0.0
      %778 = vmatpush.msra.mxu0 0.0
      %779 = vmatpush.msra.mxu0 0.0
      %780 = vmatpush.msra.mxu0 0.0
      %781 = vmatpush.msra.mxu0 0.0
      %782 = vmatpush.msra.mxu0 0.0
      %v783 = vand.u32 %v735, 4294901760
      %v784 = vsub.f32 %v735, %v783
      %v785 = vand.u32 %v784, 4294901760
      %v786 = vsub.f32 %v784, %v785
      %v787 = vand.u32 %v786, 4294901760
      %788 = vmatpush.msra.mxu0 %v787
      %v789 = vand.u32 %v740, 4294901760
      %790 = vmatmul.f32.gmra.mxu0 %v789
      %v791 = vpop.f32.mrf.mxu0
      %v792 = vadd.f32 %v766, %v791
      %793 = vdwg.mxu0
      %794 = vmatpush.msra.mxu0 0.0
      %795 = vmatpush.msra.mxu0 0.0
      %796 = vmatpush.msra.mxu0 0.0
      %797 = vmatpush.msra.mxu0 0.0
      %798 = vmatpush.msra.mxu0 0.0
      %799 = vmatpush.msra.mxu0 0.0
      %800 = vmatpush.msra.mxu0 0.0
      %801 = vmatpush.msra.mxu0 0.0
      %802 = vmatpush.msra.mxu0 0.0
      %803 = vmatpush.msra.mxu0 0.0
      %804 = vmatpush.msra.mxu0 0.0
      %805 = vmatpush.msra.mxu0 0.0
      %806 = vmatpush.msra.mxu0 0.0
      %807 = vmatpush.msra.mxu0 0.0
      %808 = vmatpush.msra.mxu0 0.0
      %v809 = vand.u32 %v735, 4294901760
      %v810 = vsub.f32 %v735, %v809
      %811 = vmatpush.msra.mxu0 %v810
      %v812 = vand.u32 %v740, 4294901760
      %v813 = vsub.f32 %v740, %v812
      %814 = vmatmul.f32.gmra.mxu0 %v813
      %v815 = vpop.f32.mrf.mxu0
      %v816 = vadd.f32 %v792, %v815
      %817 = vdwg.mxu0
      %818 = vmatpush.msra.mxu0 0.0
      %819 = vmatpush.msra.mxu0 0.0
      %820 = vmatpush.msra.mxu0 0.0
      %821 = vmatpush.msra.mxu0 0.0
      %822 = vmatpush.msra.mxu0 0.0
      %823 = vmatpush.msra.mxu0 0.0
      %824 = vmatpush.msra.mxu0 0.0
      %825 = vmatpush.msra.mxu0 0.0
      %826 = vmatpush.msra.mxu0 0.0
      %827 = vmatpush.msra.mxu0 0.0
      %828 = vmatpush.msra.mxu0 0.0
      %829 = vmatpush.msra.mxu0 0.0
      %830 = vmatpush.msra.mxu0 0.0
      %831 = vmatpush.msra.mxu0 0.0
      %832 = vmatpush.msra.mxu0 0.0
      %v833 = vand.u32 %v735, 4294901760
      %834 = vmatpush.msra.mxu0 %v833
      %v835 = vand.u32 %v740, 4294901760
      %v836 = vsub.f32 %v740, %v835
      %v837 = vand.u32 %v836, 4294901760
      %838 = vmatmul.f32.gmra.mxu0 %v837
      %v839 = vpop.f32.mrf.mxu0
      %v840 = vadd.f32 %v816, %v839
      %841 = vdwg.mxu0
      %842 = vmatpush.msra.mxu0 0.0
      %843 = vmatpush.msra.mxu0 0.0
      %844 = vmatpush.msra.mxu0 0.0
      %845 = vmatpush.msra.mxu0 0.0
      %846 = vmatpush.msra.mxu0 0.0
      %847 = vmatpush.msra.mxu0 0.0
      %848 = vmatpush.msra.mxu0 0.0
      %849 = vmatpush.msra.mxu0 0.0
      %850 = vmatpush.msra.mxu0 0.0
      %851 = vmatpush.msra.mxu0 0.0
      %852 = vmatpush.msra.mxu0 0.0
      %853 = vmatpush.msra.mxu0 0.0
      %854 = vmatpush.msra.mxu0 0.0
      %855 = vmatpush.msra.mxu0 0.0
      %856 = vmatpush.msra.mxu0 0.0
      %v857 = vand.u32 %v735, 4294901760
      %v858 = vsub.f32 %v735, %v857
      %v859 = vand.u32 %v858, 4294901760
      %860 = vmatpush.msra.mxu0 %v859
      %v861 = vand.u32 %v740, 4294901760
      %862 = vmatmul.f32.gmra.mxu0 %v861
      %v863 = vpop.f32.mrf.mxu0
      %v864 = vadd.f32 %v840, %v863
      %865 = vdwg.mxu0
      %866 = vmatpush.msra.mxu0 0.0
      %867 = vmatpush.msra.mxu0 0.0
      %868 = vmatpush.msra.mxu0 0.0
      %869 = vmatpush.msra.mxu0 0.0
      %870 = vmatpush.msra.mxu0 0.0
      %871 = vmatpush.msra.mxu0 0.0
      %872 = vmatpush.msra.mxu0 0.0
      %873 = vmatpush.msra.mxu0 0.0
      %874 = vmatpush.msra.mxu0 0.0
      %875 = vmatpush.msra.mxu0 0.0
      %876 = vmatpush.msra.mxu0 0.0
      %877 = vmatpush.msra.mxu0 0.0
      %878 = vmatpush.msra.mxu0 0.0
      %879 = vmatpush.msra.mxu0 0.0
      %880 = vmatpush.msra.mxu0 0.0
      %v881 = vand.u32 %v735, 4294901760
      %882 = vmatpush.msra.mxu0 %v881
      %v883 = vand.u32 %v740, 4294901760
      %884 = vmatmul.f32.gmra.mxu0 %v883
      %v885 = vpop.f32.mrf.mxu0
      %v886 = vadd.f32 %v864, %v885
      %887 = vdwg.mxu0
      %888 = vmatpush.msra.mxu0 0.0
      %889 = vmatpush.msra.mxu0 0.0
      %890 = vmatpush.msra.mxu0 0.0
      %891 = vmatpush.msra.mxu0 0.0
      %892 = vmatpush.msra.mxu0 0.0
      %893 = vmatpush.msra.mxu0 0.0
      %894 = vmatpush.msra.mxu0 0.0
      %895 = vmatpush.msra.mxu0 0.0
      %896 = vmatpush.msra.mxu0 0.0
      %897 = vmatpush.msra.mxu0 0.0
      %898 = vmatpush.msra.mxu0 0.0
      %899 = vmatpush.msra.mxu0 0.0
      %900 = vmatpush.msra.mxu0 0.0
      %901 = vmatpush.msra.mxu0 0.0
      %902 = vmatpush.msra.mxu0 0.0
      %v903 = vand.u32 %v736, 4294901760
      %904 = vmatpush.msra.mxu0 %v903
      %v905 = vand.u32 %v740, 4294901760
      %v906 = vsub.f32 %v740, %v905
      %v907 = vand.u32 %v906, 4294901760
      %v908 = vsub.f32 %v906, %v907
      %v909 = vand.u32 %v908, 4294901760
      %910 = vmatmul.f32.gmra.mxu0 %v909
      %v911 = vpop.f32.mrf.mxu0
      %v912 = vadd.f32 %v723, %v911
      %913 = vdwg.mxu0
      %914 = vmatpush.msra.mxu0 0.0
      %915 = vmatpush.msra.mxu0 0.0
      %916 = vmatpush.msra.mxu0 0.0
      %917 = vmatpush.msra.mxu0 0.0
      %918 = vmatpush.msra.mxu0 0.0
      %919 = vmatpush.msra.mxu0 0.0
      %920 = vmatpush.msra.mxu0 0.0
      %921 = vmatpush.msra.mxu0 0.0
      %922 = vmatpush.msra.mxu0 0.0
      %923 = vmatpush.msra.mxu0 0.0
      %924 = vmatpush.msra.mxu0 0.0
      %925 = vmatpush.msra.mxu0 0.0
      %926 = vmatpush.msra.mxu0 0.0
      %927 = vmatpush.msra.mxu0 0.0
      %928 = vmatpush.msra.mxu0 0.0
      %v929 = vand.u32 %v736, 4294901760
      %v930 = vsub.f32 %v736, %v929
      %v931 = vand.u32 %v930, 4294901760
      %v932 = vsub.f32 %v930, %v931
      %v933 = vand.u32 %v932, 4294901760
      %934 = vmatpush.msra.mxu0 %v933
      %v935 = vand.u32 %v740, 4294901760
      %936 = vmatmul.f32.gmra.mxu0 %v935
      %v937 = vpop.f32.mrf.mxu0
      %v938 = vadd.f32 %v912, %v937
      %939 = vdwg.mxu0
      %940 = vmatpush.msra.mxu0 0.0
      %941 = vmatpush.msra.mxu0 0.0
      %942 = vmatpush.msra.mxu0 0.0
      %943 = vmatpush.msra.mxu0 0.0
      %944 = vmatpush.msra.mxu0 0.0
      %945 = vmatpush.msra.mxu0 0.0
      %946 = vmatpush.msra.mxu0 0.0
      %947 = vmatpush.msra.mxu0 0.0
      %948 = vmatpush.msra.mxu0 0.0
      %949 = vmatpush.msra.mxu0 0.0
      %950 = vmatpush.msra.mxu0 0.0
      %951 = vmatpush.msra.mxu0 0.0
      %952 = vmatpush.msra.mxu0 0.0
      %953 = vmatpush.msra.mxu0 0.0
      %954 = vmatpush.msra.mxu0 0.0
      %v955 = vand.u32 %v736, 4294901760
      %v956 = vsub.f32 %v736, %v955
      %957 = vmatpush.msra.mxu0 %v956
      %v958 = vand.u32 %v740, 4294901760
      %v959 = vsub.f32 %v740, %v958
      %960 = vmatmul.f32.gmra.mxu0 %v959
      %v961 = vpop.f32.mrf.mxu0
      %v962 = vadd.f32 %v938, %v961
      %963 = vdwg.mxu0
      %964 = vmatpush.msra.mxu0 0.0
      %965 = vmatpush.msra.mxu0 0.0
      %966 = vmatpush.msra.mxu0 0.0
      %967 = vmatpush.msra.mxu0 0.0
      %968 = vmatpush.msra.mxu0 0.0
      %969 = vmatpush.msra.mxu0 0.0
      %970 = vmatpush.msra.mxu0 0.0
      %971 = vmatpush.msra.mxu0 0.0
      %972 = vmatpush.msra.mxu0 0.0
      %973 = vmatpush.msra.mxu0 0.0
      %974 = vmatpush.msra.mxu0 0.0
      %975 = vmatpush.msra.mxu0 0.0
      %976 = vmatpush.msra.mxu0 0.0
      %977 = vmatpush.msra.mxu0 0.0
      %978 = vmatpush.msra.mxu0 0.0
      %v979 = vand.u32 %v736, 4294901760
      %980 = vmatpush.msra.mxu0 %v979
      %v981 = vand.u32 %v740, 4294901760
      %v982 = vsub.f32 %v740, %v981
      %v983 = vand.u32 %v982, 4294901760
      %984 = vmatmul.f32.gmra.mxu0 %v983
      %v985 = vpop.f32.mrf.mxu0
      %v986 = vadd.f32 %v962, %v985
      %987 = vdwg.mxu0
      %988 = vmatpush.msra.mxu0 0.0
      %989 = vmatpush.msra.mxu0 0.0
      %990 = vmatpush.msra.mxu0 0.0
      %991 = vmatpush.msra.mxu0 0.0
      %992 = vmatpush.msra.mxu0 0.0
      %993 = vmatpush.msra.mxu0 0.0
      %994 = vmatpush.msra.mxu0 0.0
      %995 = vmatpush.msra.mxu0 0.0
      %996 = vmatpush.msra.mxu0 0.0
      %997 = vmatpush.msra.mxu0 0.0
      %998 = vmatpush.msra.mxu0 0.0
      %999 = vmatpush.msra.mxu0 0.0
      %1000 = vmatpush.msra.mxu0 0.0
      %1001 = vmatpush.msra.mxu0 0.0
      %1002 = vmatpush.msra.mxu0 0.0
      %v1003 = vand.u32 %v736, 4294901760
      %v1004 = vsub.f32 %v736, %v1003
      %v1005 = vand.u32 %v1004, 4294901760
      %1006 = vmatpush.msra.mxu0 %v1005
      %v1007 = vand.u32 %v740, 4294901760
      %1008 = vmatmul.f32.gmra.mxu0 %v1007
      %v1009 = vpop.f32.mrf.mxu0
      %v1010 = vadd.f32 %v986, %v1009
      %1011 = vdwg.mxu0
      %1012 = vmatpush.msra.mxu0 0.0
      %1013 = vmatpush.msra.mxu0 0.0
      %1014 = vmatpush.msra.mxu0 0.0
      %1015 = vmatpush.msra.mxu0 0.0
      %1016 = vmatpush.msra.mxu0 0.0
      %1017 = vmatpush.msra.mxu0 0.0
      %1018 = vmatpush.msra.mxu0 0.0
      %1019 = vmatpush.msra.mxu0 0.0
      %1020 = vmatpush.msra.mxu0 0.0
      %1021 = vmatpush.msra.mxu0 0.0
      %1022 = vmatpush.msra.mxu0 0.0
      %1023 = vmatpush.msra.mxu0 0.0
      %1024 = vmatpush.msra.mxu0 0.0
      %1025 = vmatpush.msra.mxu0 0.0
      %1026 = vmatpush.msra.mxu0 0.0
      %v1027 = vand.u32 %v736, 4294901760
      %1028 = vmatpush.msra.mxu0 %v1027
      %v1029 = vand.u32 %v740, 4294901760
      %1030 = vmatmul.f32.gmra.mxu0 %v1029
      %v1031 = vpop.f32.mrf.mxu0
      %v1032 = vadd.f32 %v1010, %v1031
      %1033 = vdwg.mxu0
      %s1034 = scalar_lea.vmem %s2, 8
      %v1035 = vld [vmem:[%s1034] sm:$0xf]
      %1036 = vrot.lane.b32.xlu0 %v425, 127
      %v1037 = vpop.permute.xlu0 %1036
      %1038 = vrot.lane.b32.xlu0 %v426, 127
      %v1039 = vpop.permute.xlu0 %1038
      %vm1040 = vcmask 1039360
      %v1041 = vsel %vm1040, %v1037, %v1039
      %v1045 = vsel %vm429, %v1035, 0
      %1047 = vmatpush.msra.mxu0 0.0
      %1048 = vmatpush.msra.mxu0 0.0
      %1049 = vmatpush.msra.mxu0 0.0
      %1050 = vmatpush.msra.mxu0 0.0
      %1051 = vmatpush.msra.mxu0 0.0
      %1052 = vmatpush.msra.mxu0 0.0
      %1053 = vmatpush.msra.mxu0 0.0
      %1054 = vmatpush.msra.mxu0 0.0
      %1055 = vmatpush.msra.mxu0 0.0
      %1056 = vmatpush.msra.mxu0 0.0
      %1057 = vmatpush.msra.mxu0 0.0
      %1058 = vmatpush.msra.mxu0 0.0
      %1059 = vmatpush.msra.mxu0 0.0
      %1060 = vmatpush.msra.mxu0 0.0
      %1061 = vmatpush.msra.mxu0 0.0
      %v1062 = vand.u32 %v1041, 4294901760
      %1063 = vmatpush.msra.mxu0 %v1062
      %v1064 = vand.u32 %v1045, 4294901760
      %v1065 = vsub.f32 %v1045, %v1064
      %v1066 = vand.u32 %v1065, 4294901760
      %v1067 = vsub.f32 %v1065, %v1066
      %v1068 = vand.u32 %v1067, 4294901760
      %1069 = vmatmul.f32.gmra.mxu0 %v1068
      %v1070 = vpop.f32.mrf.mxu0
      %v1071 = vadd.f32 0.0, %v1070
      %1072 = vdwg.mxu0
      %1073 = vmatpush.msra.mxu0 0.0
      %1074 = vmatpush.msra.mxu0 0.0
      %1075 = vmatpush.msra.mxu0 0.0
      %1076 = vmatpush.msra.mxu0 0.0
      %1077 = vmatpush.msra.mxu0 0.0
      %1078 = vmatpush.msra.mxu0 0.0
      %1079 = vmatpush.msra.mxu0 0.0
      %1080 = vmatpush.msra.mxu0 0.0
      %1081 = vmatpush.msra.mxu0 0.0
      %1082 = vmatpush.msra.mxu0 0.0
      %1083 = vmatpush.msra.mxu0 0.0
      %1084 = vmatpush.msra.mxu0 0.0
      %1085 = vmatpush.msra.mxu0 0.0
      %1086 = vmatpush.msra.mxu0 0.0
      %1087 = vmatpush.msra.mxu0 0.0
      %v1088 = vand.u32 %v1041, 4294901760
      %v1089 = vsub.f32 %v1041, %v1088
      %v1090 = vand.u32 %v1089, 4294901760
      %v1091 = vsub.f32 %v1089, %v1090
      %v1092 = vand.u32 %v1091, 4294901760
      %1093 = vmatpush.msra.mxu0 %v1092
      %v1094 = vand.u32 %v1045, 4294901760
      %1095 = vmatmul.f32.gmra.mxu0 %v1094
      %v1096 = vpop.f32.mrf.mxu0
      %v1097 = vadd.f32 %v1071, %v1096
      %1098 = vdwg.mxu0
      %1099 = vmatpush.msra.mxu0 0.0
      %1100 = vmatpush.msra.mxu0 0.0
      %1101 = vmatpush.msra.mxu0 0.0
      %1102 = vmatpush.msra.mxu0 0.0
      %1103 = vmatpush.msra.mxu0 0.0
      %1104 = vmatpush.msra.mxu0 0.0
      %1105 = vmatpush.msra.mxu0 0.0
      %1106 = vmatpush.msra.mxu0 0.0
      %1107 = vmatpush.msra.mxu0 0.0
      %1108 = vmatpush.msra.mxu0 0.0
      %1109 = vmatpush.msra.mxu0 0.0
      %1110 = vmatpush.msra.mxu0 0.0
      %1111 = vmatpush.msra.mxu0 0.0
      %1112 = vmatpush.msra.mxu0 0.0
      %1113 = vmatpush.msra.mxu0 0.0
      %v1114 = vand.u32 %v1041, 4294901760
      %v1115 = vsub.f32 %v1041, %v1114
      %1116 = vmatpush.msra.mxu0 %v1115
      %v1117 = vand.u32 %v1045, 4294901760
      %v1118 = vsub.f32 %v1045, %v1117
      %1119 = vmatmul.f32.gmra.mxu0 %v1118
      %v1120 = vpop.f32.mrf.mxu0
      %v1121 = vadd.f32 %v1097, %v1120
      %1122 = vdwg.mxu0
      %1123 = vmatpush.msra.mxu0 0.0
      %1124 = vmatpush.msra.mxu0 0.0
      %1125 = vmatpush.msra.mxu0 0.0
      %1126 = vmatpush.msra.mxu0 0.0
      %1127 = vmatpush.msra.mxu0 0.0
      %1128 = vmatpush.msra.mxu0 0.0
      %1129 = vmatpush.msra.mxu0 0.0
      %1130 = vmatpush.msra.mxu0 0.0
      %1131 = vmatpush.msra.mxu0 0.0
      %1132 = vmatpush.msra.mxu0 0.0
      %1133 = vmatpush.msra.mxu0 0.0
      %1134 = vmatpush.msra.mxu0 0.0
      %1135 = vmatpush.msra.mxu0 0.0
      %1136 = vmatpush.msra.mxu0 0.0
      %1137 = vmatpush.msra.mxu0 0.0
      %v1138 = vand.u32 %v1041, 4294901760
      %1139 = vmatpush.msra.mxu0 %v1138
      %v1140 = vand.u32 %v1045, 4294901760
      %v1141 = vsub.f32 %v1045, %v1140
      %v1142 = vand.u32 %v1141, 4294901760
      %1143 = vmatmul.f32.gmra.mxu0 %v1142
      %v1144 = vpop.f32.mrf.mxu0
      %v1145 = vadd.f32 %v1121, %v1144
      %1146 = vdwg.mxu0
      %1147 = vmatpush.msra.mxu0 0.0
      %1148 = vmatpush.msra.mxu0 0.0
      %1149 = vmatpush.msra.mxu0 0.0
      %1150 = vmatpush.msra.mxu0 0.0
      %1151 = vmatpush.msra.mxu0 0.0
      %1152 = vmatpush.msra.mxu0 0.0
      %1153 = vmatpush.msra.mxu0 0.0
      %1154 = vmatpush.msra.mxu0 0.0
      %1155 = vmatpush.msra.mxu0 0.0
      %1156 = vmatpush.msra.mxu0 0.0
      %1157 = vmatpush.msra.mxu0 0.0
      %1158 = vmatpush.msra.mxu0 0.0
      %1159 = vmatpush.msra.mxu0 0.0
      %1160 = vmatpush.msra.mxu0 0.0
      %1161 = vmatpush.msra.mxu0 0.0
      %v1162 = vand.u32 %v1041, 4294901760
      %v1163 = vsub.f32 %v1041, %v1162
      %v1164 = vand.u32 %v1163, 4294901760
      %1165 = vmatpush.msra.mxu0 %v1164
      %v1166 = vand.u32 %v1045, 4294901760
      %1167 = vmatmul.f32.gmra.mxu0 %v1166
      %v1168 = vpop.f32.mrf.mxu0
      %v1169 = vadd.f32 %v1145, %v1168
      %1170 = vdwg.mxu0
      %1171 = vmatpush.msra.mxu0 0.0
      %1172 = vmatpush.msra.mxu0 0.0
      %1173 = vmatpush.msra.mxu0 0.0
      %1174 = vmatpush.msra.mxu0 0.0
      %1175 = vmatpush.msra.mxu0 0.0
      %1176 = vmatpush.msra.mxu0 0.0
      %1177 = vmatpush.msra.mxu0 0.0
      %1178 = vmatpush.msra.mxu0 0.0
      %1179 = vmatpush.msra.mxu0 0.0
      %1180 = vmatpush.msra.mxu0 0.0
      %1181 = vmatpush.msra.mxu0 0.0
      %1182 = vmatpush.msra.mxu0 0.0
      %1183 = vmatpush.msra.mxu0 0.0
      %1184 = vmatpush.msra.mxu0 0.0
      %1185 = vmatpush.msra.mxu0 0.0
      %v1186 = vand.u32 %v1041, 4294901760
      %1187 = vmatpush.msra.mxu0 %v1186
      %v1188 = vand.u32 %v1045, 4294901760
      %1189 = vmatmul.f32.gmra.mxu0 %v1188
      %v1190 = vpop.f32.mrf.mxu0
      %v1191 = vadd.f32 %v1169, %v1190
      %1192 = vdwg.mxu0
      %1193 = vmatpush.msra.mxu0 0.0
      %1194 = vmatpush.msra.mxu0 0.0
      %1195 = vmatpush.msra.mxu0 0.0
      %1196 = vmatpush.msra.mxu0 0.0
      %1197 = vmatpush.msra.mxu0 0.0
      %1198 = vmatpush.msra.mxu0 0.0
      %1199 = vmatpush.msra.mxu0 0.0
      %1200 = vmatpush.msra.mxu0 0.0
      %1201 = vmatpush.msra.mxu0 0.0
      %1202 = vmatpush.msra.mxu0 0.0
      %1203 = vmatpush.msra.mxu0 0.0
      %1204 = vmatpush.msra.mxu0 0.0
      %1205 = vmatpush.msra.mxu0 0.0
      %1206 = vmatpush.msra.mxu0 0.0
      %1207 = vmatpush.msra.mxu0 0.0
      %v1208 = vand.u32 %v1039, 4294901760
      %1209 = vmatpush.msra.mxu0 %v1208
      %v1210 = vand.u32 %v1045, 4294901760
      %v1211 = vsub.f32 %v1045, %v1210
      %v1212 = vand.u32 %v1211, 4294901760
      %v1213 = vsub.f32 %v1211, %v1212
      %v1214 = vand.u32 %v1213, 4294901760
      %1215 = vmatmul.f32.gmra.mxu0 %v1214
      %v1216 = vpop.f32.mrf.mxu0
      %v1217 = vadd.f32 0.0, %v1216
      %1218 = vdwg.mxu0
      %1219 = vmatpush.msra.mxu0 0.0
      %1220 = vmatpush.msra.mxu0 0.0
      %1221 = vmatpush.msra.mxu0 0.0
      %1222 = vmatpush.msra.mxu0 0.0
      %1223 = vmatpush.msra.mxu0 0.0
      %1224 = vmatpush.msra.mxu0 0.0
      %1225 = vmatpush.msra.mxu0 0.0
      %1226 = vmatpush.msra.mxu0 0.0
      %1227 = vmatpush.msra.mxu0 0.0
      %1228 = vmatpush.msra.mxu0 0.0
      %1229 = vmatpush.msra.mxu0 0.0
      %1230 = vmatpush.msra.mxu0 0.0
      %1231 = vmatpush.msra.mxu0 0.0
      %1232 = vmatpush.msra.mxu0 0.0
      %1233 = vmatpush.msra.mxu0 0.0
      %v1234 = vand.u32 %v1039, 4294901760
      %v1235 = vsub.f32 %v1039, %v1234
      %v1236 = vand.u32 %v1235, 4294901760
      %v1237 = vsub.f32 %v1235, %v1236
      %v1238 = vand.u32 %v1237, 4294901760
      %1239 = vmatpush.msra.mxu0 %v1238
      %v1240 = vand.u32 %v1045, 4294901760
      %1241 = vmatmul.f32.gmra.mxu0 %v1240
      %v1242 = vpop.f32.mrf.mxu0
      %v1243 = vadd.f32 %v1217, %v1242
      %1244 = vdwg.mxu0
      %1245 = vmatpush.msra.mxu0 0.0
      %1246 = vmatpush.msra.mxu0 0.0
      %1247 = vmatpush.msra.mxu0 0.0
      %1248 = vmatpush.msra.mxu0 0.0
      %1249 = vmatpush.msra.mxu0 0.0
      %1250 = vmatpush.msra.mxu0 0.0
      %1251 = vmatpush.msra.mxu0 0.0
      %1252 = vmatpush.msra.mxu0 0.0
      %1253 = vmatpush.msra.mxu0 0.0
      %1254 = vmatpush.msra.mxu0 0.0
      %1255 = vmatpush.msra.mxu0 0.0
      %1256 = vmatpush.msra.mxu0 0.0
      %1257 = vmatpush.msra.mxu0 0.0
      %1258 = vmatpush.msra.mxu0 0.0
      %1259 = vmatpush.msra.mxu0 0.0
      %v1260 = vand.u32 %v1039, 4294901760
      %v1261 = vsub.f32 %v1039, %v1260
      %1262 = vmatpush.msra.mxu0 %v1261
      %v1263 = vand.u32 %v1045, 4294901760
      %v1264 = vsub.f32 %v1045, %v1263
      %1265 = vmatmul.f32.gmra.mxu0 %v1264
      %v1266 = vpop.f32.mrf.mxu0
      %v1267 = vadd.f32 %v1243, %v1266
      %1268 = vdwg.mxu0
      %1269 = vmatpush.msra.mxu0 0.0
      %1270 = vmatpush.msra.mxu0 0.0
      %1271 = vmatpush.msra.mxu0 0.0
      %1272 = vmatpush.msra.mxu0 0.0
      %1273 = vmatpush.msra.mxu0 0.0
      %1274 = vmatpush.msra.mxu0 0.0
      %1275 = vmatpush.msra.mxu0 0.0
      %1276 = vmatpush.msra.mxu0 0.0
      %1277 = vmatpush.msra.mxu0 0.0
      %1278 = vmatpush.msra.mxu0 0.0
      %1279 = vmatpush.msra.mxu0 0.0
      %1280 = vmatpush.msra.mxu0 0.0
      %1281 = vmatpush.msra.mxu0 0.0
      %1282 = vmatpush.msra.mxu0 0.0
      %1283 = vmatpush.msra.mxu0 0.0
      %v1284 = vand.u32 %v1039, 4294901760
      %1285 = vmatpush.msra.mxu0 %v1284
      %v1286 = vand.u32 %v1045, 4294901760
      %v1287 = vsub.f32 %v1045, %v1286
      %v1288 = vand.u32 %v1287, 4294901760
      %1289 = vmatmul.f32.gmra.mxu0 %v1288
      %v1290 = vpop.f32.mrf.mxu0
      %v1291 = vadd.f32 %v1267, %v1290
      %1292 = vdwg.mxu0
      %1293 = vmatpush.msra.mxu0 0.0
      %1294 = vmatpush.msra.mxu0 0.0
      %1295 = vmatpush.msra.mxu0 0.0
      %1296 = vmatpush.msra.mxu0 0.0
      %1297 = vmatpush.msra.mxu0 0.0
      %1298 = vmatpush.msra.mxu0 0.0
      %1299 = vmatpush.msra.mxu0 0.0
      %1300 = vmatpush.msra.mxu0 0.0
      %1301 = vmatpush.msra.mxu0 0.0
      %1302 = vmatpush.msra.mxu0 0.0
      %1303 = vmatpush.msra.mxu0 0.0
      %1304 = vmatpush.msra.mxu0 0.0
      %1305 = vmatpush.msra.mxu0 0.0
      %1306 = vmatpush.msra.mxu0 0.0
      %1307 = vmatpush.msra.mxu0 0.0
      %v1308 = vand.u32 %v1039, 4294901760
      %v1309 = vsub.f32 %v1039, %v1308
      %v1310 = vand.u32 %v1309, 4294901760
      %1311 = vmatpush.msra.mxu0 %v1310
      %v1312 = vand.u32 %v1045, 4294901760
      %1313 = vmatmul.f32.gmra.mxu0 %v1312
      %v1314 = vpop.f32.mrf.mxu0
      %v1315 = vadd.f32 %v1291, %v1314
      %1316 = vdwg.mxu0
      %1317 = vmatpush.msra.mxu0 0.0
      %1318 = vmatpush.msra.mxu0 0.0
      %1319 = vmatpush.msra.mxu0 0.0
      %1320 = vmatpush.msra.mxu0 0.0
      %1321 = vmatpush.msra.mxu0 0.0
      %1322 = vmatpush.msra.mxu0 0.0
      %1323 = vmatpush.msra.mxu0 0.0
      %1324 = vmatpush.msra.mxu0 0.0
      %1325 = vmatpush.msra.mxu0 0.0
      %1326 = vmatpush.msra.mxu0 0.0
      %1327 = vmatpush.msra.mxu0 0.0
      %1328 = vmatpush.msra.mxu0 0.0
      %1329 = vmatpush.msra.mxu0 0.0
      %1330 = vmatpush.msra.mxu0 0.0
      %1331 = vmatpush.msra.mxu0 0.0
      %v1332 = vand.u32 %v1039, 4294901760
      %1333 = vmatpush.msra.mxu0 %v1332
      %v1334 = vand.u32 %v1045, 4294901760
      %1335 = vmatmul.f32.gmra.mxu0 %v1334
      %v1336 = vpop.f32.mrf.mxu0
      %v1337 = vadd.f32 %v1315, %v1336
      %1338 = vdwg.mxu0
      %v1339 = vadd.f32 %v886, %v1191
      %v1340 = vadd.f32 %v1032, %v1337
      %s1341 = scalar_lea.vmem %s2, 12
      %v1342 = vld [vmem:[%s1341] sm:$0xf]
      %1343 = vrot.lane.b32.xlu0 %v425, 111
      %v1344 = vpop.permute.xlu0 %1343
      %1345 = vrot.lane.b32.xlu0 %v426, 111
      %v1346 = vpop.permute.xlu0 %1345
      %vm1347 = vcmask 908288
      %v1348 = vsel %vm1347, %v1344, %v1346
      %v1352 = vsel %vm429, %v1342, 0
      %1354 = vmatpush.msra.mxu0 0.0
      %1355 = vmatpush.msra.mxu0 0.0
      %1356 = vmatpush.msra.mxu0 0.0
      %1357 = vmatpush.msra.mxu0 0.0
      %1358 = vmatpush.msra.mxu0 0.0
      %1359 = vmatpush.msra.mxu0 0.0
      %1360 = vmatpush.msra.mxu0 0.0
      %1361 = vmatpush.msra.mxu0 0.0
      %1362 = vmatpush.msra.mxu0 0.0
      %1363 = vmatpush.msra.mxu0 0.0
      %1364 = vmatpush.msra.mxu0 0.0
      %1365 = vmatpush.msra.mxu0 0.0
      %1366 = vmatpush.msra.mxu0 0.0
      %1367 = vmatpush.msra.mxu0 0.0
      %1368 = vmatpush.msra.mxu0 0.0
      %v1369 = vand.u32 %v1348, 4294901760
      %1370 = vmatpush.msra.mxu0 %v1369
      %v1371 = vand.u32 %v1352, 4294901760
      %v1372 = vsub.f32 %v1352, %v1371
      %v1373 = vand.u32 %v1372, 4294901760
      %v1374 = vsub.f32 %v1372, %v1373
      %v1375 = vand.u32 %v1374, 4294901760
      %1376 = vmatmul.f32.gmra.mxu0 %v1375
      %v1377 = vpop.f32.mrf.mxu0
      %v1378 = vadd.f32 0.0, %v1377
      %1379 = vdwg.mxu0
      %1380 = vmatpush.msra.mxu0 0.0
      %1381 = vmatpush.msra.mxu0 0.0
      %1382 = vmatpush.msra.mxu0 0.0
      %1383 = vmatpush.msra.mxu0 0.0
      %1384 = vmatpush.msra.mxu0 0.0
      %1385 = vmatpush.msra.mxu0 0.0
      %1386 = vmatpush.msra.mxu0 0.0
      %1387 = vmatpush.msra.mxu0 0.0
      %1388 = vmatpush.msra.mxu0 0.0
      %1389 = vmatpush.msra.mxu0 0.0
      %1390 = vmatpush.msra.mxu0 0.0
      %1391 = vmatpush.msra.mxu0 0.0
      %1392 = vmatpush.msra.mxu0 0.0
      %1393 = vmatpush.msra.mxu0 0.0
      %1394 = vmatpush.msra.mxu0 0.0
      %v1395 = vand.u32 %v1348, 4294901760
      %v1396 = vsub.f32 %v1348, %v1395
      %v1397 = vand.u32 %v1396, 4294901760
      %v1398 = vsub.f32 %v1396, %v1397
      %v1399 = vand.u32 %v1398, 4294901760
      %1400 = vmatpush.msra.mxu0 %v1399
      %v1401 = vand.u32 %v1352, 4294901760
      %1402 = vmatmul.f32.gmra.mxu0 %v1401
      %v1403 = vpop.f32.mrf.mxu0
      %v1404 = vadd.f32 %v1378, %v1403
      %1405 = vdwg.mxu0
      %1406 = vmatpush.msra.mxu0 0.0
      %1407 = vmatpush.msra.mxu0 0.0
      %1408 = vmatpush.msra.mxu0 0.0
      %1409 = vmatpush.msra.mxu0 0.0
      %1410 = vmatpush.msra.mxu0 0.0
      %1411 = vmatpush.msra.mxu0 0.0
      %1412 = vmatpush.msra.mxu0 0.0
      %1413 = vmatpush.msra.mxu0 0.0
      %1414 = vmatpush.msra.mxu0 0.0
      %1415 = vmatpush.msra.mxu0 0.0
      %1416 = vmatpush.msra.mxu0 0.0
      %1417 = vmatpush.msra.mxu0 0.0
      %1418 = vmatpush.msra.mxu0 0.0
      %1419 = vmatpush.msra.mxu0 0.0
      %1420 = vmatpush.msra.mxu0 0.0
      %v1421 = vand.u32 %v1348, 4294901760
      %v1422 = vsub.f32 %v1348, %v1421
      %1423 = vmatpush.msra.mxu0 %v1422
      %v1424 = vand.u32 %v1352, 4294901760
      %v1425 = vsub.f32 %v1352, %v1424
      %1426 = vmatmul.f32.gmra.mxu0 %v1425
      %v1427 = vpop.f32.mrf.mxu0
      %v1428 = vadd.f32 %v1404, %v1427
      %1429 = vdwg.mxu0
      %1430 = vmatpush.msra.mxu0 0.0
      %1431 = vmatpush.msra.mxu0 0.0
      %1432 = vmatpush.msra.mxu0 0.0
      %1433 = vmatpush.msra.mxu0 0.0
      %1434 = vmatpush.msra.mxu0 0.0
      %1435 = vmatpush.msra.mxu0 0.0
      %1436 = vmatpush.msra.mxu0 0.0
      %1437 = vmatpush.msra.mxu0 0.0
      %1438 = vmatpush.msra.mxu0 0.0
      %1439 = vmatpush.msra.mxu0 0.0
      %1440 = vmatpush.msra.mxu0 0.0
      %1441 = vmatpush.msra.mxu0 0.0
      %1442 = vmatpush.msra.mxu0 0.0
      %1443 = vmatpush.msra.mxu0 0.0
      %1444 = vmatpush.msra.mxu0 0.0
      %v1445 = vand.u32 %v1348, 4294901760
      %1446 = vmatpush.msra.mxu0 %v1445
      %v1447 = vand.u32 %v1352, 4294901760
      %v1448 = vsub.f32 %v1352, %v1447
      %v1449 = vand.u32 %v1448, 4294901760
      %1450 = vmatmul.f32.gmra.mxu0 %v1449
      %v1451 = vpop.f32.mrf.mxu0
      %v1452 = vadd.f32 %v1428, %v1451
      %1453 = vdwg.mxu0
      %1454 = vmatpush.msra.mxu0 0.0
      %1455 = vmatpush.msra.mxu0 0.0
      %1456 = vmatpush.msra.mxu0 0.0
      %1457 = vmatpush.msra.mxu0 0.0
      %1458 = vmatpush.msra.mxu0 0.0
      %1459 = vmatpush.msra.mxu0 0.0
      %1460 = vmatpush.msra.mxu0 0.0
      %1461 = vmatpush.msra.mxu0 0.0
      %1462 = vmatpush.msra.mxu0 0.0
      %1463 = vmatpush.msra.mxu0 0.0
      %1464 = vmatpush.msra.mxu0 0.0
      %1465 = vmatpush.msra.mxu0 0.0
      %1466 = vmatpush.msra.mxu0 0.0
      %1467 = vmatpush.msra.mxu0 0.0
      %1468 = vmatpush.msra.mxu0 0.0
      %v1469 = vand.u32 %v1348, 4294901760
      %v1470 = vsub.f32 %v1348, %v1469
      %v1471 = vand.u32 %v1470, 4294901760
      %1472 = vmatpush.msra.mxu0 %v1471
      %v1473 = vand.u32 %v1352, 4294901760
      %1474 = vmatmul.f32.gmra.mxu0 %v1473
      %v1475 = vpop.f32.mrf.mxu0
      %v1476 = vadd.f32 %v1452, %v1475
      %1477 = vdwg.mxu0
      %1478 = vmatpush.msra.mxu0 0.0
      %1479 = vmatpush.msra.mxu0 0.0
      %1480 = vmatpush.msra.mxu0 0.0
      %1481 = vmatpush.msra.mxu0 0.0
      %1482 = vmatpush.msra.mxu0 0.0
      %1483 = vmatpush.msra.mxu0 0.0
      %1484 = vmatpush.msra.mxu0 0.0
      %1485 = vmatpush.msra.mxu0 0.0
      %1486 = vmatpush.msra.mxu0 0.0
      %1487 = vmatpush.msra.mxu0 0.0
      %1488 = vmatpush.msra.mxu0 0.0
      %1489 = vmatpush.msra.mxu0 0.0
      %1490 = vmatpush.msra.mxu0 0.0
      %1491 = vmatpush.msra.mxu0 0.0
      %1492 = vmatpush.msra.mxu0 0.0
      %v1493 = vand.u32 %v1348, 4294901760
      %1494 = vmatpush.msra.mxu0 %v1493
      %v1495 = vand.u32 %v1352, 4294901760
      %1496 = vmatmul.f32.gmra.mxu0 %v1495
      %v1497 = vpop.f32.mrf.mxu0
      %v1498 = vadd.f32 %v1476, %v1497
      %1499 = vdwg.mxu0
      %1500 = vmatpush.msra.mxu0 0.0
      %1501 = vmatpush.msra.mxu0 0.0
      %1502 = vmatpush.msra.mxu0 0.0
      %1503 = vmatpush.msra.mxu0 0.0
      %1504 = vmatpush.msra.mxu0 0.0
      %1505 = vmatpush.msra.mxu0 0.0
      %1506 = vmatpush.msra.mxu0 0.0
      %1507 = vmatpush.msra.mxu0 0.0
      %1508 = vmatpush.msra.mxu0 0.0
      %1509 = vmatpush.msra.mxu0 0.0
      %1510 = vmatpush.msra.mxu0 0.0
      %1511 = vmatpush.msra.mxu0 0.0
      %1512 = vmatpush.msra.mxu0 0.0
      %1513 = vmatpush.msra.mxu0 0.0
      %1514 = vmatpush.msra.mxu0 0.0
      %v1515 = vand.u32 %v1346, 4294901760
      %1516 = vmatpush.msra.mxu0 %v1515
      %v1517 = vand.u32 %v1352, 4294901760
      %v1518 = vsub.f32 %v1352, %v1517
      %v1519 = vand.u32 %v1518, 4294901760
      %v1520 = vsub.f32 %v1518, %v1519
      %v1521 = vand.u32 %v1520, 4294901760
      %1522 = vmatmul.f32.gmra.mxu0 %v1521
      %v1523 = vpop.f32.mrf.mxu0
      %v1524 = vadd.f32 0.0, %v1523
      %1525 = vdwg.mxu0
      %1526 = vmatpush.msra.mxu0 0.0
      %1527 = vmatpush.msra.mxu0 0.0
      %1528 = vmatpush.msra.mxu0 0.0
      %1529 = vmatpush.msra.mxu0 0.0
      %1530 = vmatpush.msra.mxu0 0.0
      %1531 = vmatpush.msra.mxu0 0.0
      %1532 = vmatpush.msra.mxu0 0.0
      %1533 = vmatpush.msra.mxu0 0.0
      %1534 = vmatpush.msra.mxu0 0.0
      %1535 = vmatpush.msra.mxu0 0.0
      %1536 = vmatpush.msra.mxu0 0.0
      %1537 = vmatpush.msra.mxu0 0.0
      %1538 = vmatpush.msra.mxu0 0.0
      %1539 = vmatpush.msra.mxu0 0.0
      %1540 = vmatpush.msra.mxu0 0.0
      %v1541 = vand.u32 %v1346, 4294901760
      %v1542 = vsub.f32 %v1346, %v1541
      %v1543 = vand.u32 %v1542, 4294901760
      %v1544 = vsub.f32 %v1542, %v1543
      %v1545 = vand.u32 %v1544, 4294901760
      %1546 = vmatpush.msra.mxu0 %v1545
      %v1547 = vand.u32 %v1352, 4294901760
      %1548 = vmatmul.f32.gmra.mxu0 %v1547
      %v1549 = vpop.f32.mrf.mxu0
      %v1550 = vadd.f32 %v1524, %v1549
      %1551 = vdwg.mxu0
      %1552 = vmatpush.msra.mxu0 0.0
      %1553 = vmatpush.msra.mxu0 0.0
      %1554 = vmatpush.msra.mxu0 0.0
      %1555 = vmatpush.msra.mxu0 0.0
      %1556 = vmatpush.msra.mxu0 0.0
      %1557 = vmatpush.msra.mxu0 0.0
      %1558 = vmatpush.msra.mxu0 0.0
      %1559 = vmatpush.msra.mxu0 0.0
      %1560 = vmatpush.msra.mxu0 0.0
      %1561 = vmatpush.msra.mxu0 0.0
      %1562 = vmatpush.msra.mxu0 0.0
      %1563 = vmatpush.msra.mxu0 0.0
      %1564 = vmatpush.msra.mxu0 0.0
      %1565 = vmatpush.msra.mxu0 0.0
      %1566 = vmatpush.msra.mxu0 0.0
      %v1567 = vand.u32 %v1346, 4294901760
      %v1568 = vsub.f32 %v1346, %v1567
      %1569 = vmatpush.msra.mxu0 %v1568
      %v1570 = vand.u32 %v1352, 4294901760
      %v1571 = vsub.f32 %v1352, %v1570
      %1572 = vmatmul.f32.gmra.mxu0 %v1571
      %v1573 = vpop.f32.mrf.mxu0
      %v1574 = vadd.f32 %v1550, %v1573
      %1575 = vdwg.mxu0
      %1576 = vmatpush.msra.mxu0 0.0
      %1577 = vmatpush.msra.mxu0 0.0
      %1578 = vmatpush.msra.mxu0 0.0
      %1579 = vmatpush.msra.mxu0 0.0
      %1580 = vmatpush.msra.mxu0 0.0
      %1581 = vmatpush.msra.mxu0 0.0
      %1582 = vmatpush.msra.mxu0 0.0
      %1583 = vmatpush.msra.mxu0 0.0
      %1584 = vmatpush.msra.mxu0 0.0
      %1585 = vmatpush.msra.mxu0 0.0
      %1586 = vmatpush.msra.mxu0 0.0
      %1587 = vmatpush.msra.mxu0 0.0
      %1588 = vmatpush.msra.mxu0 0.0
      %1589 = vmatpush.msra.mxu0 0.0
      %1590 = vmatpush.msra.mxu0 0.0
      %v1591 = vand.u32 %v1346, 4294901760
      %1592 = vmatpush.msra.mxu0 %v1591
      %v1593 = vand.u32 %v1352, 4294901760
      %v1594 = vsub.f32 %v1352, %v1593
      %v1595 = vand.u32 %v1594, 4294901760
      %1596 = vmatmul.f32.gmra.mxu0 %v1595
      %v1597 = vpop.f32.mrf.mxu0
      %v1598 = vadd.f32 %v1574, %v1597
      %1599 = vdwg.mxu0
      %1600 = vmatpush.msra.mxu0 0.0
      %1601 = vmatpush.msra.mxu0 0.0
      %1602 = vmatpush.msra.mxu0 0.0
      %1603 = vmatpush.msra.mxu0 0.0
      %1604 = vmatpush.msra.mxu0 0.0
      %1605 = vmatpush.msra.mxu0 0.0
      %1606 = vmatpush.msra.mxu0 0.0
      %1607 = vmatpush.msra.mxu0 0.0
      %1608 = vmatpush.msra.mxu0 0.0
      %1609 = vmatpush.msra.mxu0 0.0
      %1610 = vmatpush.msra.mxu0 0.0
      %1611 = vmatpush.msra.mxu0 0.0
      %1612 = vmatpush.msra.mxu0 0.0
      %1613 = vmatpush.msra.mxu0 0.0
      %1614 = vmatpush.msra.mxu0 0.0
      %v1615 = vand.u32 %v1346, 4294901760
      %v1616 = vsub.f32 %v1346, %v1615
      %v1617 = vand.u32 %v1616, 4294901760
      %1618 = vmatpush.msra.mxu0 %v1617
      %v1619 = vand.u32 %v1352, 4294901760
      %1620 = vmatmul.f32.gmra.mxu0 %v1619
      %v1621 = vpop.f32.mrf.mxu0
      %v1622 = vadd.f32 %v1598, %v1621
      %1623 = vdwg.mxu0
      %1624 = vmatpush.msra.mxu0 0.0
      %1625 = vmatpush.msra.mxu0 0.0
      %1626 = vmatpush.msra.mxu0 0.0
      %1627 = vmatpush.msra.mxu0 0.0
      %1628 = vmatpush.msra.mxu0 0.0
      %1629 = vmatpush.msra.mxu0 0.0
      %1630 = vmatpush.msra.mxu0 0.0
      %1631 = vmatpush.msra.mxu0 0.0
      %1632 = vmatpush.msra.mxu0 0.0
      %1633 = vmatpush.msra.mxu0 0.0
      %1634 = vmatpush.msra.mxu0 0.0
      %1635 = vmatpush.msra.mxu0 0.0
      %1636 = vmatpush.msra.mxu0 0.0
      %1637 = vmatpush.msra.mxu0 0.0
      %1638 = vmatpush.msra.mxu0 0.0
      %v1639 = vand.u32 %v1346, 4294901760
      %1640 = vmatpush.msra.mxu0 %v1639
      %v1641 = vand.u32 %v1352, 4294901760
      %1642 = vmatmul.f32.gmra.mxu0 %v1641
      %v1643 = vpop.f32.mrf.mxu0
      %v1644 = vadd.f32 %v1622, %v1643
      %1645 = vdwg.mxu0
      %v1646 = vadd.f32 %v1339, %v1498
      %v1647 = vadd.f32 %v1340, %v1644
      %s1648 = scalar_lea.vmem %s2, 16
      %v1649 = vld [vmem:[%s1648] sm:$0xf]
      %1650 = vrot.lane.b32.xlu0 %v425, 110
      %v1651 = vpop.permute.xlu0 %1650
      %1652 = vrot.lane.b32.xlu0 %v426, 110
      %v1653 = vpop.permute.xlu0 %1652
      %vm1654 = vcmask 900096
      %v1655 = vsel %vm1654, %v1651, %v1653
      %v1659 = vsel %vm429, %v1649, 0
      %1661 = vmatpush.msra.mxu0 0.0
      %1662 = vmatpush.msra.mxu0 0.0
      %1663 = vmatpush.msra.mxu0 0.0
      %1664 = vmatpush.msra.mxu0 0.0
      %1665 = vmatpush.msra.mxu0 0.0
      %1666 = vmatpush.msra.mxu0 0.0
      %1667 = vmatpush.msra.mxu0 0.0
      %1668 = vmatpush.msra.mxu0 0.0
      %1669 = vmatpush.msra.mxu0 0.0
      %1670 = vmatpush.msra.mxu0 0.0
      %1671 = vmatpush.msra.mxu0 0.0
      %1672 = vmatpush.msra.mxu0 0.0
      %1673 = vmatpush.msra.mxu0 0.0
      %1674 = vmatpush.msra.mxu0 0.0
      %1675 = vmatpush.msra.mxu0 0.0
      %v1676 = vand.u32 %v1655, 4294901760
      %1677 = vmatpush.msra.mxu0 %v1676
      %v1678 = vand.u32 %v1659, 4294901760
      %v1679 = vsub.f32 %v1659, %v1678
      %v1680 = vand.u32 %v1679, 4294901760
      %v1681 = vsub.f32 %v1679, %v1680
      %v1682 = vand.u32 %v1681, 4294901760
      %1683 = vmatmul.f32.gmra.mxu0 %v1682
      %v1684 = vpop.f32.mrf.mxu0
      %v1685 = vadd.f32 0.0, %v1684
      %1686 = vdwg.mxu0
      %1687 = vmatpush.msra.mxu0 0.0
      %1688 = vmatpush.msra.mxu0 0.0
      %1689 = vmatpush.msra.mxu0 0.0
      %1690 = vmatpush.msra.mxu0 0.0
      %1691 = vmatpush.msra.mxu0 0.0
      %1692 = vmatpush.msra.mxu0 0.0
      %1693 = vmatpush.msra.mxu0 0.0
      %1694 = vmatpush.msra.mxu0 0.0
      %1695 = vmatpush.msra.mxu0 0.0
      %1696 = vmatpush.msra.mxu0 0.0
      %1697 = vmatpush.msra.mxu0 0.0
      %1698 = vmatpush.msra.mxu0 0.0
      %1699 = vmatpush.msra.mxu0 0.0
      %1700 = vmatpush.msra.mxu0 0.0
      %1701 = vmatpush.msra.mxu0 0.0
      %v1702 = vand.u32 %v1655, 4294901760
      %v1703 = vsub.f32 %v1655, %v1702
      %v1704 = vand.u32 %v1703, 4294901760
      %v1705 = vsub.f32 %v1703, %v1704
      %v1706 = vand.u32 %v1705, 4294901760
      %1707 = vmatpush.msra.mxu0 %v1706
      %v1708 = vand.u32 %v1659, 4294901760
      %1709 = vmatmul.f32.gmra.mxu0 %v1708
      %v1710 = vpop.f32.mrf.mxu0
      %v1711 = vadd.f32 %v1685, %v1710
      %1712 = vdwg.mxu0
      %1713 = vmatpush.msra.mxu0 0.0
      %1714 = vmatpush.msra.mxu0 0.0
      %1715 = vmatpush.msra.mxu0 0.0
      %1716 = vmatpush.msra.mxu0 0.0
      %1717 = vmatpush.msra.mxu0 0.0
      %1718 = vmatpush.msra.mxu0 0.0
      %1719 = vmatpush.msra.mxu0 0.0
      %1720 = vmatpush.msra.mxu0 0.0
      %1721 = vmatpush.msra.mxu0 0.0
      %1722 = vmatpush.msra.mxu0 0.0
      %1723 = vmatpush.msra.mxu0 0.0
      %1724 = vmatpush.msra.mxu0 0.0
      %1725 = vmatpush.msra.mxu0 0.0
      %1726 = vmatpush.msra.mxu0 0.0
      %1727 = vmatpush.msra.mxu0 0.0
      %v1728 = vand.u32 %v1655, 4294901760
      %v1729 = vsub.f32 %v1655, %v1728
      %1730 = vmatpush.msra.mxu0 %v1729
      %v1731 = vand.u32 %v1659, 4294901760
      %v1732 = vsub.f32 %v1659, %v1731
      %1733 = vmatmul.f32.gmra.mxu0 %v1732
      %v1734 = vpop.f32.mrf.mxu0
      %v1735 = vadd.f32 %v1711, %v1734
      %1736 = vdwg.mxu0
      %1737 = vmatpush.msra.mxu0 0.0
      %1738 = vmatpush.msra.mxu0 0.0
      %1739 = vmatpush.msra.mxu0 0.0
      %1740 = vmatpush.msra.mxu0 0.0
      %1741 = vmatpush.msra.mxu0 0.0
      %1742 = vmatpush.msra.mxu0 0.0
      %1743 = vmatpush.msra.mxu0 0.0
      %1744 = vmatpush.msra.mxu0 0.0
      %1745 = vmatpush.msra.mxu0 0.0
      %1746 = vmatpush.msra.mxu0 0.0
      %1747 = vmatpush.msra.mxu0 0.0
      %1748 = vmatpush.msra.mxu0 0.0
      %1749 = vmatpush.msra.mxu0 0.0
      %1750 = vmatpush.msra.mxu0 0.0
      %1751 = vmatpush.msra.mxu0 0.0
      %v1752 = vand.u32 %v1655, 4294901760
      %1753 = vmatpush.msra.mxu0 %v1752
      %v1754 = vand.u32 %v1659, 4294901760
      %v1755 = vsub.f32 %v1659, %v1754
      %v1756 = vand.u32 %v1755, 4294901760
      %1757 = vmatmul.f32.gmra.mxu0 %v1756
      %v1758 = vpop.f32.mrf.mxu0
      %v1759 = vadd.f32 %v1735, %v1758
      %1760 = vdwg.mxu0
      %1761 = vmatpush.msra.mxu0 0.0
      %1762 = vmatpush.msra.mxu0 0.0
      %1763 = vmatpush.msra.mxu0 0.0
      %1764 = vmatpush.msra.mxu0 0.0
      %1765 = vmatpush.msra.mxu0 0.0
      %1766 = vmatpush.msra.mxu0 0.0
      %1767 = vmatpush.msra.mxu0 0.0
      %1768 = vmatpush.msra.mxu0 0.0
      %1769 = vmatpush.msra.mxu0 0.0
      %1770 = vmatpush.msra.mxu0 0.0
      %1771 = vmatpush.msra.mxu0 0.0
      %1772 = vmatpush.msra.mxu0 0.0
      %1773 = vmatpush.msra.mxu0 0.0
      %1774 = vmatpush.msra.mxu0 0.0
      %1775 = vmatpush.msra.mxu0 0.0
      %v1776 = vand.u32 %v1655, 4294901760
      %v1777 = vsub.f32 %v1655, %v1776
      %v1778 = vand.u32 %v1777, 4294901760
      %1779 = vmatpush.msra.mxu0 %v1778
      %v1780 = vand.u32 %v1659, 4294901760
      %1781 = vmatmul.f32.gmra.mxu0 %v1780
      %v1782 = vpop.f32.mrf.mxu0
      %v1783 = vadd.f32 %v1759, %v1782
      %1784 = vdwg.mxu0
      %1785 = vmatpush.msra.mxu0 0.0
      %1786 = vmatpush.msra.mxu0 0.0
      %1787 = vmatpush.msra.mxu0 0.0
      %1788 = vmatpush.msra.mxu0 0.0
      %1789 = vmatpush.msra.mxu0 0.0
      %1790 = vmatpush.msra.mxu0 0.0
      %1791 = vmatpush.msra.mxu0 0.0
      %1792 = vmatpush.msra.mxu0 0.0
      %1793 = vmatpush.msra.mxu0 0.0
      %1794 = vmatpush.msra.mxu0 0.0
      %1795 = vmatpush.msra.mxu0 0.0
      %1796 = vmatpush.msra.mxu0 0.0
      %1797 = vmatpush.msra.mxu0 0.0
      %1798 = vmatpush.msra.mxu0 0.0
      %1799 = vmatpush.msra.mxu0 0.0
      %v1800 = vand.u32 %v1655, 4294901760
      %1801 = vmatpush.msra.mxu0 %v1800
      %v1802 = vand.u32 %v1659, 4294901760
      %1803 = vmatmul.f32.gmra.mxu0 %v1802
      %v1804 = vpop.f32.mrf.mxu0
      %v1805 = vadd.f32 %v1783, %v1804
      %1806 = vdwg.mxu0
      %1807 = vmatpush.msra.mxu0 0.0
      %1808 = vmatpush.msra.mxu0 0.0
      %1809 = vmatpush.msra.mxu0 0.0
      %1810 = vmatpush.msra.mxu0 0.0
      %1811 = vmatpush.msra.mxu0 0.0
      %1812 = vmatpush.msra.mxu0 0.0
      %1813 = vmatpush.msra.mxu0 0.0
      %1814 = vmatpush.msra.mxu0 0.0
      %1815 = vmatpush.msra.mxu0 0.0
      %1816 = vmatpush.msra.mxu0 0.0
      %1817 = vmatpush.msra.mxu0 0.0
      %1818 = vmatpush.msra.mxu0 0.0
      %1819 = vmatpush.msra.mxu0 0.0
      %1820 = vmatpush.msra.mxu0 0.0
      %1821 = vmatpush.msra.mxu0 0.0
      %v1822 = vand.u32 %v1653, 4294901760
      %1823 = vmatpush.msra.mxu0 %v1822
      %v1824 = vand.u32 %v1659, 4294901760
      %v1825 = vsub.f32 %v1659, %v1824
      %v1826 = vand.u32 %v1825, 4294901760
      %v1827 = vsub.f32 %v1825, %v1826
      %v1828 = vand.u32 %v1827, 4294901760
      %1829 = vmatmul.f32.gmra.mxu0 %v1828
      %v1830 = vpop.f32.mrf.mxu0
      %v1831 = vadd.f32 0.0, %v1830
      %1832 = vdwg.mxu0
      %1833 = vmatpush.msra.mxu0 0.0
      %1834 = vmatpush.msra.mxu0 0.0
      %1835 = vmatpush.msra.mxu0 0.0
      %1836 = vmatpush.msra.mxu0 0.0
      %1837 = vmatpush.msra.mxu0 0.0
      %1838 = vmatpush.msra.mxu0 0.0
      %1839 = vmatpush.msra.mxu0 0.0
      %1840 = vmatpush.msra.mxu0 0.0
      %1841 = vmatpush.msra.mxu0 0.0
      %1842 = vmatpush.msra.mxu0 0.0
      %1843 = vmatpush.msra.mxu0 0.0
      %1844 = vmatpush.msra.mxu0 0.0
      %1845 = vmatpush.msra.mxu0 0.0
      %1846 = vmatpush.msra.mxu0 0.0
      %1847 = vmatpush.msra.mxu0 0.0
      %v1848 = vand.u32 %v1653, 4294901760
      %v1849 = vsub.f32 %v1653, %v1848
      %v1850 = vand.u32 %v1849, 4294901760
      %v1851 = vsub.f32 %v1849, %v1850
      %v1852 = vand.u32 %v1851, 4294901760
      %1853 = vmatpush.msra.mxu0 %v1852
      %v1854 = vand.u32 %v1659, 4294901760
      %1855 = vmatmul.f32.gmra.mxu0 %v1854
      %v1856 = vpop.f32.mrf.mxu0
      %v1857 = vadd.f32 %v1831, %v1856
      %1858 = vdwg.mxu0
      %1859 = vmatpush.msra.mxu0 0.0
      %1860 = vmatpush.msra.mxu0 0.0
      %1861 = vmatpush.msra.mxu0 0.0
      %1862 = vmatpush.msra.mxu0 0.0
      %1863 = vmatpush.msra.mxu0 0.0
      %1864 = vmatpush.msra.mxu0 0.0
      %1865 = vmatpush.msra.mxu0 0.0
      %1866 = vmatpush.msra.mxu0 0.0
      %1867 = vmatpush.msra.mxu0 0.0
      %1868 = vmatpush.msra.mxu0 0.0
      %1869 = vmatpush.msra.mxu0 0.0
      %1870 = vmatpush.msra.mxu0 0.0
      %1871 = vmatpush.msra.mxu0 0.0
      %1872 = vmatpush.msra.mxu0 0.0
      %1873 = vmatpush.msra.mxu0 0.0
      %v1874 = vand.u32 %v1653, 4294901760
      %v1875 = vsub.f32 %v1653, %v1874
      %1876 = vmatpush.msra.mxu0 %v1875
      %v1877 = vand.u32 %v1659, 4294901760
      %v1878 = vsub.f32 %v1659, %v1877
      %1879 = vmatmul.f32.gmra.mxu0 %v1878
      %v1880 = vpop.f32.mrf.mxu0
      %v1881 = vadd.f32 %v1857, %v1880
      %1882 = vdwg.mxu0
      %1883 = vmatpush.msra.mxu0 0.0
      %1884 = vmatpush.msra.mxu0 0.0
      %1885 = vmatpush.msra.mxu0 0.0
      %1886 = vmatpush.msra.mxu0 0.0
      %1887 = vmatpush.msra.mxu0 0.0
      %1888 = vmatpush.msra.mxu0 0.0
      %1889 = vmatpush.msra.mxu0 0.0
      %1890 = vmatpush.msra.mxu0 0.0
      %1891 = vmatpush.msra.mxu0 0.0
      %1892 = vmatpush.msra.mxu0 0.0
      %1893 = vmatpush.msra.mxu0 0.0
      %1894 = vmatpush.msra.mxu0 0.0
      %1895 = vmatpush.msra.mxu0 0.0
      %1896 = vmatpush.msra.mxu0 0.0
      %1897 = vmatpush.msra.mxu0 0.0
      %v1898 = vand.u32 %v1653, 4294901760
      %1899 = vmatpush.msra.mxu0 %v1898
      %v1900 = vand.u32 %v1659, 4294901760
      %v1901 = vsub.f32 %v1659, %v1900
      %v1902 = vand.u32 %v1901, 4294901760
      %1903 = vmatmul.f32.gmra.mxu0 %v1902
      %v1904 = vpop.f32.mrf.mxu0
      %v1905 = vadd.f32 %v1881, %v1904
      %1906 = vdwg.mxu0
      %1907 = vmatpush.msra.mxu0 0.0
      %1908 = vmatpush.msra.mxu0 0.0
      %1909 = vmatpush.msra.mxu0 0.0
      %1910 = vmatpush.msra.mxu0 0.0
      %1911 = vmatpush.msra.mxu0 0.0
      %1912 = vmatpush.msra.mxu0 0.0
      %1913 = vmatpush.msra.mxu0 0.0
      %1914 = vmatpush.msra.mxu0 0.0
      %1915 = vmatpush.msra.mxu0 0.0
      %1916 = vmatpush.msra.mxu0 0.0
      %1917 = vmatpush.msra.mxu0 0.0
      %1918 = vmatpush.msra.mxu0 0.0
      %1919 = vmatpush.msra.mxu0 0.0
      %1920 = vmatpush.msra.mxu0 0.0
      %1921 = vmatpush.msra.mxu0 0.0
      %v1922 = vand.u32 %v1653, 4294901760
      %v1923 = vsub.f32 %v1653, %v1922
      %v1924 = vand.u32 %v1923, 4294901760
      %1925 = vmatpush.msra.mxu0 %v1924
      %v1926 = vand.u32 %v1659, 4294901760
      %1927 = vmatmul.f32.gmra.mxu0 %v1926
      %v1928 = vpop.f32.mrf.mxu0
      %v1929 = vadd.f32 %v1905, %v1928
      %1930 = vdwg.mxu0
      %1931 = vmatpush.msra.mxu0 0.0
      %1932 = vmatpush.msra.mxu0 0.0
      %1933 = vmatpush.msra.mxu0 0.0
      %1934 = vmatpush.msra.mxu0 0.0
      %1935 = vmatpush.msra.mxu0 0.0
      %1936 = vmatpush.msra.mxu0 0.0
      %1937 = vmatpush.msra.mxu0 0.0
      %1938 = vmatpush.msra.mxu0 0.0
      %1939 = vmatpush.msra.mxu0 0.0
      %1940 = vmatpush.msra.mxu0 0.0
      %1941 = vmatpush.msra.mxu0 0.0
      %1942 = vmatpush.msra.mxu0 0.0
      %1943 = vmatpush.msra.mxu0 0.0
      %1944 = vmatpush.msra.mxu0 0.0
      %1945 = vmatpush.msra.mxu0 0.0
      %v1946 = vand.u32 %v1653, 4294901760
      %1947 = vmatpush.msra.mxu0 %v1946
      %v1948 = vand.u32 %v1659, 4294901760
      %1949 = vmatmul.f32.gmra.mxu0 %v1948
      %v1950 = vpop.f32.mrf.mxu0
      %v1951 = vadd.f32 %v1929, %v1950
      %1952 = vdwg.mxu0
      %v1953 = vadd.f32 %v1646, %v1805
      %v1954 = vadd.f32 %v1647, %v1951
      %s1955 = scalar_lea.vmem %s2, 20
      %v1956 = vld [vmem:[%s1955] sm:$0xf]
      %1957 = vrot.lane.b32.xlu0 %v425, 109
      %v1958 = vpop.permute.xlu0 %1957
      %1959 = vrot.lane.b32.xlu0 %v426, 109
      %v1960 = vpop.permute.xlu0 %1959
      %vm1961 = vcmask 891904
      %v1962 = vsel %vm1961, %v1958, %v1960
      %v1966 = vsel %vm429, %v1956, 0
      %1968 = vmatpush.msra.mxu0 0.0
      %1969 = vmatpush.msra.mxu0 0.0
      %1970 = vmatpush.msra.mxu0 0.0
      %1971 = vmatpush.msra.mxu0 0.0
      %1972 = vmatpush.msra.mxu0 0.0
      %1973 = vmatpush.msra.mxu0 0.0
      %1974 = vmatpush.msra.mxu0 0.0
      %1975 = vmatpush.msra.mxu0 0.0
      %1976 = vmatpush.msra.mxu0 0.0
      %1977 = vmatpush.msra.mxu0 0.0
      %1978 = vmatpush.msra.mxu0 0.0
      %1979 = vmatpush.msra.mxu0 0.0
      %1980 = vmatpush.msra.mxu0 0.0
      %1981 = vmatpush.msra.mxu0 0.0
      %1982 = vmatpush.msra.mxu0 0.0
      %v1983 = vand.u32 %v1962, 4294901760
      %1984 = vmatpush.msra.mxu0 %v1983
      %v1985 = vand.u32 %v1966, 4294901760
      %v1986 = vsub.f32 %v1966, %v1985
      %v1987 = vand.u32 %v1986, 4294901760
      %v1988 = vsub.f32 %v1986, %v1987
      %v1989 = vand.u32 %v1988, 4294901760
      %1990 = vmatmul.f32.gmra.mxu0 %v1989
      %v1991 = vpop.f32.mrf.mxu0
      %v1992 = vadd.f32 0.0, %v1991
      %1993 = vdwg.mxu0
      %1994 = vmatpush.msra.mxu0 0.0
      %1995 = vmatpush.msra.mxu0 0.0
      %1996 = vmatpush.msra.mxu0 0.0
      %1997 = vmatpush.msra.mxu0 0.0
      %1998 = vmatpush.msra.mxu0 0.0
      %1999 = vmatpush.msra.mxu0 0.0
      %2000 = vmatpush.msra.mxu0 0.0
      %2001 = vmatpush.msra.mxu0 0.0
      %2002 = vmatpush.msra.mxu0 0.0
      %2003 = vmatpush.msra.mxu0 0.0
      %2004 = vmatpush.msra.mxu0 0.0
      %2005 = vmatpush.msra.mxu0 0.0
      %2006 = vmatpush.msra.mxu0 0.0
      %2007 = vmatpush.msra.mxu0 0.0
      %2008 = vmatpush.msra.mxu0 0.0
      %v2009 = vand.u32 %v1962, 4294901760
      %v2010 = vsub.f32 %v1962, %v2009
      %v2011 = vand.u32 %v2010, 4294901760
      %v2012 = vsub.f32 %v2010, %v2011
      %v2013 = vand.u32 %v2012, 4294901760
      %2014 = vmatpush.msra.mxu0 %v2013
      %v2015 = vand.u32 %v1966, 4294901760
      %2016 = vmatmul.f32.gmra.mxu0 %v2015
      %v2017 = vpop.f32.mrf.mxu0
      %v2018 = vadd.f32 %v1992, %v2017
      %2019 = vdwg.mxu0
      %2020 = vmatpush.msra.mxu0 0.0
      %2021 = vmatpush.msra.mxu0 0.0
      %2022 = vmatpush.msra.mxu0 0.0
      %2023 = vmatpush.msra.mxu0 0.0
      %2024 = vmatpush.msra.mxu0 0.0
      %2025 = vmatpush.msra.mxu0 0.0
      %2026 = vmatpush.msra.mxu0 0.0
      %2027 = vmatpush.msra.mxu0 0.0
      %2028 = vmatpush.msra.mxu0 0.0
      %2029 = vmatpush.msra.mxu0 0.0
      %2030 = vmatpush.msra.mxu0 0.0
      %2031 = vmatpush.msra.mxu0 0.0
      %2032 = vmatpush.msra.mxu0 0.0
      %2033 = vmatpush.msra.mxu0 0.0
      %2034 = vmatpush.msra.mxu0 0.0
      %v2035 = vand.u32 %v1962, 4294901760
      %v2036 = vsub.f32 %v1962, %v2035
      %2037 = vmatpush.msra.mxu0 %v2036
      %v2038 = vand.u32 %v1966, 4294901760
      %v2039 = vsub.f32 %v1966, %v2038
      %2040 = vmatmul.f32.gmra.mxu0 %v2039
      %v2041 = vpop.f32.mrf.mxu0
      %v2042 = vadd.f32 %v2018, %v2041
      %2043 = vdwg.mxu0
      %2044 = vmatpush.msra.mxu0 0.0
      %2045 = vmatpush.msra.mxu0 0.0
      %2046 = vmatpush.msra.mxu0 0.0
      %2047 = vmatpush.msra.mxu0 0.0
      %2048 = vmatpush.msra.mxu0 0.0
      %2049 = vmatpush.msra.mxu0 0.0
      %2050 = vmatpush.msra.mxu0 0.0
      %2051 = vmatpush.msra.mxu0 0.0
      %2052 = vmatpush.msra.mxu0 0.0
      %2053 = vmatpush.msra.mxu0 0.0
      %2054 = vmatpush.msra.mxu0 0.0
      %2055 = vmatpush.msra.mxu0 0.0
      %2056 = vmatpush.msra.mxu0 0.0
      %2057 = vmatpush.msra.mxu0 0.0
      %2058 = vmatpush.msra.mxu0 0.0
      %v2059 = vand.u32 %v1962, 4294901760
      %2060 = vmatpush.msra.mxu0 %v2059
      %v2061 = vand.u32 %v1966, 4294901760
      %v2062 = vsub.f32 %v1966, %v2061
      %v2063 = vand.u32 %v2062, 4294901760
      %2064 = vmatmul.f32.gmra.mxu0 %v2063
      %v2065 = vpop.f32.mrf.mxu0
      %v2066 = vadd.f32 %v2042, %v2065
      %2067 = vdwg.mxu0
      %2068 = vmatpush.msra.mxu0 0.0
      %2069 = vmatpush.msra.mxu0 0.0
      %2070 = vmatpush.msra.mxu0 0.0
      %2071 = vmatpush.msra.mxu0 0.0
      %2072 = vmatpush.msra.mxu0 0.0
      %2073 = vmatpush.msra.mxu0 0.0
      %2074 = vmatpush.msra.mxu0 0.0
      %2075 = vmatpush.msra.mxu0 0.0
      %2076 = vmatpush.msra.mxu0 0.0
      %2077 = vmatpush.msra.mxu0 0.0
      %2078 = vmatpush.msra.mxu0 0.0
      %2079 = vmatpush.msra.mxu0 0.0
      %2080 = vmatpush.msra.mxu0 0.0
      %2081 = vmatpush.msra.mxu0 0.0
      %2082 = vmatpush.msra.mxu0 0.0
      %v2083 = vand.u32 %v1962, 4294901760
      %v2084 = vsub.f32 %v1962, %v2083
      %v2085 = vand.u32 %v2084, 4294901760
      %2086 = vmatpush.msra.mxu0 %v2085
      %v2087 = vand.u32 %v1966, 4294901760
      %2088 = vmatmul.f32.gmra.mxu0 %v2087
      %v2089 = vpop.f32.mrf.mxu0
      %v2090 = vadd.f32 %v2066, %v2089
      %2091 = vdwg.mxu0
      %2092 = vmatpush.msra.mxu0 0.0
      %2093 = vmatpush.msra.mxu0 0.0
      %2094 = vmatpush.msra.mxu0 0.0
      %2095 = vmatpush.msra.mxu0 0.0
      %2096 = vmatpush.msra.mxu0 0.0
      %2097 = vmatpush.msra.mxu0 0.0
      %2098 = vmatpush.msra.mxu0 0.0
      %2099 = vmatpush.msra.mxu0 0.0
      %2100 = vmatpush.msra.mxu0 0.0
      %2101 = vmatpush.msra.mxu0 0.0
      %2102 = vmatpush.msra.mxu0 0.0
      %2103 = vmatpush.msra.mxu0 0.0
      %2104 = vmatpush.msra.mxu0 0.0
      %2105 = vmatpush.msra.mxu0 0.0
      %2106 = vmatpush.msra.mxu0 0.0
      %v2107 = vand.u32 %v1962, 4294901760
      %2108 = vmatpush.msra.mxu0 %v2107
      %v2109 = vand.u32 %v1966, 4294901760
      %2110 = vmatmul.f32.gmra.mxu0 %v2109
      %v2111 = vpop.f32.mrf.mxu0
      %v2112 = vadd.f32 %v2090, %v2111
      %2113 = vdwg.mxu0
      %2114 = vmatpush.msra.mxu0 0.0
      %2115 = vmatpush.msra.mxu0 0.0
      %2116 = vmatpush.msra.mxu0 0.0
      %2117 = vmatpush.msra.mxu0 0.0
      %2118 = vmatpush.msra.mxu0 0.0
      %2119 = vmatpush.msra.mxu0 0.0
      %2120 = vmatpush.msra.mxu0 0.0
      %2121 = vmatpush.msra.mxu0 0.0
      %2122 = vmatpush.msra.mxu0 0.0
      %2123 = vmatpush.msra.mxu0 0.0
      %2124 = vmatpush.msra.mxu0 0.0
      %2125 = vmatpush.msra.mxu0 0.0
      %2126 = vmatpush.msra.mxu0 0.0
      %2127 = vmatpush.msra.mxu0 0.0
      %2128 = vmatpush.msra.mxu0 0.0
      %v2129 = vand.u32 %v1960, 4294901760
      %2130 = vmatpush.msra.mxu0 %v2129
      %v2131 = vand.u32 %v1966, 4294901760
      %v2132 = vsub.f32 %v1966, %v2131
      %v2133 = vand.u32 %v2132, 4294901760
      %v2134 = vsub.f32 %v2132, %v2133
      %v2135 = vand.u32 %v2134, 4294901760
      %2136 = vmatmul.f32.gmra.mxu0 %v2135
      %v2137 = vpop.f32.mrf.mxu0
      %v2138 = vadd.f32 0.0, %v2137
      %2139 = vdwg.mxu0
      %2140 = vmatpush.msra.mxu0 0.0
      %2141 = vmatpush.msra.mxu0 0.0
      %2142 = vmatpush.msra.mxu0 0.0
      %2143 = vmatpush.msra.mxu0 0.0
      %2144 = vmatpush.msra.mxu0 0.0
      %2145 = vmatpush.msra.mxu0 0.0
      %2146 = vmatpush.msra.mxu0 0.0
      %2147 = vmatpush.msra.mxu0 0.0
      %2148 = vmatpush.msra.mxu0 0.0
      %2149 = vmatpush.msra.mxu0 0.0
      %2150 = vmatpush.msra.mxu0 0.0
      %2151 = vmatpush.msra.mxu0 0.0
      %2152 = vmatpush.msra.mxu0 0.0
      %2153 = vmatpush.msra.mxu0 0.0
      %2154 = vmatpush.msra.mxu0 0.0
      %v2155 = vand.u32 %v1960, 4294901760
      %v2156 = vsub.f32 %v1960, %v2155
      %v2157 = vand.u32 %v2156, 4294901760
      %v2158 = vsub.f32 %v2156, %v2157
      %v2159 = vand.u32 %v2158, 4294901760
      %2160 = vmatpush.msra.mxu0 %v2159
      %v2161 = vand.u32 %v1966, 4294901760
      %2162 = vmatmul.f32.gmra.mxu0 %v2161
      %v2163 = vpop.f32.mrf.mxu0
      %v2164 = vadd.f32 %v2138, %v2163
      %2165 = vdwg.mxu0
      %2166 = vmatpush.msra.mxu0 0.0
      %2167 = vmatpush.msra.mxu0 0.0
      %2168 = vmatpush.msra.mxu0 0.0
      %2169 = vmatpush.msra.mxu0 0.0
      %2170 = vmatpush.msra.mxu0 0.0
      %2171 = vmatpush.msra.mxu0 0.0
      %2172 = vmatpush.msra.mxu0 0.0
      %2173 = vmatpush.msra.mxu0 0.0
      %2174 = vmatpush.msra.mxu0 0.0
      %2175 = vmatpush.msra.mxu0 0.0
      %2176 = vmatpush.msra.mxu0 0.0
      %2177 = vmatpush.msra.mxu0 0.0
      %2178 = vmatpush.msra.mxu0 0.0
      %2179 = vmatpush.msra.mxu0 0.0
      %2180 = vmatpush.msra.mxu0 0.0
      %v2181 = vand.u32 %v1960, 4294901760
      %v2182 = vsub.f32 %v1960, %v2181
      %2183 = vmatpush.msra.mxu0 %v2182
      %v2184 = vand.u32 %v1966, 4294901760
      %v2185 = vsub.f32 %v1966, %v2184
      %2186 = vmatmul.f32.gmra.mxu0 %v2185
      %v2187 = vpop.f32.mrf.mxu0
      %v2188 = vadd.f32 %v2164, %v2187
      %2189 = vdwg.mxu0
      %2190 = vmatpush.msra.mxu0 0.0
      %2191 = vmatpush.msra.mxu0 0.0
      %2192 = vmatpush.msra.mxu0 0.0
      %2193 = vmatpush.msra.mxu0 0.0
      %2194 = vmatpush.msra.mxu0 0.0
      %2195 = vmatpush.msra.mxu0 0.0
      %2196 = vmatpush.msra.mxu0 0.0
      %2197 = vmatpush.msra.mxu0 0.0
      %2198 = vmatpush.msra.mxu0 0.0
      %2199 = vmatpush.msra.mxu0 0.0
      %2200 = vmatpush.msra.mxu0 0.0
      %2201 = vmatpush.msra.mxu0 0.0
      %2202 = vmatpush.msra.mxu0 0.0
      %2203 = vmatpush.msra.mxu0 0.0
      %2204 = vmatpush.msra.mxu0 0.0
      %v2205 = vand.u32 %v1960, 4294901760
      %2206 = vmatpush.msra.mxu0 %v2205
      %v2207 = vand.u32 %v1966, 4294901760
      %v2208 = vsub.f32 %v1966, %v2207
      %v2209 = vand.u32 %v2208, 4294901760
      %2210 = vmatmul.f32.gmra.mxu0 %v2209
      %v2211 = vpop.f32.mrf.mxu0
      %v2212 = vadd.f32 %v2188, %v2211
      %2213 = vdwg.mxu0
      %2214 = vmatpush.msra.mxu0 0.0
      %2215 = vmatpush.msra.mxu0 0.0
      %2216 = vmatpush.msra.mxu0 0.0
      %2217 = vmatpush.msra.mxu0 0.0
      %2218 = vmatpush.msra.mxu0 0.0
      %2219 = vmatpush.msra.mxu0 0.0
      %2220 = vmatpush.msra.mxu0 0.0
      %2221 = vmatpush.msra.mxu0 0.0
      %2222 = vmatpush.msra.mxu0 0.0
      %2223 = vmatpush.msra.mxu0 0.0
      %2224 = vmatpush.msra.mxu0 0.0
      %2225 = vmatpush.msra.mxu0 0.0
      %2226 = vmatpush.msra.mxu0 0.0
      %2227 = vmatpush.msra.mxu0 0.0
      %2228 = vmatpush.msra.mxu0 0.0
      %v2229 = vand.u32 %v1960, 4294901760
      %v2230 = vsub.f32 %v1960, %v2229
      %v2231 = vand.u32 %v2230, 4294901760
      %2232 = vmatpush.msra.mxu0 %v2231
      %v2233 = vand.u32 %v1966, 4294901760
      %2234 = vmatmul.f32.gmra.mxu0 %v2233
      %v2235 = vpop.f32.mrf.mxu0
      %v2236 = vadd.f32 %v2212, %v2235
      %2237 = vdwg.mxu0
      %2238 = vmatpush.msra.mxu0 0.0
      %2239 = vmatpush.msra.mxu0 0.0
      %2240 = vmatpush.msra.mxu0 0.0
      %2241 = vmatpush.msra.mxu0 0.0
      %2242 = vmatpush.msra.mxu0 0.0
      %2243 = vmatpush.msra.mxu0 0.0
      %2244 = vmatpush.msra.mxu0 0.0
      %2245 = vmatpush.msra.mxu0 0.0
      %2246 = vmatpush.msra.mxu0 0.0
      %2247 = vmatpush.msra.mxu0 0.0
      %2248 = vmatpush.msra.mxu0 0.0
      %2249 = vmatpush.msra.mxu0 0.0
      %2250 = vmatpush.msra.mxu0 0.0
      %2251 = vmatpush.msra.mxu0 0.0
      %2252 = vmatpush.msra.mxu0 0.0
      %v2253 = vand.u32 %v1960, 4294901760
      %2254 = vmatpush.msra.mxu0 %v2253
      %v2255 = vand.u32 %v1966, 4294901760
      %2256 = vmatmul.f32.gmra.mxu0 %v2255
      %v2257 = vpop.f32.mrf.mxu0
      %v2258 = vadd.f32 %v2236, %v2257
      %2259 = vdwg.mxu0
      %v2260 = vadd.f32 %v1953, %v2112
      %v2261 = vadd.f32 %v1954, %v2258
      %s2262 = scalar_lea.vmem %s2, 24
      %v2263 = vld [vmem:[%s2262] sm:$0xf]
      %2264 = vrot.lane.b32.xlu0 %v425, 93
      %v2265 = vpop.permute.xlu0 %2264
      %2266 = vrot.lane.b32.xlu0 %v426, 93
      %v2267 = vpop.permute.xlu0 %2266
      %vm2268 = vcmask 760832
      %v2269 = vsel %vm2268, %v2265, %v2267
      %v2273 = vsel %vm429, %v2263, 0
      %2275 = vmatpush.msra.mxu0 0.0
      %2276 = vmatpush.msra.mxu0 0.0
      %2277 = vmatpush.msra.mxu0 0.0
      %2278 = vmatpush.msra.mxu0 0.0
      %2279 = vmatpush.msra.mxu0 0.0
      %2280 = vmatpush.msra.mxu0 0.0
      %2281 = vmatpush.msra.mxu0 0.0
      %2282 = vmatpush.msra.mxu0 0.0
      %2283 = vmatpush.msra.mxu0 0.0
      %2284 = vmatpush.msra.mxu0 0.0
      %2285 = vmatpush.msra.mxu0 0.0
      %2286 = vmatpush.msra.mxu0 0.0
      %2287 = vmatpush.msra.mxu0 0.0
      %2288 = vmatpush.msra.mxu0 0.0
      %2289 = vmatpush.msra.mxu0 0.0
      %v2290 = vand.u32 %v2269, 4294901760
      %2291 = vmatpush.msra.mxu0 %v2290
      %v2292 = vand.u32 %v2273, 4294901760
      %v2293 = vsub.f32 %v2273, %v2292
      %v2294 = vand.u32 %v2293, 4294901760
      %v2295 = vsub.f32 %v2293, %v2294
      %v2296 = vand.u32 %v2295, 4294901760
      %2297 = vmatmul.f32.gmra.mxu0 %v2296
      %v2298 = vpop.f32.mrf.mxu0
      %v2299 = vadd.f32 0.0, %v2298
      %2300 = vdwg.mxu0
      %2301 = vmatpush.msra.mxu0 0.0
      %2302 = vmatpush.msra.mxu0 0.0
      %2303 = vmatpush.msra.mxu0 0.0
      %2304 = vmatpush.msra.mxu0 0.0
      %2305 = vmatpush.msra.mxu0 0.0
      %2306 = vmatpush.msra.mxu0 0.0
      %2307 = vmatpush.msra.mxu0 0.0
      %2308 = vmatpush.msra.mxu0 0.0
      %2309 = vmatpush.msra.mxu0 0.0
      %2310 = vmatpush.msra.mxu0 0.0
      %2311 = vmatpush.msra.mxu0 0.0
      %2312 = vmatpush.msra.mxu0 0.0
      %2313 = vmatpush.msra.mxu0 0.0
      %2314 = vmatpush.msra.mxu0 0.0
      %2315 = vmatpush.msra.mxu0 0.0
      %v2316 = vand.u32 %v2269, 4294901760
      %v2317 = vsub.f32 %v2269, %v2316
      %v2318 = vand.u32 %v2317, 4294901760
      %v2319 = vsub.f32 %v2317, %v2318
      %v2320 = vand.u32 %v2319, 4294901760
      %2321 = vmatpush.msra.mxu0 %v2320
      %v2322 = vand.u32 %v2273, 4294901760
      %2323 = vmatmul.f32.gmra.mxu0 %v2322
      %v2324 = vpop.f32.mrf.mxu0
      %v2325 = vadd.f32 %v2299, %v2324
      %2326 = vdwg.mxu0
      %2327 = vmatpush.msra.mxu0 0.0
      %2328 = vmatpush.msra.mxu0 0.0
      %2329 = vmatpush.msra.mxu0 0.0
      %2330 = vmatpush.msra.mxu0 0.0
      %2331 = vmatpush.msra.mxu0 0.0
      %2332 = vmatpush.msra.mxu0 0.0
      %2333 = vmatpush.msra.mxu0 0.0
      %2334 = vmatpush.msra.mxu0 0.0
      %2335 = vmatpush.msra.mxu0 0.0
      %2336 = vmatpush.msra.mxu0 0.0
      %2337 = vmatpush.msra.mxu0 0.0
      %2338 = vmatpush.msra.mxu0 0.0
      %2339 = vmatpush.msra.mxu0 0.0
      %2340 = vmatpush.msra.mxu0 0.0
      %2341 = vmatpush.msra.mxu0 0.0
      %v2342 = vand.u32 %v2269, 4294901760
      %v2343 = vsub.f32 %v2269, %v2342
      %2344 = vmatpush.msra.mxu0 %v2343
      %v2345 = vand.u32 %v2273, 4294901760
      %v2346 = vsub.f32 %v2273, %v2345
      %2347 = vmatmul.f32.gmra.mxu0 %v2346
      %v2348 = vpop.f32.mrf.mxu0
      %v2349 = vadd.f32 %v2325, %v2348
      %2350 = vdwg.mxu0
      %2351 = vmatpush.msra.mxu0 0.0
      %2352 = vmatpush.msra.mxu0 0.0
      %2353 = vmatpush.msra.mxu0 0.0
      %2354 = vmatpush.msra.mxu0 0.0
      %2355 = vmatpush.msra.mxu0 0.0
      %2356 = vmatpush.msra.mxu0 0.0
      %2357 = vmatpush.msra.mxu0 0.0
      %2358 = vmatpush.msra.mxu0 0.0
      %2359 = vmatpush.msra.mxu0 0.0
      %2360 = vmatpush.msra.mxu0 0.0
      %2361 = vmatpush.msra.mxu0 0.0
      %2362 = vmatpush.msra.mxu0 0.0
      %2363 = vmatpush.msra.mxu0 0.0
      %2364 = vmatpush.msra.mxu0 0.0
      %2365 = vmatpush.msra.mxu0 0.0
      %v2366 = vand.u32 %v2269, 4294901760
      %2367 = vmatpush.msra.mxu0 %v2366
      %v2368 = vand.u32 %v2273, 4294901760
      %v2369 = vsub.f32 %v2273, %v2368
      %v2370 = vand.u32 %v2369, 4294901760
      %2371 = vmatmul.f32.gmra.mxu0 %v2370
      %v2372 = vpop.f32.mrf.mxu0
      %v2373 = vadd.f32 %v2349, %v2372
      %2374 = vdwg.mxu0
      %2375 = vmatpush.msra.mxu0 0.0
      %2376 = vmatpush.msra.mxu0 0.0
      %2377 = vmatpush.msra.mxu0 0.0
      %2378 = vmatpush.msra.mxu0 0.0
      %2379 = vmatpush.msra.mxu0 0.0
      %2380 = vmatpush.msra.mxu0 0.0
      %2381 = vmatpush.msra.mxu0 0.0
      %2382 = vmatpush.msra.mxu0 0.0
      %2383 = vmatpush.msra.mxu0 0.0
      %2384 = vmatpush.msra.mxu0 0.0
      %2385 = vmatpush.msra.mxu0 0.0
      %2386 = vmatpush.msra.mxu0 0.0
      %2387 = vmatpush.msra.mxu0 0.0
      %2388 = vmatpush.msra.mxu0 0.0
      %2389 = vmatpush.msra.mxu0 0.0
      %v2390 = vand.u32 %v2269, 4294901760
      %v2391 = vsub.f32 %v2269, %v2390
      %v2392 = vand.u32 %v2391, 4294901760
      %2393 = vmatpush.msra.mxu0 %v2392
      %v2394 = vand.u32 %v2273, 4294901760
      %2395 = vmatmul.f32.gmra.mxu0 %v2394
      %v2396 = vpop.f32.mrf.mxu0
      %v2397 = vadd.f32 %v2373, %v2396
      %2398 = vdwg.mxu0
      %2399 = vmatpush.msra.mxu0 0.0
      %2400 = vmatpush.msra.mxu0 0.0
      %2401 = vmatpush.msra.mxu0 0.0
      %2402 = vmatpush.msra.mxu0 0.0
      %2403 = vmatpush.msra.mxu0 0.0
      %2404 = vmatpush.msra.mxu0 0.0
      %2405 = vmatpush.msra.mxu0 0.0
      %2406 = vmatpush.msra.mxu0 0.0
      %2407 = vmatpush.msra.mxu0 0.0
      %2408 = vmatpush.msra.mxu0 0.0
      %2409 = vmatpush.msra.mxu0 0.0
      %2410 = vmatpush.msra.mxu0 0.0
      %2411 = vmatpush.msra.mxu0 0.0
      %2412 = vmatpush.msra.mxu0 0.0
      %2413 = vmatpush.msra.mxu0 0.0
      %v2414 = vand.u32 %v2269, 4294901760
      %2415 = vmatpush.msra.mxu0 %v2414
      %v2416 = vand.u32 %v2273, 4294901760
      %2417 = vmatmul.f32.gmra.mxu0 %v2416
      %v2418 = vpop.f32.mrf.mxu0
      %v2419 = vadd.f32 %v2397, %v2418
      %2420 = vdwg.mxu0
      %2421 = vmatpush.msra.mxu0 0.0
      %2422 = vmatpush.msra.mxu0 0.0
      %2423 = vmatpush.msra.mxu0 0.0
      %2424 = vmatpush.msra.mxu0 0.0
      %2425 = vmatpush.msra.mxu0 0.0
      %2426 = vmatpush.msra.mxu0 0.0
      %2427 = vmatpush.msra.mxu0 0.0
      %2428 = vmatpush.msra.mxu0 0.0
      %2429 = vmatpush.msra.mxu0 0.0
      %2430 = vmatpush.msra.mxu0 0.0
      %2431 = vmatpush.msra.mxu0 0.0
      %2432 = vmatpush.msra.mxu0 0.0
      %2433 = vmatpush.msra.mxu0 0.0
      %2434 = vmatpush.msra.mxu0 0.0
      %2435 = vmatpush.msra.mxu0 0.0
      %v2436 = vand.u32 %v2267, 4294901760
      %2437 = vmatpush.msra.mxu0 %v2436
      %v2438 = vand.u32 %v2273, 4294901760
      %v2439 = vsub.f32 %v2273, %v2438
      %v2440 = vand.u32 %v2439, 4294901760
      %v2441 = vsub.f32 %v2439, %v2440
      %v2442 = vand.u32 %v2441, 4294901760
      %2443 = vmatmul.f32.gmra.mxu0 %v2442
      %v2444 = vpop.f32.mrf.mxu0
      %v2445 = vadd.f32 0.0, %v2444
      %2446 = vdwg.mxu0
      %2447 = vmatpush.msra.mxu0 0.0
      %2448 = vmatpush.msra.mxu0 0.0
      %2449 = vmatpush.msra.mxu0 0.0
      %2450 = vmatpush.msra.mxu0 0.0
      %2451 = vmatpush.msra.mxu0 0.0
      %2452 = vmatpush.msra.mxu0 0.0
      %2453 = vmatpush.msra.mxu0 0.0
      %2454 = vmatpush.msra.mxu0 0.0
      %2455 = vmatpush.msra.mxu0 0.0
      %2456 = vmatpush.msra.mxu0 0.0
      %2457 = vmatpush.msra.mxu0 0.0
      %2458 = vmatpush.msra.mxu0 0.0
      %2459 = vmatpush.msra.mxu0 0.0
      %2460 = vmatpush.msra.mxu0 0.0
      %2461 = vmatpush.msra.mxu0 0.0
      %v2462 = vand.u32 %v2267, 4294901760
      %v2463 = vsub.f32 %v2267, %v2462
      %v2464 = vand.u32 %v2463, 4294901760
      %v2465 = vsub.f32 %v2463, %v2464
      %v2466 = vand.u32 %v2465, 4294901760
      %2467 = vmatpush.msra.mxu0 %v2466
      %v2468 = vand.u32 %v2273, 4294901760
      %2469 = vmatmul.f32.gmra.mxu0 %v2468
      %v2470 = vpop.f32.mrf.mxu0
      %v2471 = vadd.f32 %v2445, %v2470
      %2472 = vdwg.mxu0
      %2473 = vmatpush.msra.mxu0 0.0
      %2474 = vmatpush.msra.mxu0 0.0
      %2475 = vmatpush.msra.mxu0 0.0
      %2476 = vmatpush.msra.mxu0 0.0
      %2477 = vmatpush.msra.mxu0 0.0
      %2478 = vmatpush.msra.mxu0 0.0
      %2479 = vmatpush.msra.mxu0 0.0
      %2480 = vmatpush.msra.mxu0 0.0
      %2481 = vmatpush.msra.mxu0 0.0
      %2482 = vmatpush.msra.mxu0 0.0
      %2483 = vmatpush.msra.mxu0 0.0
      %2484 = vmatpush.msra.mxu0 0.0
      %2485 = vmatpush.msra.mxu0 0.0
      %2486 = vmatpush.msra.mxu0 0.0
      %2487 = vmatpush.msra.mxu0 0.0
      %v2488 = vand.u32 %v2267, 4294901760
      %v2489 = vsub.f32 %v2267, %v2488
      %2490 = vmatpush.msra.mxu0 %v2489
      %v2491 = vand.u32 %v2273, 4294901760
      %v2492 = vsub.f32 %v2273, %v2491
      %2493 = vmatmul.f32.gmra.mxu0 %v2492
      %v2494 = vpop.f32.mrf.mxu0
      %v2495 = vadd.f32 %v2471, %v2494
      %2496 = vdwg.mxu0
      %2497 = vmatpush.msra.mxu0 0.0
      %2498 = vmatpush.msra.mxu0 0.0
      %2499 = vmatpush.msra.mxu0 0.0
      %2500 = vmatpush.msra.mxu0 0.0
      %2501 = vmatpush.msra.mxu0 0.0
      %2502 = vmatpush.msra.mxu0 0.0
      %2503 = vmatpush.msra.mxu0 0.0
      %2504 = vmatpush.msra.mxu0 0.0
      %2505 = vmatpush.msra.mxu0 0.0
      %2506 = vmatpush.msra.mxu0 0.0
      %2507 = vmatpush.msra.mxu0 0.0
      %2508 = vmatpush.msra.mxu0 0.0
      %2509 = vmatpush.msra.mxu0 0.0
      %2510 = vmatpush.msra.mxu0 0.0
      %2511 = vmatpush.msra.mxu0 0.0
      %v2512 = vand.u32 %v2267, 4294901760
      %2513 = vmatpush.msra.mxu0 %v2512
      %v2514 = vand.u32 %v2273, 4294901760
      %v2515 = vsub.f32 %v2273, %v2514
      %v2516 = vand.u32 %v2515, 4294901760
      %2517 = vmatmul.f32.gmra.mxu0 %v2516
      %v2518 = vpop.f32.mrf.mxu0
      %v2519 = vadd.f32 %v2495, %v2518
      %2520 = vdwg.mxu0
      %2521 = vmatpush.msra.mxu0 0.0
      %2522 = vmatpush.msra.mxu0 0.0
      %2523 = vmatpush.msra.mxu0 0.0
      %2524 = vmatpush.msra.mxu0 0.0
      %2525 = vmatpush.msra.mxu0 0.0
      %2526 = vmatpush.msra.mxu0 0.0
      %2527 = vmatpush.msra.mxu0 0.0
      %2528 = vmatpush.msra.mxu0 0.0
      %2529 = vmatpush.msra.mxu0 0.0
      %2530 = vmatpush.msra.mxu0 0.0
      %2531 = vmatpush.msra.mxu0 0.0
      %2532 = vmatpush.msra.mxu0 0.0
      %2533 = vmatpush.msra.mxu0 0.0
      %2534 = vmatpush.msra.mxu0 0.0
      %2535 = vmatpush.msra.mxu0 0.0
      %v2536 = vand.u32 %v2267, 4294901760
      %v2537 = vsub.f32 %v2267, %v2536
      %v2538 = vand.u32 %v2537, 4294901760
      %2539 = vmatpush.msra.mxu0 %v2538
      %v2540 = vand.u32 %v2273, 4294901760
      %2541 = vmatmul.f32.gmra.mxu0 %v2540
      %v2542 = vpop.f32.mrf.mxu0
      %v2543 = vadd.f32 %v2519, %v2542
      %2544 = vdwg.mxu0
      %2545 = vmatpush.msra.mxu0 0.0
      %2546 = vmatpush.msra.mxu0 0.0
      %2547 = vmatpush.msra.mxu0 0.0
      %2548 = vmatpush.msra.mxu0 0.0
      %2549 = vmatpush.msra.mxu0 0.0
      %2550 = vmatpush.msra.mxu0 0.0
      %2551 = vmatpush.msra.mxu0 0.0
      %2552 = vmatpush.msra.mxu0 0.0
      %2553 = vmatpush.msra.mxu0 0.0
      %2554 = vmatpush.msra.mxu0 0.0
      %2555 = vmatpush.msra.mxu0 0.0
      %2556 = vmatpush.msra.mxu0 0.0
      %2557 = vmatpush.msra.mxu0 0.0
      %2558 = vmatpush.msra.mxu0 0.0
      %2559 = vmatpush.msra.mxu0 0.0
      %v2560 = vand.u32 %v2267, 4294901760
      %2561 = vmatpush.msra.mxu0 %v2560
      %v2562 = vand.u32 %v2273, 4294901760
      %2563 = vmatmul.f32.gmra.mxu0 %v2562
      %v2564 = vpop.f32.mrf.mxu0
      %v2565 = vadd.f32 %v2543, %v2564
      %2566 = vdwg.mxu0
      %v2567 = vadd.f32 %v2260, %v2419
      %v2568 = vadd.f32 %v2261, %v2565
      %s2569 = scalar_lea.vmem %s2, 28
      %v2570 = vld [vmem:[%s2569] sm:$0xf]
      %2571 = vrot.lane.b32.xlu0 %v425, 92
      %v2572 = vpop.permute.xlu0 %2571
      %2573 = vrot.lane.b32.xlu0 %v426, 92
      %v2574 = vpop.permute.xlu0 %2573
      %vm2575 = vcmask 752640
      %v2576 = vsel %vm2575, %v2572, %v2574
      %v2580 = vsel %vm429, %v2570, 0
      %2582 = vmatpush.msra.mxu0 0.0
      %2583 = vmatpush.msra.mxu0 0.0
      %2584 = vmatpush.msra.mxu0 0.0
      %2585 = vmatpush.msra.mxu0 0.0
      %2586 = vmatpush.msra.mxu0 0.0
      %2587 = vmatpush.msra.mxu0 0.0
      %2588 = vmatpush.msra.mxu0 0.0
      %2589 = vmatpush.msra.mxu0 0.0
      %2590 = vmatpush.msra.mxu0 0.0
      %2591 = vmatpush.msra.mxu0 0.0
      %2592 = vmatpush.msra.mxu0 0.0
      %2593 = vmatpush.msra.mxu0 0.0
      %2594 = vmatpush.msra.mxu0 0.0
      %2595 = vmatpush.msra.mxu0 0.0
      %2596 = vmatpush.msra.mxu0 0.0
      %v2597 = vand.u32 %v2576, 4294901760
      %2598 = vmatpush.msra.mxu0 %v2597
      %v2599 = vand.u32 %v2580, 4294901760
      %v2600 = vsub.f32 %v2580, %v2599
      %v2601 = vand.u32 %v2600, 4294901760
      %v2602 = vsub.f32 %v2600, %v2601
      %v2603 = vand.u32 %v2602, 4294901760
      %2604 = vmatmul.f32.gmra.mxu0 %v2603
      %v2605 = vpop.f32.mrf.mxu0
      %v2606 = vadd.f32 0.0, %v2605
      %2607 = vdwg.mxu0
      %2608 = vmatpush.msra.mxu0 0.0
      %2609 = vmatpush.msra.mxu0 0.0
      %2610 = vmatpush.msra.mxu0 0.0
      %2611 = vmatpush.msra.mxu0 0.0
      %2612 = vmatpush.msra.mxu0 0.0
      %2613 = vmatpush.msra.mxu0 0.0
      %2614 = vmatpush.msra.mxu0 0.0
      %2615 = vmatpush.msra.mxu0 0.0
      %2616 = vmatpush.msra.mxu0 0.0
      %2617 = vmatpush.msra.mxu0 0.0
      %2618 = vmatpush.msra.mxu0 0.0
      %2619 = vmatpush.msra.mxu0 0.0
      %2620 = vmatpush.msra.mxu0 0.0
      %2621 = vmatpush.msra.mxu0 0.0
      %2622 = vmatpush.msra.mxu0 0.0
      %v2623 = vand.u32 %v2576, 4294901760
      %v2624 = vsub.f32 %v2576, %v2623
      %v2625 = vand.u32 %v2624, 4294901760
      %v2626 = vsub.f32 %v2624, %v2625
      %v2627 = vand.u32 %v2626, 4294901760
      %2628 = vmatpush.msra.mxu0 %v2627
      %v2629 = vand.u32 %v2580, 4294901760
      %2630 = vmatmul.f32.gmra.mxu0 %v2629
      %v2631 = vpop.f32.mrf.mxu0
      %v2632 = vadd.f32 %v2606, %v2631
      %2633 = vdwg.mxu0
      %2634 = vmatpush.msra.mxu0 0.0
      %2635 = vmatpush.msra.mxu0 0.0
      %2636 = vmatpush.msra.mxu0 0.0
      %2637 = vmatpush.msra.mxu0 0.0
      %2638 = vmatpush.msra.mxu0 0.0
      %2639 = vmatpush.msra.mxu0 0.0
      %2640 = vmatpush.msra.mxu0 0.0
      %2641 = vmatpush.msra.mxu0 0.0
      %2642 = vmatpush.msra.mxu0 0.0
      %2643 = vmatpush.msra.mxu0 0.0
      %2644 = vmatpush.msra.mxu0 0.0
      %2645 = vmatpush.msra.mxu0 0.0
      %2646 = vmatpush.msra.mxu0 0.0
      %2647 = vmatpush.msra.mxu0 0.0
      %2648 = vmatpush.msra.mxu0 0.0
      %v2649 = vand.u32 %v2576, 4294901760
      %v2650 = vsub.f32 %v2576, %v2649
      %2651 = vmatpush.msra.mxu0 %v2650
      %v2652 = vand.u32 %v2580, 4294901760
      %v2653 = vsub.f32 %v2580, %v2652
      %2654 = vmatmul.f32.gmra.mxu0 %v2653
      %v2655 = vpop.f32.mrf.mxu0
      %v2656 = vadd.f32 %v2632, %v2655
      %2657 = vdwg.mxu0
      %2658 = vmatpush.msra.mxu0 0.0
      %2659 = vmatpush.msra.mxu0 0.0
      %2660 = vmatpush.msra.mxu0 0.0
      %2661 = vmatpush.msra.mxu0 0.0
      %2662 = vmatpush.msra.mxu0 0.0
      %2663 = vmatpush.msra.mxu0 0.0
      %2664 = vmatpush.msra.mxu0 0.0
      %2665 = vmatpush.msra.mxu0 0.0
      %2666 = vmatpush.msra.mxu0 0.0
      %2667 = vmatpush.msra.mxu0 0.0
      %2668 = vmatpush.msra.mxu0 0.0
      %2669 = vmatpush.msra.mxu0 0.0
      %2670 = vmatpush.msra.mxu0 0.0
      %2671 = vmatpush.msra.mxu0 0.0
      %2672 = vmatpush.msra.mxu0 0.0
      %v2673 = vand.u32 %v2576, 4294901760
      %2674 = vmatpush.msra.mxu0 %v2673
      %v2675 = vand.u32 %v2580, 4294901760
      %v2676 = vsub.f32 %v2580, %v2675
      %v2677 = vand.u32 %v2676, 4294901760
      %2678 = vmatmul.f32.gmra.mxu0 %v2677
      %v2679 = vpop.f32.mrf.mxu0
      %v2680 = vadd.f32 %v2656, %v2679
      %2681 = vdwg.mxu0
      %2682 = vmatpush.msra.mxu0 0.0
      %2683 = vmatpush.msra.mxu0 0.0
      %2684 = vmatpush.msra.mxu0 0.0
      %2685 = vmatpush.msra.mxu0 0.0
      %2686 = vmatpush.msra.mxu0 0.0
      %2687 = vmatpush.msra.mxu0 0.0
      %2688 = vmatpush.msra.mxu0 0.0
      %2689 = vmatpush.msra.mxu0 0.0
      %2690 = vmatpush.msra.mxu0 0.0
      %2691 = vmatpush.msra.mxu0 0.0
      %2692 = vmatpush.msra.mxu0 0.0
      %2693 = vmatpush.msra.mxu0 0.0
      %2694 = vmatpush.msra.mxu0 0.0
      %2695 = vmatpush.msra.mxu0 0.0
      %2696 = vmatpush.msra.mxu0 0.0
      %v2697 = vand.u32 %v2576, 4294901760
      %v2698 = vsub.f32 %v2576, %v2697
      %v2699 = vand.u32 %v2698, 4294901760
      %2700 = vmatpush.msra.mxu0 %v2699
      %v2701 = vand.u32 %v2580, 4294901760
      %2702 = vmatmul.f32.gmra.mxu0 %v2701
      %v2703 = vpop.f32.mrf.mxu0
      %v2704 = vadd.f32 %v2680, %v2703
      %2705 = vdwg.mxu0
      %2706 = vmatpush.msra.mxu0 0.0
      %2707 = vmatpush.msra.mxu0 0.0
      %2708 = vmatpush.msra.mxu0 0.0
      %2709 = vmatpush.msra.mxu0 0.0
      %2710 = vmatpush.msra.mxu0 0.0
      %2711 = vmatpush.msra.mxu0 0.0
      %2712 = vmatpush.msra.mxu0 0.0
      %2713 = vmatpush.msra.mxu0 0.0
      %2714 = vmatpush.msra.mxu0 0.0
      %2715 = vmatpush.msra.mxu0 0.0
      %2716 = vmatpush.msra.mxu0 0.0
      %2717 = vmatpush.msra.mxu0 0.0
      %2718 = vmatpush.msra.mxu0 0.0
      %2719 = vmatpush.msra.mxu0 0.0
      %2720 = vmatpush.msra.mxu0 0.0
      %v2721 = vand.u32 %v2576, 4294901760
      %2722 = vmatpush.msra.mxu0 %v2721
      %v2723 = vand.u32 %v2580, 4294901760
      %2724 = vmatmul.f32.gmra.mxu0 %v2723
      %v2725 = vpop.f32.mrf.mxu0
      %v2726 = vadd.f32 %v2704, %v2725
      %2727 = vdwg.mxu0
      %2728 = vmatpush.msra.mxu0 0.0
      %2729 = vmatpush.msra.mxu0 0.0
      %2730 = vmatpush.msra.mxu0 0.0
      %2731 = vmatpush.msra.mxu0 0.0
      %2732 = vmatpush.msra.mxu0 0.0
      %2733 = vmatpush.msra.mxu0 0.0
      %2734 = vmatpush.msra.mxu0 0.0
      %2735 = vmatpush.msra.mxu0 0.0
      %2736 = vmatpush.msra.mxu0 0.0
      %2737 = vmatpush.msra.mxu0 0.0
      %2738 = vmatpush.msra.mxu0 0.0
      %2739 = vmatpush.msra.mxu0 0.0
      %2740 = vmatpush.msra.mxu0 0.0
      %2741 = vmatpush.msra.mxu0 0.0
      %2742 = vmatpush.msra.mxu0 0.0
      %v2743 = vand.u32 %v2574, 4294901760
      %2744 = vmatpush.msra.mxu0 %v2743
      %v2745 = vand.u32 %v2580, 4294901760
      %v2746 = vsub.f32 %v2580, %v2745
      %v2747 = vand.u32 %v2746, 4294901760
      %v2748 = vsub.f32 %v2746, %v2747
      %v2749 = vand.u32 %v2748, 4294901760
      %2750 = vmatmul.f32.gmra.mxu0 %v2749
      %v2751 = vpop.f32.mrf.mxu0
      %v2752 = vadd.f32 0.0, %v2751
      %2753 = vdwg.mxu0
      %2754 = vmatpush.msra.mxu0 0.0
      %2755 = vmatpush.msra.mxu0 0.0
      %2756 = vmatpush.msra.mxu0 0.0
      %2757 = vmatpush.msra.mxu0 0.0
      %2758 = vmatpush.msra.mxu0 0.0
      %2759 = vmatpush.msra.mxu0 0.0
      %2760 = vmatpush.msra.mxu0 0.0
      %2761 = vmatpush.msra.mxu0 0.0
      %2762 = vmatpush.msra.mxu0 0.0
      %2763 = vmatpush.msra.mxu0 0.0
      %2764 = vmatpush.msra.mxu0 0.0
      %2765 = vmatpush.msra.mxu0 0.0
      %2766 = vmatpush.msra.mxu0 0.0
      %2767 = vmatpush.msra.mxu0 0.0
      %2768 = vmatpush.msra.mxu0 0.0
      %v2769 = vand.u32 %v2574, 4294901760
      %v2770 = vsub.f32 %v2574, %v2769
      %v2771 = vand.u32 %v2770, 4294901760
      %v2772 = vsub.f32 %v2770, %v2771
      %v2773 = vand.u32 %v2772, 4294901760
      %2774 = vmatpush.msra.mxu0 %v2773
      %v2775 = vand.u32 %v2580, 4294901760
      %2776 = vmatmul.f32.gmra.mxu0 %v2775
      %v2777 = vpop.f32.mrf.mxu0
      %v2778 = vadd.f32 %v2752, %v2777
      %2779 = vdwg.mxu0
      %2780 = vmatpush.msra.mxu0 0.0
      %2781 = vmatpush.msra.mxu0 0.0
      %2782 = vmatpush.msra.mxu0 0.0
      %2783 = vmatpush.msra.mxu0 0.0
      %2784 = vmatpush.msra.mxu0 0.0
      %2785 = vmatpush.msra.mxu0 0.0
      %2786 = vmatpush.msra.mxu0 0.0
      %2787 = vmatpush.msra.mxu0 0.0
      %2788 = vmatpush.msra.mxu0 0.0
      %2789 = vmatpush.msra.mxu0 0.0
      %2790 = vmatpush.msra.mxu0 0.0
      %2791 = vmatpush.msra.mxu0 0.0
      %2792 = vmatpush.msra.mxu0 0.0
      %2793 = vmatpush.msra.mxu0 0.0
      %2794 = vmatpush.msra.mxu0 0.0
      %v2795 = vand.u32 %v2574, 4294901760
      %v2796 = vsub.f32 %v2574, %v2795
      %2797 = vmatpush.msra.mxu0 %v2796
      %v2798 = vand.u32 %v2580, 4294901760
      %v2799 = vsub.f32 %v2580, %v2798
      %2800 = vmatmul.f32.gmra.mxu0 %v2799
      %v2801 = vpop.f32.mrf.mxu0
      %v2802 = vadd.f32 %v2778, %v2801
      %2803 = vdwg.mxu0
      %2804 = vmatpush.msra.mxu0 0.0
      %2805 = vmatpush.msra.mxu0 0.0
      %2806 = vmatpush.msra.mxu0 0.0
      %2807 = vmatpush.msra.mxu0 0.0
      %2808 = vmatpush.msra.mxu0 0.0
      %2809 = vmatpush.msra.mxu0 0.0
      %2810 = vmatpush.msra.mxu0 0.0
      %2811 = vmatpush.msra.mxu0 0.0
      %2812 = vmatpush.msra.mxu0 0.0
      %2813 = vmatpush.msra.mxu0 0.0
      %2814 = vmatpush.msra.mxu0 0.0
      %2815 = vmatpush.msra.mxu0 0.0
      %2816 = vmatpush.msra.mxu0 0.0
      %2817 = vmatpush.msra.mxu0 0.0
      %2818 = vmatpush.msra.mxu0 0.0
      %v2819 = vand.u32 %v2574, 4294901760
      %2820 = vmatpush.msra.mxu0 %v2819
      %v2821 = vand.u32 %v2580, 4294901760
      %v2822 = vsub.f32 %v2580, %v2821
      %v2823 = vand.u32 %v2822, 4294901760
      %2824 = vmatmul.f32.gmra.mxu0 %v2823
      %v2825 = vpop.f32.mrf.mxu0
      %v2826 = vadd.f32 %v2802, %v2825
      %2827 = vdwg.mxu0
      %2828 = vmatpush.msra.mxu0 0.0
      %2829 = vmatpush.msra.mxu0 0.0
      %2830 = vmatpush.msra.mxu0 0.0
      %2831 = vmatpush.msra.mxu0 0.0
      %2832 = vmatpush.msra.mxu0 0.0
      %2833 = vmatpush.msra.mxu0 0.0
      %2834 = vmatpush.msra.mxu0 0.0
      %2835 = vmatpush.msra.mxu0 0.0
      %2836 = vmatpush.msra.mxu0 0.0
      %2837 = vmatpush.msra.mxu0 0.0
      %2838 = vmatpush.msra.mxu0 0.0
      %2839 = vmatpush.msra.mxu0 0.0
      %2840 = vmatpush.msra.mxu0 0.0
      %2841 = vmatpush.msra.mxu0 0.0
      %2842 = vmatpush.msra.mxu0 0.0
      %v2843 = vand.u32 %v2574, 4294901760
      %v2844 = vsub.f32 %v2574, %v2843
      %v2845 = vand.u32 %v2844, 4294901760
      %2846 = vmatpush.msra.mxu0 %v2845
      %v2847 = vand.u32 %v2580, 4294901760
      %2848 = vmatmul.f32.gmra.mxu0 %v2847
      %v2849 = vpop.f32.mrf.mxu0
      %v2850 = vadd.f32 %v2826, %v2849
      %2851 = vdwg.mxu0
      %2852 = vmatpush.msra.mxu0 0.0
      %2853 = vmatpush.msra.mxu0 0.0
      %2854 = vmatpush.msra.mxu0 0.0
      %2855 = vmatpush.msra.mxu0 0.0
      %2856 = vmatpush.msra.mxu0 0.0
      %2857 = vmatpush.msra.mxu0 0.0
      %2858 = vmatpush.msra.mxu0 0.0
      %2859 = vmatpush.msra.mxu0 0.0
      %2860 = vmatpush.msra.mxu0 0.0
      %2861 = vmatpush.msra.mxu0 0.0
      %2862 = vmatpush.msra.mxu0 0.0
      %2863 = vmatpush.msra.mxu0 0.0
      %2864 = vmatpush.msra.mxu0 0.0
      %2865 = vmatpush.msra.mxu0 0.0
      %2866 = vmatpush.msra.mxu0 0.0
      %v2867 = vand.u32 %v2574, 4294901760
      %2868 = vmatpush.msra.mxu0 %v2867
      %v2869 = vand.u32 %v2580, 4294901760
      %2870 = vmatmul.f32.gmra.mxu0 %v2869
      %v2871 = vpop.f32.mrf.mxu0
      %v2872 = vadd.f32 %v2850, %v2871
      %2873 = vdwg.mxu0
      %v2874 = vadd.f32 %v2567, %v2726
      %v2875 = vadd.f32 %v2568, %v2872
      %s2876 = scalar_lea.vmem %s2, 32
      %v2877 = vld [vmem:[%s2876] sm:$0xf]
      %2878 = vrot.lane.b32.xlu0 %v425, 91
      %v2879 = vpop.permute.xlu0 %2878
      %2880 = vrot.lane.b32.xlu0 %v426, 91
      %v2881 = vpop.permute.xlu0 %2880
      %vm2882 = vcmask 744448
      %v2883 = vsel %vm2882, %v2879, %v2881
      %v2887 = vsel %vm429, %v2877, 0
      %2889 = vmatpush.msra.mxu0 0.0
      %2890 = vmatpush.msra.mxu0 0.0
      %2891 = vmatpush.msra.mxu0 0.0
      %2892 = vmatpush.msra.mxu0 0.0
      %2893 = vmatpush.msra.mxu0 0.0
      %2894 = vmatpush.msra.mxu0 0.0
      %2895 = vmatpush.msra.mxu0 0.0
      %2896 = vmatpush.msra.mxu0 0.0
      %2897 = vmatpush.msra.mxu0 0.0
      %2898 = vmatpush.msra.mxu0 0.0
      %2899 = vmatpush.msra.mxu0 0.0
      %2900 = vmatpush.msra.mxu0 0.0
      %2901 = vmatpush.msra.mxu0 0.0
      %2902 = vmatpush.msra.mxu0 0.0
      %2903 = vmatpush.msra.mxu0 0.0
      %v2904 = vand.u32 %v2883, 4294901760
      %2905 = vmatpush.msra.mxu0 %v2904
      %v2906 = vand.u32 %v2887, 4294901760
      %v2907 = vsub.f32 %v2887, %v2906
      %v2908 = vand.u32 %v2907, 4294901760
      %v2909 = vsub.f32 %v2907, %v2908
      %v2910 = vand.u32 %v2909, 4294901760
      %2911 = vmatmul.f32.gmra.mxu0 %v2910
      %v2912 = vpop.f32.mrf.mxu0
      %v2913 = vadd.f32 0.0, %v2912
      %2914 = vdwg.mxu0
      %2915 = vmatpush.msra.mxu0 0.0
      %2916 = vmatpush.msra.mxu0 0.0
      %2917 = vmatpush.msra.mxu0 0.0
      %2918 = vmatpush.msra.mxu0 0.0
      %2919 = vmatpush.msra.mxu0 0.0
      %2920 = vmatpush.msra.mxu0 0.0
      %2921 = vmatpush.msra.mxu0 0.0
      %2922 = vmatpush.msra.mxu0 0.0
      %2923 = vmatpush.msra.mxu0 0.0
      %2924 = vmatpush.msra.mxu0 0.0
      %2925 = vmatpush.msra.mxu0 0.0
      %2926 = vmatpush.msra.mxu0 0.0
      %2927 = vmatpush.msra.mxu0 0.0
      %2928 = vmatpush.msra.mxu0 0.0
      %2929 = vmatpush.msra.mxu0 0.0
      %v2930 = vand.u32 %v2883, 4294901760
      %v2931 = vsub.f32 %v2883, %v2930
      %v2932 = vand.u32 %v2931, 4294901760
      %v2933 = vsub.f32 %v2931, %v2932
      %v2934 = vand.u32 %v2933, 4294901760
      %2935 = vmatpush.msra.mxu0 %v2934
      %v2936 = vand.u32 %v2887, 4294901760
      %2937 = vmatmul.f32.gmra.mxu0 %v2936
      %v2938 = vpop.f32.mrf.mxu0
      %v2939 = vadd.f32 %v2913, %v2938
      %2940 = vdwg.mxu0
      %2941 = vmatpush.msra.mxu0 0.0
      %2942 = vmatpush.msra.mxu0 0.0
      %2943 = vmatpush.msra.mxu0 0.0
      %2944 = vmatpush.msra.mxu0 0.0
      %2945 = vmatpush.msra.mxu0 0.0
      %2946 = vmatpush.msra.mxu0 0.0
      %2947 = vmatpush.msra.mxu0 0.0
      %2948 = vmatpush.msra.mxu0 0.0
      %2949 = vmatpush.msra.mxu0 0.0
      %2950 = vmatpush.msra.mxu0 0.0
      %2951 = vmatpush.msra.mxu0 0.0
      %2952 = vmatpush.msra.mxu0 0.0
      %2953 = vmatpush.msra.mxu0 0.0
      %2954 = vmatpush.msra.mxu0 0.0
      %2955 = vmatpush.msra.mxu0 0.0
      %v2956 = vand.u32 %v2883, 4294901760
      %v2957 = vsub.f32 %v2883, %v2956
      %2958 = vmatpush.msra.mxu0 %v2957
      %v2959 = vand.u32 %v2887, 4294901760
      %v2960 = vsub.f32 %v2887, %v2959
      %2961 = vmatmul.f32.gmra.mxu0 %v2960
      %v2962 = vpop.f32.mrf.mxu0
      %v2963 = vadd.f32 %v2939, %v2962
      %2964 = vdwg.mxu0
      %2965 = vmatpush.msra.mxu0 0.0
      %2966 = vmatpush.msra.mxu0 0.0
      %2967 = vmatpush.msra.mxu0 0.0
      %2968 = vmatpush.msra.mxu0 0.0
      %2969 = vmatpush.msra.mxu0 0.0
      %2970 = vmatpush.msra.mxu0 0.0
      %2971 = vmatpush.msra.mxu0 0.0
      %2972 = vmatpush.msra.mxu0 0.0
      %2973 = vmatpush.msra.mxu0 0.0
      %2974 = vmatpush.msra.mxu0 0.0
      %2975 = vmatpush.msra.mxu0 0.0
      %2976 = vmatpush.msra.mxu0 0.0
      %2977 = vmatpush.msra.mxu0 0.0
      %2978 = vmatpush.msra.mxu0 0.0
      %2979 = vmatpush.msra.mxu0 0.0
      %v2980 = vand.u32 %v2883, 4294901760
      %2981 = vmatpush.msra.mxu0 %v2980
      %v2982 = vand.u32 %v2887, 4294901760
      %v2983 = vsub.f32 %v2887, %v2982
      %v2984 = vand.u32 %v2983, 4294901760
      %2985 = vmatmul.f32.gmra.mxu0 %v2984
      %v2986 = vpop.f32.mrf.mxu0
      %v2987 = vadd.f32 %v2963, %v2986
      %2988 = vdwg.mxu0
      %2989 = vmatpush.msra.mxu0 0.0
      %2990 = vmatpush.msra.mxu0 0.0
      %2991 = vmatpush.msra.mxu0 0.0
      %2992 = vmatpush.msra.mxu0 0.0
      %2993 = vmatpush.msra.mxu0 0.0
      %2994 = vmatpush.msra.mxu0 0.0
      %2995 = vmatpush.msra.mxu0 0.0
      %2996 = vmatpush.msra.mxu0 0.0
      %2997 = vmatpush.msra.mxu0 0.0
      %2998 = vmatpush.msra.mxu0 0.0
      %2999 = vmatpush.msra.mxu0 0.0
      %3000 = vmatpush.msra.mxu0 0.0
      %3001 = vmatpush.msra.mxu0 0.0
      %3002 = vmatpush.msra.mxu0 0.0
      %3003 = vmatpush.msra.mxu0 0.0
      %v3004 = vand.u32 %v2883, 4294901760
      %v3005 = vsub.f32 %v2883, %v3004
      %v3006 = vand.u32 %v3005, 4294901760
      %3007 = vmatpush.msra.mxu0 %v3006
      %v3008 = vand.u32 %v2887, 4294901760
      %3009 = vmatmul.f32.gmra.mxu0 %v3008
      %v3010 = vpop.f32.mrf.mxu0
      %v3011 = vadd.f32 %v2987, %v3010
      %3012 = vdwg.mxu0
      %3013 = vmatpush.msra.mxu0 0.0
      %3014 = vmatpush.msra.mxu0 0.0
      %3015 = vmatpush.msra.mxu0 0.0
      %3016 = vmatpush.msra.mxu0 0.0
      %3017 = vmatpush.msra.mxu0 0.0
      %3018 = vmatpush.msra.mxu0 0.0
      %3019 = vmatpush.msra.mxu0 0.0
      %3020 = vmatpush.msra.mxu0 0.0
      %3021 = vmatpush.msra.mxu0 0.0
      %3022 = vmatpush.msra.mxu0 0.0
      %3023 = vmatpush.msra.mxu0 0.0
      %3024 = vmatpush.msra.mxu0 0.0
      %3025 = vmatpush.msra.mxu0 0.0
      %3026 = vmatpush.msra.mxu0 0.0
      %3027 = vmatpush.msra.mxu0 0.0
      %v3028 = vand.u32 %v2883, 4294901760
      %3029 = vmatpush.msra.mxu0 %v3028
      %v3030 = vand.u32 %v2887, 4294901760
      %3031 = vmatmul.f32.gmra.mxu0 %v3030
      %v3032 = vpop.f32.mrf.mxu0
      %v3033 = vadd.f32 %v3011, %v3032
      %3034 = vdwg.mxu0
      %3035 = vmatpush.msra.mxu0 0.0
      %3036 = vmatpush.msra.mxu0 0.0
      %3037 = vmatpush.msra.mxu0 0.0
      %3038 = vmatpush.msra.mxu0 0.0
      %3039 = vmatpush.msra.mxu0 0.0
      %3040 = vmatpush.msra.mxu0 0.0
      %3041 = vmatpush.msra.mxu0 0.0
      %3042 = vmatpush.msra.mxu0 0.0
      %3043 = vmatpush.msra.mxu0 0.0
      %3044 = vmatpush.msra.mxu0 0.0
      %3045 = vmatpush.msra.mxu0 0.0
      %3046 = vmatpush.msra.mxu0 0.0
      %3047 = vmatpush.msra.mxu0 0.0
      %3048 = vmatpush.msra.mxu0 0.0
      %3049 = vmatpush.msra.mxu0 0.0
      %v3050 = vand.u32 %v2881, 4294901760
      %3051 = vmatpush.msra.mxu0 %v3050
      %v3052 = vand.u32 %v2887, 4294901760
      %v3053 = vsub.f32 %v2887, %v3052
      %v3054 = vand.u32 %v3053, 4294901760
      %v3055 = vsub.f32 %v3053, %v3054
      %v3056 = vand.u32 %v3055, 4294901760
      %3057 = vmatmul.f32.gmra.mxu0 %v3056
      %v3058 = vpop.f32.mrf.mxu0
      %v3059 = vadd.f32 0.0, %v3058
      %3060 = vdwg.mxu0
      %3061 = vmatpush.msra.mxu0 0.0
      %3062 = vmatpush.msra.mxu0 0.0
      %3063 = vmatpush.msra.mxu0 0.0
      %3064 = vmatpush.msra.mxu0 0.0
      %3065 = vmatpush.msra.mxu0 0.0
      %3066 = vmatpush.msra.mxu0 0.0
      %3067 = vmatpush.msra.mxu0 0.0
      %3068 = vmatpush.msra.mxu0 0.0
      %3069 = vmatpush.msra.mxu0 0.0
      %3070 = vmatpush.msra.mxu0 0.0
      %3071 = vmatpush.msra.mxu0 0.0
      %3072 = vmatpush.msra.mxu0 0.0
      %3073 = vmatpush.msra.mxu0 0.0
      %3074 = vmatpush.msra.mxu0 0.0
      %3075 = vmatpush.msra.mxu0 0.0
      %v3076 = vand.u32 %v2881, 4294901760
      %v3077 = vsub.f32 %v2881, %v3076
      %v3078 = vand.u32 %v3077, 4294901760
      %v3079 = vsub.f32 %v3077, %v3078
      %v3080 = vand.u32 %v3079, 4294901760
      %3081 = vmatpush.msra.mxu0 %v3080
      %v3082 = vand.u32 %v2887, 4294901760
      %3083 = vmatmul.f32.gmra.mxu0 %v3082
      %v3084 = vpop.f32.mrf.mxu0
      %v3085 = vadd.f32 %v3059, %v3084
      %3086 = vdwg.mxu0
      %3087 = vmatpush.msra.mxu0 0.0
      %3088 = vmatpush.msra.mxu0 0.0
      %3089 = vmatpush.msra.mxu0 0.0
      %3090 = vmatpush.msra.mxu0 0.0
      %3091 = vmatpush.msra.mxu0 0.0
      %3092 = vmatpush.msra.mxu0 0.0
      %3093 = vmatpush.msra.mxu0 0.0
      %3094 = vmatpush.msra.mxu0 0.0
      %3095 = vmatpush.msra.mxu0 0.0
      %3096 = vmatpush.msra.mxu0 0.0
      %3097 = vmatpush.msra.mxu0 0.0
      %3098 = vmatpush.msra.mxu0 0.0
      %3099 = vmatpush.msra.mxu0 0.0
      %3100 = vmatpush.msra.mxu0 0.0
      %3101 = vmatpush.msra.mxu0 0.0
      %v3102 = vand.u32 %v2881, 4294901760
      %v3103 = vsub.f32 %v2881, %v3102
      %3104 = vmatpush.msra.mxu0 %v3103
      %v3105 = vand.u32 %v2887, 4294901760
      %v3106 = vsub.f32 %v2887, %v3105
      %3107 = vmatmul.f32.gmra.mxu0 %v3106
      %v3108 = vpop.f32.mrf.mxu0
      %v3109 = vadd.f32 %v3085, %v3108
      %3110 = vdwg.mxu0
      %3111 = vmatpush.msra.mxu0 0.0
      %3112 = vmatpush.msra.mxu0 0.0
      %3113 = vmatpush.msra.mxu0 0.0
      %3114 = vmatpush.msra.mxu0 0.0
      %3115 = vmatpush.msra.mxu0 0.0
      %3116 = vmatpush.msra.mxu0 0.0
      %3117 = vmatpush.msra.mxu0 0.0
      %3118 = vmatpush.msra.mxu0 0.0
      %3119 = vmatpush.msra.mxu0 0.0
      %3120 = vmatpush.msra.mxu0 0.0
      %3121 = vmatpush.msra.mxu0 0.0
      %3122 = vmatpush.msra.mxu0 0.0
      %3123 = vmatpush.msra.mxu0 0.0
      %3124 = vmatpush.msra.mxu0 0.0
      %3125 = vmatpush.msra.mxu0 0.0
      %v3126 = vand.u32 %v2881, 4294901760
      %3127 = vmatpush.msra.mxu0 %v3126
      %v3128 = vand.u32 %v2887, 4294901760
      %v3129 = vsub.f32 %v2887, %v3128
      %v3130 = vand.u32 %v3129, 4294901760
      %3131 = vmatmul.f32.gmra.mxu0 %v3130
      %v3132 = vpop.f32.mrf.mxu0
      %v3133 = vadd.f32 %v3109, %v3132
      %3134 = vdwg.mxu0
      %3135 = vmatpush.msra.mxu0 0.0
      %3136 = vmatpush.msra.mxu0 0.0
      %3137 = vmatpush.msra.mxu0 0.0
      %3138 = vmatpush.msra.mxu0 0.0
      %3139 = vmatpush.msra.mxu0 0.0
      %3140 = vmatpush.msra.mxu0 0.0
      %3141 = vmatpush.msra.mxu0 0.0
      %3142 = vmatpush.msra.mxu0 0.0
      %3143 = vmatpush.msra.mxu0 0.0
      %3144 = vmatpush.msra.mxu0 0.0
      %3145 = vmatpush.msra.mxu0 0.0
      %3146 = vmatpush.msra.mxu0 0.0
      %3147 = vmatpush.msra.mxu0 0.0
      %3148 = vmatpush.msra.mxu0 0.0
      %3149 = vmatpush.msra.mxu0 0.0
      %v3150 = vand.u32 %v2881, 4294901760
      %v3151 = vsub.f32 %v2881, %v3150
      %v3152 = vand.u32 %v3151, 4294901760
      %3153 = vmatpush.msra.mxu0 %v3152
      %v3154 = vand.u32 %v2887, 4294901760
      %3155 = vmatmul.f32.gmra.mxu0 %v3154
      %v3156 = vpop.f32.mrf.mxu0
      %v3157 = vadd.f32 %v3133, %v3156
      %3158 = vdwg.mxu0
      %3159 = vmatpush.msra.mxu0 0.0
      %3160 = vmatpush.msra.mxu0 0.0
      %3161 = vmatpush.msra.mxu0 0.0
      %3162 = vmatpush.msra.mxu0 0.0
      %3163 = vmatpush.msra.mxu0 0.0
      %3164 = vmatpush.msra.mxu0 0.0
      %3165 = vmatpush.msra.mxu0 0.0
      %3166 = vmatpush.msra.mxu0 0.0
      %3167 = vmatpush.msra.mxu0 0.0
      %3168 = vmatpush.msra.mxu0 0.0
      %3169 = vmatpush.msra.mxu0 0.0
      %3170 = vmatpush.msra.mxu0 0.0
      %3171 = vmatpush.msra.mxu0 0.0
      %3172 = vmatpush.msra.mxu0 0.0
      %3173 = vmatpush.msra.mxu0 0.0
      %v3174 = vand.u32 %v2881, 4294901760
      %3175 = vmatpush.msra.mxu0 %v3174
      %v3176 = vand.u32 %v2887, 4294901760
      %3177 = vmatmul.f32.gmra.mxu0 %v3176
      %v3178 = vpop.f32.mrf.mxu0
      %v3179 = vadd.f32 %v3157, %v3178
      %3180 = vdwg.mxu0
      %v3181 = vadd.f32 %v2874, %v3033
      %v3182 = vadd.f32 %v2875, %v3179
      %3184 = vset.pattern.permute.xlu0 0
      %3185 = vperm.xlu0 %3184, %v422
      %v3186 = vpop.permute.xlu0 %3185
      %v3188 = vadd.f32 %v3181, %v3186
      %v3189 = vadd.f32 %v3182, %v3186
      %v3190 = vmax.f32 %v3188, 0.0
      %v3191 = vmax.f32 %v3189, 0.0
      %v3192 = vld [vmem:[%s403] sm:$0x3]
      %v3194 = vperm.slane %v3192, 0
      %v3195 = vperm.slane %v3192, 1
      %3196 = vrot.lane.b32.xlu0 %v3194, 110
      %v3197 = vpop.permute.xlu0 %3196
      %3198 = vrot.lane.b32.xlu0 %v3195, 110
      %v3199 = vpop.permute.xlu0 %3198
      %v3200 = vsel %vm1654, %v3197, %v3199
      %v3203 = vmul.f32 %v3190, %v3200
      %v3204 = vmul.f32 %v3191, %v3199
      %3207 = vrot.lane.b32.xlu0 %v3203, 18
      %v3208 = vpop.permute.xlu0 %3207
      %3209 = vrot.lane.b32.xlu0 %v3204, 18
      %v3210 = vpop.permute.xlu0 %3209
      %vm3211 = vcmask 146432
      %v3212 = vsel %vm3211, %v3208, %v3210
      %vm3215 = vcmask 1043600
      %3216 = vst.msk [vmem:[#allocation2 + $0x28] sm:$0xf] %vm3215, %v3208
      %vm3217 = vcmask 863232
      %3218 = vst.msk [vmem:[#allocation2 + $0x30] sm:$0xf] %vm3217, %v3212
      %vm3219 = vcmask 142472
      %3220 = vst.msk [vmem:[#allocation2 + $0x28] sm:$0xf] %vm3219, 0.0
      %vm3221 = vcmask 872272
      %3222 = vst.msk [vmem:[#allocation2 + $0x30] sm:$0xf] %vm3221, 0.0
      %v3223 = vld [vmem:[%s5] sm:$0xf]
      %v3224 = vld [vmem:[%s4] sm:$0xf]
      %v3225 = vld [vmem:[#allocation2 + $0x8] sm:$0xff]
      %v3226 = vld [vmem:[#allocation2 + $0x10] sm:$0xff]
      %v3227 = vld [vmem:[#allocation2 + $0x28] sm:$0xf]
      %v3228 = vld [vmem:[#allocation2 + $0x30] sm:$0xf]
      %s3229 = scalar_lea.vmem %s4, 4
      %v3230 = vld [vmem:[%s3229] sm:$0xf]
      %3235 = vrot.lane.b32.xlu0 %v3225, 110
      %v3236 = vpop.permute.xlu0 %3235
      %3237 = vrot.lane.b32.xlu0 %v3226, 110
      %v3238 = vpop.permute.xlu0 %3237
      %3239 = vrot.lane.b32.xlu0 %v3227, 110
      %v3240 = vpop.permute.xlu0 %3239
      %3241 = vrot.lane.b32.xlu0 %v3228, 110
      %v3242 = vpop.permute.xlu0 %3241
      %v3243 = vsel %vm1654, %v3236, %v3238
      %v3244 = vsel %vm1654, %v3240, %v3242
      %vm3247 = vcmask 97280
      %v3249 = vsel %vm3247, %v3230, 0
      %vm3251 = vcmask 1043456
      %v3252 = vsel %vm3251, %v3244, 0
      %v3254 = vsel %vm3251, %v3242, 0
      %3256 = vmatpush.msra.mxu0 0.0
      %3257 = vmatpush.msra.mxu0 0.0
      %3258 = vmatpush.msra.mxu0 0.0
      %3259 = vmatpush.msra.mxu0 0.0
      %3260 = vmatpush.msra.mxu0 0.0
      %3261 = vmatpush.msra.mxu0 0.0
      %3262 = vmatpush.msra.mxu0 0.0
      %3263 = vmatpush.msra.mxu0 0.0
      %3264 = vmatpush.msra.mxu0 0.0
      %3265 = vmatpush.msra.mxu0 0.0
      %3266 = vmatpush.msra.mxu0 0.0
      %3267 = vmatpush.msra.mxu0 0.0
      %3268 = vmatpush.msra.mxu0 0.0
      %3269 = vmatpush.msra.mxu0 0.0
      %v3270 = vand.u32 %v3252, 4294901760
      %3271 = vmatpush.msra.mxu0 %v3270
      %v3272 = vand.u32 %v3243, 4294901760
      %3273 = vmatpush.msra.mxu0 %v3272
      %v3274 = vand.u32 %v3249, 4294901760
      %v3275 = vsub.f32 %v3249, %v3274
      %v3276 = vand.u32 %v3275, 4294901760
      %v3277 = vsub.f32 %v3275, %v3276
      %v3278 = vand.u32 %v3277, 4294901760
      %3279 = vmatmul.f32.gmra.mxu0 %v3278
      %v3280 = vpop.f32.mrf.mxu0
      %v3281 = vadd.f32 0.0, %v3280
      %3282 = vdwg.mxu0
      %3283 = vmatpush.msra.mxu0 0.0
      %3284 = vmatpush.msra.mxu0 0.0
      %3285 = vmatpush.msra.mxu0 0.0
      %3286 = vmatpush.msra.mxu0 0.0
      %3287 = vmatpush.msra.mxu0 0.0
      %3288 = vmatpush.msra.mxu0 0.0
      %3289 = vmatpush.msra.mxu0 0.0
      %3290 = vmatpush.msra.mxu0 0.0
      %3291 = vmatpush.msra.mxu0 0.0
      %3292 = vmatpush.msra.mxu0 0.0
      %3293 = vmatpush.msra.mxu0 0.0
      %3294 = vmatpush.msra.mxu0 0.0
      %3295 = vmatpush.msra.mxu0 0.0
      %3296 = vmatpush.msra.mxu0 0.0
      %v3297 = vand.u32 %v3252, 4294901760
      %v3298 = vsub.f32 %v3252, %v3297
      %v3299 = vand.u32 %v3298, 4294901760
      %v3300 = vsub.f32 %v3298, %v3299
      %v3301 = vand.u32 %v3300, 4294901760
      %3302 = vmatpush.msra.mxu0 %v3301
      %v3303 = vand.u32 %v3243, 4294901760
      %v3304 = vsub.f32 %v3243, %v3303
      %v3305 = vand.u32 %v3304, 4294901760
      %v3306 = vsub.f32 %v3304, %v3305
      %v3307 = vand.u32 %v3306, 4294901760
      %3308 = vmatpush.msra.mxu0 %v3307
      %v3309 = vand.u32 %v3249, 4294901760
      %3310 = vmatmul.f32.gmra.mxu0 %v3309
      %v3311 = vpop.f32.mrf.mxu0
      %v3312 = vadd.f32 %v3281, %v3311
      %3313 = vdwg.mxu0
      %3314 = vmatpush.msra.mxu0 0.0
      %3315 = vmatpush.msra.mxu0 0.0
      %3316 = vmatpush.msra.mxu0 0.0
      %3317 = vmatpush.msra.mxu0 0.0
      %3318 = vmatpush.msra.mxu0 0.0
      %3319 = vmatpush.msra.mxu0 0.0
      %3320 = vmatpush.msra.mxu0 0.0
      %3321 = vmatpush.msra.mxu0 0.0
      %3322 = vmatpush.msra.mxu0 0.0
      %3323 = vmatpush.msra.mxu0 0.0
      %3324 = vmatpush.msra.mxu0 0.0
      %3325 = vmatpush.msra.mxu0 0.0
      %3326 = vmatpush.msra.mxu0 0.0
      %3327 = vmatpush.msra.mxu0 0.0
      %v3328 = vand.u32 %v3252, 4294901760
      %v3329 = vsub.f32 %v3252, %v3328
      %3330 = vmatpush.msra.mxu0 %v3329
      %v3331 = vand.u32 %v3243, 4294901760
      %v3332 = vsub.f32 %v3243, %v3331
      %3333 = vmatpush.msra.mxu0 %v3332
      %v3334 = vand.u32 %v3249, 4294901760
      %v3335 = vsub.f32 %v3249, %v3334
      %3336 = vmatmul.f32.gmra.mxu0 %v3335
      %v3337 = vpop.f32.mrf.mxu0
      %v3338 = vadd.f32 %v3312, %v3337
      %3339 = vdwg.mxu0
      %3340 = vmatpush.msra.mxu0 0.0
      %3341 = vmatpush.msra.mxu0 0.0
      %3342 = vmatpush.msra.mxu0 0.0
      %3343 = vmatpush.msra.mxu0 0.0
      %3344 = vmatpush.msra.mxu0 0.0
      %3345 = vmatpush.msra.mxu0 0.0
      %3346 = vmatpush.msra.mxu0 0.0
      %3347 = vmatpush.msra.mxu0 0.0
      %3348 = vmatpush.msra.mxu0 0.0
      %3349 = vmatpush.msra.mxu0 0.0
      %3350 = vmatpush.msra.mxu0 0.0
      %3351 = vmatpush.msra.mxu0 0.0
      %3352 = vmatpush.msra.mxu0 0.0
      %3353 = vmatpush.msra.mxu0 0.0
      %v3354 = vand.u32 %v3252, 4294901760
      %3355 = vmatpush.msra.mxu0 %v3354
      %v3356 = vand.u32 %v3243, 4294901760
      %3357 = vmatpush.msra.mxu0 %v3356
      %v3358 = vand.u32 %v3249, 4294901760
      %v3359 = vsub.f32 %v3249, %v3358
      %v3360 = vand.u32 %v3359, 4294901760
      %3361 = vmatmul.f32.gmra.mxu0 %v3360
      %v3362 = vpop.f32.mrf.mxu0
      %v3363 = vadd.f32 %v3338, %v3362
      %3364 = vdwg.mxu0
      %3365 = vmatpush.msra.mxu0 0.0
      %3366 = vmatpush.msra.mxu0 0.0
      %3367 = vmatpush.msra.mxu0 0.0
      %3368 = vmatpush.msra.mxu0 0.0
      %3369 = vmatpush.msra.mxu0 0.0
      %3370 = vmatpush.msra.mxu0 0.0
      %3371 = vmatpush.msra.mxu0 0.0
      %3372 = vmatpush.msra.mxu0 0.0
      %3373 = vmatpush.msra.mxu0 0.0
      %3374 = vmatpush.msra.mxu0 0.0
      %3375 = vmatpush.msra.mxu0 0.0
      %3376 = vmatpush.msra.mxu0 0.0
      %3377 = vmatpush.msra.mxu0 0.0
      %3378 = vmatpush.msra.mxu0 0.0
      %v3379 = vand.u32 %v3252, 4294901760
      %v3380 = vsub.f32 %v3252, %v3379
      %v3381 = vand.u32 %v3380, 4294901760
      %3382 = vmatpush.msra.mxu0 %v3381
      %v3383 = vand.u32 %v3243, 4294901760
      %v3384 = vsub.f32 %v3243, %v3383
      %v3385 = vand.u32 %v3384, 4294901760
      %3386 = vmatpush.msra.mxu0 %v3385
      %v3387 = vand.u32 %v3249, 4294901760
      %3388 = vmatmul.f32.gmra.mxu0 %v3387
      %v3389 = vpop.f32.mrf.mxu0
      %v3390 = vadd.f32 %v3363, %v3389
      %3391 = vdwg.mxu0
      %3392 = vmatpush.msra.mxu0 0.0
      %3393 = vmatpush.msra.mxu0 0.0
      %3394 = vmatpush.msra.mxu0 0.0
      %3395 = vmatpush.msra.mxu0 0.0
      %3396 = vmatpush.msra.mxu0 0.0
      %3397 = vmatpush.msra.mxu0 0.0
      %3398 = vmatpush.msra.mxu0 0.0
      %3399 = vmatpush.msra.mxu0 0.0
      %3400 = vmatpush.msra.mxu0 0.0
      %3401 = vmatpush.msra.mxu0 0.0
      %3402 = vmatpush.msra.mxu0 0.0
      %3403 = vmatpush.msra.mxu0 0.0
      %3404 = vmatpush.msra.mxu0 0.0
      %3405 = vmatpush.msra.mxu0 0.0
      %v3406 = vand.u32 %v3252, 4294901760
      %3407 = vmatpush.msra.mxu0 %v3406
      %v3408 = vand.u32 %v3243, 4294901760
      %3409 = vmatpush.msra.mxu0 %v3408
      %v3410 = vand.u32 %v3249, 4294901760
      %3411 = vmatmul.f32.gmra.mxu0 %v3410
      %v3412 = vpop.f32.mrf.mxu0
      %v3413 = vadd.f32 %v3390, %v3412
      %3414 = vdwg.mxu0
      %3415 = vmatpush.msra.mxu0 0.0
      %3416 = vmatpush.msra.mxu0 0.0
      %3417 = vmatpush.msra.mxu0 0.0
      %3418 = vmatpush.msra.mxu0 0.0
      %3419 = vmatpush.msra.mxu0 0.0
      %3420 = vmatpush.msra.mxu0 0.0
      %3421 = vmatpush.msra.mxu0 0.0
      %3422 = vmatpush.msra.mxu0 0.0
      %3423 = vmatpush.msra.mxu0 0.0
      %3424 = vmatpush.msra.mxu0 0.0
      %3425 = vmatpush.msra.mxu0 0.0
      %3426 = vmatpush.msra.mxu0 0.0
      %3427 = vmatpush.msra.mxu0 0.0
      %3428 = vmatpush.msra.mxu0 0.0
      %v3429 = vand.u32 %v3254, 4294901760
      %3430 = vmatpush.msra.mxu0 %v3429
      %v3431 = vand.u32 %v3238, 4294901760
      %3432 = vmatpush.msra.mxu0 %v3431
      %v3433 = vand.u32 %v3249, 4294901760
      %v3434 = vsub.f32 %v3249, %v3433
      %v3435 = vand.u32 %v3434, 4294901760
      %v3436 = vsub.f32 %v3434, %v3435
      %v3437 = vand.u32 %v3436, 4294901760
      %3438 = vmatmul.f32.gmra.mxu0 %v3437
      %v3439 = vpop.f32.mrf.mxu0
      %v3440 = vadd.f32 0.0, %v3439
      %3441 = vdwg.mxu0
      %3442 = vmatpush.msra.mxu0 0.0
      %3443 = vmatpush.msra.mxu0 0.0
      %3444 = vmatpush.msra.mxu0 0.0
      %3445 = vmatpush.msra.mxu0 0.0
      %3446 = vmatpush.msra.mxu0 0.0
      %3447 = vmatpush.msra.mxu0 0.0
      %3448 = vmatpush.msra.mxu0 0.0
      %3449 = vmatpush.msra.mxu0 0.0
      %3450 = vmatpush.msra.mxu0 0.0
      %3451 = vmatpush.msra.mxu0 0.0
      %3452 = vmatpush.msra.mxu0 0.0
      %3453 = vmatpush.msra.mxu0 0.0
      %3454 = vmatpush.msra.mxu0 0.0
      %3455 = vmatpush.msra.mxu0 0.0
      %v3456 = vand.u32 %v3254, 4294901760
      %v3457 = vsub.f32 %v3254, %v3456
      %v3458 = vand.u32 %v3457, 4294901760
      %v3459 = vsub.f32 %v3457, %v3458
      %v3460 = vand.u32 %v3459, 4294901760
      %3461 = vmatpush.msra.mxu0 %v3460
      %v3462 = vand.u32 %v3238, 4294901760
      %v3463 = vsub.f32 %v3238, %v3462
      %v3464 = vand.u32 %v3463, 4294901760
      %v3465 = vsub.f32 %v3463, %v3464
      %v3466 = vand.u32 %v3465, 4294901760
      %3467 = vmatpush.msra.mxu0 %v3466
      %v3468 = vand.u32 %v3249, 4294901760
      %3469 = vmatmul.f32.gmra.mxu0 %v3468
      %v3470 = vpop.f32.mrf.mxu0
      %v3471 = vadd.f32 %v3440, %v3470
      %3472 = vdwg.mxu0
      %3473 = vmatpush.msra.mxu0 0.0
      %3474 = vmatpush.msra.mxu0 0.0
      %3475 = vmatpush.msra.mxu0 0.0
      %3476 = vmatpush.msra.mxu0 0.0
      %3477 = vmatpush.msra.mxu0 0.0
      %3478 = vmatpush.msra.mxu0 0.0
      %3479 = vmatpush.msra.mxu0 0.0
      %3480 = vmatpush.msra.mxu0 0.0
      %3481 = vmatpush.msra.mxu0 0.0
      %3482 = vmatpush.msra.mxu0 0.0
      %3483 = vmatpush.msra.mxu0 0.0
      %3484 = vmatpush.msra.mxu0 0.0
      %3485 = vmatpush.msra.mxu0 0.0
      %3486 = vmatpush.msra.mxu0 0.0
      %v3487 = vand.u32 %v3254, 4294901760
      %v3488 = vsub.f32 %v3254, %v3487
      %3489 = vmatpush.msra.mxu0 %v3488
      %v3490 = vand.u32 %v3238, 4294901760
      %v3491 = vsub.f32 %v3238, %v3490
      %3492 = vmatpush.msra.mxu0 %v3491
      %v3493 = vand.u32 %v3249, 4294901760
      %v3494 = vsub.f32 %v3249, %v3493
      %3495 = vmatmul.f32.gmra.mxu0 %v3494
      %v3496 = vpop.f32.mrf.mxu0
      %v3497 = vadd.f32 %v3471, %v3496
      %3498 = vdwg.mxu0
      %3499 = vmatpush.msra.mxu0 0.0
      %3500 = vmatpush.msra.mxu0 0.0
      %3501 = vmatpush.msra.mxu0 0.0
      %3502 = vmatpush.msra.mxu0 0.0
      %3503 = vmatpush.msra.mxu0 0.0
      %3504 = vmatpush.msra.mxu0 0.0
      %3505 = vmatpush.msra.mxu0 0.0
      %3506 = vmatpush.msra.mxu0 0.0
      %3507 = vmatpush.msra.mxu0 0.0
      %3508 = vmatpush.msra.mxu0 0.0
      %3509 = vmatpush.msra.mxu0 0.0
      %3510 = vmatpush.msra.mxu0 0.0
      %3511 = vmatpush.msra.mxu0 0.0
      %3512 = vmatpush.msra.mxu0 0.0
      %v3513 = vand.u32 %v3254, 4294901760
      %3514 = vmatpush.msra.mxu0 %v3513
      %v3515 = vand.u32 %v3238, 4294901760
      %3516 = vmatpush.msra.mxu0 %v3515
      %v3517 = vand.u32 %v3249, 4294901760
      %v3518 = vsub.f32 %v3249, %v3517
      %v3519 = vand.u32 %v3518, 4294901760
      %3520 = vmatmul.f32.gmra.mxu0 %v3519
      %v3521 = vpop.f32.mrf.mxu0
      %v3522 = vadd.f32 %v3497, %v3521
      %3523 = vdwg.mxu0
      %3524 = vmatpush.msra.mxu0 0.0
      %3525 = vmatpush.msra.mxu0 0.0
      %3526 = vmatpush.msra.mxu0 0.0
      %3527 = vmatpush.msra.mxu0 0.0
      %3528 = vmatpush.msra.mxu0 0.0
      %3529 = vmatpush.msra.mxu0 0.0
      %3530 = vmatpush.msra.mxu0 0.0
      %3531 = vmatpush.msra.mxu0 0.0
      %3532 = vmatpush.msra.mxu0 0.0
      %3533 = vmatpush.msra.mxu0 0.0
      %3534 = vmatpush.msra.mxu0 0.0
      %3535 = vmatpush.msra.mxu0 0.0
      %3536 = vmatpush.msra.mxu0 0.0
      %3537 = vmatpush.msra.mxu0 0.0
      %v3538 = vand.u32 %v3254, 4294901760
      %v3539 = vsub.f32 %v3254, %v3538
      %v3540 = vand.u32 %v3539, 4294901760
      %3541 = vmatpush.msra.mxu0 %v3540
      %v3542 = vand.u32 %v3238, 4294901760
      %v3543 = vsub.f32 %v3238, %v3542
      %v3544 = vand.u32 %v3543, 4294901760
      %3545 = vmatpush.msra.mxu0 %v3544
      %v3546 = vand.u32 %v3249, 4294901760
      %3547 = vmatmul.f32.gmra.mxu0 %v3546
      %v3548 = vpop.f32.mrf.mxu0
      %v3549 = vadd.f32 %v3522, %v3548
      %3550 = vdwg.mxu0
      %3551 = vmatpush.msra.mxu0 0.0
      %3552 = vmatpush.msra.mxu0 0.0
      %3553 = vmatpush.msra.mxu0 0.0
      %3554 = vmatpush.msra.mxu0 0.0
      %3555 = vmatpush.msra.mxu0 0.0
      %3556 = vmatpush.msra.mxu0 0.0
      %3557 = vmatpush.msra.mxu0 0.0
      %3558 = vmatpush.msra.mxu0 0.0
      %3559 = vmatpush.msra.mxu0 0.0
      %3560 = vmatpush.msra.mxu0 0.0
      %3561 = vmatpush.msra.mxu0 0.0
      %3562 = vmatpush.msra.mxu0 0.0
      %3563 = vmatpush.msra.mxu0 0.0
      %3564 = vmatpush.msra.mxu0 0.0
      %v3565 = vand.u32 %v3254, 4294901760
      %3566 = vmatpush.msra.mxu0 %v3565
      %v3567 = vand.u32 %v3238, 4294901760
      %3568 = vmatpush.msra.mxu0 %v3567
      %v3569 = vand.u32 %v3249, 4294901760
      %3570 = vmatmul.f32.gmra.mxu0 %v3569
      %v3571 = vpop.f32.mrf.mxu0
      %v3572 = vadd.f32 %v3549, %v3571
      %3573 = vdwg.mxu0
      %3574 = vrot.lane.b32.xlu0 %v3225, 111
      %v3575 = vpop.permute.xlu0 %3574
      %3576 = vrot.lane.b32.xlu0 %v3226, 111
      %v3577 = vpop.permute.xlu0 %3576
      %3578 = vrot.lane.b32.xlu0 %v3227, 111
      %v3579 = vpop.permute.xlu0 %3578
      %3580 = vrot.lane.b32.xlu0 %v3228, 111
      %v3581 = vpop.permute.xlu0 %3580
      %v3582 = vsel %vm1347, %v3575, %v3577
      %v3583 = vsel %vm1347, %v3579, %v3581
      %v3587 = vsel %vm3247, %v3224, 0
      %v3589 = vsel %vm3251, %v3583, 0
      %v3591 = vsel %vm3251, %v3581, 0
      %3593 = vmatpush.msra.mxu0 0.0
      %3594 = vmatpush.msra.mxu0 0.0
      %3595 = vmatpush.msra.mxu0 0.0
      %3596 = vmatpush.msra.mxu0 0.0
      %3597 = vmatpush.msra.mxu0 0.0
      %3598 = vmatpush.msra.mxu0 0.0
      %3599 = vmatpush.msra.mxu0 0.0
      %3600 = vmatpush.msra.mxu0 0.0
      %3601 = vmatpush.msra.mxu0 0.0
      %3602 = vmatpush.msra.mxu0 0.0
      %3603 = vmatpush.msra.mxu0 0.0
      %3604 = vmatpush.msra.mxu0 0.0
      %3605 = vmatpush.msra.mxu0 0.0
      %3606 = vmatpush.msra.mxu0 0.0
      %v3607 = vand.u32 %v3589, 4294901760
      %3608 = vmatpush.msra.mxu0 %v3607
      %v3609 = vand.u32 %v3582, 4294901760
      %3610 = vmatpush.msra.mxu0 %v3609
      %v3611 = vand.u32 %v3587, 4294901760
      %v3612 = vsub.f32 %v3587, %v3611
      %v3613 = vand.u32 %v3612, 4294901760
      %v3614 = vsub.f32 %v3612, %v3613
      %v3615 = vand.u32 %v3614, 4294901760
      %3616 = vmatmul.f32.gmra.mxu0 %v3615
      %v3617 = vpop.f32.mrf.mxu0
      %v3618 = vadd.f32 %v3413, %v3617
      %3619 = vdwg.mxu0
      %3620 = vmatpush.msra.mxu0 0.0
      %3621 = vmatpush.msra.mxu0 0.0
      %3622 = vmatpush.msra.mxu0 0.0
      %3623 = vmatpush.msra.mxu0 0.0
      %3624 = vmatpush.msra.mxu0 0.0
      %3625 = vmatpush.msra.mxu0 0.0
      %3626 = vmatpush.msra.mxu0 0.0
      %3627 = vmatpush.msra.mxu0 0.0
      %3628 = vmatpush.msra.mxu0 0.0
      %3629 = vmatpush.msra.mxu0 0.0
      %3630 = vmatpush.msra.mxu0 0.0
      %3631 = vmatpush.msra.mxu0 0.0
      %3632 = vmatpush.msra.mxu0 0.0
      %3633 = vmatpush.msra.mxu0 0.0
      %v3634 = vand.u32 %v3589, 4294901760
      %v3635 = vsub.f32 %v3589, %v3634
      %v3636 = vand.u32 %v3635, 4294901760
      %v3637 = vsub.f32 %v3635, %v3636
      %v3638 = vand.u32 %v3637, 4294901760
      %3639 = vmatpush.msra.mxu0 %v3638
      %v3640 = vand.u32 %v3582, 4294901760
      %v3641 = vsub.f32 %v3582, %v3640
      %v3642 = vand.u32 %v3641, 4294901760
      %v3643 = vsub.f32 %v3641, %v3642
      %v3644 = vand.u32 %v3643, 4294901760
      %3645 = vmatpush.msra.mxu0 %v3644
      %v3646 = vand.u32 %v3587, 4294901760
      %3647 = vmatmul.f32.gmra.mxu0 %v3646
      %v3648 = vpop.f32.mrf.mxu0
      %v3649 = vadd.f32 %v3618, %v3648
      %3650 = vdwg.mxu0
      %3651 = vmatpush.msra.mxu0 0.0
      %3652 = vmatpush.msra.mxu0 0.0
      %3653 = vmatpush.msra.mxu0 0.0
      %3654 = vmatpush.msra.mxu0 0.0
      %3655 = vmatpush.msra.mxu0 0.0
      %3656 = vmatpush.msra.mxu0 0.0
      %3657 = vmatpush.msra.mxu0 0.0
      %3658 = vmatpush.msra.mxu0 0.0
      %3659 = vmatpush.msra.mxu0 0.0
      %3660 = vmatpush.msra.mxu0 0.0
      %3661 = vmatpush.msra.mxu0 0.0
      %3662 = vmatpush.msra.mxu0 0.0
      %3663 = vmatpush.msra.mxu0 0.0
      %3664 = vmatpush.msra.mxu0 0.0
      %v3665 = vand.u32 %v3589, 4294901760
      %v3666 = vsub.f32 %v3589, %v3665
      %3667 = vmatpush.msra.mxu0 %v3666
      %v3668 = vand.u32 %v3582, 4294901760
      %v3669 = vsub.f32 %v3582, %v3668
      %3670 = vmatpush.msra.mxu0 %v3669
      %v3671 = vand.u32 %v3587, 4294901760
      %v3672 = vsub.f32 %v3587, %v3671
      %3673 = vmatmul.f32.gmra.mxu0 %v3672
      %v3674 = vpop.f32.mrf.mxu0
      %v3675 = vadd.f32 %v3649, %v3674
      %3676 = vdwg.mxu0
      %3677 = vmatpush.msra.mxu0 0.0
      %3678 = vmatpush.msra.mxu0 0.0
      %3679 = vmatpush.msra.mxu0 0.0
      %3680 = vmatpush.msra.mxu0 0.0
      %3681 = vmatpush.msra.mxu0 0.0
      %3682 = vmatpush.msra.mxu0 0.0
      %3683 = vmatpush.msra.mxu0 0.0
      %3684 = vmatpush.msra.mxu0 0.0
      %3685 = vmatpush.msra.mxu0 0.0
      %3686 = vmatpush.msra.mxu0 0.0
      %3687 = vmatpush.msra.mxu0 0.0
      %3688 = vmatpush.msra.mxu0 0.0
      %3689 = vmatpush.msra.mxu0 0.0
      %3690 = vmatpush.msra.mxu0 0.0
      %v3691 = vand.u32 %v3589, 4294901760
      %3692 = vmatpush.msra.mxu0 %v3691
      %v3693 = vand.u32 %v3582, 4294901760
      %3694 = vmatpush.msra.mxu0 %v3693
      %v3695 = vand.u32 %v3587, 4294901760
      %v3696 = vsub.f32 %v3587, %v3695
      %v3697 = vand.u32 %v3696, 4294901760
      %3698 = vmatmul.f32.gmra.mxu0 %v3697
      %v3699 = vpop.f32.mrf.mxu0
      %v3700 = vadd.f32 %v3675, %v3699
      %3701 = vdwg.mxu0
      %3702 = vmatpush.msra.mxu0 0.0
      %3703 = vmatpush.msra.mxu0 0.0
      %3704 = vmatpush.msra.mxu0 0.0
      %3705 = vmatpush.msra.mxu0 0.0
      %3706 = vmatpush.msra.mxu0 0.0
      %3707 = vmatpush.msra.mxu0 0.0
      %3708 = vmatpush.msra.mxu0 0.0
      %3709 = vmatpush.msra.mxu0 0.0
      %3710 = vmatpush.msra.mxu0 0.0
      %3711 = vmatpush.msra.mxu0 0.0
      %3712 = vmatpush.msra.mxu0 0.0
      %3713 = vmatpush.msra.mxu0 0.0
      %3714 = vmatpush.msra.mxu0 0.0
      %3715 = vmatpush.msra.mxu0 0.0
      %v3716 = vand.u32 %v3589, 4294901760
      %v3717 = vsub.f32 %v3589, %v3716
      %v3718 = vand.u32 %v3717, 4294901760
      %3719 = vmatpush.msra.mxu0 %v3718
      %v3720 = vand.u32 %v3582, 4294901760
      %v3721 = vsub.f32 %v3582, %v3720
      %v3722 = vand.u32 %v3721, 4294901760
      %3723 = vmatpush.msra.mxu0 %v3722
      %v3724 = vand.u32 %v3587, 4294901760
      %3725 = vmatmul.f32.gmra.mxu0 %v3724
      %v3726 = vpop.f32.mrf.mxu0
      %v3727 = vadd.f32 %v3700, %v3726
      %3728 = vdwg.mxu0
      %3729 = vmatpush.msra.mxu0 0.0
      %3730 = vmatpush.msra.mxu0 0.0
      %3731 = vmatpush.msra.mxu0 0.0
      %3732 = vmatpush.msra.mxu0 0.0
      %3733 = vmatpush.msra.mxu0 0.0
      %3734 = vmatpush.msra.mxu0 0.0
      %3735 = vmatpush.msra.mxu0 0.0
      %3736 = vmatpush.msra.mxu0 0.0
      %3737 = vmatpush.msra.mxu0 0.0
      %3738 = vmatpush.msra.mxu0 0.0
      %3739 = vmatpush.msra.mxu0 0.0
      %3740 = vmatpush.msra.mxu0 0.0
      %3741 = vmatpush.msra.mxu0 0.0
      %3742 = vmatpush.msra.mxu0 0.0
      %v3743 = vand.u32 %v3589, 4294901760
      %3744 = vmatpush.msra.mxu0 %v3743
      %v3745 = vand.u32 %v3582, 4294901760
      %3746 = vmatpush.msra.mxu0 %v3745
      %v3747 = vand.u32 %v3587, 4294901760
      %3748 = vmatmul.f32.gmra.mxu0 %v3747
      %v3749 = vpop.f32.mrf.mxu0
      %v3750 = vadd.f32 %v3727, %v3749
      %3751 = vdwg.mxu0
      %3752 = vmatpush.msra.mxu0 0.0
      %3753 = vmatpush.msra.mxu0 0.0
      %3754 = vmatpush.msra.mxu0 0.0
      %3755 = vmatpush.msra.mxu0 0.0
      %3756 = vmatpush.msra.mxu0 0.0
      %3757 = vmatpush.msra.mxu0 0.0
      %3758 = vmatpush.msra.mxu0 0.0
      %3759 = vmatpush.msra.mxu0 0.0
      %3760 = vmatpush.msra.mxu0 0.0
      %3761 = vmatpush.msra.mxu0 0.0
      %3762 = vmatpush.msra.mxu0 0.0
      %3763 = vmatpush.msra.mxu0 0.0
      %3764 = vmatpush.msra.mxu0 0.0
      %3765 = vmatpush.msra.mxu0 0.0
      %v3766 = vand.u32 %v3591, 4294901760
      %3767 = vmatpush.msra.mxu0 %v3766
      %v3768 = vand.u32 %v3577, 4294901760
      %3769 = vmatpush.msra.mxu0 %v3768
      %v3770 = vand.u32 %v3587, 4294901760
      %v3771 = vsub.f32 %v3587, %v3770
      %v3772 = vand.u32 %v3771, 4294901760
      %v3773 = vsub.f32 %v3771, %v3772
      %v3774 = vand.u32 %v3773, 4294901760
      %3775 = vmatmul.f32.gmra.mxu0 %v3774
      %v3776 = vpop.f32.mrf.mxu0
      %v3777 = vadd.f32 %v3572, %v3776
      %3778 = vdwg.mxu0
      %3779 = vmatpush.msra.mxu0 0.0
      %3780 = vmatpush.msra.mxu0 0.0
      %3781 = vmatpush.msra.mxu0 0.0
      %3782 = vmatpush.msra.mxu0 0.0
      %3783 = vmatpush.msra.mxu0 0.0
      %3784 = vmatpush.msra.mxu0 0.0
      %3785 = vmatpush.msra.mxu0 0.0
      %3786 = vmatpush.msra.mxu0 0.0
      %3787 = vmatpush.msra.mxu0 0.0
      %3788 = vmatpush.msra.mxu0 0.0
      %3789 = vmatpush.msra.mxu0 0.0
      %3790 = vmatpush.msra.mxu0 0.0
      %3791 = vmatpush.msra.mxu0 0.0
      %3792 = vmatpush.msra.mxu0 0.0
      %v3793 = vand.u32 %v3591, 4294901760
      %v3794 = vsub.f32 %v3591, %v3793
      %v3795 = vand.u32 %v3794, 4294901760
      %v3796 = vsub.f32 %v3794, %v3795
      %v3797 = vand.u32 %v3796, 4294901760
      %3798 = vmatpush.msra.mxu0 %v3797
      %v3799 = vand.u32 %v3577, 4294901760
      %v3800 = vsub.f32 %v3577, %v3799
      %v3801 = vand.u32 %v3800, 4294901760
      %v3802 = vsub.f32 %v3800, %v3801
      %v3803 = vand.u32 %v3802, 4294901760
      %3804 = vmatpush.msra.mxu0 %v3803
      %v3805 = vand.u32 %v3587, 4294901760
      %3806 = vmatmul.f32.gmra.mxu0 %v3805
      %v3807 = vpop.f32.mrf.mxu0
      %v3808 = vadd.f32 %v3777, %v3807
      %3809 = vdwg.mxu0
      %3810 = vmatpush.msra.mxu0 0.0
      %3811 = vmatpush.msra.mxu0 0.0
      %3812 = vmatpush.msra.mxu0 0.0
      %3813 = vmatpush.msra.mxu0 0.0
      %3814 = vmatpush.msra.mxu0 0.0
      %3815 = vmatpush.msra.mxu0 0.0
      %3816 = vmatpush.msra.mxu0 0.0
      %3817 = vmatpush.msra.mxu0 0.0
      %3818 = vmatpush.msra.mxu0 0.0
      %3819 = vmatpush.msra.mxu0 0.0
      %3820 = vmatpush.msra.mxu0 0.0
      %3821 = vmatpush.msra.mxu0 0.0
      %3822 = vmatpush.msra.mxu0 0.0
      %3823 = vmatpush.msra.mxu0 0.0
      %v3824 = vand.u32 %v3591, 4294901760
      %v3825 = vsub.f32 %v3591, %v3824
      %3826 = vmatpush.msra.mxu0 %v3825
      %v3827 = vand.u32 %v3577, 4294901760
      %v3828 = vsub.f32 %v3577, %v3827
      %3829 = vmatpush.msra.mxu0 %v3828
      %v3830 = vand.u32 %v3587, 4294901760
      %v3831 = vsub.f32 %v3587, %v3830
      %3832 = vmatmul.f32.gmra.mxu0 %v3831
      %v3833 = vpop.f32.mrf.mxu0
      %v3834 = vadd.f32 %v3808, %v3833
      %3835 = vdwg.mxu0
      %3836 = vmatpush.msra.mxu0 0.0
      %3837 = vmatpush.msra.mxu0 0.0
      %3838 = vmatpush.msra.mxu0 0.0
      %3839 = vmatpush.msra.mxu0 0.0
      %3840 = vmatpush.msra.mxu0 0.0
      %3841 = vmatpush.msra.mxu0 0.0
      %3842 = vmatpush.msra.mxu0 0.0
      %3843 = vmatpush.msra.mxu0 0.0
      %3844 = vmatpush.msra.mxu0 0.0
      %3845 = vmatpush.msra.mxu0 0.0
      %3846 = vmatpush.msra.mxu0 0.0
      %3847 = vmatpush.msra.mxu0 0.0
      %3848 = vmatpush.msra.mxu0 0.0
      %3849 = vmatpush.msra.mxu0 0.0
      %v3850 = vand.u32 %v3591, 4294901760
      %3851 = vmatpush.msra.mxu0 %v3850
      %v3852 = vand.u32 %v3577, 4294901760
      %3853 = vmatpush.msra.mxu0 %v3852
      %v3854 = vand.u32 %v3587, 4294901760
      %v3855 = vsub.f32 %v3587, %v3854
      %v3856 = vand.u32 %v3855, 4294901760
      %3857 = vmatmul.f32.gmra.mxu0 %v3856
      %v3858 = vpop.f32.mrf.mxu0
      %v3859 = vadd.f32 %v3834, %v3858
      %3860 = vdwg.mxu0
      %3861 = vmatpush.msra.mxu0 0.0
      %3862 = vmatpush.msra.mxu0 0.0
      %3863 = vmatpush.msra.mxu0 0.0
      %3864 = vmatpush.msra.mxu0 0.0
      %3865 = vmatpush.msra.mxu0 0.0
      %3866 = vmatpush.msra.mxu0 0.0
      %3867 = vmatpush.msra.mxu0 0.0
      %3868 = vmatpush.msra.mxu0 0.0
      %3869 = vmatpush.msra.mxu0 0.0
      %3870 = vmatpush.msra.mxu0 0.0
      %3871 = vmatpush.msra.mxu0 0.0
      %3872 = vmatpush.msra.mxu0 0.0
      %3873 = vmatpush.msra.mxu0 0.0
      %3874 = vmatpush.msra.mxu0 0.0
      %v3875 = vand.u32 %v3591, 4294901760
      %v3876 = vsub.f32 %v3591, %v3875
      %v3877 = vand.u32 %v3876, 4294901760
      %3878 = vmatpush.msra.mxu0 %v3877
      %v3879 = vand.u32 %v3577, 4294901760
      %v3880 = vsub.f32 %v3577, %v3879
      %v3881 = vand.u32 %v3880, 4294901760
      %3882 = vmatpush.msra.mxu0 %v3881
      %v3883 = vand.u32 %v3587, 4294901760
      %3884 = vmatmul.f32.gmra.mxu0 %v3883
      %v3885 = vpop.f32.mrf.mxu0
      %v3886 = vadd.f32 %v3859, %v3885
      %3887 = vdwg.mxu0
      %3888 = vmatpush.msra.mxu0 0.0
      %3889 = vmatpush.msra.mxu0 0.0
      %3890 = vmatpush.msra.mxu0 0.0
      %3891 = vmatpush.msra.mxu0 0.0
      %3892 = vmatpush.msra.mxu0 0.0
      %3893 = vmatpush.msra.mxu0 0.0
      %3894 = vmatpush.msra.mxu0 0.0
      %3895 = vmatpush.msra.mxu0 0.0
      %3896 = vmatpush.msra.mxu0 0.0
      %3897 = vmatpush.msra.mxu0 0.0
      %3898 = vmatpush.msra.mxu0 0.0
      %3899 = vmatpush.msra.mxu0 0.0
      %3900 = vmatpush.msra.mxu0 0.0
      %3901 = vmatpush.msra.mxu0 0.0
      %v3902 = vand.u32 %v3591, 4294901760
      %3903 = vmatpush.msra.mxu0 %v3902
      %v3904 = vand.u32 %v3577, 4294901760
      %3905 = vmatpush.msra.mxu0 %v3904
      %v3906 = vand.u32 %v3587, 4294901760
      %3907 = vmatmul.f32.gmra.mxu0 %v3906
      %v3908 = vpop.f32.mrf.mxu0
      %v3909 = vadd.f32 %v3886, %v3908
      %3910 = vdwg.mxu0
      %s3911 = scalar_lea.vmem %s4, 8
      %v3912 = vld [vmem:[%s3911] sm:$0xf]
      %3913 = vrot.lane.b32.xlu0 %v3225, 109
      %v3914 = vpop.permute.xlu0 %3913
      %3915 = vrot.lane.b32.xlu0 %v3226, 109
      %v3916 = vpop.permute.xlu0 %3915
      %3917 = vrot.lane.b32.xlu0 %v3227, 109
      %v3918 = vpop.permute.xlu0 %3917
      %3919 = vrot.lane.b32.xlu0 %v3228, 109
      %v3920 = vpop.permute.xlu0 %3919
      %v3921 = vsel %vm1961, %v3914, %v3916
      %v3922 = vsel %vm1961, %v3918, %v3920
      %v3926 = vsel %vm3247, %v3912, 0
      %v3928 = vsel %vm3251, %v3922, 0
      %v3930 = vsel %vm3251, %v3920, 0
      %3932 = vmatpush.msra.mxu0 0.0
      %3933 = vmatpush.msra.mxu0 0.0
      %3934 = vmatpush.msra.mxu0 0.0
      %3935 = vmatpush.msra.mxu0 0.0
      %3936 = vmatpush.msra.mxu0 0.0
      %3937 = vmatpush.msra.mxu0 0.0
      %3938 = vmatpush.msra.mxu0 0.0
      %3939 = vmatpush.msra.mxu0 0.0
      %3940 = vmatpush.msra.mxu0 0.0
      %3941 = vmatpush.msra.mxu0 0.0
      %3942 = vmatpush.msra.mxu0 0.0
      %3943 = vmatpush.msra.mxu0 0.0
      %3944 = vmatpush.msra.mxu0 0.0
      %3945 = vmatpush.msra.mxu0 0.0
      %v3946 = vand.u32 %v3928, 4294901760
      %3947 = vmatpush.msra.mxu0 %v3946
      %v3948 = vand.u32 %v3921, 4294901760
      %3949 = vmatpush.msra.mxu0 %v3948
      %v3950 = vand.u32 %v3926, 4294901760
      %v3951 = vsub.f32 %v3926, %v3950
      %v3952 = vand.u32 %v3951, 4294901760
      %v3953 = vsub.f32 %v3951, %v3952
      %v3954 = vand.u32 %v3953, 4294901760
      %3955 = vmatmul.f32.gmra.mxu0 %v3954
      %v3956 = vpop.f32.mrf.mxu0
      %v3957 = vadd.f32 0.0, %v3956
      %3958 = vdwg.mxu0
      %3959 = vmatpush.msra.mxu0 0.0
      %3960 = vmatpush.msra.mxu0 0.0
      %3961 = vmatpush.msra.mxu0 0.0
      %3962 = vmatpush.msra.mxu0 0.0
      %3963 = vmatpush.msra.mxu0 0.0
      %3964 = vmatpush.msra.mxu0 0.0
      %3965 = vmatpush.msra.mxu0 0.0
      %3966 = vmatpush.msra.mxu0 0.0
      %3967 = vmatpush.msra.mxu0 0.0
      %3968 = vmatpush.msra.mxu0 0.0
      %3969 = vmatpush.msra.mxu0 0.0
      %3970 = vmatpush.msra.mxu0 0.0
      %3971 = vmatpush.msra.mxu0 0.0
      %3972 = vmatpush.msra.mxu0 0.0
      %v3973 = vand.u32 %v3928, 4294901760
      %v3974 = vsub.f32 %v3928, %v3973
      %v3975 = vand.u32 %v3974, 4294901760
      %v3976 = vsub.f32 %v3974, %v3975
      %v3977 = vand.u32 %v3976, 4294901760
      %3978 = vmatpush.msra.mxu0 %v3977
      %v3979 = vand.u32 %v3921, 4294901760
      %v3980 = vsub.f32 %v3921, %v3979
      %v3981 = vand.u32 %v3980, 4294901760
      %v3982 = vsub.f32 %v3980, %v3981
      %v3983 = vand.u32 %v3982, 4294901760
      %3984 = vmatpush.msra.mxu0 %v3983
      %v3985 = vand.u32 %v3926, 4294901760
      %3986 = vmatmul.f32.gmra.mxu0 %v3985
      %v3987 = vpop.f32.mrf.mxu0
      %v3988 = vadd.f32 %v3957, %v3987
      %3989 = vdwg.mxu0
      %3990 = vmatpush.msra.mxu0 0.0
      %3991 = vmatpush.msra.mxu0 0.0
      %3992 = vmatpush.msra.mxu0 0.0
      %3993 = vmatpush.msra.mxu0 0.0
      %3994 = vmatpush.msra.mxu0 0.0
      %3995 = vmatpush.msra.mxu0 0.0
      %3996 = vmatpush.msra.mxu0 0.0
      %3997 = vmatpush.msra.mxu0 0.0
      %3998 = vmatpush.msra.mxu0 0.0
      %3999 = vmatpush.msra.mxu0 0.0
      %4000 = vmatpush.msra.mxu0 0.0
      %4001 = vmatpush.msra.mxu0 0.0
      %4002 = vmatpush.msra.mxu0 0.0
      %4003 = vmatpush.msra.mxu0 0.0
      %v4004 = vand.u32 %v3928, 4294901760
      %v4005 = vsub.f32 %v3928, %v4004
      %4006 = vmatpush.msra.mxu0 %v4005
      %v4007 = vand.u32 %v3921, 4294901760
      %v4008 = vsub.f32 %v3921, %v4007
      %4009 = vmatpush.msra.mxu0 %v4008
      %v4010 = vand.u32 %v3926, 4294901760
      %v4011 = vsub.f32 %v3926, %v4010
      %4012 = vmatmul.f32.gmra.mxu0 %v4011
      %v4013 = vpop.f32.mrf.mxu0
      %v4014 = vadd.f32 %v3988, %v4013
      %4015 = vdwg.mxu0
      %4016 = vmatpush.msra.mxu0 0.0
      %4017 = vmatpush.msra.mxu0 0.0
      %4018 = vmatpush.msra.mxu0 0.0
      %4019 = vmatpush.msra.mxu0 0.0
      %4020 = vmatpush.msra.mxu0 0.0
      %4021 = vmatpush.msra.mxu0 0.0
      %4022 = vmatpush.msra.mxu0 0.0
      %4023 = vmatpush.msra.mxu0 0.0
      %4024 = vmatpush.msra.mxu0 0.0
      %4025 = vmatpush.msra.mxu0 0.0
      %4026 = vmatpush.msra.mxu0 0.0
      %4027 = vmatpush.msra.mxu0 0.0
      %4028 = vmatpush.msra.mxu0 0.0
      %4029 = vmatpush.msra.mxu0 0.0
      %v4030 = vand.u32 %v3928, 4294901760
      %4031 = vmatpush.msra.mxu0 %v4030
      %v4032 = vand.u32 %v3921, 4294901760
      %4033 = vmatpush.msra.mxu0 %v4032
      %v4034 = vand.u32 %v3926, 4294901760
      %v4035 = vsub.f32 %v3926, %v4034
      %v4036 = vand.u32 %v4035, 4294901760
      %4037 = vmatmul.f32.gmra.mxu0 %v4036
      %v4038 = vpop.f32.mrf.mxu0
      %v4039 = vadd.f32 %v4014, %v4038
      %4040 = vdwg.mxu0
      %4041 = vmatpush.msra.mxu0 0.0
      %4042 = vmatpush.msra.mxu0 0.0
      %4043 = vmatpush.msra.mxu0 0.0
      %4044 = vmatpush.msra.mxu0 0.0
      %4045 = vmatpush.msra.mxu0 0.0
      %4046 = vmatpush.msra.mxu0 0.0
      %4047 = vmatpush.msra.mxu0 0.0
      %4048 = vmatpush.msra.mxu0 0.0
      %4049 = vmatpush.msra.mxu0 0.0
      %4050 = vmatpush.msra.mxu0 0.0
      %4051 = vmatpush.msra.mxu0 0.0
      %4052 = vmatpush.msra.mxu0 0.0
      %4053 = vmatpush.msra.mxu0 0.0
      %4054 = vmatpush.msra.mxu0 0.0
      %v4055 = vand.u32 %v3928, 4294901760
      %v4056 = vsub.f32 %v3928, %v4055
      %v4057 = vand.u32 %v4056, 4294901760
      %4058 = vmatpush.msra.mxu0 %v4057
      %v4059 = vand.u32 %v3921, 4294901760
      %v4060 = vsub.f32 %v3921, %v4059
      %v4061 = vand.u32 %v4060, 4294901760
      %4062 = vmatpush.msra.mxu0 %v4061
      %v4063 = vand.u32 %v3926, 4294901760
      %4064 = vmatmul.f32.gmra.mxu0 %v4063
      %v4065 = vpop.f32.mrf.mxu0
      %v4066 = vadd.f32 %v4039, %v4065
      %4067 = vdwg.mxu0
      %4068 = vmatpush.msra.mxu0 0.0
      %4069 = vmatpush.msra.mxu0 0.0
      %4070 = vmatpush.msra.mxu0 0.0
      %4071 = vmatpush.msra.mxu0 0.0
      %4072 = vmatpush.msra.mxu0 0.0
      %4073 = vmatpush.msra.mxu0 0.0
      %4074 = vmatpush.msra.mxu0 0.0
      %4075 = vmatpush.msra.mxu0 0.0
      %4076 = vmatpush.msra.mxu0 0.0
      %4077 = vmatpush.msra.mxu0 0.0
      %4078 = vmatpush.msra.mxu0 0.0
      %4079 = vmatpush.msra.mxu0 0.0
      %4080 = vmatpush.msra.mxu0 0.0
      %4081 = vmatpush.msra.mxu0 0.0
      %v4082 = vand.u32 %v3928, 4294901760
      %4083 = vmatpush.msra.mxu0 %v4082
      %v4084 = vand.u32 %v3921, 4294901760
      %4085 = vmatpush.msra.mxu0 %v4084
      %v4086 = vand.u32 %v3926, 4294901760
      %4087 = vmatmul.f32.gmra.mxu0 %v4086
      %v4088 = vpop.f32.mrf.mxu0
      %v4089 = vadd.f32 %v4066, %v4088
      %4090 = vdwg.mxu0
      %4091 = vmatpush.msra.mxu0 0.0
      %4092 = vmatpush.msra.mxu0 0.0
      %4093 = vmatpush.msra.mxu0 0.0
      %4094 = vmatpush.msra.mxu0 0.0
      %4095 = vmatpush.msra.mxu0 0.0
      %4096 = vmatpush.msra.mxu0 0.0
      %4097 = vmatpush.msra.mxu0 0.0
      %4098 = vmatpush.msra.mxu0 0.0
      %4099 = vmatpush.msra.mxu0 0.0
      %4100 = vmatpush.msra.mxu0 0.0
      %4101 = vmatpush.msra.mxu0 0.0
      %4102 = vmatpush.msra.mxu0 0.0
      %4103 = vmatpush.msra.mxu0 0.0
      %4104 = vmatpush.msra.mxu0 0.0
      %v4105 = vand.u32 %v3930, 4294901760
      %4106 = vmatpush.msra.mxu0 %v4105
      %v4107 = vand.u32 %v3916, 4294901760
      %4108 = vmatpush.msra.mxu0 %v4107
      %v4109 = vand.u32 %v3926, 4294901760
      %v4110 = vsub.f32 %v3926, %v4109
      %v4111 = vand.u32 %v4110, 4294901760
      %v4112 = vsub.f32 %v4110, %v4111
      %v4113 = vand.u32 %v4112, 4294901760
      %4114 = vmatmul.f32.gmra.mxu0 %v4113
      %v4115 = vpop.f32.mrf.mxu0
      %v4116 = vadd.f32 0.0, %v4115
      %4117 = vdwg.mxu0
      %4118 = vmatpush.msra.mxu0 0.0
      %4119 = vmatpush.msra.mxu0 0.0
      %4120 = vmatpush.msra.mxu0 0.0
      %4121 = vmatpush.msra.mxu0 0.0
      %4122 = vmatpush.msra.mxu0 0.0
      %4123 = vmatpush.msra.mxu0 0.0
      %4124 = vmatpush.msra.mxu0 0.0
      %4125 = vmatpush.msra.mxu0 0.0
      %4126 = vmatpush.msra.mxu0 0.0
      %4127 = vmatpush.msra.mxu0 0.0
      %4128 = vmatpush.msra.mxu0 0.0
      %4129 = vmatpush.msra.mxu0 0.0
      %4130 = vmatpush.msra.mxu0 0.0
      %4131 = vmatpush.msra.mxu0 0.0
      %v4132 = vand.u32 %v3930, 4294901760
      %v4133 = vsub.f32 %v3930, %v4132
      %v4134 = vand.u32 %v4133, 4294901760
      %v4135 = vsub.f32 %v4133, %v4134
      %v4136 = vand.u32 %v4135, 4294901760
      %4137 = vmatpush.msra.mxu0 %v4136
      %v4138 = vand.u32 %v3916, 4294901760
      %v4139 = vsub.f32 %v3916, %v4138
      %v4140 = vand.u32 %v4139, 4294901760
      %v4141 = vsub.f32 %v4139, %v4140
      %v4142 = vand.u32 %v4141, 4294901760
      %4143 = vmatpush.msra.mxu0 %v4142
      %v4144 = vand.u32 %v3926, 4294901760
      %4145 = vmatmul.f32.gmra.mxu0 %v4144
      %v4146 = vpop.f32.mrf.mxu0
      %v4147 = vadd.f32 %v4116, %v4146
      %4148 = vdwg.mxu0
      %4149 = vmatpush.msra.mxu0 0.0
      %4150 = vmatpush.msra.mxu0 0.0
      %4151 = vmatpush.msra.mxu0 0.0
      %4152 = vmatpush.msra.mxu0 0.0
      %4153 = vmatpush.msra.mxu0 0.0
      %4154 = vmatpush.msra.mxu0 0.0
      %4155 = vmatpush.msra.mxu0 0.0
      %4156 = vmatpush.msra.mxu0 0.0
      %4157 = vmatpush.msra.mxu0 0.0
      %4158 = vmatpush.msra.mxu0 0.0
      %4159 = vmatpush.msra.mxu0 0.0
      %4160 = vmatpush.msra.mxu0 0.0
      %4161 = vmatpush.msra.mxu0 0.0
      %4162 = vmatpush.msra.mxu0 0.0
      %v4163 = vand.u32 %v3930, 4294901760
      %v4164 = vsub.f32 %v3930, %v4163
      %4165 = vmatpush.msra.mxu0 %v4164
      %v4166 = vand.u32 %v3916, 4294901760
      %v4167 = vsub.f32 %v3916, %v4166
      %4168 = vmatpush.msra.mxu0 %v4167
      %v4169 = vand.u32 %v3926, 4294901760
      %v4170 = vsub.f32 %v3926, %v4169
      %4171 = vmatmul.f32.gmra.mxu0 %v4170
      %v4172 = vpop.f32.mrf.mxu0
      %v4173 = vadd.f32 %v4147, %v4172
      %4174 = vdwg.mxu0
      %4175 = vmatpush.msra.mxu0 0.0
      %4176 = vmatpush.msra.mxu0 0.0
      %4177 = vmatpush.msra.mxu0 0.0
      %4178 = vmatpush.msra.mxu0 0.0
      %4179 = vmatpush.msra.mxu0 0.0
      %4180 = vmatpush.msra.mxu0 0.0
      %4181 = vmatpush.msra.mxu0 0.0
      %4182 = vmatpush.msra.mxu0 0.0
      %4183 = vmatpush.msra.mxu0 0.0
      %4184 = vmatpush.msra.mxu0 0.0
      %4185 = vmatpush.msra.mxu0 0.0
      %4186 = vmatpush.msra.mxu0 0.0
      %4187 = vmatpush.msra.mxu0 0.0
      %4188 = vmatpush.msra.mxu0 0.0
      %v4189 = vand.u32 %v3930, 4294901760
      %4190 = vmatpush.msra.mxu0 %v4189
      %v4191 = vand.u32 %v3916, 4294901760
      %4192 = vmatpush.msra.mxu0 %v4191
      %v4193 = vand.u32 %v3926, 4294901760
      %v4194 = vsub.f32 %v3926, %v4193
      %v4195 = vand.u32 %v4194, 4294901760
      %4196 = vmatmul.f32.gmra.mxu0 %v4195
      %v4197 = vpop.f32.mrf.mxu0
      %v4198 = vadd.f32 %v4173, %v4197
      %4199 = vdwg.mxu0
      %4200 = vmatpush.msra.mxu0 0.0
      %4201 = vmatpush.msra.mxu0 0.0
      %4202 = vmatpush.msra.mxu0 0.0
      %4203 = vmatpush.msra.mxu0 0.0
      %4204 = vmatpush.msra.mxu0 0.0
      %4205 = vmatpush.msra.mxu0 0.0
      %4206 = vmatpush.msra.mxu0 0.0
      %4207 = vmatpush.msra.mxu0 0.0
      %4208 = vmatpush.msra.mxu0 0.0
      %4209 = vmatpush.msra.mxu0 0.0
      %4210 = vmatpush.msra.mxu0 0.0
      %4211 = vmatpush.msra.mxu0 0.0
      %4212 = vmatpush.msra.mxu0 0.0
      %4213 = vmatpush.msra.mxu0 0.0
      %v4214 = vand.u32 %v3930, 4294901760
      %v4215 = vsub.f32 %v3930, %v4214
      %v4216 = vand.u32 %v4215, 4294901760
      %4217 = vmatpush.msra.mxu0 %v4216
      %v4218 = vand.u32 %v3916, 4294901760
      %v4219 = vsub.f32 %v3916, %v4218
      %v4220 = vand.u32 %v4219, 4294901760
      %4221 = vmatpush.msra.mxu0 %v4220
      %v4222 = vand.u32 %v3926, 4294901760
      %4223 = vmatmul.f32.gmra.mxu0 %v4222
      %v4224 = vpop.f32.mrf.mxu0
      %v4225 = vadd.f32 %v4198, %v4224
      %4226 = vdwg.mxu0
      %4227 = vmatpush.msra.mxu0 0.0
      %4228 = vmatpush.msra.mxu0 0.0
      %4229 = vmatpush.msra.mxu0 0.0
      %4230 = vmatpush.msra.mxu0 0.0
      %4231 = vmatpush.msra.mxu0 0.0
      %4232 = vmatpush.msra.mxu0 0.0
      %4233 = vmatpush.msra.mxu0 0.0
      %4234 = vmatpush.msra.mxu0 0.0
      %4235 = vmatpush.msra.mxu0 0.0
      %4236 = vmatpush.msra.mxu0 0.0
      %4237 = vmatpush.msra.mxu0 0.0
      %4238 = vmatpush.msra.mxu0 0.0
      %4239 = vmatpush.msra.mxu0 0.0
      %4240 = vmatpush.msra.mxu0 0.0
      %v4241 = vand.u32 %v3930, 4294901760
      %4242 = vmatpush.msra.mxu0 %v4241
      %v4243 = vand.u32 %v3916, 4294901760
      %4244 = vmatpush.msra.mxu0 %v4243
      %v4245 = vand.u32 %v3926, 4294901760
      %4246 = vmatmul.f32.gmra.mxu0 %v4245
      %v4247 = vpop.f32.mrf.mxu0
      %v4248 = vadd.f32 %v4225, %v4247
      %4249 = vdwg.mxu0
      %v4250 = vadd.f32 %v3750, %v4089
      %v4251 = vadd.f32 %v3909, %v4248
      %s4252 = scalar_lea.vmem %s4, 12
      %v4253 = vld [vmem:[%s4252] sm:$0xf]
      %4254 = vrot.lane.b32.xlu0 %v3225, 93
      %v4255 = vpop.permute.xlu0 %4254
      %4256 = vrot.lane.b32.xlu0 %v3226, 93
      %v4257 = vpop.permute.xlu0 %4256
      %4258 = vrot.lane.b32.xlu0 %v3227, 93
      %v4259 = vpop.permute.xlu0 %4258
      %4260 = vrot.lane.b32.xlu0 %v3228, 93
      %v4261 = vpop.permute.xlu0 %4260
      %v4262 = vsel %vm2268, %v4255, %v4257
      %v4263 = vsel %vm2268, %v4259, %v4261
      %v4267 = vsel %vm3247, %v4253, 0
      %v4269 = vsel %vm3251, %v4263, 0
      %v4271 = vsel %vm3251, %v4261, 0
      %4273 = vmatpush.msra.mxu0 0.0
      %4274 = vmatpush.msra.mxu0 0.0
      %4275 = vmatpush.msra.mxu0 0.0
      %4276 = vmatpush.msra.mxu0 0.0
      %4277 = vmatpush.msra.mxu0 0.0
      %4278 = vmatpush.msra.mxu0 0.0
      %4279 = vmatpush.msra.mxu0 0.0
      %4280 = vmatpush.msra.mxu0 0.0
      %4281 = vmatpush.msra.mxu0 0.0
      %4282 = vmatpush.msra.mxu0 0.0
      %4283 = vmatpush.msra.mxu0 0.0
      %4284 = vmatpush.msra.mxu0 0.0
      %4285 = vmatpush.msra.mxu0 0.0
      %4286 = vmatpush.msra.mxu0 0.0
      %v4287 = vand.u32 %v4269, 4294901760
      %4288 = vmatpush.msra.mxu0 %v4287
      %v4289 = vand.u32 %v4262, 4294901760
      %4290 = vmatpush.msra.mxu0 %v4289
      %v4291 = vand.u32 %v4267, 4294901760
      %v4292 = vsub.f32 %v4267, %v4291
      %v4293 = vand.u32 %v4292, 4294901760
      %v4294 = vsub.f32 %v4292, %v4293
      %v4295 = vand.u32 %v4294, 4294901760
      %4296 = vmatmul.f32.gmra.mxu0 %v4295
      %v4297 = vpop.f32.mrf.mxu0
      %v4298 = vadd.f32 0.0, %v4297
      %4299 = vdwg.mxu0
      %4300 = vmatpush.msra.mxu0 0.0
      %4301 = vmatpush.msra.mxu0 0.0
      %4302 = vmatpush.msra.mxu0 0.0
      %4303 = vmatpush.msra.mxu0 0.0
      %4304 = vmatpush.msra.mxu0 0.0
      %4305 = vmatpush.msra.mxu0 0.0
      %4306 = vmatpush.msra.mxu0 0.0
      %4307 = vmatpush.msra.mxu0 0.0
      %4308 = vmatpush.msra.mxu0 0.0
      %4309 = vmatpush.msra.mxu0 0.0
      %4310 = vmatpush.msra.mxu0 0.0
      %4311 = vmatpush.msra.mxu0 0.0
      %4312 = vmatpush.msra.mxu0 0.0
      %4313 = vmatpush.msra.mxu0 0.0
      %v4314 = vand.u32 %v4269, 4294901760
      %v4315 = vsub.f32 %v4269, %v4314
      %v4316 = vand.u32 %v4315, 4294901760
      %v4317 = vsub.f32 %v4315, %v4316
      %v4318 = vand.u32 %v4317, 4294901760
      %4319 = vmatpush.msra.mxu0 %v4318
      %v4320 = vand.u32 %v4262, 4294901760
      %v4321 = vsub.f32 %v4262, %v4320
      %v4322 = vand.u32 %v4321, 4294901760
      %v4323 = vsub.f32 %v4321, %v4322
      %v4324 = vand.u32 %v4323, 4294901760
      %4325 = vmatpush.msra.mxu0 %v4324
      %v4326 = vand.u32 %v4267, 4294901760
      %4327 = vmatmul.f32.gmra.mxu0 %v4326
      %v4328 = vpop.f32.mrf.mxu0
      %v4329 = vadd.f32 %v4298, %v4328
      %4330 = vdwg.mxu0
      %4331 = vmatpush.msra.mxu0 0.0
      %4332 = vmatpush.msra.mxu0 0.0
      %4333 = vmatpush.msra.mxu0 0.0
      %4334 = vmatpush.msra.mxu0 0.0
      %4335 = vmatpush.msra.mxu0 0.0
      %4336 = vmatpush.msra.mxu0 0.0
      %4337 = vmatpush.msra.mxu0 0.0
      %4338 = vmatpush.msra.mxu0 0.0
      %4339 = vmatpush.msra.mxu0 0.0
      %4340 = vmatpush.msra.mxu0 0.0
      %4341 = vmatpush.msra.mxu0 0.0
      %4342 = vmatpush.msra.mxu0 0.0
      %4343 = vmatpush.msra.mxu0 0.0
      %4344 = vmatpush.msra.mxu0 0.0
      %v4345 = vand.u32 %v4269, 4294901760
      %v4346 = vsub.f32 %v4269, %v4345
      %4347 = vmatpush.msra.mxu0 %v4346
      %v4348 = vand.u32 %v4262, 4294901760
      %v4349 = vsub.f32 %v4262, %v4348
      %4350 = vmatpush.msra.mxu0 %v4349
      %v4351 = vand.u32 %v4267, 4294901760
      %v4352 = vsub.f32 %v4267, %v4351
      %4353 = vmatmul.f32.gmra.mxu0 %v4352
      %v4354 = vpop.f32.mrf.mxu0
      %v4355 = vadd.f32 %v4329, %v4354
      %4356 = vdwg.mxu0
      %4357 = vmatpush.msra.mxu0 0.0
      %4358 = vmatpush.msra.mxu0 0.0
      %4359 = vmatpush.msra.mxu0 0.0
      %4360 = vmatpush.msra.mxu0 0.0
      %4361 = vmatpush.msra.mxu0 0.0
      %4362 = vmatpush.msra.mxu0 0.0
      %4363 = vmatpush.msra.mxu0 0.0
      %4364 = vmatpush.msra.mxu0 0.0
      %4365 = vmatpush.msra.mxu0 0.0
      %4366 = vmatpush.msra.mxu0 0.0
      %4367 = vmatpush.msra.mxu0 0.0
      %4368 = vmatpush.msra.mxu0 0.0
      %4369 = vmatpush.msra.mxu0 0.0
      %4370 = vmatpush.msra.mxu0 0.0
      %v4371 = vand.u32 %v4269, 4294901760
      %4372 = vmatpush.msra.mxu0 %v4371
      %v4373 = vand.u32 %v4262, 4294901760
      %4374 = vmatpush.msra.mxu0 %v4373
      %v4375 = vand.u32 %v4267, 4294901760
      %v4376 = vsub.f32 %v4267, %v4375
      %v4377 = vand.u32 %v4376, 4294901760
      %4378 = vmatmul.f32.gmra.mxu0 %v4377
      %v4379 = vpop.f32.mrf.mxu0
      %v4380 = vadd.f32 %v4355, %v4379
      %4381 = vdwg.mxu0
      %4382 = vmatpush.msra.mxu0 0.0
      %4383 = vmatpush.msra.mxu0 0.0
      %4384 = vmatpush.msra.mxu0 0.0
      %4385 = vmatpush.msra.mxu0 0.0
      %4386 = vmatpush.msra.mxu0 0.0
      %4387 = vmatpush.msra.mxu0 0.0
      %4388 = vmatpush.msra.mxu0 0.0
      %4389 = vmatpush.msra.mxu0 0.0
      %4390 = vmatpush.msra.mxu0 0.0
      %4391 = vmatpush.msra.mxu0 0.0
      %4392 = vmatpush.msra.mxu0 0.0
      %4393 = vmatpush.msra.mxu0 0.0
      %4394 = vmatpush.msra.mxu0 0.0
      %4395 = vmatpush.msra.mxu0 0.0
      %v4396 = vand.u32 %v4269, 4294901760
      %v4397 = vsub.f32 %v4269, %v4396
      %v4398 = vand.u32 %v4397, 4294901760
      %4399 = vmatpush.msra.mxu0 %v4398
      %v4400 = vand.u32 %v4262, 4294901760
      %v4401 = vsub.f32 %v4262, %v4400
      %v4402 = vand.u32 %v4401, 4294901760
      %4403 = vmatpush.msra.mxu0 %v4402
      %v4404 = vand.u32 %v4267, 4294901760
      %4405 = vmatmul.f32.gmra.mxu0 %v4404
      %v4406 = vpop.f32.mrf.mxu0
      %v4407 = vadd.f32 %v4380, %v4406
      %4408 = vdwg.mxu0
      %4409 = vmatpush.msra.mxu0 0.0
      %4410 = vmatpush.msra.mxu0 0.0
      %4411 = vmatpush.msra.mxu0 0.0
      %4412 = vmatpush.msra.mxu0 0.0
      %4413 = vmatpush.msra.mxu0 0.0
      %4414 = vmatpush.msra.mxu0 0.0
      %4415 = vmatpush.msra.mxu0 0.0
      %4416 = vmatpush.msra.mxu0 0.0
      %4417 = vmatpush.msra.mxu0 0.0
      %4418 = vmatpush.msra.mxu0 0.0
      %4419 = vmatpush.msra.mxu0 0.0
      %4420 = vmatpush.msra.mxu0 0.0
      %4421 = vmatpush.msra.mxu0 0.0
      %4422 = vmatpush.msra.mxu0 0.0
      %v4423 = vand.u32 %v4269, 4294901760
      %4424 = vmatpush.msra.mxu0 %v4423
      %v4425 = vand.u32 %v4262, 4294901760
      %4426 = vmatpush.msra.mxu0 %v4425
      %v4427 = vand.u32 %v4267, 4294901760
      %4428 = vmatmul.f32.gmra.mxu0 %v4427
      %v4429 = vpop.f32.mrf.mxu0
      %v4430 = vadd.f32 %v4407, %v4429
      %4431 = vdwg.mxu0
      %4432 = vmatpush.msra.mxu0 0.0
      %4433 = vmatpush.msra.mxu0 0.0
      %4434 = vmatpush.msra.mxu0 0.0
      %4435 = vmatpush.msra.mxu0 0.0
      %4436 = vmatpush.msra.mxu0 0.0
      %4437 = vmatpush.msra.mxu0 0.0
      %4438 = vmatpush.msra.mxu0 0.0
      %4439 = vmatpush.msra.mxu0 0.0
      %4440 = vmatpush.msra.mxu0 0.0
      %4441 = vmatpush.msra.mxu0 0.0
      %4442 = vmatpush.msra.mxu0 0.0
      %4443 = vmatpush.msra.mxu0 0.0
      %4444 = vmatpush.msra.mxu0 0.0
      %4445 = vmatpush.msra.mxu0 0.0
      %v4446 = vand.u32 %v4271, 4294901760
      %4447 = vmatpush.msra.mxu0 %v4446
      %v4448 = vand.u32 %v4257, 4294901760
      %4449 = vmatpush.msra.mxu0 %v4448
      %v4450 = vand.u32 %v4267, 4294901760
      %v4451 = vsub.f32 %v4267, %v4450
      %v4452 = vand.u32 %v4451, 4294901760
      %v4453 = vsub.f32 %v4451, %v4452
      %v4454 = vand.u32 %v4453, 4294901760
      %4455 = vmatmul.f32.gmra.mxu0 %v4454
      %v4456 = vpop.f32.mrf.mxu0
      %v4457 = vadd.f32 0.0, %v4456
      %4458 = vdwg.mxu0
      %4459 = vmatpush.msra.mxu0 0.0
      %4460 = vmatpush.msra.mxu0 0.0
      %4461 = vmatpush.msra.mxu0 0.0
      %4462 = vmatpush.msra.mxu0 0.0
      %4463 = vmatpush.msra.mxu0 0.0
      %4464 = vmatpush.msra.mxu0 0.0
      %4465 = vmatpush.msra.mxu0 0.0
      %4466 = vmatpush.msra.mxu0 0.0
      %4467 = vmatpush.msra.mxu0 0.0
      %4468 = vmatpush.msra.mxu0 0.0
      %4469 = vmatpush.msra.mxu0 0.0
      %4470 = vmatpush.msra.mxu0 0.0
      %4471 = vmatpush.msra.mxu0 0.0
      %4472 = vmatpush.msra.mxu0 0.0
      %v4473 = vand.u32 %v4271, 4294901760
      %v4474 = vsub.f32 %v4271, %v4473
      %v4475 = vand.u32 %v4474, 4294901760
      %v4476 = vsub.f32 %v4474, %v4475
      %v4477 = vand.u32 %v4476, 4294901760
      %4478 = vmatpush.msra.mxu0 %v4477
      %v4479 = vand.u32 %v4257, 4294901760
      %v4480 = vsub.f32 %v4257, %v4479
      %v4481 = vand.u32 %v4480, 4294901760
      %v4482 = vsub.f32 %v4480, %v4481
      %v4483 = vand.u32 %v4482, 4294901760
      %4484 = vmatpush.msra.mxu0 %v4483
      %v4485 = vand.u32 %v4267, 4294901760
      %4486 = vmatmul.f32.gmra.mxu0 %v4485
      %v4487 = vpop.f32.mrf.mxu0
      %v4488 = vadd.f32 %v4457, %v4487
      %4489 = vdwg.mxu0
      %4490 = vmatpush.msra.mxu0 0.0
      %4491 = vmatpush.msra.mxu0 0.0
      %4492 = vmatpush.msra.mxu0 0.0
      %4493 = vmatpush.msra.mxu0 0.0
      %4494 = vmatpush.msra.mxu0 0.0
      %4495 = vmatpush.msra.mxu0 0.0
      %4496 = vmatpush.msra.mxu0 0.0
      %4497 = vmatpush.msra.mxu0 0.0
      %4498 = vmatpush.msra.mxu0 0.0
      %4499 = vmatpush.msra.mxu0 0.0
      %4500 = vmatpush.msra.mxu0 0.0
      %4501 = vmatpush.msra.mxu0 0.0
      %4502 = vmatpush.msra.mxu0 0.0
      %4503 = vmatpush.msra.mxu0 0.0
      %v4504 = vand.u32 %v4271, 4294901760
      %v4505 = vsub.f32 %v4271, %v4504
      %4506 = vmatpush.msra.mxu0 %v4505
      %v4507 = vand.u32 %v4257, 4294901760
      %v4508 = vsub.f32 %v4257, %v4507
      %4509 = vmatpush.msra.mxu0 %v4508
      %v4510 = vand.u32 %v4267, 4294901760
      %v4511 = vsub.f32 %v4267, %v4510
      %4512 = vmatmul.f32.gmra.mxu0 %v4511
      %v4513 = vpop.f32.mrf.mxu0
      %v4514 = vadd.f32 %v4488, %v4513
      %4515 = vdwg.mxu0
      %4516 = vmatpush.msra.mxu0 0.0
      %4517 = vmatpush.msra.mxu0 0.0
      %4518 = vmatpush.msra.mxu0 0.0
      %4519 = vmatpush.msra.mxu0 0.0
      %4520 = vmatpush.msra.mxu0 0.0
      %4521 = vmatpush.msra.mxu0 0.0
      %4522 = vmatpush.msra.mxu0 0.0
      %4523 = vmatpush.msra.mxu0 0.0
      %4524 = vmatpush.msra.mxu0 0.0
      %4525 = vmatpush.msra.mxu0 0.0
      %4526 = vmatpush.msra.mxu0 0.0
      %4527 = vmatpush.msra.mxu0 0.0
      %4528 = vmatpush.msra.mxu0 0.0
      %4529 = vmatpush.msra.mxu0 0.0
      %v4530 = vand.u32 %v4271, 4294901760
      %4531 = vmatpush.msra.mxu0 %v4530
      %v4532 = vand.u32 %v4257, 4294901760
      %4533 = vmatpush.msra.mxu0 %v4532
      %v4534 = vand.u32 %v4267, 4294901760
      %v4535 = vsub.f32 %v4267, %v4534
      %v4536 = vand.u32 %v4535, 4294901760
      %4537 = vmatmul.f32.gmra.mxu0 %v4536
      %v4538 = vpop.f32.mrf.mxu0
      %v4539 = vadd.f32 %v4514, %v4538
      %4540 = vdwg.mxu0
      %4541 = vmatpush.msra.mxu0 0.0
      %4542 = vmatpush.msra.mxu0 0.0
      %4543 = vmatpush.msra.mxu0 0.0
      %4544 = vmatpush.msra.mxu0 0.0
      %4545 = vmatpush.msra.mxu0 0.0
      %4546 = vmatpush.msra.mxu0 0.0
      %4547 = vmatpush.msra.mxu0 0.0
      %4548 = vmatpush.msra.mxu0 0.0
      %4549 = vmatpush.msra.mxu0 0.0
      %4550 = vmatpush.msra.mxu0 0.0
      %4551 = vmatpush.msra.mxu0 0.0
      %4552 = vmatpush.msra.mxu0 0.0
      %4553 = vmatpush.msra.mxu0 0.0
      %4554 = vmatpush.msra.mxu0 0.0
      %v4555 = vand.u32 %v4271, 4294901760
      %v4556 = vsub.f32 %v4271, %v4555
      %v4557 = vand.u32 %v4556, 4294901760
      %4558 = vmatpush.msra.mxu0 %v4557
      %v4559 = vand.u32 %v4257, 4294901760
      %v4560 = vsub.f32 %v4257, %v4559
      %v4561 = vand.u32 %v4560, 4294901760
      %4562 = vmatpush.msra.mxu0 %v4561
      %v4563 = vand.u32 %v4267, 4294901760
      %4564 = vmatmul.f32.gmra.mxu0 %v4563
      %v4565 = vpop.f32.mrf.mxu0
      %v4566 = vadd.f32 %v4539, %v4565
      %4567 = vdwg.mxu0
      %4568 = vmatpush.msra.mxu0 0.0
      %4569 = vmatpush.msra.mxu0 0.0
      %4570 = vmatpush.msra.mxu0 0.0
      %4571 = vmatpush.msra.mxu0 0.0
      %4572 = vmatpush.msra.mxu0 0.0
      %4573 = vmatpush.msra.mxu0 0.0
      %4574 = vmatpush.msra.mxu0 0.0
      %4575 = vmatpush.msra.mxu0 0.0
      %4576 = vmatpush.msra.mxu0 0.0
      %4577 = vmatpush.msra.mxu0 0.0
      %4578 = vmatpush.msra.mxu0 0.0
      %4579 = vmatpush.msra.mxu0 0.0
      %4580 = vmatpush.msra.mxu0 0.0
      %4581 = vmatpush.msra.mxu0 0.0
      %v4582 = vand.u32 %v4271, 4294901760
      %4583 = vmatpush.msra.mxu0 %v4582
      %v4584 = vand.u32 %v4257, 4294901760
      %4585 = vmatpush.msra.mxu0 %v4584
      %v4586 = vand.u32 %v4267, 4294901760
      %4587 = vmatmul.f32.gmra.mxu0 %v4586
      %v4588 = vpop.f32.mrf.mxu0
      %v4589 = vadd.f32 %v4566, %v4588
      %4590 = vdwg.mxu0
      %v4591 = vadd.f32 %v4250, %v4430
      %v4592 = vadd.f32 %v4251, %v4589
      %s4593 = scalar_lea.vmem %s4, 16
      %v4594 = vld [vmem:[%s4593] sm:$0xf]
      %4595 = vrot.lane.b32.xlu0 %v3225, 92
      %v4596 = vpop.permute.xlu0 %4595
      %4597 = vrot.lane.b32.xlu0 %v3226, 92
      %v4598 = vpop.permute.xlu0 %4597
      %4599 = vrot.lane.b32.xlu0 %v3227, 92
      %v4600 = vpop.permute.xlu0 %4599
      %4601 = vrot.lane.b32.xlu0 %v3228, 92
      %v4602 = vpop.permute.xlu0 %4601
      %v4603 = vsel %vm2575, %v4596, %v4598
      %v4604 = vsel %vm2575, %v4600, %v4602
      %v4608 = vsel %vm3247, %v4594, 0
      %v4610 = vsel %vm3251, %v4604, 0
      %v4612 = vsel %vm3251, %v4602, 0
      %4614 = vmatpush.msra.mxu0 0.0
      %4615 = vmatpush.msra.mxu0 0.0
      %4616 = vmatpush.msra.mxu0 0.0
      %4617 = vmatpush.msra.mxu0 0.0
      %4618 = vmatpush.msra.mxu0 0.0
      %4619 = vmatpush.msra.mxu0 0.0
      %4620 = vmatpush.msra.mxu0 0.0
      %4621 = vmatpush.msra.mxu0 0.0
      %4622 = vmatpush.msra.mxu0 0.0
      %4623 = vmatpush.msra.mxu0 0.0
      %4624 = vmatpush.msra.mxu0 0.0
      %4625 = vmatpush.msra.mxu0 0.0
      %4626 = vmatpush.msra.mxu0 0.0
      %4627 = vmatpush.msra.mxu0 0.0
      %v4628 = vand.u32 %v4610, 4294901760
      %4629 = vmatpush.msra.mxu0 %v4628
      %v4630 = vand.u32 %v4603, 4294901760
      %4631 = vmatpush.msra.mxu0 %v4630
      %v4632 = vand.u32 %v4608, 4294901760
      %v4633 = vsub.f32 %v4608, %v4632
      %v4634 = vand.u32 %v4633, 4294901760
      %v4635 = vsub.f32 %v4633, %v4634
      %v4636 = vand.u32 %v4635, 4294901760
      %4637 = vmatmul.f32.gmra.mxu0 %v4636
      %v4638 = vpop.f32.mrf.mxu0
      %v4639 = vadd.f32 0.0, %v4638
      %4640 = vdwg.mxu0
      %4641 = vmatpush.msra.mxu0 0.0
      %4642 = vmatpush.msra.mxu0 0.0
      %4643 = vmatpush.msra.mxu0 0.0
      %4644 = vmatpush.msra.mxu0 0.0
      %4645 = vmatpush.msra.mxu0 0.0
      %4646 = vmatpush.msra.mxu0 0.0
      %4647 = vmatpush.msra.mxu0 0.0
      %4648 = vmatpush.msra.mxu0 0.0
      %4649 = vmatpush.msra.mxu0 0.0
      %4650 = vmatpush.msra.mxu0 0.0
      %4651 = vmatpush.msra.mxu0 0.0
      %4652 = vmatpush.msra.mxu0 0.0
      %4653 = vmatpush.msra.mxu0 0.0
      %4654 = vmatpush.msra.mxu0 0.0
      %v4655 = vand.u32 %v4610, 4294901760
      %v4656 = vsub.f32 %v4610, %v4655
      %v4657 = vand.u32 %v4656, 4294901760
      %v4658 = vsub.f32 %v4656, %v4657
      %v4659 = vand.u32 %v4658, 4294901760
      %4660 = vmatpush.msra.mxu0 %v4659
      %v4661 = vand.u32 %v4603, 4294901760
      %v4662 = vsub.f32 %v4603, %v4661
      %v4663 = vand.u32 %v4662, 4294901760
      %v4664 = vsub.f32 %v4662, %v4663
      %v4665 = vand.u32 %v4664, 4294901760
      %4666 = vmatpush.msra.mxu0 %v4665
      %v4667 = vand.u32 %v4608, 4294901760
      %4668 = vmatmul.f32.gmra.mxu0 %v4667
      %v4669 = vpop.f32.mrf.mxu0
      %v4670 = vadd.f32 %v4639, %v4669
      %4671 = vdwg.mxu0
      %4672 = vmatpush.msra.mxu0 0.0
      %4673 = vmatpush.msra.mxu0 0.0
      %4674 = vmatpush.msra.mxu0 0.0
      %4675 = vmatpush.msra.mxu0 0.0
      %4676 = vmatpush.msra.mxu0 0.0
      %4677 = vmatpush.msra.mxu0 0.0
      %4678 = vmatpush.msra.mxu0 0.0
      %4679 = vmatpush.msra.mxu0 0.0
      %4680 = vmatpush.msra.mxu0 0.0
      %4681 = vmatpush.msra.mxu0 0.0
      %4682 = vmatpush.msra.mxu0 0.0
      %4683 = vmatpush.msra.mxu0 0.0
      %4684 = vmatpush.msra.mxu0 0.0
      %4685 = vmatpush.msra.mxu0 0.0
      %v4686 = vand.u32 %v4610, 4294901760
      %v4687 = vsub.f32 %v4610, %v4686
      %4688 = vmatpush.msra.mxu0 %v4687
      %v4689 = vand.u32 %v4603, 4294901760
      %v4690 = vsub.f32 %v4603, %v4689
      %4691 = vmatpush.msra.mxu0 %v4690
      %v4692 = vand.u32 %v4608, 4294901760
      %v4693 = vsub.f32 %v4608, %v4692
      %4694 = vmatmul.f32.gmra.mxu0 %v4693
      %v4695 = vpop.f32.mrf.mxu0
      %v4696 = vadd.f32 %v4670, %v4695
      %4697 = vdwg.mxu0
      %4698 = vmatpush.msra.mxu0 0.0
      %4699 = vmatpush.msra.mxu0 0.0
      %4700 = vmatpush.msra.mxu0 0.0
      %4701 = vmatpush.msra.mxu0 0.0
      %4702 = vmatpush.msra.mxu0 0.0
      %4703 = vmatpush.msra.mxu0 0.0
      %4704 = vmatpush.msra.mxu0 0.0
      %4705 = vmatpush.msra.mxu0 0.0
      %4706 = vmatpush.msra.mxu0 0.0
      %4707 = vmatpush.msra.mxu0 0.0
      %4708 = vmatpush.msra.mxu0 0.0
      %4709 = vmatpush.msra.mxu0 0.0
      %4710 = vmatpush.msra.mxu0 0.0
      %4711 = vmatpush.msra.mxu0 0.0
      %v4712 = vand.u32 %v4610, 4294901760
      %4713 = vmatpush.msra.mxu0 %v4712
      %v4714 = vand.u32 %v4603, 4294901760
      %4715 = vmatpush.msra.mxu0 %v4714
      %v4716 = vand.u32 %v4608, 4294901760
      %v4717 = vsub.f32 %v4608, %v4716
      %v4718 = vand.u32 %v4717, 4294901760
      %4719 = vmatmul.f32.gmra.mxu0 %v4718
      %v4720 = vpop.f32.mrf.mxu0
      %v4721 = vadd.f32 %v4696, %v4720
      %4722 = vdwg.mxu0
      %4723 = vmatpush.msra.mxu0 0.0
      %4724 = vmatpush.msra.mxu0 0.0
      %4725 = vmatpush.msra.mxu0 0.0
      %4726 = vmatpush.msra.mxu0 0.0
      %4727 = vmatpush.msra.mxu0 0.0
      %4728 = vmatpush.msra.mxu0 0.0
      %4729 = vmatpush.msra.mxu0 0.0
      %4730 = vmatpush.msra.mxu0 0.0
      %4731 = vmatpush.msra.mxu0 0.0
      %4732 = vmatpush.msra.mxu0 0.0
      %4733 = vmatpush.msra.mxu0 0.0
      %4734 = vmatpush.msra.mxu0 0.0
      %4735 = vmatpush.msra.mxu0 0.0
      %4736 = vmatpush.msra.mxu0 0.0
      %v4737 = vand.u32 %v4610, 4294901760
      %v4738 = vsub.f32 %v4610, %v4737
      %v4739 = vand.u32 %v4738, 4294901760
      %4740 = vmatpush.msra.mxu0 %v4739
      %v4741 = vand.u32 %v4603, 4294901760
      %v4742 = vsub.f32 %v4603, %v4741
      %v4743 = vand.u32 %v4742, 4294901760
      %4744 = vmatpush.msra.mxu0 %v4743
      %v4745 = vand.u32 %v4608, 4294901760
      %4746 = vmatmul.f32.gmra.mxu0 %v4745
      %v4747 = vpop.f32.mrf.mxu0
      %v4748 = vadd.f32 %v4721, %v4747
      %4749 = vdwg.mxu0
      %4750 = vmatpush.msra.mxu0 0.0
      %4751 = vmatpush.msra.mxu0 0.0
      %4752 = vmatpush.msra.mxu0 0.0
      %4753 = vmatpush.msra.mxu0 0.0
      %4754 = vmatpush.msra.mxu0 0.0
      %4755 = vmatpush.msra.mxu0 0.0
      %4756 = vmatpush.msra.mxu0 0.0
      %4757 = vmatpush.msra.mxu0 0.0
      %4758 = vmatpush.msra.mxu0 0.0
      %4759 = vmatpush.msra.mxu0 0.0
      %4760 = vmatpush.msra.mxu0 0.0
      %4761 = vmatpush.msra.mxu0 0.0
      %4762 = vmatpush.msra.mxu0 0.0
      %4763 = vmatpush.msra.mxu0 0.0
      %v4764 = vand.u32 %v4610, 4294901760
      %4765 = vmatpush.msra.mxu0 %v4764
      %v4766 = vand.u32 %v4603, 4294901760
      %4767 = vmatpush.msra.mxu0 %v4766
      %v4768 = vand.u32 %v4608, 4294901760
      %4769 = vmatmul.f32.gmra.mxu0 %v4768
      %v4770 = vpop.f32.mrf.mxu0
      %v4771 = vadd.f32 %v4748, %v4770
      %4772 = vdwg.mxu0
      %4773 = vmatpush.msra.mxu0 0.0
      %4774 = vmatpush.msra.mxu0 0.0
      %4775 = vmatpush.msra.mxu0 0.0
      %4776 = vmatpush.msra.mxu0 0.0
      %4777 = vmatpush.msra.mxu0 0.0
      %4778 = vmatpush.msra.mxu0 0.0
      %4779 = vmatpush.msra.mxu0 0.0
      %4780 = vmatpush.msra.mxu0 0.0
      %4781 = vmatpush.msra.mxu0 0.0
      %4782 = vmatpush.msra.mxu0 0.0
      %4783 = vmatpush.msra.mxu0 0.0
      %4784 = vmatpush.msra.mxu0 0.0
      %4785 = vmatpush.msra.mxu0 0.0
      %4786 = vmatpush.msra.mxu0 0.0
      %v4787 = vand.u32 %v4612, 4294901760
      %4788 = vmatpush.msra.mxu0 %v4787
      %v4789 = vand.u32 %v4598, 4294901760
      %4790 = vmatpush.msra.mxu0 %v4789
      %v4791 = vand.u32 %v4608, 4294901760
      %v4792 = vsub.f32 %v4608, %v4791
      %v4793 = vand.u32 %v4792, 4294901760
      %v4794 = vsub.f32 %v4792, %v4793
      %v4795 = vand.u32 %v4794, 4294901760
      %4796 = vmatmul.f32.gmra.mxu0 %v4795
      %v4797 = vpop.f32.mrf.mxu0
      %v4798 = vadd.f32 0.0, %v4797
      %4799 = vdwg.mxu0
      %4800 = vmatpush.msra.mxu0 0.0
      %4801 = vmatpush.msra.mxu0 0.0
      %4802 = vmatpush.msra.mxu0 0.0
      %4803 = vmatpush.msra.mxu0 0.0
      %4804 = vmatpush.msra.mxu0 0.0
      %4805 = vmatpush.msra.mxu0 0.0
      %4806 = vmatpush.msra.mxu0 0.0
      %4807 = vmatpush.msra.mxu0 0.0
      %4808 = vmatpush.msra.mxu0 0.0
      %4809 = vmatpush.msra.mxu0 0.0
      %4810 = vmatpush.msra.mxu0 0.0
      %4811 = vmatpush.msra.mxu0 0.0
      %4812 = vmatpush.msra.mxu0 0.0
      %4813 = vmatpush.msra.mxu0 0.0
      %v4814 = vand.u32 %v4612, 4294901760
      %v4815 = vsub.f32 %v4612, %v4814
      %v4816 = vand.u32 %v4815, 4294901760
      %v4817 = vsub.f32 %v4815, %v4816
      %v4818 = vand.u32 %v4817, 4294901760
      %4819 = vmatpush.msra.mxu0 %v4818
      %v4820 = vand.u32 %v4598, 4294901760
      %v4821 = vsub.f32 %v4598, %v4820
      %v4822 = vand.u32 %v4821, 4294901760
      %v4823 = vsub.f32 %v4821, %v4822
      %v4824 = vand.u32 %v4823, 4294901760
      %4825 = vmatpush.msra.mxu0 %v4824
      %v4826 = vand.u32 %v4608, 4294901760
      %4827 = vmatmul.f32.gmra.mxu0 %v4826
      %v4828 = vpop.f32.mrf.mxu0
      %v4829 = vadd.f32 %v4798, %v4828
      %4830 = vdwg.mxu0
      %4831 = vmatpush.msra.mxu0 0.0
      %4832 = vmatpush.msra.mxu0 0.0
      %4833 = vmatpush.msra.mxu0 0.0
      %4834 = vmatpush.msra.mxu0 0.0
      %4835 = vmatpush.msra.mxu0 0.0
      %4836 = vmatpush.msra.mxu0 0.0
      %4837 = vmatpush.msra.mxu0 0.0
      %4838 = vmatpush.msra.mxu0 0.0
      %4839 = vmatpush.msra.mxu0 0.0
      %4840 = vmatpush.msra.mxu0 0.0
      %4841 = vmatpush.msra.mxu0 0.0
      %4842 = vmatpush.msra.mxu0 0.0
      %4843 = vmatpush.msra.mxu0 0.0
      %4844 = vmatpush.msra.mxu0 0.0
      %v4845 = vand.u32 %v4612, 4294901760
      %v4846 = vsub.f32 %v4612, %v4845
      %4847 = vmatpush.msra.mxu0 %v4846
      %v4848 = vand.u32 %v4598, 4294901760
      %v4849 = vsub.f32 %v4598, %v4848
      %4850 = vmatpush.msra.mxu0 %v4849
      %v4851 = vand.u32 %v4608, 4294901760
      %v4852 = vsub.f32 %v4608, %v4851
      %4853 = vmatmul.f32.gmra.mxu0 %v4852
      %v4854 = vpop.f32.mrf.mxu0
      %v4855 = vadd.f32 %v4829, %v4854
      %4856 = vdwg.mxu0
      %4857 = vmatpush.msra.mxu0 0.0
      %4858 = vmatpush.msra.mxu0 0.0
      %4859 = vmatpush.msra.mxu0 0.0
      %4860 = vmatpush.msra.mxu0 0.0
      %4861 = vmatpush.msra.mxu0 0.0
      %4862 = vmatpush.msra.mxu0 0.0
      %4863 = vmatpush.msra.mxu0 0.0
      %4864 = vmatpush.msra.mxu0 0.0
      %4865 = vmatpush.msra.mxu0 0.0
      %4866 = vmatpush.msra.mxu0 0.0
      %4867 = vmatpush.msra.mxu0 0.0
      %4868 = vmatpush.msra.mxu0 0.0
      %4869 = vmatpush.msra.mxu0 0.0
      %4870 = vmatpush.msra.mxu0 0.0
      %v4871 = vand.u32 %v4612, 4294901760
      %4872 = vmatpush.msra.mxu0 %v4871
      %v4873 = vand.u32 %v4598, 4294901760
      %4874 = vmatpush.msra.mxu0 %v4873
      %v4875 = vand.u32 %v4608, 4294901760
      %v4876 = vsub.f32 %v4608, %v4875
      %v4877 = vand.u32 %v4876, 4294901760
      %4878 = vmatmul.f32.gmra.mxu0 %v4877
      %v4879 = vpop.f32.mrf.mxu0
      %v4880 = vadd.f32 %v4855, %v4879
      %4881 = vdwg.mxu0
      %4882 = vmatpush.msra.mxu0 0.0
      %4883 = vmatpush.msra.mxu0 0.0
      %4884 = vmatpush.msra.mxu0 0.0
      %4885 = vmatpush.msra.mxu0 0.0
      %4886 = vmatpush.msra.mxu0 0.0
      %4887 = vmatpush.msra.mxu0 0.0
      %4888 = vmatpush.msra.mxu0 0.0
      %4889 = vmatpush.msra.mxu0 0.0
      %4890 = vmatpush.msra.mxu0 0.0
      %4891 = vmatpush.msra.mxu0 0.0
      %4892 = vmatpush.msra.mxu0 0.0
      %4893 = vmatpush.msra.mxu0 0.0
      %4894 = vmatpush.msra.mxu0 0.0
      %4895 = vmatpush.msra.mxu0 0.0
      %v4896 = vand.u32 %v4612, 4294901760
      %v4897 = vsub.f32 %v4612, %v4896
      %v4898 = vand.u32 %v4897, 4294901760
      %4899 = vmatpush.msra.mxu0 %v4898
      %v4900 = vand.u32 %v4598, 4294901760
      %v4901 = vsub.f32 %v4598, %v4900
      %v4902 = vand.u32 %v4901, 4294901760
      %4903 = vmatpush.msra.mxu0 %v4902
      %v4904 = vand.u32 %v4608, 4294901760
      %4905 = vmatmul.f32.gmra.mxu0 %v4904
      %v4906 = vpop.f32.mrf.mxu0
      %v4907 = vadd.f32 %v4880, %v4906
      %4908 = vdwg.mxu0
      %4909 = vmatpush.msra.mxu0 0.0
      %4910 = vmatpush.msra.mxu0 0.0
      %4911 = vmatpush.msra.mxu0 0.0
      %4912 = vmatpush.msra.mxu0 0.0
      %4913 = vmatpush.msra.mxu0 0.0
      %4914 = vmatpush.msra.mxu0 0.0
      %4915 = vmatpush.msra.mxu0 0.0
      %4916 = vmatpush.msra.mxu0 0.0
      %4917 = vmatpush.msra.mxu0 0.0
      %4918 = vmatpush.msra.mxu0 0.0
      %4919 = vmatpush.msra.mxu0 0.0
      %4920 = vmatpush.msra.mxu0 0.0
      %4921 = vmatpush.msra.mxu0 0.0
      %4922 = vmatpush.msra.mxu0 0.0
      %v4923 = vand.u32 %v4612, 4294901760
      %4924 = vmatpush.msra.mxu0 %v4923
      %v4925 = vand.u32 %v4598, 4294901760
      %4926 = vmatpush.msra.mxu0 %v4925
      %v4927 = vand.u32 %v4608, 4294901760
      %4928 = vmatmul.f32.gmra.mxu0 %v4927
      %v4929 = vpop.f32.mrf.mxu0
      %v4930 = vadd.f32 %v4907, %v4929
      %4931 = vdwg.mxu0
      %v4932 = vadd.f32 %v4591, %v4771
      %v4933 = vadd.f32 %v4592, %v4930
      %s4934 = scalar_lea.vmem %s4, 20
      %v4935 = vld [vmem:[%s4934] sm:$0xf]
      %4936 = vrot.lane.b32.xlu0 %v3225, 91
      %v4937 = vpop.permute.xlu0 %4936
      %4938 = vrot.lane.b32.xlu0 %v3226, 91
      %v4939 = vpop.permute.xlu0 %4938
      %4940 = vrot.lane.b32.xlu0 %v3227, 91
      %v4941 = vpop.permute.xlu0 %4940
      %4942 = vrot.lane.b32.xlu0 %v3228, 91
      %v4943 = vpop.permute.xlu0 %4942
      %v4944 = vsel %vm2882, %v4937, %v4939
      %v4945 = vsel %vm2882, %v4941, %v4943
      %v4949 = vsel %vm3247, %v4935, 0
      %v4951 = vsel %vm3251, %v4945, 0
      %v4953 = vsel %vm3251, %v4943, 0
      %4955 = vmatpush.msra.mxu0 0.0
      %4956 = vmatpush.msra.mxu0 0.0
      %4957 = vmatpush.msra.mxu0 0.0
      %4958 = vmatpush.msra.mxu0 0.0
      %4959 = vmatpush.msra.mxu0 0.0
      %4960 = vmatpush.msra.mxu0 0.0
      %4961 = vmatpush.msra.mxu0 0.0
      %4962 = vmatpush.msra.mxu0 0.0
      %4963 = vmatpush.msra.mxu0 0.0
      %4964 = vmatpush.msra.mxu0 0.0
      %4965 = vmatpush.msra.mxu0 0.0
      %4966 = vmatpush.msra.mxu0 0.0
      %4967 = vmatpush.msra.mxu0 0.0
      %4968 = vmatpush.msra.mxu0 0.0
      %v4969 = vand.u32 %v4951, 4294901760
      %4970 = vmatpush.msra.mxu0 %v4969
      %v4971 = vand.u32 %v4944, 4294901760
      %4972 = vmatpush.msra.mxu0 %v4971
      %v4973 = vand.u32 %v4949, 4294901760
      %v4974 = vsub.f32 %v4949, %v4973
      %v4975 = vand.u32 %v4974, 4294901760
      %v4976 = vsub.f32 %v4974, %v4975
      %v4977 = vand.u32 %v4976, 4294901760
      %4978 = vmatmul.f32.gmra.mxu0 %v4977
      %v4979 = vpop.f32.mrf.mxu0
      %v4980 = vadd.f32 0.0, %v4979
      %4981 = vdwg.mxu0
      %4982 = vmatpush.msra.mxu0 0.0
      %4983 = vmatpush.msra.mxu0 0.0
      %4984 = vmatpush.msra.mxu0 0.0
      %4985 = vmatpush.msra.mxu0 0.0
      %4986 = vmatpush.msra.mxu0 0.0
      %4987 = vmatpush.msra.mxu0 0.0
      %4988 = vmatpush.msra.mxu0 0.0
      %4989 = vmatpush.msra.mxu0 0.0
      %4990 = vmatpush.msra.mxu0 0.0
      %4991 = vmatpush.msra.mxu0 0.0
      %4992 = vmatpush.msra.mxu0 0.0
      %4993 = vmatpush.msra.mxu0 0.0
      %4994 = vmatpush.msra.mxu0 0.0
      %4995 = vmatpush.msra.mxu0 0.0
      %v4996 = vand.u32 %v4951, 4294901760
      %v4997 = vsub.f32 %v4951, %v4996
      %v4998 = vand.u32 %v4997, 4294901760
      %v4999 = vsub.f32 %v4997, %v4998
      %v5000 = vand.u32 %v4999, 4294901760
      %5001 = vmatpush.msra.mxu0 %v5000
      %v5002 = vand.u32 %v4944, 4294901760
      %v5003 = vsub.f32 %v4944, %v5002
      %v5004 = vand.u32 %v5003, 4294901760
      %v5005 = vsub.f32 %v5003, %v5004
      %v5006 = vand.u32 %v5005, 4294901760
      %5007 = vmatpush.msra.mxu0 %v5006
      %v5008 = vand.u32 %v4949, 4294901760
      %5009 = vmatmul.f32.gmra.mxu0 %v5008
      %v5010 = vpop.f32.mrf.mxu0
      %v5011 = vadd.f32 %v4980, %v5010
      %5012 = vdwg.mxu0
      %5013 = vmatpush.msra.mxu0 0.0
      %5014 = vmatpush.msra.mxu0 0.0
      %5015 = vmatpush.msra.mxu0 0.0
      %5016 = vmatpush.msra.mxu0 0.0
      %5017 = vmatpush.msra.mxu0 0.0
      %5018 = vmatpush.msra.mxu0 0.0
      %5019 = vmatpush.msra.mxu0 0.0
      %5020 = vmatpush.msra.mxu0 0.0
      %5021 = vmatpush.msra.mxu0 0.0
      %5022 = vmatpush.msra.mxu0 0.0
      %5023 = vmatpush.msra.mxu0 0.0
      %5024 = vmatpush.msra.mxu0 0.0
      %5025 = vmatpush.msra.mxu0 0.0
      %5026 = vmatpush.msra.mxu0 0.0
      %v5027 = vand.u32 %v4951, 4294901760
      %v5028 = vsub.f32 %v4951, %v5027
      %5029 = vmatpush.msra.mxu0 %v5028
      %v5030 = vand.u32 %v4944, 4294901760
      %v5031 = vsub.f32 %v4944, %v5030
      %5032 = vmatpush.msra.mxu0 %v5031
      %v5033 = vand.u32 %v4949, 4294901760
      %v5034 = vsub.f32 %v4949, %v5033
      %5035 = vmatmul.f32.gmra.mxu0 %v5034
      %v5036 = vpop.f32.mrf.mxu0
      %v5037 = vadd.f32 %v5011, %v5036
      %5038 = vdwg.mxu0
      %5039 = vmatpush.msra.mxu0 0.0
      %5040 = vmatpush.msra.mxu0 0.0
      %5041 = vmatpush.msra.mxu0 0.0
      %5042 = vmatpush.msra.mxu0 0.0
      %5043 = vmatpush.msra.mxu0 0.0
      %5044 = vmatpush.msra.mxu0 0.0
      %5045 = vmatpush.msra.mxu0 0.0
      %5046 = vmatpush.msra.mxu0 0.0
      %5047 = vmatpush.msra.mxu0 0.0
      %5048 = vmatpush.msra.mxu0 0.0
      %5049 = vmatpush.msra.mxu0 0.0
      %5050 = vmatpush.msra.mxu0 0.0
      %5051 = vmatpush.msra.mxu0 0.0
      %5052 = vmatpush.msra.mxu0 0.0
      %v5053 = vand.u32 %v4951, 4294901760
      %5054 = vmatpush.msra.mxu0 %v5053
      %v5055 = vand.u32 %v4944, 4294901760
      %5056 = vmatpush.msra.mxu0 %v5055
      %v5057 = vand.u32 %v4949, 4294901760
      %v5058 = vsub.f32 %v4949, %v5057
      %v5059 = vand.u32 %v5058, 4294901760
      %5060 = vmatmul.f32.gmra.mxu0 %v5059
      %v5061 = vpop.f32.mrf.mxu0
      %v5062 = vadd.f32 %v5037, %v5061
      %5063 = vdwg.mxu0
      %5064 = vmatpush.msra.mxu0 0.0
      %5065 = vmatpush.msra.mxu0 0.0
      %5066 = vmatpush.msra.mxu0 0.0
      %5067 = vmatpush.msra.mxu0 0.0
      %5068 = vmatpush.msra.mxu0 0.0
      %5069 = vmatpush.msra.mxu0 0.0
      %5070 = vmatpush.msra.mxu0 0.0
      %5071 = vmatpush.msra.mxu0 0.0
      %5072 = vmatpush.msra.mxu0 0.0
      %5073 = vmatpush.msra.mxu0 0.0
      %5074 = vmatpush.msra.mxu0 0.0
      %5075 = vmatpush.msra.mxu0 0.0
      %5076 = vmatpush.msra.mxu0 0.0
      %5077 = vmatpush.msra.mxu0 0.0
      %v5078 = vand.u32 %v4951, 4294901760
      %v5079 = vsub.f32 %v4951, %v5078
      %v5080 = vand.u32 %v5079, 4294901760
      %5081 = vmatpush.msra.mxu0 %v5080
      %v5082 = vand.u32 %v4944, 4294901760
      %v5083 = vsub.f32 %v4944, %v5082
      %v5084 = vand.u32 %v5083, 4294901760
      %5085 = vmatpush.msra.mxu0 %v5084
      %v5086 = vand.u32 %v4949, 4294901760
      %5087 = vmatmul.f32.gmra.mxu0 %v5086
      %v5088 = vpop.f32.mrf.mxu0
      %v5089 = vadd.f32 %v5062, %v5088
      %5090 = vdwg.mxu0
      %5091 = vmatpush.msra.mxu0 0.0
      %5092 = vmatpush.msra.mxu0 0.0
      %5093 = vmatpush.msra.mxu0 0.0
      %5094 = vmatpush.msra.mxu0 0.0
      %5095 = vmatpush.msra.mxu0 0.0
      %5096 = vmatpush.msra.mxu0 0.0
      %5097 = vmatpush.msra.mxu0 0.0
      %5098 = vmatpush.msra.mxu0 0.0
      %5099 = vmatpush.msra.mxu0 0.0
      %5100 = vmatpush.msra.mxu0 0.0
      %5101 = vmatpush.msra.mxu0 0.0
      %5102 = vmatpush.msra.mxu0 0.0
      %5103 = vmatpush.msra.mxu0 0.0
      %5104 = vmatpush.msra.mxu0 0.0
      %v5105 = vand.u32 %v4951, 4294901760
      %5106 = vmatpush.msra.mxu0 %v5105
      %v5107 = vand.u32 %v4944, 4294901760
      %5108 = vmatpush.msra.mxu0 %v5107
      %v5109 = vand.u32 %v4949, 4294901760
      %5110 = vmatmul.f32.gmra.mxu0 %v5109
      %v5111 = vpop.f32.mrf.mxu0
      %v5112 = vadd.f32 %v5089, %v5111
      %5113 = vdwg.mxu0
      %5114 = vmatpush.msra.mxu0 0.0
      %5115 = vmatpush.msra.mxu0 0.0
      %5116 = vmatpush.msra.mxu0 0.0
      %5117 = vmatpush.msra.mxu0 0.0
      %5118 = vmatpush.msra.mxu0 0.0
      %5119 = vmatpush.msra.mxu0 0.0
      %5120 = vmatpush.msra.mxu0 0.0
      %5121 = vmatpush.msra.mxu0 0.0
      %5122 = vmatpush.msra.mxu0 0.0
      %5123 = vmatpush.msra.mxu0 0.0
      %5124 = vmatpush.msra.mxu0 0.0
      %5125 = vmatpush.msra.mxu0 0.0
      %5126 = vmatpush.msra.mxu0 0.0
      %5127 = vmatpush.msra.mxu0 0.0
      %v5128 = vand.u32 %v4953, 4294901760
      %5129 = vmatpush.msra.mxu0 %v5128
      %v5130 = vand.u32 %v4939, 4294901760
      %5131 = vmatpush.msra.mxu0 %v5130
      %v5132 = vand.u32 %v4949, 4294901760
      %v5133 = vsub.f32 %v4949, %v5132
      %v5134 = vand.u32 %v5133, 4294901760
      %v5135 = vsub.f32 %v5133, %v5134
      %v5136 = vand.u32 %v5135, 4294901760
      %5137 = vmatmul.f32.gmra.mxu0 %v5136
      %v5138 = vpop.f32.mrf.mxu0
      %v5139 = vadd.f32 0.0, %v5138
      %5140 = vdwg.mxu0
      %5141 = vmatpush.msra.mxu0 0.0
      %5142 = vmatpush.msra.mxu0 0.0
      %5143 = vmatpush.msra.mxu0 0.0
      %5144 = vmatpush.msra.mxu0 0.0
      %5145 = vmatpush.msra.mxu0 0.0
      %5146 = vmatpush.msra.mxu0 0.0
      %5147 = vmatpush.msra.mxu0 0.0
      %5148 = vmatpush.msra.mxu0 0.0
      %5149 = vmatpush.msra.mxu0 0.0
      %5150 = vmatpush.msra.mxu0 0.0
      %5151 = vmatpush.msra.mxu0 0.0
      %5152 = vmatpush.msra.mxu0 0.0
      %5153 = vmatpush.msra.mxu0 0.0
      %5154 = vmatpush.msra.mxu0 0.0
      %v5155 = vand.u32 %v4953, 4294901760
      %v5156 = vsub.f32 %v4953, %v5155
      %v5157 = vand.u32 %v5156, 4294901760
      %v5158 = vsub.f32 %v5156, %v5157
      %v5159 = vand.u32 %v5158, 4294901760
      %5160 = vmatpush.msra.mxu0 %v5159
      %v5161 = vand.u32 %v4939, 4294901760
      %v5162 = vsub.f32 %v4939, %v5161
      %v5163 = vand.u32 %v5162, 4294901760
      %v5164 = vsub.f32 %v5162, %v5163
      %v5165 = vand.u32 %v5164, 4294901760
      %5166 = vmatpush.msra.mxu0 %v5165
      %v5167 = vand.u32 %v4949, 4294901760
      %5168 = vmatmul.f32.gmra.mxu0 %v5167
      %v5169 = vpop.f32.mrf.mxu0
      %v5170 = vadd.f32 %v5139, %v5169
      %5171 = vdwg.mxu0
      %5172 = vmatpush.msra.mxu0 0.0
      %5173 = vmatpush.msra.mxu0 0.0
      %5174 = vmatpush.msra.mxu0 0.0
      %5175 = vmatpush.msra.mxu0 0.0
      %5176 = vmatpush.msra.mxu0 0.0
      %5177 = vmatpush.msra.mxu0 0.0
      %5178 = vmatpush.msra.mxu0 0.0
      %5179 = vmatpush.msra.mxu0 0.0
      %5180 = vmatpush.msra.mxu0 0.0
      %5181 = vmatpush.msra.mxu0 0.0
      %5182 = vmatpush.msra.mxu0 0.0
      %5183 = vmatpush.msra.mxu0 0.0
      %5184 = vmatpush.msra.mxu0 0.0
      %5185 = vmatpush.msra.mxu0 0.0
      %v5186 = vand.u32 %v4953, 4294901760
      %v5187 = vsub.f32 %v4953, %v5186
      %5188 = vmatpush.msra.mxu0 %v5187
      %v5189 = vand.u32 %v4939, 4294901760
      %v5190 = vsub.f32 %v4939, %v5189
      %5191 = vmatpush.msra.mxu0 %v5190
      %v5192 = vand.u32 %v4949, 4294901760
      %v5193 = vsub.f32 %v4949, %v5192
      %5194 = vmatmul.f32.gmra.mxu0 %v5193
      %v5195 = vpop.f32.mrf.mxu0
      %v5196 = vadd.f32 %v5170, %v5195
      %5197 = vdwg.mxu0
      %5198 = vmatpush.msra.mxu0 0.0
      %5199 = vmatpush.msra.mxu0 0.0
      %5200 = vmatpush.msra.mxu0 0.0
      %5201 = vmatpush.msra.mxu0 0.0
      %5202 = vmatpush.msra.mxu0 0.0
      %5203 = vmatpush.msra.mxu0 0.0
      %5204 = vmatpush.msra.mxu0 0.0
      %5205 = vmatpush.msra.mxu0 0.0
      %5206 = vmatpush.msra.mxu0 0.0
      %5207 = vmatpush.msra.mxu0 0.0
      %5208 = vmatpush.msra.mxu0 0.0
      %5209 = vmatpush.msra.mxu0 0.0
      %5210 = vmatpush.msra.mxu0 0.0
      %5211 = vmatpush.msra.mxu0 0.0
      %v5212 = vand.u32 %v4953, 4294901760
      %5213 = vmatpush.msra.mxu0 %v5212
      %v5214 = vand.u32 %v4939, 4294901760
      %5215 = vmatpush.msra.mxu0 %v5214
      %v5216 = vand.u32 %v4949, 4294901760
      %v5217 = vsub.f32 %v4949, %v5216
      %v5218 = vand.u32 %v5217, 4294901760
      %5219 = vmatmul.f32.gmra.mxu0 %v5218
      %v5220 = vpop.f32.mrf.mxu0
      %v5221 = vadd.f32 %v5196, %v5220
      %5222 = vdwg.mxu0
      %5223 = vmatpush.msra.mxu0 0.0
      %5224 = vmatpush.msra.mxu0 0.0
      %5225 = vmatpush.msra.mxu0 0.0
      %5226 = vmatpush.msra.mxu0 0.0
      %5227 = vmatpush.msra.mxu0 0.0
      %5228 = vmatpush.msra.mxu0 0.0
      %5229 = vmatpush.msra.mxu0 0.0
      %5230 = vmatpush.msra.mxu0 0.0
      %5231 = vmatpush.msra.mxu0 0.0
      %5232 = vmatpush.msra.mxu0 0.0
      %5233 = vmatpush.msra.mxu0 0.0
      %5234 = vmatpush.msra.mxu0 0.0
      %5235 = vmatpush.msra.mxu0 0.0
      %5236 = vmatpush.msra.mxu0 0.0
      %v5237 = vand.u32 %v4953, 4294901760
      %v5238 = vsub.f32 %v4953, %v5237
      %v5239 = vand.u32 %v5238, 4294901760
      %5240 = vmatpush.msra.mxu0 %v5239
      %v5241 = vand.u32 %v4939, 4294901760
      %v5242 = vsub.f32 %v4939, %v5241
      %v5243 = vand.u32 %v5242, 4294901760
      %5244 = vmatpush.msra.mxu0 %v5243
      %v5245 = vand.u32 %v4949, 4294901760
      %5246 = vmatmul.f32.gmra.mxu0 %v5245
      %v5247 = vpop.f32.mrf.mxu0
      %v5248 = vadd.f32 %v5221, %v5247
      %5249 = vdwg.mxu0
      %5250 = vmatpush.msra.mxu0 0.0
      %5251 = vmatpush.msra.mxu0 0.0
      %5252 = vmatpush.msra.mxu0 0.0
      %5253 = vmatpush.msra.mxu0 0.0
      %5254 = vmatpush.msra.mxu0 0.0
      %5255 = vmatpush.msra.mxu0 0.0
      %5256 = vmatpush.msra.mxu0 0.0
      %5257 = vmatpush.msra.mxu0 0.0
      %5258 = vmatpush.msra.mxu0 0.0
      %5259 = vmatpush.msra.mxu0 0.0
      %5260 = vmatpush.msra.mxu0 0.0
      %5261 = vmatpush.msra.mxu0 0.0
      %5262 = vmatpush.msra.mxu0 0.0
      %5263 = vmatpush.msra.mxu0 0.0
      %v5264 = vand.u32 %v4953, 4294901760
      %5265 = vmatpush.msra.mxu0 %v5264
      %v5266 = vand.u32 %v4939, 4294901760
      %5267 = vmatpush.msra.mxu0 %v5266
      %v5268 = vand.u32 %v4949, 4294901760
      %5269 = vmatmul.f32.gmra.mxu0 %v5268
      %v5270 = vpop.f32.mrf.mxu0
      %v5271 = vadd.f32 %v5248, %v5270
      %5272 = vdwg.mxu0
      %v5273 = vadd.f32 %v4932, %v5112
      %v5274 = vadd.f32 %v4933, %v5271
      %s5275 = scalar_lea.vmem %s4, 24
      %v5276 = vld [vmem:[%s5275] sm:$0xf]
      %5277 = vrot.lane.b32.xlu0 %v3225, 75
      %v5278 = vpop.permute.xlu0 %5277
      %5279 = vrot.lane.b32.xlu0 %v3226, 75
      %v5280 = vpop.permute.xlu0 %5279
      %5281 = vrot.lane.b32.xlu0 %v3227, 75
      %v5282 = vpop.permute.xlu0 %5281
      %5283 = vrot.lane.b32.xlu0 %v3228, 75
      %v5284 = vpop.permute.xlu0 %5283
      %vm5285 = vcmask 613376
      %v5286 = vsel %vm5285, %v5278, %v5280
      %v5287 = vsel %vm5285, %v5282, %v5284
      %v5291 = vsel %vm3247, %v5276, 0
      %v5293 = vsel %vm3251, %v5287, 0
      %v5295 = vsel %vm3251, %v5284, 0
      %5297 = vmatpush.msra.mxu0 0.0
      %5298 = vmatpush.msra.mxu0 0.0
      %5299 = vmatpush.msra.mxu0 0.0
      %5300 = vmatpush.msra.mxu0 0.0
      %5301 = vmatpush.msra.mxu0 0.0
      %5302 = vmatpush.msra.mxu0 0.0
      %5303 = vmatpush.msra.mxu0 0.0
      %5304 = vmatpush.msra.mxu0 0.0
      %5305 = vmatpush.msra.mxu0 0.0
      %5306 = vmatpush.msra.mxu0 0.0
      %5307 = vmatpush.msra.mxu0 0.0
      %5308 = vmatpush.msra.mxu0 0.0
      %5309 = vmatpush.msra.mxu0 0.0
      %5310 = vmatpush.msra.mxu0 0.0
      %v5311 = vand.u32 %v5293, 4294901760
      %5312 = vmatpush.msra.mxu0 %v5311
      %v5313 = vand.u32 %v5286, 4294901760
      %5314 = vmatpush.msra.mxu0 %v5313
      %v5315 = vand.u32 %v5291, 4294901760
      %v5316 = vsub.f32 %v5291, %v5315
      %v5317 = vand.u32 %v5316, 4294901760
      %v5318 = vsub.f32 %v5316, %v5317
      %v5319 = vand.u32 %v5318, 4294901760
      %5320 = vmatmul.f32.gmra.mxu0 %v5319
      %v5321 = vpop.f32.mrf.mxu0
      %v5322 = vadd.f32 0.0, %v5321
      %5323 = vdwg.mxu0
      %5324 = vmatpush.msra.mxu0 0.0
      %5325 = vmatpush.msra.mxu0 0.0
      %5326 = vmatpush.msra.mxu0 0.0
      %5327 = vmatpush.msra.mxu0 0.0
      %5328 = vmatpush.msra.mxu0 0.0
      %5329 = vmatpush.msra.mxu0 0.0
      %5330 = vmatpush.msra.mxu0 0.0
      %5331 = vmatpush.msra.mxu0 0.0
      %5332 = vmatpush.msra.mxu0 0.0
      %5333 = vmatpush.msra.mxu0 0.0
      %5334 = vmatpush.msra.mxu0 0.0
      %5335 = vmatpush.msra.mxu0 0.0
      %5336 = vmatpush.msra.mxu0 0.0
      %5337 = vmatpush.msra.mxu0 0.0
      %v5338 = vand.u32 %v5293, 4294901760
      %v5339 = vsub.f32 %v5293, %v5338
      %v5340 = vand.u32 %v5339, 4294901760
      %v5341 = vsub.f32 %v5339, %v5340
      %v5342 = vand.u32 %v5341, 4294901760
      %5343 = vmatpush.msra.mxu0 %v5342
      %v5344 = vand.u32 %v5286, 4294901760
      %v5345 = vsub.f32 %v5286, %v5344
      %v5346 = vand.u32 %v5345, 4294901760
      %v5347 = vsub.f32 %v5345, %v5346
      %v5348 = vand.u32 %v5347, 4294901760
      %5349 = vmatpush.msra.mxu0 %v5348
      %v5350 = vand.u32 %v5291, 4294901760
      %5351 = vmatmul.f32.gmra.mxu0 %v5350
      %v5352 = vpop.f32.mrf.mxu0
      %v5353 = vadd.f32 %v5322, %v5352
      %5354 = vdwg.mxu0
      %5355 = vmatpush.msra.mxu0 0.0
      %5356 = vmatpush.msra.mxu0 0.0
      %5357 = vmatpush.msra.mxu0 0.0
      %5358 = vmatpush.msra.mxu0 0.0
      %5359 = vmatpush.msra.mxu0 0.0
      %5360 = vmatpush.msra.mxu0 0.0
      %5361 = vmatpush.msra.mxu0 0.0
      %5362 = vmatpush.msra.mxu0 0.0
      %5363 = vmatpush.msra.mxu0 0.0
      %5364 = vmatpush.msra.mxu0 0.0
      %5365 = vmatpush.msra.mxu0 0.0
      %5366 = vmatpush.msra.mxu0 0.0
      %5367 = vmatpush.msra.mxu0 0.0
      %5368 = vmatpush.msra.mxu0 0.0
      %v5369 = vand.u32 %v5293, 4294901760
      %v5370 = vsub.f32 %v5293, %v5369
      %5371 = vmatpush.msra.mxu0 %v5370
      %v5372 = vand.u32 %v5286, 4294901760
      %v5373 = vsub.f32 %v5286, %v5372
      %5374 = vmatpush.msra.mxu0 %v5373
      %v5375 = vand.u32 %v5291, 4294901760
      %v5376 = vsub.f32 %v5291, %v5375
      %5377 = vmatmul.f32.gmra.mxu0 %v5376
      %v5378 = vpop.f32.mrf.mxu0
      %v5379 = vadd.f32 %v5353, %v5378
      %5380 = vdwg.mxu0
      %5381 = vmatpush.msra.mxu0 0.0
      %5382 = vmatpush.msra.mxu0 0.0
      %5383 = vmatpush.msra.mxu0 0.0
      %5384 = vmatpush.msra.mxu0 0.0
      %5385 = vmatpush.msra.mxu0 0.0
      %5386 = vmatpush.msra.mxu0 0.0
      %5387 = vmatpush.msra.mxu0 0.0
      %5388 = vmatpush.msra.mxu0 0.0
      %5389 = vmatpush.msra.mxu0 0.0
      %5390 = vmatpush.msra.mxu0 0.0
      %5391 = vmatpush.msra.mxu0 0.0
      %5392 = vmatpush.msra.mxu0 0.0
      %5393 = vmatpush.msra.mxu0 0.0
      %5394 = vmatpush.msra.mxu0 0.0
      %v5395 = vand.u32 %v5293, 4294901760
      %5396 = vmatpush.msra.mxu0 %v5395
      %v5397 = vand.u32 %v5286, 4294901760
      %5398 = vmatpush.msra.mxu0 %v5397
      %v5399 = vand.u32 %v5291, 4294901760
      %v5400 = vsub.f32 %v5291, %v5399
      %v5401 = vand.u32 %v5400, 4294901760
      %5402 = vmatmul.f32.gmra.mxu0 %v5401
      %v5403 = vpop.f32.mrf.mxu0
      %v5404 = vadd.f32 %v5379, %v5403
      %5405 = vdwg.mxu0
      %5406 = vmatpush.msra.mxu0 0.0
      %5407 = vmatpush.msra.mxu0 0.0
      %5408 = vmatpush.msra.mxu0 0.0
      %5409 = vmatpush.msra.mxu0 0.0
      %5410 = vmatpush.msra.mxu0 0.0
      %5411 = vmatpush.msra.mxu0 0.0
      %5412 = vmatpush.msra.mxu0 0.0
      %5413 = vmatpush.msra.mxu0 0.0
      %5414 = vmatpush.msra.mxu0 0.0
      %5415 = vmatpush.msra.mxu0 0.0
      %5416 = vmatpush.msra.mxu0 0.0
      %5417 = vmatpush.msra.mxu0 0.0
      %5418 = vmatpush.msra.mxu0 0.0
      %5419 = vmatpush.msra.mxu0 0.0
      %v5420 = vand.u32 %v5293, 4294901760
      %v5421 = vsub.f32 %v5293, %v5420
      %v5422 = vand.u32 %v5421, 4294901760
      %5423 = vmatpush.msra.mxu0 %v5422
      %v5424 = vand.u32 %v5286, 4294901760
      %v5425 = vsub.f32 %v5286, %v5424
      %v5426 = vand.u32 %v5425, 4294901760
      %5427 = vmatpush.msra.mxu0 %v5426
      %v5428 = vand.u32 %v5291, 4294901760
      %5429 = vmatmul.f32.gmra.mxu0 %v5428
      %v5430 = vpop.f32.mrf.mxu0
      %v5431 = vadd.f32 %v5404, %v5430
      %5432 = vdwg.mxu0
      %5433 = vmatpush.msra.mxu0 0.0
      %5434 = vmatpush.msra.mxu0 0.0
      %5435 = vmatpush.msra.mxu0 0.0
      %5436 = vmatpush.msra.mxu0 0.0
      %5437 = vmatpush.msra.mxu0 0.0
      %5438 = vmatpush.msra.mxu0 0.0
      %5439 = vmatpush.msra.mxu0 0.0
      %5440 = vmatpush.msra.mxu0 0.0
      %5441 = vmatpush.msra.mxu0 0.0
      %5442 = vmatpush.msra.mxu0 0.0
      %5443 = vmatpush.msra.mxu0 0.0
      %5444 = vmatpush.msra.mxu0 0.0
      %5445 = vmatpush.msra.mxu0 0.0
      %5446 = vmatpush.msra.mxu0 0.0
      %v5447 = vand.u32 %v5293, 4294901760
      %5448 = vmatpush.msra.mxu0 %v5447
      %v5449 = vand.u32 %v5286, 4294901760
      %5450 = vmatpush.msra.mxu0 %v5449
      %v5451 = vand.u32 %v5291, 4294901760
      %5452 = vmatmul.f32.gmra.mxu0 %v5451
      %v5453 = vpop.f32.mrf.mxu0
      %v5454 = vadd.f32 %v5431, %v5453
      %5455 = vdwg.mxu0
      %5456 = vmatpush.msra.mxu0 0.0
      %5457 = vmatpush.msra.mxu0 0.0
      %5458 = vmatpush.msra.mxu0 0.0
      %5459 = vmatpush.msra.mxu0 0.0
      %5460 = vmatpush.msra.mxu0 0.0
      %5461 = vmatpush.msra.mxu0 0.0
      %5462 = vmatpush.msra.mxu0 0.0
      %5463 = vmatpush.msra.mxu0 0.0
      %5464 = vmatpush.msra.mxu0 0.0
      %5465 = vmatpush.msra.mxu0 0.0
      %5466 = vmatpush.msra.mxu0 0.0
      %5467 = vmatpush.msra.mxu0 0.0
      %5468 = vmatpush.msra.mxu0 0.0
      %5469 = vmatpush.msra.mxu0 0.0
      %v5470 = vand.u32 %v5295, 4294901760
      %5471 = vmatpush.msra.mxu0 %v5470
      %v5472 = vand.u32 %v5280, 4294901760
      %5473 = vmatpush.msra.mxu0 %v5472
      %v5474 = vand.u32 %v5291, 4294901760
      %v5475 = vsub.f32 %v5291, %v5474
      %v5476 = vand.u32 %v5475, 4294901760
      %v5477 = vsub.f32 %v5475, %v5476
      %v5478 = vand.u32 %v5477, 4294901760
      %5479 = vmatmul.f32.gmra.mxu0 %v5478
      %v5480 = vpop.f32.mrf.mxu0
      %v5481 = vadd.f32 0.0, %v5480
      %5482 = vdwg.mxu0
      %5483 = vmatpush.msra.mxu0 0.0
      %5484 = vmatpush.msra.mxu0 0.0
      %5485 = vmatpush.msra.mxu0 0.0
      %5486 = vmatpush.msra.mxu0 0.0
      %5487 = vmatpush.msra.mxu0 0.0
      %5488 = vmatpush.msra.mxu0 0.0
      %5489 = vmatpush.msra.mxu0 0.0
      %5490 = vmatpush.msra.mxu0 0.0
      %5491 = vmatpush.msra.mxu0 0.0
      %5492 = vmatpush.msra.mxu0 0.0
      %5493 = vmatpush.msra.mxu0 0.0
      %5494 = vmatpush.msra.mxu0 0.0
      %5495 = vmatpush.msra.mxu0 0.0
      %5496 = vmatpush.msra.mxu0 0.0
      %v5497 = vand.u32 %v5295, 4294901760
      %v5498 = vsub.f32 %v5295, %v5497
      %v5499 = vand.u32 %v5498, 4294901760
      %v5500 = vsub.f32 %v5498, %v5499
      %v5501 = vand.u32 %v5500, 4294901760
      %5502 = vmatpush.msra.mxu0 %v5501
      %v5503 = vand.u32 %v5280, 4294901760
      %v5504 = vsub.f32 %v5280, %v5503
      %v5505 = vand.u32 %v5504, 4294901760
      %v5506 = vsub.f32 %v5504, %v5505
      %v5507 = vand.u32 %v5506, 4294901760
      %5508 = vmatpush.msra.mxu0 %v5507
      %v5509 = vand.u32 %v5291, 4294901760
      %5510 = vmatmul.f32.gmra.mxu0 %v5509
      %v5511 = vpop.f32.mrf.mxu0
      %v5512 = vadd.f32 %v5481, %v5511
      %5513 = vdwg.mxu0
      %5514 = vmatpush.msra.mxu0 0.0
      %5515 = vmatpush.msra.mxu0 0.0
      %5516 = vmatpush.msra.mxu0 0.0
      %5517 = vmatpush.msra.mxu0 0.0
      %5518 = vmatpush.msra.mxu0 0.0
      %5519 = vmatpush.msra.mxu0 0.0
      %5520 = vmatpush.msra.mxu0 0.0
      %5521 = vmatpush.msra.mxu0 0.0
      %5522 = vmatpush.msra.mxu0 0.0
      %5523 = vmatpush.msra.mxu0 0.0
      %5524 = vmatpush.msra.mxu0 0.0
      %5525 = vmatpush.msra.mxu0 0.0
      %5526 = vmatpush.msra.mxu0 0.0
      %5527 = vmatpush.msra.mxu0 0.0
      %v5528 = vand.u32 %v5295, 4294901760
      %v5529 = vsub.f32 %v5295, %v5528
      %5530 = vmatpush.msra.mxu0 %v5529
      %v5531 = vand.u32 %v5280, 4294901760
      %v5532 = vsub.f32 %v5280, %v5531
      %5533 = vmatpush.msra.mxu0 %v5532
      %v5534 = vand.u32 %v5291, 4294901760
      %v5535 = vsub.f32 %v5291, %v5534
      %5536 = vmatmul.f32.gmra.mxu0 %v5535
      %v5537 = vpop.f32.mrf.mxu0
      %v5538 = vadd.f32 %v5512, %v5537
      %5539 = vdwg.mxu0
      %5540 = vmatpush.msra.mxu0 0.0
      %5541 = vmatpush.msra.mxu0 0.0
      %5542 = vmatpush.msra.mxu0 0.0
      %5543 = vmatpush.msra.mxu0 0.0
      %5544 = vmatpush.msra.mxu0 0.0
      %5545 = vmatpush.msra.mxu0 0.0
      %5546 = vmatpush.msra.mxu0 0.0
      %5547 = vmatpush.msra.mxu0 0.0
      %5548 = vmatpush.msra.mxu0 0.0
      %5549 = vmatpush.msra.mxu0 0.0
      %5550 = vmatpush.msra.mxu0 0.0
      %5551 = vmatpush.msra.mxu0 0.0
      %5552 = vmatpush.msra.mxu0 0.0
      %5553 = vmatpush.msra.mxu0 0.0
      %v5554 = vand.u32 %v5295, 4294901760
      %5555 = vmatpush.msra.mxu0 %v5554
      %v5556 = vand.u32 %v5280, 4294901760
      %5557 = vmatpush.msra.mxu0 %v5556
      %v5558 = vand.u32 %v5291, 4294901760
      %v5559 = vsub.f32 %v5291, %v5558
      %v5560 = vand.u32 %v5559, 4294901760
      %5561 = vmatmul.f32.gmra.mxu0 %v5560
      %v5562 = vpop.f32.mrf.mxu0
      %v5563 = vadd.f32 %v5538, %v5562
      %5564 = vdwg.mxu0
      %5565 = vmatpush.msra.mxu0 0.0
      %5566 = vmatpush.msra.mxu0 0.0
      %5567 = vmatpush.msra.mxu0 0.0
      %5568 = vmatpush.msra.mxu0 0.0
      %5569 = vmatpush.msra.mxu0 0.0
      %5570 = vmatpush.msra.mxu0 0.0
      %5571 = vmatpush.msra.mxu0 0.0
      %5572 = vmatpush.msra.mxu0 0.0
      %5573 = vmatpush.msra.mxu0 0.0
      %5574 = vmatpush.msra.mxu0 0.0
      %5575 = vmatpush.msra.mxu0 0.0
      %5576 = vmatpush.msra.mxu0 0.0
      %5577 = vmatpush.msra.mxu0 0.0
      %5578 = vmatpush.msra.mxu0 0.0
      %v5579 = vand.u32 %v5295, 4294901760
      %v5580 = vsub.f32 %v5295, %v5579
      %v5581 = vand.u32 %v5580, 4294901760
      %5582 = vmatpush.msra.mxu0 %v5581
      %v5583 = vand.u32 %v5280, 4294901760
      %v5584 = vsub.f32 %v5280, %v5583
      %v5585 = vand.u32 %v5584, 4294901760
      %5586 = vmatpush.msra.mxu0 %v5585
      %v5587 = vand.u32 %v5291, 4294901760
      %5588 = vmatmul.f32.gmra.mxu0 %v5587
      %v5589 = vpop.f32.mrf.mxu0
      %v5590 = vadd.f32 %v5563, %v5589
      %5591 = vdwg.mxu0
      %5592 = vmatpush.msra.mxu0 0.0
      %5593 = vmatpush.msra.mxu0 0.0
      %5594 = vmatpush.msra.mxu0 0.0
      %5595 = vmatpush.msra.mxu0 0.0
      %5596 = vmatpush.msra.mxu0 0.0
      %5597 = vmatpush.msra.mxu0 0.0
      %5598 = vmatpush.msra.mxu0 0.0
      %5599 = vmatpush.msra.mxu0 0.0
      %5600 = vmatpush.msra.mxu0 0.0
      %5601 = vmatpush.msra.mxu0 0.0
      %5602 = vmatpush.msra.mxu0 0.0
      %5603 = vmatpush.msra.mxu0 0.0
      %5604 = vmatpush.msra.mxu0 0.0
      %5605 = vmatpush.msra.mxu0 0.0
      %v5606 = vand.u32 %v5295, 4294901760
      %5607 = vmatpush.msra.mxu0 %v5606
      %v5608 = vand.u32 %v5280, 4294901760
      %5609 = vmatpush.msra.mxu0 %v5608
      %v5610 = vand.u32 %v5291, 4294901760
      %5611 = vmatmul.f32.gmra.mxu0 %v5610
      %v5612 = vpop.f32.mrf.mxu0
      %v5613 = vadd.f32 %v5590, %v5612
      %5614 = vdwg.mxu0
      %v5615 = vadd.f32 %v5273, %v5454
      %v5616 = vadd.f32 %v5274, %v5613
      %s5617 = scalar_lea.vmem %s4, 28
      %v5618 = vld [vmem:[%s5617] sm:$0xf]
      %5619 = vrot.lane.b32.xlu0 %v3225, 74
      %v5620 = vpop.permute.xlu0 %5619
      %5621 = vrot.lane.b32.xlu0 %v3226, 74
      %v5622 = vpop.permute.xlu0 %5621
      %5623 = vrot.lane.b32.xlu0 %v3227, 74
      %v5624 = vpop.permute.xlu0 %5623
      %5625 = vrot.lane.b32.xlu0 %v3228, 74
      %v5626 = vpop.permute.xlu0 %5625
      %vm5627 = vcmask 605184
      %v5628 = vsel %vm5627, %v5620, %v5622
      %v5629 = vsel %vm5627, %v5624, %v5626
      %v5633 = vsel %vm3247, %v5618, 0
      %v5635 = vsel %vm3251, %v5629, 0
      %v5637 = vsel %vm3251, %v5626, 0
      %5639 = vmatpush.msra.mxu0 0.0
      %5640 = vmatpush.msra.mxu0 0.0
      %5641 = vmatpush.msra.mxu0 0.0
      %5642 = vmatpush.msra.mxu0 0.0
      %5643 = vmatpush.msra.mxu0 0.0
      %5644 = vmatpush.msra.mxu0 0.0
      %5645 = vmatpush.msra.mxu0 0.0
      %5646 = vmatpush.msra.mxu0 0.0
      %5647 = vmatpush.msra.mxu0 0.0
      %5648 = vmatpush.msra.mxu0 0.0
      %5649 = vmatpush.msra.mxu0 0.0
      %5650 = vmatpush.msra.mxu0 0.0
      %5651 = vmatpush.msra.mxu0 0.0
      %5652 = vmatpush.msra.mxu0 0.0
      %v5653 = vand.u32 %v5635, 4294901760
      %5654 = vmatpush.msra.mxu0 %v5653
      %v5655 = vand.u32 %v5628, 4294901760
      %5656 = vmatpush.msra.mxu0 %v5655
      %v5657 = vand.u32 %v5633, 4294901760
      %v5658 = vsub.f32 %v5633, %v5657
      %v5659 = vand.u32 %v5658, 4294901760
      %v5660 = vsub.f32 %v5658, %v5659
      %v5661 = vand.u32 %v5660, 4294901760
      %5662 = vmatmul.f32.gmra.mxu0 %v5661
      %v5663 = vpop.f32.mrf.mxu0
      %v5664 = vadd.f32 0.0, %v5663
      %5665 = vdwg.mxu0
      %5666 = vmatpush.msra.mxu0 0.0
      %5667 = vmatpush.msra.mxu0 0.0
      %5668 = vmatpush.msra.mxu0 0.0
      %5669 = vmatpush.msra.mxu0 0.0
      %5670 = vmatpush.msra.mxu0 0.0
      %5671 = vmatpush.msra.mxu0 0.0
      %5672 = vmatpush.msra.mxu0 0.0
      %5673 = vmatpush.msra.mxu0 0.0
      %5674 = vmatpush.msra.mxu0 0.0
      %5675 = vmatpush.msra.mxu0 0.0
      %5676 = vmatpush.msra.mxu0 0.0
      %5677 = vmatpush.msra.mxu0 0.0
      %5678 = vmatpush.msra.mxu0 0.0
      %5679 = vmatpush.msra.mxu0 0.0
      %v5680 = vand.u32 %v5635, 4294901760
      %v5681 = vsub.f32 %v5635, %v5680
      %v5682 = vand.u32 %v5681, 4294901760
      %v5683 = vsub.f32 %v5681, %v5682
      %v5684 = vand.u32 %v5683, 4294901760
      %5685 = vmatpush.msra.mxu0 %v5684
      %v5686 = vand.u32 %v5628, 4294901760
      %v5687 = vsub.f32 %v5628, %v5686
      %v5688 = vand.u32 %v5687, 4294901760
      %v5689 = vsub.f32 %v5687, %v5688
      %v5690 = vand.u32 %v5689, 4294901760
      %5691 = vmatpush.msra.mxu0 %v5690
      %v5692 = vand.u32 %v5633, 4294901760
      %5693 = vmatmul.f32.gmra.mxu0 %v5692
      %v5694 = vpop.f32.mrf.mxu0
      %v5695 = vadd.f32 %v5664, %v5694
      %5696 = vdwg.mxu0
      %5697 = vmatpush.msra.mxu0 0.0
      %5698 = vmatpush.msra.mxu0 0.0
      %5699 = vmatpush.msra.mxu0 0.0
      %5700 = vmatpush.msra.mxu0 0.0
      %5701 = vmatpush.msra.mxu0 0.0
      %5702 = vmatpush.msra.mxu0 0.0
      %5703 = vmatpush.msra.mxu0 0.0
      %5704 = vmatpush.msra.mxu0 0.0
      %5705 = vmatpush.msra.mxu0 0.0
      %5706 = vmatpush.msra.mxu0 0.0
      %5707 = vmatpush.msra.mxu0 0.0
      %5708 = vmatpush.msra.mxu0 0.0
      %5709 = vmatpush.msra.mxu0 0.0
      %5710 = vmatpush.msra.mxu0 0.0
      %v5711 = vand.u32 %v5635, 4294901760
      %v5712 = vsub.f32 %v5635, %v5711
      %5713 = vmatpush.msra.mxu0 %v5712
      %v5714 = vand.u32 %v5628, 4294901760
      %v5715 = vsub.f32 %v5628, %v5714
      %5716 = vmatpush.msra.mxu0 %v5715
      %v5717 = vand.u32 %v5633, 4294901760
      %v5718 = vsub.f32 %v5633, %v5717
      %5719 = vmatmul.f32.gmra.mxu0 %v5718
      %v5720 = vpop.f32.mrf.mxu0
      %v5721 = vadd.f32 %v5695, %v5720
      %5722 = vdwg.mxu0
      %5723 = vmatpush.msra.mxu0 0.0
      %5724 = vmatpush.msra.mxu0 0.0
      %5725 = vmatpush.msra.mxu0 0.0
      %5726 = vmatpush.msra.mxu0 0.0
      %5727 = vmatpush.msra.mxu0 0.0
      %5728 = vmatpush.msra.mxu0 0.0
      %5729 = vmatpush.msra.mxu0 0.0
      %5730 = vmatpush.msra.mxu0 0.0
      %5731 = vmatpush.msra.mxu0 0.0
      %5732 = vmatpush.msra.mxu0 0.0
      %5733 = vmatpush.msra.mxu0 0.0
      %5734 = vmatpush.msra.mxu0 0.0
      %5735 = vmatpush.msra.mxu0 0.0
      %5736 = vmatpush.msra.mxu0 0.0
      %v5737 = vand.u32 %v5635, 4294901760
      %5738 = vmatpush.msra.mxu0 %v5737
      %v5739 = vand.u32 %v5628, 4294901760
      %5740 = vmatpush.msra.mxu0 %v5739
      %v5741 = vand.u32 %v5633, 4294901760
      %v5742 = vsub.f32 %v5633, %v5741
      %v5743 = vand.u32 %v5742, 4294901760
      %5744 = vmatmul.f32.gmra.mxu0 %v5743
      %v5745 = vpop.f32.mrf.mxu0
      %v5746 = vadd.f32 %v5721, %v5745
      %5747 = vdwg.mxu0
      %5748 = vmatpush.msra.mxu0 0.0
      %5749 = vmatpush.msra.mxu0 0.0
      %5750 = vmatpush.msra.mxu0 0.0
      %5751 = vmatpush.msra.mxu0 0.0
      %5752 = vmatpush.msra.mxu0 0.0
      %5753 = vmatpush.msra.mxu0 0.0
      %5754 = vmatpush.msra.mxu0 0.0
      %5755 = vmatpush.msra.mxu0 0.0
      %5756 = vmatpush.msra.mxu0 0.0
      %5757 = vmatpush.msra.mxu0 0.0
      %5758 = vmatpush.msra.mxu0 0.0
      %5759 = vmatpush.msra.mxu0 0.0
      %5760 = vmatpush.msra.mxu0 0.0
      %5761 = vmatpush.msra.mxu0 0.0
      %v5762 = vand.u32 %v5635, 4294901760
      %v5763 = vsub.f32 %v5635, %v5762
      %v5764 = vand.u32 %v5763, 4294901760
      %5765 = vmatpush.msra.mxu0 %v5764
      %v5766 = vand.u32 %v5628, 4294901760
      %v5767 = vsub.f32 %v5628, %v5766
      %v5768 = vand.u32 %v5767, 4294901760
      %5769 = vmatpush.msra.mxu0 %v5768
      %v5770 = vand.u32 %v5633, 4294901760
      %5771 = vmatmul.f32.gmra.mxu0 %v5770
      %v5772 = vpop.f32.mrf.mxu0
      %v5773 = vadd.f32 %v5746, %v5772
      %5774 = vdwg.mxu0
      %5775 = vmatpush.msra.mxu0 0.0
      %5776 = vmatpush.msra.mxu0 0.0
      %5777 = vmatpush.msra.mxu0 0.0
      %5778 = vmatpush.msra.mxu0 0.0
      %5779 = vmatpush.msra.mxu0 0.0
      %5780 = vmatpush.msra.mxu0 0.0
      %5781 = vmatpush.msra.mxu0 0.0
      %5782 = vmatpush.msra.mxu0 0.0
      %5783 = vmatpush.msra.mxu0 0.0
      %5784 = vmatpush.msra.mxu0 0.0
      %5785 = vmatpush.msra.mxu0 0.0
      %5786 = vmatpush.msra.mxu0 0.0
      %5787 = vmatpush.msra.mxu0 0.0
      %5788 = vmatpush.msra.mxu0 0.0
      %v5789 = vand.u32 %v5635, 4294901760
      %5790 = vmatpush.msra.mxu0 %v5789
      %v5791 = vand.u32 %v5628, 4294901760
      %5792 = vmatpush.msra.mxu0 %v5791
      %v5793 = vand.u32 %v5633, 4294901760
      %5794 = vmatmul.f32.gmra.mxu0 %v5793
      %v5795 = vpop.f32.mrf.mxu0
      %v5796 = vadd.f32 %v5773, %v5795
      %5797 = vdwg.mxu0
      %5798 = vmatpush.msra.mxu0 0.0
      %5799 = vmatpush.msra.mxu0 0.0
      %5800 = vmatpush.msra.mxu0 0.0
      %5801 = vmatpush.msra.mxu0 0.0
      %5802 = vmatpush.msra.mxu0 0.0
      %5803 = vmatpush.msra.mxu0 0.0
      %5804 = vmatpush.msra.mxu0 0.0
      %5805 = vmatpush.msra.mxu0 0.0
      %5806 = vmatpush.msra.mxu0 0.0
      %5807 = vmatpush.msra.mxu0 0.0
      %5808 = vmatpush.msra.mxu0 0.0
      %5809 = vmatpush.msra.mxu0 0.0
      %5810 = vmatpush.msra.mxu0 0.0
      %5811 = vmatpush.msra.mxu0 0.0
      %v5812 = vand.u32 %v5637, 4294901760
      %5813 = vmatpush.msra.mxu0 %v5812
      %v5814 = vand.u32 %v5622, 4294901760
      %5815 = vmatpush.msra.mxu0 %v5814
      %v5816 = vand.u32 %v5633, 4294901760
      %v5817 = vsub.f32 %v5633, %v5816
      %v5818 = vand.u32 %v5817, 4294901760
      %v5819 = vsub.f32 %v5817, %v5818
      %v5820 = vand.u32 %v5819, 4294901760
      %5821 = vmatmul.f32.gmra.mxu0 %v5820
      %v5822 = vpop.f32.mrf.mxu0
      %v5823 = vadd.f32 0.0, %v5822
      %5824 = vdwg.mxu0
      %5825 = vmatpush.msra.mxu0 0.0
      %5826 = vmatpush.msra.mxu0 0.0
      %5827 = vmatpush.msra.mxu0 0.0
      %5828 = vmatpush.msra.mxu0 0.0
      %5829 = vmatpush.msra.mxu0 0.0
      %5830 = vmatpush.msra.mxu0 0.0
      %5831 = vmatpush.msra.mxu0 0.0
      %5832 = vmatpush.msra.mxu0 0.0
      %5833 = vmatpush.msra.mxu0 0.0
      %5834 = vmatpush.msra.mxu0 0.0
      %5835 = vmatpush.msra.mxu0 0.0
      %5836 = vmatpush.msra.mxu0 0.0
      %5837 = vmatpush.msra.mxu0 0.0
      %5838 = vmatpush.msra.mxu0 0.0
      %v5839 = vand.u32 %v5637, 4294901760
      %v5840 = vsub.f32 %v5637, %v5839
      %v5841 = vand.u32 %v5840, 4294901760
      %v5842 = vsub.f32 %v5840, %v5841
      %v5843 = vand.u32 %v5842, 4294901760
      %5844 = vmatpush.msra.mxu0 %v5843
      %v5845 = vand.u32 %v5622, 4294901760
      %v5846 = vsub.f32 %v5622, %v5845
      %v5847 = vand.u32 %v5846, 4294901760
      %v5848 = vsub.f32 %v5846, %v5847
      %v5849 = vand.u32 %v5848, 4294901760
      %5850 = vmatpush.msra.mxu0 %v5849
      %v5851 = vand.u32 %v5633, 4294901760
      %5852 = vmatmul.f32.gmra.mxu0 %v5851
      %v5853 = vpop.f32.mrf.mxu0
      %v5854 = vadd.f32 %v5823, %v5853
      %5855 = vdwg.mxu0
      %5856 = vmatpush.msra.mxu0 0.0
      %5857 = vmatpush.msra.mxu0 0.0
      %5858 = vmatpush.msra.mxu0 0.0
      %5859 = vmatpush.msra.mxu0 0.0
      %5860 = vmatpush.msra.mxu0 0.0
      %5861 = vmatpush.msra.mxu0 0.0
      %5862 = vmatpush.msra.mxu0 0.0
      %5863 = vmatpush.msra.mxu0 0.0
      %5864 = vmatpush.msra.mxu0 0.0
      %5865 = vmatpush.msra.mxu0 0.0
      %5866 = vmatpush.msra.mxu0 0.0
      %5867 = vmatpush.msra.mxu0 0.0
      %5868 = vmatpush.msra.mxu0 0.0
      %5869 = vmatpush.msra.mxu0 0.0
      %v5870 = vand.u32 %v5637, 4294901760
      %v5871 = vsub.f32 %v5637, %v5870
      %5872 = vmatpush.msra.mxu0 %v5871
      %v5873 = vand.u32 %v5622, 4294901760
      %v5874 = vsub.f32 %v5622, %v5873
      %5875 = vmatpush.msra.mxu0 %v5874
      %v5876 = vand.u32 %v5633, 4294901760
      %v5877 = vsub.f32 %v5633, %v5876
      %5878 = vmatmul.f32.gmra.mxu0 %v5877
      %v5879 = vpop.f32.mrf.mxu0
      %v5880 = vadd.f32 %v5854, %v5879
      %5881 = vdwg.mxu0
      %5882 = vmatpush.msra.mxu0 0.0
      %5883 = vmatpush.msra.mxu0 0.0
      %5884 = vmatpush.msra.mxu0 0.0
      %5885 = vmatpush.msra.mxu0 0.0
      %5886 = vmatpush.msra.mxu0 0.0
      %5887 = vmatpush.msra.mxu0 0.0
      %5888 = vmatpush.msra.mxu0 0.0
      %5889 = vmatpush.msra.mxu0 0.0
      %5890 = vmatpush.msra.mxu0 0.0
      %5891 = vmatpush.msra.mxu0 0.0
      %5892 = vmatpush.msra.mxu0 0.0
      %5893 = vmatpush.msra.mxu0 0.0
      %5894 = vmatpush.msra.mxu0 0.0
      %5895 = vmatpush.msra.mxu0 0.0
      %v5896 = vand.u32 %v5637, 4294901760
      %5897 = vmatpush.msra.mxu0 %v5896
      %v5898 = vand.u32 %v5622, 4294901760
      %5899 = vmatpush.msra.mxu0 %v5898
      %v5900 = vand.u32 %v5633, 4294901760
      %v5901 = vsub.f32 %v5633, %v5900
      %v5902 = vand.u32 %v5901, 4294901760
      %5903 = vmatmul.f32.gmra.mxu0 %v5902
      %v5904 = vpop.f32.mrf.mxu0
      %v5905 = vadd.f32 %v5880, %v5904
      %5906 = vdwg.mxu0
      %5907 = vmatpush.msra.mxu0 0.0
      %5908 = vmatpush.msra.mxu0 0.0
      %5909 = vmatpush.msra.mxu0 0.0
      %5910 = vmatpush.msra.mxu0 0.0
      %5911 = vmatpush.msra.mxu0 0.0
      %5912 = vmatpush.msra.mxu0 0.0
      %5913 = vmatpush.msra.mxu0 0.0
      %5914 = vmatpush.msra.mxu0 0.0
      %5915 = vmatpush.msra.mxu0 0.0
      %5916 = vmatpush.msra.mxu0 0.0
      %5917 = vmatpush.msra.mxu0 0.0
      %5918 = vmatpush.msra.mxu0 0.0
      %5919 = vmatpush.msra.mxu0 0.0
      %5920 = vmatpush.msra.mxu0 0.0
      %v5921 = vand.u32 %v5637, 4294901760
      %v5922 = vsub.f32 %v5637, %v5921
      %v5923 = vand.u32 %v5922, 4294901760
      %5924 = vmatpush.msra.mxu0 %v5923
      %v5925 = vand.u32 %v5622, 4294901760
      %v5926 = vsub.f32 %v5622, %v5925
      %v5927 = vand.u32 %v5926, 4294901760
      %5928 = vmatpush.msra.mxu0 %v5927
      %v5929 = vand.u32 %v5633, 4294901760
      %5930 = vmatmul.f32.gmra.mxu0 %v5929
      %v5931 = vpop.f32.mrf.mxu0
      %v5932 = vadd.f32 %v5905, %v5931
      %5933 = vdwg.mxu0
      %5934 = vmatpush.msra.mxu0 0.0
      %5935 = vmatpush.msra.mxu0 0.0
      %5936 = vmatpush.msra.mxu0 0.0
      %5937 = vmatpush.msra.mxu0 0.0
      %5938 = vmatpush.msra.mxu0 0.0
      %5939 = vmatpush.msra.mxu0 0.0
      %5940 = vmatpush.msra.mxu0 0.0
      %5941 = vmatpush.msra.mxu0 0.0
      %5942 = vmatpush.msra.mxu0 0.0
      %5943 = vmatpush.msra.mxu0 0.0
      %5944 = vmatpush.msra.mxu0 0.0
      %5945 = vmatpush.msra.mxu0 0.0
      %5946 = vmatpush.msra.mxu0 0.0
      %5947 = vmatpush.msra.mxu0 0.0
      %v5948 = vand.u32 %v5637, 4294901760
      %5949 = vmatpush.msra.mxu0 %v5948
      %v5950 = vand.u32 %v5622, 4294901760
      %5951 = vmatpush.msra.mxu0 %v5950
      %v5952 = vand.u32 %v5633, 4294901760
      %5953 = vmatmul.f32.gmra.mxu0 %v5952
      %v5954 = vpop.f32.mrf.mxu0
      %v5955 = vadd.f32 %v5932, %v5954
      %5956 = vdwg.mxu0
      %v5957 = vadd.f32 %v5615, %v5796
      %v5958 = vadd.f32 %v5616, %v5955
      %s5959 = scalar_lea.vmem %s4, 32
      %v5960 = vld [vmem:[%s5959] sm:$0xf]
      %5961 = vrot.lane.b32.xlu0 %v3225, 73
      %v5962 = vpop.permute.xlu0 %5961
      %5963 = vrot.lane.b32.xlu0 %v3226, 73
      %v5964 = vpop.permute.xlu0 %5963
      %5965 = vrot.lane.b32.xlu0 %v3227, 73
      %v5966 = vpop.permute.xlu0 %5965
      %5967 = vrot.lane.b32.xlu0 %v3228, 73
      %v5968 = vpop.permute.xlu0 %5967
      %vm5969 = vcmask 596992
      %v5970 = vsel %vm5969, %v5962, %v5964
      %v5971 = vsel %vm5969, %v5966, %v5968
      %v5975 = vsel %vm3247, %v5960, 0
      %v5977 = vsel %vm3251, %v5971, 0
      %v5979 = vsel %vm3251, %v5968, 0
      %5981 = vmatpush.msra.mxu0 0.0
      %5982 = vmatpush.msra.mxu0 0.0
      %5983 = vmatpush.msra.mxu0 0.0
      %5984 = vmatpush.msra.mxu0 0.0
      %5985 = vmatpush.msra.mxu0 0.0
      %5986 = vmatpush.msra.mxu0 0.0
      %5987 = vmatpush.msra.mxu0 0.0
      %5988 = vmatpush.msra.mxu0 0.0
      %5989 = vmatpush.msra.mxu0 0.0
      %5990 = vmatpush.msra.mxu0 0.0
      %5991 = vmatpush.msra.mxu0 0.0
      %5992 = vmatpush.msra.mxu0 0.0
      %5993 = vmatpush.msra.mxu0 0.0
      %5994 = vmatpush.msra.mxu0 0.0
      %v5995 = vand.u32 %v5977, 4294901760
      %5996 = vmatpush.msra.mxu0 %v5995
      %v5997 = vand.u32 %v5970, 4294901760
      %5998 = vmatpush.msra.mxu0 %v5997
      %v5999 = vand.u32 %v5975, 4294901760
      %v6000 = vsub.f32 %v5975, %v5999
      %v6001 = vand.u32 %v6000, 4294901760
      %v6002 = vsub.f32 %v6000, %v6001
      %v6003 = vand.u32 %v6002, 4294901760
      %6004 = vmatmul.f32.gmra.mxu0 %v6003
      %v6005 = vpop.f32.mrf.mxu0
      %v6006 = vadd.f32 0.0, %v6005
      %6007 = vdwg.mxu0
      %6008 = vmatpush.msra.mxu0 0.0
      %6009 = vmatpush.msra.mxu0 0.0
      %6010 = vmatpush.msra.mxu0 0.0
      %6011 = vmatpush.msra.mxu0 0.0
      %6012 = vmatpush.msra.mxu0 0.0
      %6013 = vmatpush.msra.mxu0 0.0
      %6014 = vmatpush.msra.mxu0 0.0
      %6015 = vmatpush.msra.mxu0 0.0
      %6016 = vmatpush.msra.mxu0 0.0
      %6017 = vmatpush.msra.mxu0 0.0
      %6018 = vmatpush.msra.mxu0 0.0
      %6019 = vmatpush.msra.mxu0 0.0
      %6020 = vmatpush.msra.mxu0 0.0
      %6021 = vmatpush.msra.mxu0 0.0
      %v6022 = vand.u32 %v5977, 4294901760
      %v6023 = vsub.f32 %v5977, %v6022
      %v6024 = vand.u32 %v6023, 4294901760
      %v6025 = vsub.f32 %v6023, %v6024
      %v6026 = vand.u32 %v6025, 4294901760
      %6027 = vmatpush.msra.mxu0 %v6026
      %v6028 = vand.u32 %v5970, 4294901760
      %v6029 = vsub.f32 %v5970, %v6028
      %v6030 = vand.u32 %v6029, 4294901760
      %v6031 = vsub.f32 %v6029, %v6030
      %v6032 = vand.u32 %v6031, 4294901760
      %6033 = vmatpush.msra.mxu0 %v6032
      %v6034 = vand.u32 %v5975, 4294901760
      %6035 = vmatmul.f32.gmra.mxu0 %v6034
      %v6036 = vpop.f32.mrf.mxu0
      %v6037 = vadd.f32 %v6006, %v6036
      %6038 = vdwg.mxu0
      %6039 = vmatpush.msra.mxu0 0.0
      %6040 = vmatpush.msra.mxu0 0.0
      %6041 = vmatpush.msra.mxu0 0.0
      %6042 = vmatpush.msra.mxu0 0.0
      %6043 = vmatpush.msra.mxu0 0.0
      %6044 = vmatpush.msra.mxu0 0.0
      %6045 = vmatpush.msra.mxu0 0.0
      %6046 = vmatpush.msra.mxu0 0.0
      %6047 = vmatpush.msra.mxu0 0.0
      %6048 = vmatpush.msra.mxu0 0.0
      %6049 = vmatpush.msra.mxu0 0.0
      %6050 = vmatpush.msra.mxu0 0.0
      %6051 = vmatpush.msra.mxu0 0.0
      %6052 = vmatpush.msra.mxu0 0.0
      %v6053 = vand.u32 %v5977, 4294901760
      %v6054 = vsub.f32 %v5977, %v6053
      %6055 = vmatpush.msra.mxu0 %v6054
      %v6056 = vand.u32 %v5970, 4294901760
      %v6057 = vsub.f32 %v5970, %v6056
      %6058 = vmatpush.msra.mxu0 %v6057
      %v6059 = vand.u32 %v5975, 4294901760
      %v6060 = vsub.f32 %v5975, %v6059
      %6061 = vmatmul.f32.gmra.mxu0 %v6060
      %v6062 = vpop.f32.mrf.mxu0
      %v6063 = vadd.f32 %v6037, %v6062
      %6064 = vdwg.mxu0
      %6065 = vmatpush.msra.mxu0 0.0
      %6066 = vmatpush.msra.mxu0 0.0
      %6067 = vmatpush.msra.mxu0 0.0
      %6068 = vmatpush.msra.mxu0 0.0
      %6069 = vmatpush.msra.mxu0 0.0
      %6070 = vmatpush.msra.mxu0 0.0
      %6071 = vmatpush.msra.mxu0 0.0
      %6072 = vmatpush.msra.mxu0 0.0
      %6073 = vmatpush.msra.mxu0 0.0
      %6074 = vmatpush.msra.mxu0 0.0
      %6075 = vmatpush.msra.mxu0 0.0
      %6076 = vmatpush.msra.mxu0 0.0
      %6077 = vmatpush.msra.mxu0 0.0
      %6078 = vmatpush.msra.mxu0 0.0
      %v6079 = vand.u32 %v5977, 4294901760
      %6080 = vmatpush.msra.mxu0 %v6079
      %v6081 = vand.u32 %v5970, 4294901760
      %6082 = vmatpush.msra.mxu0 %v6081
      %v6083 = vand.u32 %v5975, 4294901760
      %v6084 = vsub.f32 %v5975, %v6083
      %v6085 = vand.u32 %v6084, 4294901760
      %6086 = vmatmul.f32.gmra.mxu0 %v6085
      %v6087 = vpop.f32.mrf.mxu0
      %v6088 = vadd.f32 %v6063, %v6087
      %6089 = vdwg.mxu0
      %6090 = vmatpush.msra.mxu0 0.0
      %6091 = vmatpush.msra.mxu0 0.0
      %6092 = vmatpush.msra.mxu0 0.0
      %6093 = vmatpush.msra.mxu0 0.0
      %6094 = vmatpush.msra.mxu0 0.0
      %6095 = vmatpush.msra.mxu0 0.0
      %6096 = vmatpush.msra.mxu0 0.0
      %6097 = vmatpush.msra.mxu0 0.0
      %6098 = vmatpush.msra.mxu0 0.0
      %6099 = vmatpush.msra.mxu0 0.0
      %6100 = vmatpush.msra.mxu0 0.0
      %6101 = vmatpush.msra.mxu0 0.0
      %6102 = vmatpush.msra.mxu0 0.0
      %6103 = vmatpush.msra.mxu0 0.0
      %v6104 = vand.u32 %v5977, 4294901760
      %v6105 = vsub.f32 %v5977, %v6104
      %v6106 = vand.u32 %v6105, 4294901760
      %6107 = vmatpush.msra.mxu0 %v6106
      %v6108 = vand.u32 %v5970, 4294901760
      %v6109 = vsub.f32 %v5970, %v6108
      %v6110 = vand.u32 %v6109, 4294901760
      %6111 = vmatpush.msra.mxu0 %v6110
      %v6112 = vand.u32 %v5975, 4294901760
      %6113 = vmatmul.f32.gmra.mxu0 %v6112
      %v6114 = vpop.f32.mrf.mxu0
      %v6115 = vadd.f32 %v6088, %v6114
      %6116 = vdwg.mxu0
      %6117 = vmatpush.msra.mxu0 0.0
      %6118 = vmatpush.msra.mxu0 0.0
      %6119 = vmatpush.msra.mxu0 0.0
      %6120 = vmatpush.msra.mxu0 0.0
      %6121 = vmatpush.msra.mxu0 0.0
      %6122 = vmatpush.msra.mxu0 0.0
      %6123 = vmatpush.msra.mxu0 0.0
      %6124 = vmatpush.msra.mxu0 0.0
      %6125 = vmatpush.msra.mxu0 0.0
      %6126 = vmatpush.msra.mxu0 0.0
      %6127 = vmatpush.msra.mxu0 0.0
      %6128 = vmatpush.msra.mxu0 0.0
      %6129 = vmatpush.msra.mxu0 0.0
      %6130 = vmatpush.msra.mxu0 0.0
      %v6131 = vand.u32 %v5977, 4294901760
      %6132 = vmatpush.msra.mxu0 %v6131
      %v6133 = vand.u32 %v5970, 4294901760
      %6134 = vmatpush.msra.mxu0 %v6133
      %v6135 = vand.u32 %v5975, 4294901760
      %6136 = vmatmul.f32.gmra.mxu0 %v6135
      %v6137 = vpop.f32.mrf.mxu0
      %v6138 = vadd.f32 %v6115, %v6137
      %6139 = vdwg.mxu0
      %6140 = vmatpush.msra.mxu0 0.0
      %6141 = vmatpush.msra.mxu0 0.0
      %6142 = vmatpush.msra.mxu0 0.0
      %6143 = vmatpush.msra.mxu0 0.0
      %6144 = vmatpush.msra.mxu0 0.0
      %6145 = vmatpush.msra.mxu0 0.0
      %6146 = vmatpush.msra.mxu0 0.0
      %6147 = vmatpush.msra.mxu0 0.0
      %6148 = vmatpush.msra.mxu0 0.0
      %6149 = vmatpush.msra.mxu0 0.0
      %6150 = vmatpush.msra.mxu0 0.0
      %6151 = vmatpush.msra.mxu0 0.0
      %6152 = vmatpush.msra.mxu0 0.0
      %6153 = vmatpush.msra.mxu0 0.0
      %v6154 = vand.u32 %v5979, 4294901760
      %6155 = vmatpush.msra.mxu0 %v6154
      %v6156 = vand.u32 %v5964, 4294901760
      %6157 = vmatpush.msra.mxu0 %v6156
      %v6158 = vand.u32 %v5975, 4294901760
      %v6159 = vsub.f32 %v5975, %v6158
      %v6160 = vand.u32 %v6159, 4294901760
      %v6161 = vsub.f32 %v6159, %v6160
      %v6162 = vand.u32 %v6161, 4294901760
      %6163 = vmatmul.f32.gmra.mxu0 %v6162
      %v6164 = vpop.f32.mrf.mxu0
      %v6165 = vadd.f32 0.0, %v6164
      %6166 = vdwg.mxu0
      %6167 = vmatpush.msra.mxu0 0.0
      %6168 = vmatpush.msra.mxu0 0.0
      %6169 = vmatpush.msra.mxu0 0.0
      %6170 = vmatpush.msra.mxu0 0.0
      %6171 = vmatpush.msra.mxu0 0.0
      %6172 = vmatpush.msra.mxu0 0.0
      %6173 = vmatpush.msra.mxu0 0.0
      %6174 = vmatpush.msra.mxu0 0.0
      %6175 = vmatpush.msra.mxu0 0.0
      %6176 = vmatpush.msra.mxu0 0.0
      %6177 = vmatpush.msra.mxu0 0.0
      %6178 = vmatpush.msra.mxu0 0.0
      %6179 = vmatpush.msra.mxu0 0.0
      %6180 = vmatpush.msra.mxu0 0.0
      %v6181 = vand.u32 %v5979, 4294901760
      %v6182 = vsub.f32 %v5979, %v6181
      %v6183 = vand.u32 %v6182, 4294901760
      %v6184 = vsub.f32 %v6182, %v6183
      %v6185 = vand.u32 %v6184, 4294901760
      %6186 = vmatpush.msra.mxu0 %v6185
      %v6187 = vand.u32 %v5964, 4294901760
      %v6188 = vsub.f32 %v5964, %v6187
      %v6189 = vand.u32 %v6188, 4294901760
      %v6190 = vsub.f32 %v6188, %v6189
      %v6191 = vand.u32 %v6190, 4294901760
      %6192 = vmatpush.msra.mxu0 %v6191
      %v6193 = vand.u32 %v5975, 4294901760
      %6194 = vmatmul.f32.gmra.mxu0 %v6193
      %v6195 = vpop.f32.mrf.mxu0
      %v6196 = vadd.f32 %v6165, %v6195
      %6197 = vdwg.mxu0
      %6198 = vmatpush.msra.mxu0 0.0
      %6199 = vmatpush.msra.mxu0 0.0
      %6200 = vmatpush.msra.mxu0 0.0
      %6201 = vmatpush.msra.mxu0 0.0
      %6202 = vmatpush.msra.mxu0 0.0
      %6203 = vmatpush.msra.mxu0 0.0
      %6204 = vmatpush.msra.mxu0 0.0
      %6205 = vmatpush.msra.mxu0 0.0
      %6206 = vmatpush.msra.mxu0 0.0
      %6207 = vmatpush.msra.mxu0 0.0
      %6208 = vmatpush.msra.mxu0 0.0
      %6209 = vmatpush.msra.mxu0 0.0
      %6210 = vmatpush.msra.mxu0 0.0
      %6211 = vmatpush.msra.mxu0 0.0
      %v6212 = vand.u32 %v5979, 4294901760
      %v6213 = vsub.f32 %v5979, %v6212
      %6214 = vmatpush.msra.mxu0 %v6213
      %v6215 = vand.u32 %v5964, 4294901760
      %v6216 = vsub.f32 %v5964, %v6215
      %6217 = vmatpush.msra.mxu0 %v6216
      %v6218 = vand.u32 %v5975, 4294901760
      %v6219 = vsub.f32 %v5975, %v6218
      %6220 = vmatmul.f32.gmra.mxu0 %v6219
      %v6221 = vpop.f32.mrf.mxu0
      %v6222 = vadd.f32 %v6196, %v6221
      %6223 = vdwg.mxu0
      %6224 = vmatpush.msra.mxu0 0.0
      %6225 = vmatpush.msra.mxu0 0.0
      %6226 = vmatpush.msra.mxu0 0.0
      %6227 = vmatpush.msra.mxu0 0.0
      %6228 = vmatpush.msra.mxu0 0.0
      %6229 = vmatpush.msra.mxu0 0.0
      %6230 = vmatpush.msra.mxu0 0.0
      %6231 = vmatpush.msra.mxu0 0.0
      %6232 = vmatpush.msra.mxu0 0.0
      %6233 = vmatpush.msra.mxu0 0.0
      %6234 = vmatpush.msra.mxu0 0.0
      %6235 = vmatpush.msra.mxu0 0.0
      %6236 = vmatpush.msra.mxu0 0.0
      %6237 = vmatpush.msra.mxu0 0.0
      %v6238 = vand.u32 %v5979, 4294901760
      %6239 = vmatpush.msra.mxu0 %v6238
      %v6240 = vand.u32 %v5964, 4294901760
      %6241 = vmatpush.msra.mxu0 %v6240
      %v6242 = vand.u32 %v5975, 4294901760
      %v6243 = vsub.f32 %v5975, %v6242
      %v6244 = vand.u32 %v6243, 4294901760
      %6245 = vmatmul.f32.gmra.mxu0 %v6244
      %v6246 = vpop.f32.mrf.mxu0
      %v6247 = vadd.f32 %v6222, %v6246
      %6248 = vdwg.mxu0
      %6249 = vmatpush.msra.mxu0 0.0
      %6250 = vmatpush.msra.mxu0 0.0
      %6251 = vmatpush.msra.mxu0 0.0
      %6252 = vmatpush.msra.mxu0 0.0
      %6253 = vmatpush.msra.mxu0 0.0
      %6254 = vmatpush.msra.mxu0 0.0
      %6255 = vmatpush.msra.mxu0 0.0
      %6256 = vmatpush.msra.mxu0 0.0
      %6257 = vmatpush.msra.mxu0 0.0
      %6258 = vmatpush.msra.mxu0 0.0
      %6259 = vmatpush.msra.mxu0 0.0
      %6260 = vmatpush.msra.mxu0 0.0
      %6261 = vmatpush.msra.mxu0 0.0
      %6262 = vmatpush.msra.mxu0 0.0
      %v6263 = vand.u32 %v5979, 4294901760
      %v6264 = vsub.f32 %v5979, %v6263
      %v6265 = vand.u32 %v6264, 4294901760
      %6266 = vmatpush.msra.mxu0 %v6265
      %v6267 = vand.u32 %v5964, 4294901760
      %v6268 = vsub.f32 %v5964, %v6267
      %v6269 = vand.u32 %v6268, 4294901760
      %6270 = vmatpush.msra.mxu0 %v6269
      %v6271 = vand.u32 %v5975, 4294901760
      %6272 = vmatmul.f32.gmra.mxu0 %v6271
      %v6273 = vpop.f32.mrf.mxu0
      %v6274 = vadd.f32 %v6247, %v6273
      %6275 = vdwg.mxu0
      %6276 = vmatpush.msra.mxu0 0.0
      %6277 = vmatpush.msra.mxu0 0.0
      %6278 = vmatpush.msra.mxu0 0.0
      %6279 = vmatpush.msra.mxu0 0.0
      %6280 = vmatpush.msra.mxu0 0.0
      %6281 = vmatpush.msra.mxu0 0.0
      %6282 = vmatpush.msra.mxu0 0.0
      %6283 = vmatpush.msra.mxu0 0.0
      %6284 = vmatpush.msra.mxu0 0.0
      %6285 = vmatpush.msra.mxu0 0.0
      %6286 = vmatpush.msra.mxu0 0.0
      %6287 = vmatpush.msra.mxu0 0.0
      %6288 = vmatpush.msra.mxu0 0.0
      %6289 = vmatpush.msra.mxu0 0.0
      %v6290 = vand.u32 %v5979, 4294901760
      %6291 = vmatpush.msra.mxu0 %v6290
      %v6292 = vand.u32 %v5964, 4294901760
      %6293 = vmatpush.msra.mxu0 %v6292
      %v6294 = vand.u32 %v5975, 4294901760
      %6295 = vmatmul.f32.gmra.mxu0 %v6294
      %v6296 = vpop.f32.mrf.mxu0
      %v6297 = vadd.f32 %v6274, %v6296
      %6298 = vdwg.mxu0
      %v6299 = vadd.f32 %v5957, %v6138
      %v6300 = vadd.f32 %v5958, %v6297
      %6302 = vset.pattern.permute.xlu0 0
      %6303 = vperm.xlu0 %6302, %v3223
      %v6304 = vpop.permute.xlu0 %6303
      %v6306 = vadd.f32 %v6299, %v6304
      %v6307 = vadd.f32 %v6300, %v6304
      %v6308 = vmax.f32 %v6306, 0.0
      %v6309 = vmax.f32 %v6307, 0.0
      %v6310 = vld [vmem:[%s403] sm:$0x3]
      %v6312 = vperm.slane %v6310, 0
      %v6313 = vperm.slane %v6310, 1
      %6314 = vrot.lane.b32.xlu0 %v6312, 92
      %v6315 = vpop.permute.xlu0 %6314
      %6316 = vrot.lane.b32.xlu0 %v6313, 92
      %v6317 = vpop.permute.xlu0 %6316
      %v6318 = vsel %vm2575, %v6315, %v6317
      %v6321 = vmul.f32 %v6308, %v6318
      %v6322 = vmul.f32 %v6309, %v6317
      %v6325 = vrot.slane %v6321, 4
      %v6326 = vrot.slane %v6322, 4
      %6327 = vrot.lane.b32.xlu0 %v6325, 36
      %v6328 = vpop.permute.xlu0 %6327
      %6329 = vrot.lane.b32.xlu0 %v6326, 36
      %v6330 = vpop.permute.xlu0 %6329
      %vm6331 = vcmask 293888
      %v6332 = vsel %vm6331, %v6328, %v6330
      %vm6335 = vcmask 1047844
      %6336 = vst.msk [vmem:[#allocation2 + $0x28] sm:$0xf0] %vm6335, %v6328
      %vm6337 = vcmask 719876
      %6338 = vst.msk [vmem:[#allocation2 + $0x30] sm:$0xf0] %vm6337, %v6332
      %vm6339 = vcmask 294172
      %6340 = vst.msk [vmem:[#allocation2 + $0x28] sm:$0xf0] %vm6339, 0.0
      %vm6341 = vcmask 728772
      %6342 = vst.msk [vmem:[#allocation2 + $0x30] sm:$0xf0] %vm6341, 0.0
      %v6343 = vld [vmem:[%s7] sm:$0xf]
      %v6344 = vld [vmem:[%s6] sm:$0xf]
      %v6345 = vld [vmem:[#allocation2 + $0x8] sm:$0xff]
      %v6346 = vld [vmem:[#allocation2 + $0x10] sm:$0xff]
      %v6347 = vld [vmem:[#allocation2 + $0x28] sm:$0xff]
      %v6348 = vld [vmem:[#allocation2 + $0x30] sm:$0xff]
      %s6349 = scalar_lea.vmem %s6, 4
      %v6350 = vld [vmem:[%s6349] sm:$0xf]
      %6355 = vrot.lane.b32.xlu0 %v6345, 92
      %v6356 = vpop.permute.xlu0 %6355
      %6357 = vrot.lane.b32.xlu0 %v6346, 92
      %v6358 = vpop.permute.xlu0 %6357
      %6359 = vrot.lane.b32.xlu0 %v6347, 92
      %v6360 = vpop.permute.xlu0 %6359
      %6361 = vrot.lane.b32.xlu0 %v6348, 92
      %v6362 = vpop.permute.xlu0 %6361
      %v6363 = vsel %vm2575, %v6356, %v6358
      %v6364 = vsel %vm2575, %v6360, %v6362
      %vm6369 = vcmask 130048
      %v6371 = vsel %vm6369, %v6350, 0
      %6373 = vmatpush.msra.mxu0 0.0
      %6374 = vmatpush.msra.mxu0 0.0
      %6375 = vmatpush.msra.mxu0 0.0
      %6376 = vmatpush.msra.mxu0 0.0
      %6377 = vmatpush.msra.mxu0 0.0
      %6378 = vmatpush.msra.mxu0 0.0
      %6379 = vmatpush.msra.mxu0 0.0
      %6380 = vmatpush.msra.mxu0 0.0
      %6381 = vmatpush.msra.mxu0 0.0
      %6382 = vmatpush.msra.mxu0 0.0
      %6383 = vmatpush.msra.mxu0 0.0
      %6384 = vmatpush.msra.mxu0 0.0
      %6385 = vmatpush.msra.mxu0 0.0
      %6386 = vmatpush.msra.mxu0 0.0
      %v6387 = vand.u32 %v6364, 4294901760
      %6388 = vmatpush.msra.mxu0 %v6387
      %v6389 = vand.u32 %v6363, 4294901760
      %6390 = vmatpush.msra.mxu0 %v6389
      %v6391 = vand.u32 %v6371, 4294901760
      %v6392 = vsub.f32 %v6371, %v6391
      %v6393 = vand.u32 %v6392, 4294901760
      %v6394 = vsub.f32 %v6392, %v6393
      %v6395 = vand.u32 %v6394, 4294901760
      %6396 = vmatmul.f32.gmra.mxu0 %v6395
      %v6397 = vpop.f32.mrf.mxu0
      %v6398 = vadd.f32 0.0, %v6397
      %6399 = vdwg.mxu0
      %6400 = vmatpush.msra.mxu0 0.0
      %6401 = vmatpush.msra.mxu0 0.0
      %6402 = vmatpush.msra.mxu0 0.0
      %6403 = vmatpush.msra.mxu0 0.0
      %6404 = vmatpush.msra.mxu0 0.0
      %6405 = vmatpush.msra.mxu0 0.0
      %6406 = vmatpush.msra.mxu0 0.0
      %6407 = vmatpush.msra.mxu0 0.0
      %6408 = vmatpush.msra.mxu0 0.0
      %6409 = vmatpush.msra.mxu0 0.0
      %6410 = vmatpush.msra.mxu0 0.0
      %6411 = vmatpush.msra.mxu0 0.0
      %6412 = vmatpush.msra.mxu0 0.0
      %6413 = vmatpush.msra.mxu0 0.0
      %v6414 = vand.u32 %v6364, 4294901760
      %v6415 = vsub.f32 %v6364, %v6414
      %v6416 = vand.u32 %v6415, 4294901760
      %v6417 = vsub.f32 %v6415, %v6416
      %v6418 = vand.u32 %v6417, 4294901760
      %6419 = vmatpush.msra.mxu0 %v6418
      %v6420 = vand.u32 %v6363, 4294901760
      %v6421 = vsub.f32 %v6363, %v6420
      %v6422 = vand.u32 %v6421, 4294901760
      %v6423 = vsub.f32 %v6421, %v6422
      %v6424 = vand.u32 %v6423, 4294901760
      %6425 = vmatpush.msra.mxu0 %v6424
      %v6426 = vand.u32 %v6371, 4294901760
      %6427 = vmatmul.f32.gmra.mxu0 %v6426
      %v6428 = vpop.f32.mrf.mxu0
      %v6429 = vadd.f32 %v6398, %v6428
      %6430 = vdwg.mxu0
      %6431 = vmatpush.msra.mxu0 0.0
      %6432 = vmatpush.msra.mxu0 0.0
      %6433 = vmatpush.msra.mxu0 0.0
      %6434 = vmatpush.msra.mxu0 0.0
      %6435 = vmatpush.msra.mxu0 0.0
      %6436 = vmatpush.msra.mxu0 0.0
      %6437 = vmatpush.msra.mxu0 0.0
      %6438 = vmatpush.msra.mxu0 0.0
      %6439 = vmatpush.msra.mxu0 0.0
      %6440 = vmatpush.msra.mxu0 0.0
      %6441 = vmatpush.msra.mxu0 0.0
      %6442 = vmatpush.msra.mxu0 0.0
      %6443 = vmatpush.msra.mxu0 0.0
      %6444 = vmatpush.msra.mxu0 0.0
      %v6445 = vand.u32 %v6364, 4294901760
      %v6446 = vsub.f32 %v6364, %v6445
      %6447 = vmatpush.msra.mxu0 %v6446
      %v6448 = vand.u32 %v6363, 4294901760
      %v6449 = vsub.f32 %v6363, %v6448
      %6450 = vmatpush.msra.mxu0 %v6449
      %v6451 = vand.u32 %v6371, 4294901760
      %v6452 = vsub.f32 %v6371, %v6451
      %6453 = vmatmul.f32.gmra.mxu0 %v6452
      %v6454 = vpop.f32.mrf.mxu0
      %v6455 = vadd.f32 %v6429, %v6454
      %6456 = vdwg.mxu0
      %6457 = vmatpush.msra.mxu0 0.0
      %6458 = vmatpush.msra.mxu0 0.0
      %6459 = vmatpush.msra.mxu0 0.0
      %6460 = vmatpush.msra.mxu0 0.0
      %6461 = vmatpush.msra.mxu0 0.0
      %6462 = vmatpush.msra.mxu0 0.0
      %6463 = vmatpush.msra.mxu0 0.0
      %6464 = vmatpush.msra.mxu0 0.0
      %6465 = vmatpush.msra.mxu0 0.0
      %6466 = vmatpush.msra.mxu0 0.0
      %6467 = vmatpush.msra.mxu0 0.0
      %6468 = vmatpush.msra.mxu0 0.0
      %6469 = vmatpush.msra.mxu0 0.0
      %6470 = vmatpush.msra.mxu0 0.0
      %v6471 = vand.u32 %v6364, 4294901760
      %6472 = vmatpush.msra.mxu0 %v6471
      %v6473 = vand.u32 %v6363, 4294901760
      %6474 = vmatpush.msra.mxu0 %v6473
      %v6475 = vand.u32 %v6371, 4294901760
      %v6476 = vsub.f32 %v6371, %v6475
      %v6477 = vand.u32 %v6476, 4294901760
      %6478 = vmatmul.f32.gmra.mxu0 %v6477
      %v6479 = vpop.f32.mrf.mxu0
      %v6480 = vadd.f32 %v6455, %v6479
      %6481 = vdwg.mxu0
      %6482 = vmatpush.msra.mxu0 0.0
      %6483 = vmatpush.msra.mxu0 0.0
      %6484 = vmatpush.msra.mxu0 0.0
      %6485 = vmatpush.msra.mxu0 0.0
      %6486 = vmatpush.msra.mxu0 0.0
      %6487 = vmatpush.msra.mxu0 0.0
      %6488 = vmatpush.msra.mxu0 0.0
      %6489 = vmatpush.msra.mxu0 0.0
      %6490 = vmatpush.msra.mxu0 0.0
      %6491 = vmatpush.msra.mxu0 0.0
      %6492 = vmatpush.msra.mxu0 0.0
      %6493 = vmatpush.msra.mxu0 0.0
      %6494 = vmatpush.msra.mxu0 0.0
      %6495 = vmatpush.msra.mxu0 0.0
      %v6496 = vand.u32 %v6364, 4294901760
      %v6497 = vsub.f32 %v6364, %v6496
      %v6498 = vand.u32 %v6497, 4294901760
      %6499 = vmatpush.msra.mxu0 %v6498
      %v6500 = vand.u32 %v6363, 4294901760
      %v6501 = vsub.f32 %v6363, %v6500
      %v6502 = vand.u32 %v6501, 4294901760
      %6503 = vmatpush.msra.mxu0 %v6502
      %v6504 = vand.u32 %v6371, 4294901760
      %6505 = vmatmul.f32.gmra.mxu0 %v6504
      %v6506 = vpop.f32.mrf.mxu0
      %v6507 = vadd.f32 %v6480, %v6506
      %6508 = vdwg.mxu0
      %6509 = vmatpush.msra.mxu0 0.0
      %6510 = vmatpush.msra.mxu0 0.0
      %6511 = vmatpush.msra.mxu0 0.0
      %6512 = vmatpush.msra.mxu0 0.0
      %6513 = vmatpush.msra.mxu0 0.0
      %6514 = vmatpush.msra.mxu0 0.0
      %6515 = vmatpush.msra.mxu0 0.0
      %6516 = vmatpush.msra.mxu0 0.0
      %6517 = vmatpush.msra.mxu0 0.0
      %6518 = vmatpush.msra.mxu0 0.0
      %6519 = vmatpush.msra.mxu0 0.0
      %6520 = vmatpush.msra.mxu0 0.0
      %6521 = vmatpush.msra.mxu0 0.0
      %6522 = vmatpush.msra.mxu0 0.0
      %v6523 = vand.u32 %v6364, 4294901760
      %6524 = vmatpush.msra.mxu0 %v6523
      %v6525 = vand.u32 %v6363, 4294901760
      %6526 = vmatpush.msra.mxu0 %v6525
      %v6527 = vand.u32 %v6371, 4294901760
      %6528 = vmatmul.f32.gmra.mxu0 %v6527
      %v6529 = vpop.f32.mrf.mxu0
      %v6530 = vadd.f32 %v6507, %v6529
      %6531 = vdwg.mxu0
      %6532 = vmatpush.msra.mxu0 0.0
      %6533 = vmatpush.msra.mxu0 0.0
      %6534 = vmatpush.msra.mxu0 0.0
      %6535 = vmatpush.msra.mxu0 0.0
      %6536 = vmatpush.msra.mxu0 0.0
      %6537 = vmatpush.msra.mxu0 0.0
      %6538 = vmatpush.msra.mxu0 0.0
      %6539 = vmatpush.msra.mxu0 0.0
      %6540 = vmatpush.msra.mxu0 0.0
      %6541 = vmatpush.msra.mxu0 0.0
      %6542 = vmatpush.msra.mxu0 0.0
      %6543 = vmatpush.msra.mxu0 0.0
      %6544 = vmatpush.msra.mxu0 0.0
      %6545 = vmatpush.msra.mxu0 0.0
      %v6546 = vand.u32 %v6362, 4294901760
      %6547 = vmatpush.msra.mxu0 %v6546
      %v6548 = vand.u32 %v6358, 4294901760
      %6549 = vmatpush.msra.mxu0 %v6548
      %v6550 = vand.u32 %v6371, 4294901760
      %v6551 = vsub.f32 %v6371, %v6550
      %v6552 = vand.u32 %v6551, 4294901760
      %v6553 = vsub.f32 %v6551, %v6552
      %v6554 = vand.u32 %v6553, 4294901760
      %6555 = vmatmul.f32.gmra.mxu0 %v6554
      %v6556 = vpop.f32.mrf.mxu0
      %v6557 = vadd.f32 0.0, %v6556
      %6558 = vdwg.mxu0
      %6559 = vmatpush.msra.mxu0 0.0
      %6560 = vmatpush.msra.mxu0 0.0
      %6561 = vmatpush.msra.mxu0 0.0
      %6562 = vmatpush.msra.mxu0 0.0
      %6563 = vmatpush.msra.mxu0 0.0
      %6564 = vmatpush.msra.mxu0 0.0
      %6565 = vmatpush.msra.mxu0 0.0
      %6566 = vmatpush.msra.mxu0 0.0
      %6567 = vmatpush.msra.mxu0 0.0
      %6568 = vmatpush.msra.mxu0 0.0
      %6569 = vmatpush.msra.mxu0 0.0
      %6570 = vmatpush.msra.mxu0 0.0
      %6571 = vmatpush.msra.mxu0 0.0
      %6572 = vmatpush.msra.mxu0 0.0
      %v6573 = vand.u32 %v6362, 4294901760
      %v6574 = vsub.f32 %v6362, %v6573
      %v6575 = vand.u32 %v6574, 4294901760
      %v6576 = vsub.f32 %v6574, %v6575
      %v6577 = vand.u32 %v6576, 4294901760
      %6578 = vmatpush.msra.mxu0 %v6577
      %v6579 = vand.u32 %v6358, 4294901760
      %v6580 = vsub.f32 %v6358, %v6579
      %v6581 = vand.u32 %v6580, 4294901760
      %v6582 = vsub.f32 %v6580, %v6581
      %v6583 = vand.u32 %v6582, 4294901760
      %6584 = vmatpush.msra.mxu0 %v6583
      %v6585 = vand.u32 %v6371, 4294901760
      %6586 = vmatmul.f32.gmra.mxu0 %v6585
      %v6587 = vpop.f32.mrf.mxu0
      %v6588 = vadd.f32 %v6557, %v6587
      %6589 = vdwg.mxu0
      %6590 = vmatpush.msra.mxu0 0.0
      %6591 = vmatpush.msra.mxu0 0.0
      %6592 = vmatpush.msra.mxu0 0.0
      %6593 = vmatpush.msra.mxu0 0.0
      %6594 = vmatpush.msra.mxu0 0.0
      %6595 = vmatpush.msra.mxu0 0.0
      %6596 = vmatpush.msra.mxu0 0.0
      %6597 = vmatpush.msra.mxu0 0.0
      %6598 = vmatpush.msra.mxu0 0.0
      %6599 = vmatpush.msra.mxu0 0.0
      %6600 = vmatpush.msra.mxu0 0.0
      %6601 = vmatpush.msra.mxu0 0.0
      %6602 = vmatpush.msra.mxu0 0.0
      %6603 = vmatpush.msra.mxu0 0.0
      %v6604 = vand.u32 %v6362, 4294901760
      %v6605 = vsub.f32 %v6362, %v6604
      %6606 = vmatpush.msra.mxu0 %v6605
      %v6607 = vand.u32 %v6358, 4294901760
      %v6608 = vsub.f32 %v6358, %v6607
      %6609 = vmatpush.msra.mxu0 %v6608
      %v6610 = vand.u32 %v6371, 4294901760
      %v6611 = vsub.f32 %v6371, %v6610
      %6612 = vmatmul.f32.gmra.mxu0 %v6611
      %v6613 = vpop.f32.mrf.mxu0
      %v6614 = vadd.f32 %v6588, %v6613
      %6615 = vdwg.mxu0
      %6616 = vmatpush.msra.mxu0 0.0
      %6617 = vmatpush.msra.mxu0 0.0
      %6618 = vmatpush.msra.mxu0 0.0
      %6619 = vmatpush.msra.mxu0 0.0
      %6620 = vmatpush.msra.mxu0 0.0
      %6621 = vmatpush.msra.mxu0 0.0
      %6622 = vmatpush.msra.mxu0 0.0
      %6623 = vmatpush.msra.mxu0 0.0
      %6624 = vmatpush.msra.mxu0 0.0
      %6625 = vmatpush.msra.mxu0 0.0
      %6626 = vmatpush.msra.mxu0 0.0
      %6627 = vmatpush.msra.mxu0 0.0
      %6628 = vmatpush.msra.mxu0 0.0
      %6629 = vmatpush.msra.mxu0 0.0
      %v6630 = vand.u32 %v6362, 4294901760
      %6631 = vmatpush.msra.mxu0 %v6630
      %v6632 = vand.u32 %v6358, 4294901760
      %6633 = vmatpush.msra.mxu0 %v6632
      %v6634 = vand.u32 %v6371, 4294901760
      %v6635 = vsub.f32 %v6371, %v6634
      %v6636 = vand.u32 %v6635, 4294901760
      %6637 = vmatmul.f32.gmra.mxu0 %v6636
      %v6638 = vpop.f32.mrf.mxu0
      %v6639 = vadd.f32 %v6614, %v6638
      %6640 = vdwg.mxu0
      %6641 = vmatpush.msra.mxu0 0.0
      %6642 = vmatpush.msra.mxu0 0.0
      %6643 = vmatpush.msra.mxu0 0.0
      %6644 = vmatpush.msra.mxu0 0.0
      %6645 = vmatpush.msra.mxu0 0.0
      %6646 = vmatpush.msra.mxu0 0.0
      %6647 = vmatpush.msra.mxu0 0.0
      %6648 = vmatpush.msra.mxu0 0.0
      %6649 = vmatpush.msra.mxu0 0.0
      %6650 = vmatpush.msra.mxu0 0.0
      %6651 = vmatpush.msra.mxu0 0.0
      %6652 = vmatpush.msra.mxu0 0.0
      %6653 = vmatpush.msra.mxu0 0.0
      %6654 = vmatpush.msra.mxu0 0.0
      %v6655 = vand.u32 %v6362, 4294901760
      %v6656 = vsub.f32 %v6362, %v6655
      %v6657 = vand.u32 %v6656, 4294901760
      %6658 = vmatpush.msra.mxu0 %v6657
      %v6659 = vand.u32 %v6358, 4294901760
      %v6660 = vsub.f32 %v6358, %v6659
      %v6661 = vand.u32 %v6660, 4294901760
      %6662 = vmatpush.msra.mxu0 %v6661
      %v6663 = vand.u32 %v6371, 4294901760
      %6664 = vmatmul.f32.gmra.mxu0 %v6663
      %v6665 = vpop.f32.mrf.mxu0
      %v6666 = vadd.f32 %v6639, %v6665
      %6667 = vdwg.mxu0
      %6668 = vmatpush.msra.mxu0 0.0
      %6669 = vmatpush.msra.mxu0 0.0
      %6670 = vmatpush.msra.mxu0 0.0
      %6671 = vmatpush.msra.mxu0 0.0
      %6672 = vmatpush.msra.mxu0 0.0
      %6673 = vmatpush.msra.mxu0 0.0
      %6674 = vmatpush.msra.mxu0 0.0
      %6675 = vmatpush.msra.mxu0 0.0
      %6676 = vmatpush.msra.mxu0 0.0
      %6677 = vmatpush.msra.mxu0 0.0
      %6678 = vmatpush.msra.mxu0 0.0
      %6679 = vmatpush.msra.mxu0 0.0
      %6680 = vmatpush.msra.mxu0 0.0
      %6681 = vmatpush.msra.mxu0 0.0
      %v6682 = vand.u32 %v6362, 4294901760
      %6683 = vmatpush.msra.mxu0 %v6682
      %v6684 = vand.u32 %v6358, 4294901760
      %6685 = vmatpush.msra.mxu0 %v6684
      %v6686 = vand.u32 %v6371, 4294901760
      %6687 = vmatmul.f32.gmra.mxu0 %v6686
      %v6688 = vpop.f32.mrf.mxu0
      %v6689 = vadd.f32 %v6666, %v6688
      %6690 = vdwg.mxu0
      %6691 = vrot.lane.b32.xlu0 %v6345, 93
      %v6692 = vpop.permute.xlu0 %6691
      %6693 = vrot.lane.b32.xlu0 %v6346, 93
      %v6694 = vpop.permute.xlu0 %6693
      %6695 = vrot.lane.b32.xlu0 %v6347, 93
      %v6696 = vpop.permute.xlu0 %6695
      %6697 = vrot.lane.b32.xlu0 %v6348, 93
      %v6698 = vpop.permute.xlu0 %6697
      %v6699 = vsel %vm2268, %v6692, %v6694
      %v6700 = vsel %vm2268, %v6696, %v6698
      %v6706 = vsel %vm6369, %v6344, 0
      %6708 = vmatpush.msra.mxu0 0.0
      %6709 = vmatpush.msra.mxu0 0.0
      %6710 = vmatpush.msra.mxu0 0.0
      %6711 = vmatpush.msra.mxu0 0.0
      %6712 = vmatpush.msra.mxu0 0.0
      %6713 = vmatpush.msra.mxu0 0.0
      %6714 = vmatpush.msra.mxu0 0.0
      %6715 = vmatpush.msra.mxu0 0.0
      %6716 = vmatpush.msra.mxu0 0.0
      %6717 = vmatpush.msra.mxu0 0.0
      %6718 = vmatpush.msra.mxu0 0.0
      %6719 = vmatpush.msra.mxu0 0.0
      %6720 = vmatpush.msra.mxu0 0.0
      %6721 = vmatpush.msra.mxu0 0.0
      %v6722 = vand.u32 %v6700, 4294901760
      %6723 = vmatpush.msra.mxu0 %v6722
      %v6724 = vand.u32 %v6699, 4294901760
      %6725 = vmatpush.msra.mxu0 %v6724
      %v6726 = vand.u32 %v6706, 4294901760
      %v6727 = vsub.f32 %v6706, %v6726
      %v6728 = vand.u32 %v6727, 4294901760
      %v6729 = vsub.f32 %v6727, %v6728
      %v6730 = vand.u32 %v6729, 4294901760
      %6731 = vmatmul.f32.gmra.mxu0 %v6730
      %v6732 = vpop.f32.mrf.mxu0
      %v6733 = vadd.f32 %v6530, %v6732
      %6734 = vdwg.mxu0
      %6735 = vmatpush.msra.mxu0 0.0
      %6736 = vmatpush.msra.mxu0 0.0
      %6737 = vmatpush.msra.mxu0 0.0
      %6738 = vmatpush.msra.mxu0 0.0
      %6739 = vmatpush.msra.mxu0 0.0
      %6740 = vmatpush.msra.mxu0 0.0
      %6741 = vmatpush.msra.mxu0 0.0
      %6742 = vmatpush.msra.mxu0 0.0
      %6743 = vmatpush.msra.mxu0 0.0
      %6744 = vmatpush.msra.mxu0 0.0
      %6745 = vmatpush.msra.mxu0 0.0
      %6746 = vmatpush.msra.mxu0 0.0
      %6747 = vmatpush.msra.mxu0 0.0
      %6748 = vmatpush.msra.mxu0 0.0
      %v6749 = vand.u32 %v6700, 4294901760
      %v6750 = vsub.f32 %v6700, %v6749
      %v6751 = vand.u32 %v6750, 4294901760
      %v6752 = vsub.f32 %v6750, %v6751
      %v6753 = vand.u32 %v6752, 4294901760
      %6754 = vmatpush.msra.mxu0 %v6753
      %v6755 = vand.u32 %v6699, 4294901760
      %v6756 = vsub.f32 %v6699, %v6755
      %v6757 = vand.u32 %v6756, 4294901760
      %v6758 = vsub.f32 %v6756, %v6757
      %v6759 = vand.u32 %v6758, 4294901760
      %6760 = vmatpush.msra.mxu0 %v6759
      %v6761 = vand.u32 %v6706, 4294901760
      %6762 = vmatmul.f32.gmra.mxu0 %v6761
      %v6763 = vpop.f32.mrf.mxu0
      %v6764 = vadd.f32 %v6733, %v6763
      %6765 = vdwg.mxu0
      %6766 = vmatpush.msra.mxu0 0.0
      %6767 = vmatpush.msra.mxu0 0.0
      %6768 = vmatpush.msra.mxu0 0.0
      %6769 = vmatpush.msra.mxu0 0.0
      %6770 = vmatpush.msra.mxu0 0.0
      %6771 = vmatpush.msra.mxu0 0.0
      %6772 = vmatpush.msra.mxu0 0.0
      %6773 = vmatpush.msra.mxu0 0.0
      %6774 = vmatpush.msra.mxu0 0.0
      %6775 = vmatpush.msra.mxu0 0.0
      %6776 = vmatpush.msra.mxu0 0.0
      %6777 = vmatpush.msra.mxu0 0.0
      %6778 = vmatpush.msra.mxu0 0.0
      %6779 = vmatpush.msra.mxu0 0.0
      %v6780 = vand.u32 %v6700, 4294901760
      %v6781 = vsub.f32 %v6700, %v6780
      %6782 = vmatpush.msra.mxu0 %v6781
      %v6783 = vand.u32 %v6699, 4294901760
      %v6784 = vsub.f32 %v6699, %v6783
      %6785 = vmatpush.msra.mxu0 %v6784
      %v6786 = vand.u32 %v6706, 4294901760
      %v6787 = vsub.f32 %v6706, %v6786
      %6788 = vmatmul.f32.gmra.mxu0 %v6787
      %v6789 = vpop.f32.mrf.mxu0
      %v6790 = vadd.f32 %v6764, %v6789
      %6791 = vdwg.mxu0
      %6792 = vmatpush.msra.mxu0 0.0
      %6793 = vmatpush.msra.mxu0 0.0
      %6794 = vmatpush.msra.mxu0 0.0
      %6795 = vmatpush.msra.mxu0 0.0
      %6796 = vmatpush.msra.mxu0 0.0
      %6797 = vmatpush.msra.mxu0 0.0
      %6798 = vmatpush.msra.mxu0 0.0
      %6799 = vmatpush.msra.mxu0 0.0
      %6800 = vmatpush.msra.mxu0 0.0
      %6801 = vmatpush.msra.mxu0 0.0
      %6802 = vmatpush.msra.mxu0 0.0
      %6803 = vmatpush.msra.mxu0 0.0
      %6804 = vmatpush.msra.mxu0 0.0
      %6805 = vmatpush.msra.mxu0 0.0
      %v6806 = vand.u32 %v6700, 4294901760
      %6807 = vmatpush.msra.mxu0 %v6806
      %v6808 = vand.u32 %v6699, 4294901760
      %6809 = vmatpush.msra.mxu0 %v6808
      %v6810 = vand.u32 %v6706, 4294901760
      %v6811 = vsub.f32 %v6706, %v6810
      %v6812 = vand.u32 %v6811, 4294901760
      %6813 = vmatmul.f32.gmra.mxu0 %v6812
      %v6814 = vpop.f32.mrf.mxu0
      %v6815 = vadd.f32 %v6790, %v6814
      %6816 = vdwg.mxu0
      %6817 = vmatpush.msra.mxu0 0.0
      %6818 = vmatpush.msra.mxu0 0.0
      %6819 = vmatpush.msra.mxu0 0.0
      %6820 = vmatpush.msra.mxu0 0.0
      %6821 = vmatpush.msra.mxu0 0.0
      %6822 = vmatpush.msra.mxu0 0.0
      %6823 = vmatpush.msra.mxu0 0.0
      %6824 = vmatpush.msra.mxu0 0.0
      %6825 = vmatpush.msra.mxu0 0.0
      %6826 = vmatpush.msra.mxu0 0.0
      %6827 = vmatpush.msra.mxu0 0.0
      %6828 = vmatpush.msra.mxu0 0.0
      %6829 = vmatpush.msra.mxu0 0.0
      %6830 = vmatpush.msra.mxu0 0.0
      %v6831 = vand.u32 %v6700, 4294901760
      %v6832 = vsub.f32 %v6700, %v6831
      %v6833 = vand.u32 %v6832, 4294901760
      %6834 = vmatpush.msra.mxu0 %v6833
      %v6835 = vand.u32 %v6699, 4294901760
      %v6836 = vsub.f32 %v6699, %v6835
      %v6837 = vand.u32 %v6836, 4294901760
      %6838 = vmatpush.msra.mxu0 %v6837
      %v6839 = vand.u32 %v6706, 4294901760
      %6840 = vmatmul.f32.gmra.mxu0 %v6839
      %v6841 = vpop.f32.mrf.mxu0
      %v6842 = vadd.f32 %v6815, %v6841
      %6843 = vdwg.mxu0
      %6844 = vmatpush.msra.mxu0 0.0
      %6845 = vmatpush.msra.mxu0 0.0
      %6846 = vmatpush.msra.mxu0 0.0
      %6847 = vmatpush.msra.mxu0 0.0
      %6848 = vmatpush.msra.mxu0 0.0
      %6849 = vmatpush.msra.mxu0 0.0
      %6850 = vmatpush.msra.mxu0 0.0
      %6851 = vmatpush.msra.mxu0 0.0
      %6852 = vmatpush.msra.mxu0 0.0
      %6853 = vmatpush.msra.mxu0 0.0
      %6854 = vmatpush.msra.mxu0 0.0
      %6855 = vmatpush.msra.mxu0 0.0
      %6856 = vmatpush.msra.mxu0 0.0
      %6857 = vmatpush.msra.mxu0 0.0
      %v6858 = vand.u32 %v6700, 4294901760
      %6859 = vmatpush.msra.mxu0 %v6858
      %v6860 = vand.u32 %v6699, 4294901760
      %6861 = vmatpush.msra.mxu0 %v6860
      %v6862 = vand.u32 %v6706, 4294901760
      %6863 = vmatmul.f32.gmra.mxu0 %v6862
      %v6864 = vpop.f32.mrf.mxu0
      %v6865 = vadd.f32 %v6842, %v6864
      %6866 = vdwg.mxu0
      %6867 = vmatpush.msra.mxu0 0.0
      %6868 = vmatpush.msra.mxu0 0.0
      %6869 = vmatpush.msra.mxu0 0.0
      %6870 = vmatpush.msra.mxu0 0.0
      %6871 = vmatpush.msra.mxu0 0.0
      %6872 = vmatpush.msra.mxu0 0.0
      %6873 = vmatpush.msra.mxu0 0.0
      %6874 = vmatpush.msra.mxu0 0.0
      %6875 = vmatpush.msra.mxu0 0.0
      %6876 = vmatpush.msra.mxu0 0.0
      %6877 = vmatpush.msra.mxu0 0.0
      %6878 = vmatpush.msra.mxu0 0.0
      %6879 = vmatpush.msra.mxu0 0.0
      %6880 = vmatpush.msra.mxu0 0.0
      %v6881 = vand.u32 %v6698, 4294901760
      %6882 = vmatpush.msra.mxu0 %v6881
      %v6883 = vand.u32 %v6694, 4294901760
      %6884 = vmatpush.msra.mxu0 %v6883
      %v6885 = vand.u32 %v6706, 4294901760
      %v6886 = vsub.f32 %v6706, %v6885
      %v6887 = vand.u32 %v6886, 4294901760
      %v6888 = vsub.f32 %v6886, %v6887
      %v6889 = vand.u32 %v6888, 4294901760
      %6890 = vmatmul.f32.gmra.mxu0 %v6889
      %v6891 = vpop.f32.mrf.mxu0
      %v6892 = vadd.f32 %v6689, %v6891
      %6893 = vdwg.mxu0
      %6894 = vmatpush.msra.mxu0 0.0
      %6895 = vmatpush.msra.mxu0 0.0
      %6896 = vmatpush.msra.mxu0 0.0
      %6897 = vmatpush.msra.mxu0 0.0
      %6898 = vmatpush.msra.mxu0 0.0
      %6899 = vmatpush.msra.mxu0 0.0
      %6900 = vmatpush.msra.mxu0 0.0
      %6901 = vmatpush.msra.mxu0 0.0
      %6902 = vmatpush.msra.mxu0 0.0
      %6903 = vmatpush.msra.mxu0 0.0
      %6904 = vmatpush.msra.mxu0 0.0
      %6905 = vmatpush.msra.mxu0 0.0
      %6906 = vmatpush.msra.mxu0 0.0
      %6907 = vmatpush.msra.mxu0 0.0
      %v6908 = vand.u32 %v6698, 4294901760
      %v6909 = vsub.f32 %v6698, %v6908
      %v6910 = vand.u32 %v6909, 4294901760
      %v6911 = vsub.f32 %v6909, %v6910
      %v6912 = vand.u32 %v6911, 4294901760
      %6913 = vmatpush.msra.mxu0 %v6912
      %v6914 = vand.u32 %v6694, 4294901760
      %v6915 = vsub.f32 %v6694, %v6914
      %v6916 = vand.u32 %v6915, 4294901760
      %v6917 = vsub.f32 %v6915, %v6916
      %v6918 = vand.u32 %v6917, 4294901760
      %6919 = vmatpush.msra.mxu0 %v6918
      %v6920 = vand.u32 %v6706, 4294901760
      %6921 = vmatmul.f32.gmra.mxu0 %v6920
      %v6922 = vpop.f32.mrf.mxu0
      %v6923 = vadd.f32 %v6892, %v6922
      %6924 = vdwg.mxu0
      %6925 = vmatpush.msra.mxu0 0.0
      %6926 = vmatpush.msra.mxu0 0.0
      %6927 = vmatpush.msra.mxu0 0.0
      %6928 = vmatpush.msra.mxu0 0.0
      %6929 = vmatpush.msra.mxu0 0.0
      %6930 = vmatpush.msra.mxu0 0.0
      %6931 = vmatpush.msra.mxu0 0.0
      %6932 = vmatpush.msra.mxu0 0.0
      %6933 = vmatpush.msra.mxu0 0.0
      %6934 = vmatpush.msra.mxu0 0.0
      %6935 = vmatpush.msra.mxu0 0.0
      %6936 = vmatpush.msra.mxu0 0.0
      %6937 = vmatpush.msra.mxu0 0.0
      %6938 = vmatpush.msra.mxu0 0.0
      %v6939 = vand.u32 %v6698, 4294901760
      %v6940 = vsub.f32 %v6698, %v6939
      %6941 = vmatpush.msra.mxu0 %v6940
      %v6942 = vand.u32 %v6694, 4294901760
      %v6943 = vsub.f32 %v6694, %v6942
      %6944 = vmatpush.msra.mxu0 %v6943
      %v6945 = vand.u32 %v6706, 4294901760
      %v6946 = vsub.f32 %v6706, %v6945
      %6947 = vmatmul.f32.gmra.mxu0 %v6946
      %v6948 = vpop.f32.mrf.mxu0
      %v6949 = vadd.f32 %v6923, %v6948
      %6950 = vdwg.mxu0
      %6951 = vmatpush.msra.mxu0 0.0
      %6952 = vmatpush.msra.mxu0 0.0
      %6953 = vmatpush.msra.mxu0 0.0
      %6954 = vmatpush.msra.mxu0 0.0
      %6955 = vmatpush.msra.mxu0 0.0
      %6956 = vmatpush.msra.mxu0 0.0
      %6957 = vmatpush.msra.mxu0 0.0
      %6958 = vmatpush.msra.mxu0 0.0
      %6959 = vmatpush.msra.mxu0 0.0
      %6960 = vmatpush.msra.mxu0 0.0
      %6961 = vmatpush.msra.mxu0 0.0
      %6962 = vmatpush.msra.mxu0 0.0
      %6963 = vmatpush.msra.mxu0 0.0
      %6964 = vmatpush.msra.mxu0 0.0
      %v6965 = vand.u32 %v6698, 4294901760
      %6966 = vmatpush.msra.mxu0 %v6965
      %v6967 = vand.u32 %v6694, 4294901760
      %6968 = vmatpush.msra.mxu0 %v6967
      %v6969 = vand.u32 %v6706, 4294901760
      %v6970 = vsub.f32 %v6706, %v6969
      %v6971 = vand.u32 %v6970, 4294901760
      %6972 = vmatmul.f32.gmra.mxu0 %v6971
      %v6973 = vpop.f32.mrf.mxu0
      %v6974 = vadd.f32 %v6949, %v6973
      %6975 = vdwg.mxu0
      %6976 = vmatpush.msra.mxu0 0.0
      %6977 = vmatpush.msra.mxu0 0.0
      %6978 = vmatpush.msra.mxu0 0.0
      %6979 = vmatpush.msra.mxu0 0.0
      %6980 = vmatpush.msra.mxu0 0.0
      %6981 = vmatpush.msra.mxu0 0.0
      %6982 = vmatpush.msra.mxu0 0.0
      %6983 = vmatpush.msra.mxu0 0.0
      %6984 = vmatpush.msra.mxu0 0.0
      %6985 = vmatpush.msra.mxu0 0.0
      %6986 = vmatpush.msra.mxu0 0.0
      %6987 = vmatpush.msra.mxu0 0.0
      %6988 = vmatpush.msra.mxu0 0.0
      %6989 = vmatpush.msra.mxu0 0.0
      %v6990 = vand.u32 %v6698, 4294901760
      %v6991 = vsub.f32 %v6698, %v6990
      %v6992 = vand.u32 %v6991, 4294901760
      %6993 = vmatpush.msra.mxu0 %v6992
      %v6994 = vand.u32 %v6694, 4294901760
      %v6995 = vsub.f32 %v6694, %v6994
      %v6996 = vand.u32 %v6995, 4294901760
      %6997 = vmatpush.msra.mxu0 %v6996
      %v6998 = vand.u32 %v6706, 4294901760
      %6999 = vmatmul.f32.gmra.mxu0 %v6998
      %v7000 = vpop.f32.mrf.mxu0
      %v7001 = vadd.f32 %v6974, %v7000
      %7002 = vdwg.mxu0
      %7003 = vmatpush.msra.mxu0 0.0
      %7004 = vmatpush.msra.mxu0 0.0
      %7005 = vmatpush.msra.mxu0 0.0
      %7006 = vmatpush.msra.mxu0 0.0
      %7007 = vmatpush.msra.mxu0 0.0
      %7008 = vmatpush.msra.mxu0 0.0
      %7009 = vmatpush.msra.mxu0 0.0
      %7010 = vmatpush.msra.mxu0 0.0
      %7011 = vmatpush.msra.mxu0 0.0
      %7012 = vmatpush.msra.mxu0 0.0
      %7013 = vmatpush.msra.mxu0 0.0
      %7014 = vmatpush.msra.mxu0 0.0
      %7015 = vmatpush.msra.mxu0 0.0
      %7016 = vmatpush.msra.mxu0 0.0
      %v7017 = vand.u32 %v6698, 4294901760
      %7018 = vmatpush.msra.mxu0 %v7017
      %v7019 = vand.u32 %v6694, 4294901760
      %7020 = vmatpush.msra.mxu0 %v7019
      %v7021 = vand.u32 %v6706, 4294901760
      %7022 = vmatmul.f32.gmra.mxu0 %v7021
      %v7023 = vpop.f32.mrf.mxu0
      %v7024 = vadd.f32 %v7001, %v7023
      %7025 = vdwg.mxu0
      %s7026 = scalar_lea.vmem %s6, 8
      %v7027 = vld [vmem:[%s7026] sm:$0xf]
      %7028 = vrot.lane.b32.xlu0 %v6345, 91
      %v7029 = vpop.permute.xlu0 %7028
      %7030 = vrot.lane.b32.xlu0 %v6346, 91
      %v7031 = vpop.permute.xlu0 %7030
      %7032 = vrot.lane.b32.xlu0 %v6347, 91
      %v7033 = vpop.permute.xlu0 %7032
      %7034 = vrot.lane.b32.xlu0 %v6348, 91
      %v7035 = vpop.permute.xlu0 %7034
      %v7036 = vsel %vm2882, %v7029, %v7031
      %v7037 = vsel %vm2882, %v7033, %v7035
      %v7043 = vsel %vm6369, %v7027, 0
      %7045 = vmatpush.msra.mxu0 0.0
      %7046 = vmatpush.msra.mxu0 0.0
      %7047 = vmatpush.msra.mxu0 0.0
      %7048 = vmatpush.msra.mxu0 0.0
      %7049 = vmatpush.msra.mxu0 0.0
      %7050 = vmatpush.msra.mxu0 0.0
      %7051 = vmatpush.msra.mxu0 0.0
      %7052 = vmatpush.msra.mxu0 0.0
      %7053 = vmatpush.msra.mxu0 0.0
      %7054 = vmatpush.msra.mxu0 0.0
      %7055 = vmatpush.msra.mxu0 0.0
      %7056 = vmatpush.msra.mxu0 0.0
      %7057 = vmatpush.msra.mxu0 0.0
      %7058 = vmatpush.msra.mxu0 0.0
      %v7059 = vand.u32 %v7037, 4294901760
      %7060 = vmatpush.msra.mxu0 %v7059
      %v7061 = vand.u32 %v7036, 4294901760
      %7062 = vmatpush.msra.mxu0 %v7061
      %v7063 = vand.u32 %v7043, 4294901760
      %v7064 = vsub.f32 %v7043, %v7063
      %v7065 = vand.u32 %v7064, 4294901760
      %v7066 = vsub.f32 %v7064, %v7065
      %v7067 = vand.u32 %v7066, 4294901760
      %7068 = vmatmul.f32.gmra.mxu0 %v7067
      %v7069 = vpop.f32.mrf.mxu0
      %v7070 = vadd.f32 0.0, %v7069
      %7071 = vdwg.mxu0
      %7072 = vmatpush.msra.mxu0 0.0
      %7073 = vmatpush.msra.mxu0 0.0
      %7074 = vmatpush.msra.mxu0 0.0
      %7075 = vmatpush.msra.mxu0 0.0
      %7076 = vmatpush.msra.mxu0 0.0
      %7077 = vmatpush.msra.mxu0 0.0
      %7078 = vmatpush.msra.mxu0 0.0
      %7079 = vmatpush.msra.mxu0 0.0
      %7080 = vmatpush.msra.mxu0 0.0
      %7081 = vmatpush.msra.mxu0 0.0
      %7082 = vmatpush.msra.mxu0 0.0
      %7083 = vmatpush.msra.mxu0 0.0
      %7084 = vmatpush.msra.mxu0 0.0
      %7085 = vmatpush.msra.mxu0 0.0
      %v7086 = vand.u32 %v7037, 4294901760
      %v7087 = vsub.f32 %v7037, %v7086
      %v7088 = vand.u32 %v7087, 4294901760
      %v7089 = vsub.f32 %v7087, %v7088
      %v7090 = vand.u32 %v7089, 4294901760
      %7091 = vmatpush.msra.mxu0 %v7090
      %v7092 = vand.u32 %v7036, 4294901760
      %v7093 = vsub.f32 %v7036, %v7092
      %v7094 = vand.u32 %v7093, 4294901760
      %v7095 = vsub.f32 %v7093, %v7094
      %v7096 = vand.u32 %v7095, 4294901760
      %7097 = vmatpush.msra.mxu0 %v7096
      %v7098 = vand.u32 %v7043, 4294901760
      %7099 = vmatmul.f32.gmra.mxu0 %v7098
      %v7100 = vpop.f32.mrf.mxu0
      %v7101 = vadd.f32 %v7070, %v7100
      %7102 = vdwg.mxu0
      %7103 = vmatpush.msra.mxu0 0.0
      %7104 = vmatpush.msra.mxu0 0.0
      %7105 = vmatpush.msra.mxu0 0.0
      %7106 = vmatpush.msra.mxu0 0.0
      %7107 = vmatpush.msra.mxu0 0.0
      %7108 = vmatpush.msra.mxu0 0.0
      %7109 = vmatpush.msra.mxu0 0.0
      %7110 = vmatpush.msra.mxu0 0.0
      %7111 = vmatpush.msra.mxu0 0.0
      %7112 = vmatpush.msra.mxu0 0.0
      %7113 = vmatpush.msra.mxu0 0.0
      %7114 = vmatpush.msra.mxu0 0.0
      %7115 = vmatpush.msra.mxu0 0.0
      %7116 = vmatpush.msra.mxu0 0.0
      %v7117 = vand.u32 %v7037, 4294901760
      %v7118 = vsub.f32 %v7037, %v7117
      %7119 = vmatpush.msra.mxu0 %v7118
      %v7120 = vand.u32 %v7036, 4294901760
      %v7121 = vsub.f32 %v7036, %v7120
      %7122 = vmatpush.msra.mxu0 %v7121
      %v7123 = vand.u32 %v7043, 4294901760
      %v7124 = vsub.f32 %v7043, %v7123
      %7125 = vmatmul.f32.gmra.mxu0 %v7124
      %v7126 = vpop.f32.mrf.mxu0
      %v7127 = vadd.f32 %v7101, %v7126
      %7128 = vdwg.mxu0
      %7129 = vmatpush.msra.mxu0 0.0
      %7130 = vmatpush.msra.mxu0 0.0
      %7131 = vmatpush.msra.mxu0 0.0
      %7132 = vmatpush.msra.mxu0 0.0
      %7133 = vmatpush.msra.mxu0 0.0
      %7134 = vmatpush.msra.mxu0 0.0
      %7135 = vmatpush.msra.mxu0 0.0
      %7136 = vmatpush.msra.mxu0 0.0
      %7137 = vmatpush.msra.mxu0 0.0
      %7138 = vmatpush.msra.mxu0 0.0
      %7139 = vmatpush.msra.mxu0 0.0
      %7140 = vmatpush.msra.mxu0 0.0
      %7141 = vmatpush.msra.mxu0 0.0
      %7142 = vmatpush.msra.mxu0 0.0
      %v7143 = vand.u32 %v7037, 4294901760
      %7144 = vmatpush.msra.mxu0 %v7143
      %v7145 = vand.u32 %v7036, 4294901760
      %7146 = vmatpush.msra.mxu0 %v7145
      %v7147 = vand.u32 %v7043, 4294901760
      %v7148 = vsub.f32 %v7043, %v7147
      %v7149 = vand.u32 %v7148, 4294901760
      %7150 = vmatmul.f32.gmra.mxu0 %v7149
      %v7151 = vpop.f32.mrf.mxu0
      %v7152 = vadd.f32 %v7127, %v7151
      %7153 = vdwg.mxu0
      %7154 = vmatpush.msra.mxu0 0.0
      %7155 = vmatpush.msra.mxu0 0.0
      %7156 = vmatpush.msra.mxu0 0.0
      %7157 = vmatpush.msra.mxu0 0.0
      %7158 = vmatpush.msra.mxu0 0.0
      %7159 = vmatpush.msra.mxu0 0.0
      %7160 = vmatpush.msra.mxu0 0.0
      %7161 = vmatpush.msra.mxu0 0.0
      %7162 = vmatpush.msra.mxu0 0.0
      %7163 = vmatpush.msra.mxu0 0.0
      %7164 = vmatpush.msra.mxu0 0.0
      %7165 = vmatpush.msra.mxu0 0.0
      %7166 = vmatpush.msra.mxu0 0.0
      %7167 = vmatpush.msra.mxu0 0.0
      %v7168 = vand.u32 %v7037, 4294901760
      %v7169 = vsub.f32 %v7037, %v7168
      %v7170 = vand.u32 %v7169, 4294901760
      %7171 = vmatpush.msra.mxu0 %v7170
      %v7172 = vand.u32 %v7036, 4294901760
      %v7173 = vsub.f32 %v7036, %v7172
      %v7174 = vand.u32 %v7173, 4294901760
      %7175 = vmatpush.msra.mxu0 %v7174
      %v7176 = vand.u32 %v7043, 4294901760
      %7177 = vmatmul.f32.gmra.mxu0 %v7176
      %v7178 = vpop.f32.mrf.mxu0
      %v7179 = vadd.f32 %v7152, %v7178
      %7180 = vdwg.mxu0
      %7181 = vmatpush.msra.mxu0 0.0
      %7182 = vmatpush.msra.mxu0 0.0
      %7183 = vmatpush.msra.mxu0 0.0
      %7184 = vmatpush.msra.mxu0 0.0
      %7185 = vmatpush.msra.mxu0 0.0
      %7186 = vmatpush.msra.mxu0 0.0
      %7187 = vmatpush.msra.mxu0 0.0
      %7188 = vmatpush.msra.mxu0 0.0
      %7189 = vmatpush.msra.mxu0 0.0
      %7190 = vmatpush.msra.mxu0 0.0
      %7191 = vmatpush.msra.mxu0 0.0
      %7192 = vmatpush.msra.mxu0 0.0
      %7193 = vmatpush.msra.mxu0 0.0
      %7194 = vmatpush.msra.mxu0 0.0
      %v7195 = vand.u32 %v7037, 4294901760
      %7196 = vmatpush.msra.mxu0 %v7195
      %v7197 = vand.u32 %v7036, 4294901760
      %7198 = vmatpush.msra.mxu0 %v7197
      %v7199 = vand.u32 %v7043, 4294901760
      %7200 = vmatmul.f32.gmra.mxu0 %v7199
      %v7201 = vpop.f32.mrf.mxu0
      %v7202 = vadd.f32 %v7179, %v7201
      %7203 = vdwg.mxu0
      %7204 = vmatpush.msra.mxu0 0.0
      %7205 = vmatpush.msra.mxu0 0.0
      %7206 = vmatpush.msra.mxu0 0.0
      %7207 = vmatpush.msra.mxu0 0.0
      %7208 = vmatpush.msra.mxu0 0.0
      %7209 = vmatpush.msra.mxu0 0.0
      %7210 = vmatpush.msra.mxu0 0.0
      %7211 = vmatpush.msra.mxu0 0.0
      %7212 = vmatpush.msra.mxu0 0.0
      %7213 = vmatpush.msra.mxu0 0.0
      %7214 = vmatpush.msra.mxu0 0.0
      %7215 = vmatpush.msra.mxu0 0.0
      %7216 = vmatpush.msra.mxu0 0.0
      %7217 = vmatpush.msra.mxu0 0.0
      %v7218 = vand.u32 %v7035, 4294901760
      %7219 = vmatpush.msra.mxu0 %v7218
      %v7220 = vand.u32 %v7031, 4294901760
      %7221 = vmatpush.msra.mxu0 %v7220
      %v7222 = vand.u32 %v7043, 4294901760
      %v7223 = vsub.f32 %v7043, %v7222
      %v7224 = vand.u32 %v7223, 4294901760
      %v7225 = vsub.f32 %v7223, %v7224
      %v7226 = vand.u32 %v7225, 4294901760
      %7227 = vmatmul.f32.gmra.mxu0 %v7226
      %v7228 = vpop.f32.mrf.mxu0
      %v7229 = vadd.f32 0.0, %v7228
      %7230 = vdwg.mxu0
      %7231 = vmatpush.msra.mxu0 0.0
      %7232 = vmatpush.msra.mxu0 0.0
      %7233 = vmatpush.msra.mxu0 0.0
      %7234 = vmatpush.msra.mxu0 0.0
      %7235 = vmatpush.msra.mxu0 0.0
      %7236 = vmatpush.msra.mxu0 0.0
      %7237 = vmatpush.msra.mxu0 0.0
      %7238 = vmatpush.msra.mxu0 0.0
      %7239 = vmatpush.msra.mxu0 0.0
      %7240 = vmatpush.msra.mxu0 0.0
      %7241 = vmatpush.msra.mxu0 0.0
      %7242 = vmatpush.msra.mxu0 0.0
      %7243 = vmatpush.msra.mxu0 0.0
      %7244 = vmatpush.msra.mxu0 0.0
      %v7245 = vand.u32 %v7035, 4294901760
      %v7246 = vsub.f32 %v7035, %v7245
      %v7247 = vand.u32 %v7246, 4294901760
      %v7248 = vsub.f32 %v7246, %v7247
      %v7249 = vand.u32 %v7248, 4294901760
      %7250 = vmatpush.msra.mxu0 %v7249
      %v7251 = vand.u32 %v7031, 4294901760
      %v7252 = vsub.f32 %v7031, %v7251
      %v7253 = vand.u32 %v7252, 4294901760
      %v7254 = vsub.f32 %v7252, %v7253
      %v7255 = vand.u32 %v7254, 4294901760
      %7256 = vmatpush.msra.mxu0 %v7255
      %v7257 = vand.u32 %v7043, 4294901760
      %7258 = vmatmul.f32.gmra.mxu0 %v7257
      %v7259 = vpop.f32.mrf.mxu0
      %v7260 = vadd.f32 %v7229, %v7259
      %7261 = vdwg.mxu0
      %7262 = vmatpush.msra.mxu0 0.0
      %7263 = vmatpush.msra.mxu0 0.0
      %7264 = vmatpush.msra.mxu0 0.0
      %7265 = vmatpush.msra.mxu0 0.0
      %7266 = vmatpush.msra.mxu0 0.0
      %7267 = vmatpush.msra.mxu0 0.0
      %7268 = vmatpush.msra.mxu0 0.0
      %7269 = vmatpush.msra.mxu0 0.0
      %7270 = vmatpush.msra.mxu0 0.0
      %7271 = vmatpush.msra.mxu0 0.0
      %7272 = vmatpush.msra.mxu0 0.0
      %7273 = vmatpush.msra.mxu0 0.0
      %7274 = vmatpush.msra.mxu0 0.0
      %7275 = vmatpush.msra.mxu0 0.0
      %v7276 = vand.u32 %v7035, 4294901760
      %v7277 = vsub.f32 %v7035, %v7276
      %7278 = vmatpush.msra.mxu0 %v7277
      %v7279 = vand.u32 %v7031, 4294901760
      %v7280 = vsub.f32 %v7031, %v7279
      %7281 = vmatpush.msra.mxu0 %v7280
      %v7282 = vand.u32 %v7043, 4294901760
      %v7283 = vsub.f32 %v7043, %v7282
      %7284 = vmatmul.f32.gmra.mxu0 %v7283
      %v7285 = vpop.f32.mrf.mxu0
      %v7286 = vadd.f32 %v7260, %v7285
      %7287 = vdwg.mxu0
      %7288 = vmatpush.msra.mxu0 0.0
      %7289 = vmatpush.msra.mxu0 0.0
      %7290 = vmatpush.msra.mxu0 0.0
      %7291 = vmatpush.msra.mxu0 0.0
      %7292 = vmatpush.msra.mxu0 0.0
      %7293 = vmatpush.msra.mxu0 0.0
      %7294 = vmatpush.msra.mxu0 0.0
      %7295 = vmatpush.msra.mxu0 0.0
      %7296 = vmatpush.msra.mxu0 0.0
      %7297 = vmatpush.msra.mxu0 0.0
      %7298 = vmatpush.msra.mxu0 0.0
      %7299 = vmatpush.msra.mxu0 0.0
      %7300 = vmatpush.msra.mxu0 0.0
      %7301 = vmatpush.msra.mxu0 0.0
      %v7302 = vand.u32 %v7035, 4294901760
      %7303 = vmatpush.msra.mxu0 %v7302
      %v7304 = vand.u32 %v7031, 4294901760
      %7305 = vmatpush.msra.mxu0 %v7304
      %v7306 = vand.u32 %v7043, 4294901760
      %v7307 = vsub.f32 %v7043, %v7306
      %v7308 = vand.u32 %v7307, 4294901760
      %7309 = vmatmul.f32.gmra.mxu0 %v7308
      %v7310 = vpop.f32.mrf.mxu0
      %v7311 = vadd.f32 %v7286, %v7310
      %7312 = vdwg.mxu0
      %7313 = vmatpush.msra.mxu0 0.0
      %7314 = vmatpush.msra.mxu0 0.0
      %7315 = vmatpush.msra.mxu0 0.0
      %7316 = vmatpush.msra.mxu0 0.0
      %7317 = vmatpush.msra.mxu0 0.0
      %7318 = vmatpush.msra.mxu0 0.0
      %7319 = vmatpush.msra.mxu0 0.0
      %7320 = vmatpush.msra.mxu0 0.0
      %7321 = vmatpush.msra.mxu0 0.0
      %7322 = vmatpush.msra.mxu0 0.0
      %7323 = vmatpush.msra.mxu0 0.0
      %7324 = vmatpush.msra.mxu0 0.0
      %7325 = vmatpush.msra.mxu0 0.0
      %7326 = vmatpush.msra.mxu0 0.0
      %v7327 = vand.u32 %v7035, 4294901760
      %v7328 = vsub.f32 %v7035, %v7327
      %v7329 = vand.u32 %v7328, 4294901760
      %7330 = vmatpush.msra.mxu0 %v7329
      %v7331 = vand.u32 %v7031, 4294901760
      %v7332 = vsub.f32 %v7031, %v7331
      %v7333 = vand.u32 %v7332, 4294901760
      %7334 = vmatpush.msra.mxu0 %v7333
      %v7335 = vand.u32 %v7043, 4294901760
      %7336 = vmatmul.f32.gmra.mxu0 %v7335
      %v7337 = vpop.f32.mrf.mxu0
      %v7338 = vadd.f32 %v7311, %v7337
      %7339 = vdwg.mxu0
      %7340 = vmatpush.msra.mxu0 0.0
      %7341 = vmatpush.msra.mxu0 0.0
      %7342 = vmatpush.msra.mxu0 0.0
      %7343 = vmatpush.msra.mxu0 0.0
      %7344 = vmatpush.msra.mxu0 0.0
      %7345 = vmatpush.msra.mxu0 0.0
      %7346 = vmatpush.msra.mxu0 0.0
      %7347 = vmatpush.msra.mxu0 0.0
      %7348 = vmatpush.msra.mxu0 0.0
      %7349 = vmatpush.msra.mxu0 0.0
      %7350 = vmatpush.msra.mxu0 0.0
      %7351 = vmatpush.msra.mxu0 0.0
      %7352 = vmatpush.msra.mxu0 0.0
      %7353 = vmatpush.msra.mxu0 0.0
      %v7354 = vand.u32 %v7035, 4294901760
      %7355 = vmatpush.msra.mxu0 %v7354
      %v7356 = vand.u32 %v7031, 4294901760
      %7357 = vmatpush.msra.mxu0 %v7356
      %v7358 = vand.u32 %v7043, 4294901760
      %7359 = vmatmul.f32.gmra.mxu0 %v7358
      %v7360 = vpop.f32.mrf.mxu0
      %v7361 = vadd.f32 %v7338, %v7360
      %7362 = vdwg.mxu0
      %v7363 = vadd.f32 %v6865, %v7202
      %v7364 = vadd.f32 %v7024, %v7361
      %s7365 = scalar_lea.vmem %s6, 12
      %v7366 = vld [vmem:[%s7365] sm:$0xf]
      %7367 = vrot.lane.b32.xlu0 %v6345, 75
      %v7368 = vpop.permute.xlu0 %7367
      %7369 = vrot.lane.b32.xlu0 %v6346, 75
      %v7370 = vpop.permute.xlu0 %7369
      %7371 = vrot.lane.b32.xlu0 %v6347, 75
      %v7372 = vpop.permute.xlu0 %7371
      %7373 = vrot.lane.b32.xlu0 %v6348, 75
      %v7374 = vpop.permute.xlu0 %7373
      %v7375 = vsel %vm5285, %v7368, %v7370
      %v7376 = vsel %vm5285, %v7372, %v7374
      %v7382 = vsel %vm6369, %v7366, 0
      %7384 = vmatpush.msra.mxu0 0.0
      %7385 = vmatpush.msra.mxu0 0.0
      %7386 = vmatpush.msra.mxu0 0.0
      %7387 = vmatpush.msra.mxu0 0.0
      %7388 = vmatpush.msra.mxu0 0.0
      %7389 = vmatpush.msra.mxu0 0.0
      %7390 = vmatpush.msra.mxu0 0.0
      %7391 = vmatpush.msra.mxu0 0.0
      %7392 = vmatpush.msra.mxu0 0.0
      %7393 = vmatpush.msra.mxu0 0.0
      %7394 = vmatpush.msra.mxu0 0.0
      %7395 = vmatpush.msra.mxu0 0.0
      %7396 = vmatpush.msra.mxu0 0.0
      %7397 = vmatpush.msra.mxu0 0.0
      %v7398 = vand.u32 %v7376, 4294901760
      %7399 = vmatpush.msra.mxu0 %v7398
      %v7400 = vand.u32 %v7375, 4294901760
      %7401 = vmatpush.msra.mxu0 %v7400
      %v7402 = vand.u32 %v7382, 4294901760
      %v7403 = vsub.f32 %v7382, %v7402
      %v7404 = vand.u32 %v7403, 4294901760
      %v7405 = vsub.f32 %v7403, %v7404
      %v7406 = vand.u32 %v7405, 4294901760
      %7407 = vmatmul.f32.gmra.mxu0 %v7406
      %v7408 = vpop.f32.mrf.mxu0
      %v7409 = vadd.f32 0.0, %v7408
      %7410 = vdwg.mxu0
      %7411 = vmatpush.msra.mxu0 0.0
      %7412 = vmatpush.msra.mxu0 0.0
      %7413 = vmatpush.msra.mxu0 0.0
      %7414 = vmatpush.msra.mxu0 0.0
      %7415 = vmatpush.msra.mxu0 0.0
      %7416 = vmatpush.msra.mxu0 0.0
      %7417 = vmatpush.msra.mxu0 0.0
      %7418 = vmatpush.msra.mxu0 0.0
      %7419 = vmatpush.msra.mxu0 0.0
      %7420 = vmatpush.msra.mxu0 0.0
      %7421 = vmatpush.msra.mxu0 0.0
      %7422 = vmatpush.msra.mxu0 0.0
      %7423 = vmatpush.msra.mxu0 0.0
      %7424 = vmatpush.msra.mxu0 0.0
      %v7425 = vand.u32 %v7376, 4294901760
      %v7426 = vsub.f32 %v7376, %v7425
      %v7427 = vand.u32 %v7426, 4294901760
      %v7428 = vsub.f32 %v7426, %v7427
      %v7429 = vand.u32 %v7428, 4294901760
      %7430 = vmatpush.msra.mxu0 %v7429
      %v7431 = vand.u32 %v7375, 4294901760
      %v7432 = vsub.f32 %v7375, %v7431
      %v7433 = vand.u32 %v7432, 4294901760
      %v7434 = vsub.f32 %v7432, %v7433
      %v7435 = vand.u32 %v7434, 4294901760
      %7436 = vmatpush.msra.mxu0 %v7435
      %v7437 = vand.u32 %v7382, 4294901760
      %7438 = vmatmul.f32.gmra.mxu0 %v7437
      %v7439 = vpop.f32.mrf.mxu0
      %v7440 = vadd.f32 %v7409, %v7439
      %7441 = vdwg.mxu0
      %7442 = vmatpush.msra.mxu0 0.0
      %7443 = vmatpush.msra.mxu0 0.0
      %7444 = vmatpush.msra.mxu0 0.0
      %7445 = vmatpush.msra.mxu0 0.0
      %7446 = vmatpush.msra.mxu0 0.0
      %7447 = vmatpush.msra.mxu0 0.0
      %7448 = vmatpush.msra.mxu0 0.0
      %7449 = vmatpush.msra.mxu0 0.0
      %7450 = vmatpush.msra.mxu0 0.0
      %7451 = vmatpush.msra.mxu0 0.0
      %7452 = vmatpush.msra.mxu0 0.0
      %7453 = vmatpush.msra.mxu0 0.0
      %7454 = vmatpush.msra.mxu0 0.0
      %7455 = vmatpush.msra.mxu0 0.0
      %v7456 = vand.u32 %v7376, 4294901760
      %v7457 = vsub.f32 %v7376, %v7456
      %7458 = vmatpush.msra.mxu0 %v7457
      %v7459 = vand.u32 %v7375, 4294901760
      %v7460 = vsub.f32 %v7375, %v7459
      %7461 = vmatpush.msra.mxu0 %v7460
      %v7462 = vand.u32 %v7382, 4294901760
      %v7463 = vsub.f32 %v7382, %v7462
      %7464 = vmatmul.f32.gmra.mxu0 %v7463
      %v7465 = vpop.f32.mrf.mxu0
      %v7466 = vadd.f32 %v7440, %v7465
      %7467 = vdwg.mxu0
      %7468 = vmatpush.msra.mxu0 0.0
      %7469 = vmatpush.msra.mxu0 0.0
      %7470 = vmatpush.msra.mxu0 0.0
      %7471 = vmatpush.msra.mxu0 0.0
      %7472 = vmatpush.msra.mxu0 0.0
      %7473 = vmatpush.msra.mxu0 0.0
      %7474 = vmatpush.msra.mxu0 0.0
      %7475 = vmatpush.msra.mxu0 0.0
      %7476 = vmatpush.msra.mxu0 0.0
      %7477 = vmatpush.msra.mxu0 0.0
      %7478 = vmatpush.msra.mxu0 0.0
      %7479 = vmatpush.msra.mxu0 0.0
      %7480 = vmatpush.msra.mxu0 0.0
      %7481 = vmatpush.msra.mxu0 0.0
      %v7482 = vand.u32 %v7376, 4294901760
      %7483 = vmatpush.msra.mxu0 %v7482
      %v7484 = vand.u32 %v7375, 4294901760
      %7485 = vmatpush.msra.mxu0 %v7484
      %v7486 = vand.u32 %v7382, 4294901760
      %v7487 = vsub.f32 %v7382, %v7486
      %v7488 = vand.u32 %v7487, 4294901760
      %7489 = vmatmul.f32.gmra.mxu0 %v7488
      %v7490 = vpop.f32.mrf.mxu0
      %v7491 = vadd.f32 %v7466, %v7490
      %7492 = vdwg.mxu0
      %7493 = vmatpush.msra.mxu0 0.0
      %7494 = vmatpush.msra.mxu0 0.0
      %7495 = vmatpush.msra.mxu0 0.0
      %7496 = vmatpush.msra.mxu0 0.0
      %7497 = vmatpush.msra.mxu0 0.0
      %7498 = vmatpush.msra.mxu0 0.0
      %7499 = vmatpush.msra.mxu0 0.0
      %7500 = vmatpush.msra.mxu0 0.0
      %7501 = vmatpush.msra.mxu0 0.0
      %7502 = vmatpush.msra.mxu0 0.0
      %7503 = vmatpush.msra.mxu0 0.0
      %7504 = vmatpush.msra.mxu0 0.0
      %7505 = vmatpush.msra.mxu0 0.0
      %7506 = vmatpush.msra.mxu0 0.0
      %v7507 = vand.u32 %v7376, 4294901760
      %v7508 = vsub.f32 %v7376, %v7507
      %v7509 = vand.u32 %v7508, 4294901760
      %7510 = vmatpush.msra.mxu0 %v7509
      %v7511 = vand.u32 %v7375, 4294901760
      %v7512 = vsub.f32 %v7375, %v7511
      %v7513 = vand.u32 %v7512, 4294901760
      %7514 = vmatpush.msra.mxu0 %v7513
      %v7515 = vand.u32 %v7382, 4294901760
      %7516 = vmatmul.f32.gmra.mxu0 %v7515
      %v7517 = vpop.f32.mrf.mxu0
      %v7518 = vadd.f32 %v7491, %v7517
      %7519 = vdwg.mxu0
      %7520 = vmatpush.msra.mxu0 0.0
      %7521 = vmatpush.msra.mxu0 0.0
      %7522 = vmatpush.msra.mxu0 0.0
      %7523 = vmatpush.msra.mxu0 0.0
      %7524 = vmatpush.msra.mxu0 0.0
      %7525 = vmatpush.msra.mxu0 0.0
      %7526 = vmatpush.msra.mxu0 0.0
      %7527 = vmatpush.msra.mxu0 0.0
      %7528 = vmatpush.msra.mxu0 0.0
      %7529 = vmatpush.msra.mxu0 0.0
      %7530 = vmatpush.msra.mxu0 0.0
      %7531 = vmatpush.msra.mxu0 0.0
      %7532 = vmatpush.msra.mxu0 0.0
      %7533 = vmatpush.msra.mxu0 0.0
      %v7534 = vand.u32 %v7376, 4294901760
      %7535 = vmatpush.msra.mxu0 %v7534
      %v7536 = vand.u32 %v7375, 4294901760
      %7537 = vmatpush.msra.mxu0 %v7536
      %v7538 = vand.u32 %v7382, 4294901760
      %7539 = vmatmul.f32.gmra.mxu0 %v7538
      %v7540 = vpop.f32.mrf.mxu0
      %v7541 = vadd.f32 %v7518, %v7540
      %7542 = vdwg.mxu0
      %7543 = vmatpush.msra.mxu0 0.0
      %7544 = vmatpush.msra.mxu0 0.0
      %7545 = vmatpush.msra.mxu0 0.0
      %7546 = vmatpush.msra.mxu0 0.0
      %7547 = vmatpush.msra.mxu0 0.0
      %7548 = vmatpush.msra.mxu0 0.0
      %7549 = vmatpush.msra.mxu0 0.0
      %7550 = vmatpush.msra.mxu0 0.0
      %7551 = vmatpush.msra.mxu0 0.0
      %7552 = vmatpush.msra.mxu0 0.0
      %7553 = vmatpush.msra.mxu0 0.0
      %7554 = vmatpush.msra.mxu0 0.0
      %7555 = vmatpush.msra.mxu0 0.0
      %7556 = vmatpush.msra.mxu0 0.0
      %v7557 = vand.u32 %v7374, 4294901760
      %7558 = vmatpush.msra.mxu0 %v7557
      %v7559 = vand.u32 %v7370, 4294901760
      %7560 = vmatpush.msra.mxu0 %v7559
      %v7561 = vand.u32 %v7382, 4294901760
      %v7562 = vsub.f32 %v7382, %v7561
      %v7563 = vand.u32 %v7562, 4294901760
      %v7564 = vsub.f32 %v7562, %v7563
      %v7565 = vand.u32 %v7564, 4294901760
      %7566 = vmatmul.f32.gmra.mxu0 %v7565
      %v7567 = vpop.f32.mrf.mxu0
      %v7568 = vadd.f32 0.0, %v7567
      %7569 = vdwg.mxu0
      %7570 = vmatpush.msra.mxu0 0.0
      %7571 = vmatpush.msra.mxu0 0.0
      %7572 = vmatpush.msra.mxu0 0.0
      %7573 = vmatpush.msra.mxu0 0.0
      %7574 = vmatpush.msra.mxu0 0.0
      %7575 = vmatpush.msra.mxu0 0.0
      %7576 = vmatpush.msra.mxu0 0.0
      %7577 = vmatpush.msra.mxu0 0.0
      %7578 = vmatpush.msra.mxu0 0.0
      %7579 = vmatpush.msra.mxu0 0.0
      %7580 = vmatpush.msra.mxu0 0.0
      %7581 = vmatpush.msra.mxu0 0.0
      %7582 = vmatpush.msra.mxu0 0.0
      %7583 = vmatpush.msra.mxu0 0.0
      %v7584 = vand.u32 %v7374, 4294901760
      %v7585 = vsub.f32 %v7374, %v7584
      %v7586 = vand.u32 %v7585, 4294901760
      %v7587 = vsub.f32 %v7585, %v7586
      %v7588 = vand.u32 %v7587, 4294901760
      %7589 = vmatpush.msra.mxu0 %v7588
      %v7590 = vand.u32 %v7370, 4294901760
      %v7591 = vsub.f32 %v7370, %v7590
      %v7592 = vand.u32 %v7591, 4294901760
      %v7593 = vsub.f32 %v7591, %v7592
      %v7594 = vand.u32 %v7593, 4294901760
      %7595 = vmatpush.msra.mxu0 %v7594
      %v7596 = vand.u32 %v7382, 4294901760
      %7597 = vmatmul.f32.gmra.mxu0 %v7596
      %v7598 = vpop.f32.mrf.mxu0
      %v7599 = vadd.f32 %v7568, %v7598
      %7600 = vdwg.mxu0
      %7601 = vmatpush.msra.mxu0 0.0
      %7602 = vmatpush.msra.mxu0 0.0
      %7603 = vmatpush.msra.mxu0 0.0
      %7604 = vmatpush.msra.mxu0 0.0
      %7605 = vmatpush.msra.mxu0 0.0
      %7606 = vmatpush.msra.mxu0 0.0
      %7607 = vmatpush.msra.mxu0 0.0
      %7608 = vmatpush.msra.mxu0 0.0
      %7609 = vmatpush.msra.mxu0 0.0
      %7610 = vmatpush.msra.mxu0 0.0
      %7611 = vmatpush.msra.mxu0 0.0
      %7612 = vmatpush.msra.mxu0 0.0
      %7613 = vmatpush.msra.mxu0 0.0
      %7614 = vmatpush.msra.mxu0 0.0
      %v7615 = vand.u32 %v7374, 4294901760
      %v7616 = vsub.f32 %v7374, %v7615
      %7617 = vmatpush.msra.mxu0 %v7616
      %v7618 = vand.u32 %v7370, 4294901760
      %v7619 = vsub.f32 %v7370, %v7618
      %7620 = vmatpush.msra.mxu0 %v7619
      %v7621 = vand.u32 %v7382, 4294901760
      %v7622 = vsub.f32 %v7382, %v7621
      %7623 = vmatmul.f32.gmra.mxu0 %v7622
      %v7624 = vpop.f32.mrf.mxu0
      %v7625 = vadd.f32 %v7599, %v7624
      %7626 = vdwg.mxu0
      %7627 = vmatpush.msra.mxu0 0.0
      %7628 = vmatpush.msra.mxu0 0.0
      %7629 = vmatpush.msra.mxu0 0.0
      %7630 = vmatpush.msra.mxu0 0.0
      %7631 = vmatpush.msra.mxu0 0.0
      %7632 = vmatpush.msra.mxu0 0.0
      %7633 = vmatpush.msra.mxu0 0.0
      %7634 = vmatpush.msra.mxu0 0.0
      %7635 = vmatpush.msra.mxu0 0.0
      %7636 = vmatpush.msra.mxu0 0.0
      %7637 = vmatpush.msra.mxu0 0.0
      %7638 = vmatpush.msra.mxu0 0.0
      %7639 = vmatpush.msra.mxu0 0.0
      %7640 = vmatpush.msra.mxu0 0.0
      %v7641 = vand.u32 %v7374, 4294901760
      %7642 = vmatpush.msra.mxu0 %v7641
      %v7643 = vand.u32 %v7370, 4294901760
      %7644 = vmatpush.msra.mxu0 %v7643
      %v7645 = vand.u32 %v7382, 4294901760
      %v7646 = vsub.f32 %v7382, %v7645
      %v7647 = vand.u32 %v7646, 4294901760
      %7648 = vmatmul.f32.gmra.mxu0 %v7647
      %v7649 = vpop.f32.mrf.mxu0
      %v7650 = vadd.f32 %v7625, %v7649
      %7651 = vdwg.mxu0
      %7652 = vmatpush.msra.mxu0 0.0
      %7653 = vmatpush.msra.mxu0 0.0
      %7654 = vmatpush.msra.mxu0 0.0
      %7655 = vmatpush.msra.mxu0 0.0
      %7656 = vmatpush.msra.mxu0 0.0
      %7657 = vmatpush.msra.mxu0 0.0
      %7658 = vmatpush.msra.mxu0 0.0
      %7659 = vmatpush.msra.mxu0 0.0
      %7660 = vmatpush.msra.mxu0 0.0
      %7661 = vmatpush.msra.mxu0 0.0
      %7662 = vmatpush.msra.mxu0 0.0
      %7663 = vmatpush.msra.mxu0 0.0
      %7664 = vmatpush.msra.mxu0 0.0
      %7665 = vmatpush.msra.mxu0 0.0
      %v7666 = vand.u32 %v7374, 4294901760
      %v7667 = vsub.f32 %v7374, %v7666
      %v7668 = vand.u32 %v7667, 4294901760
      %7669 = vmatpush.msra.mxu0 %v7668
      %v7670 = vand.u32 %v7370, 4294901760
      %v7671 = vsub.f32 %v7370, %v7670
      %v7672 = vand.u32 %v7671, 4294901760
      %7673 = vmatpush.msra.mxu0 %v7672
      %v7674 = vand.u32 %v7382, 4294901760
      %7675 = vmatmul.f32.gmra.mxu0 %v7674
      %v7676 = vpop.f32.mrf.mxu0
      %v7677 = vadd.f32 %v7650, %v7676
      %7678 = vdwg.mxu0
      %7679 = vmatpush.msra.mxu0 0.0
      %7680 = vmatpush.msra.mxu0 0.0
      %7681 = vmatpush.msra.mxu0 0.0
      %7682 = vmatpush.msra.mxu0 0.0
      %7683 = vmatpush.msra.mxu0 0.0
      %7684 = vmatpush.msra.mxu0 0.0
      %7685 = vmatpush.msra.mxu0 0.0
      %7686 = vmatpush.msra.mxu0 0.0
      %7687 = vmatpush.msra.mxu0 0.0
      %7688 = vmatpush.msra.mxu0 0.0
      %7689 = vmatpush.msra.mxu0 0.0
      %7690 = vmatpush.msra.mxu0 0.0
      %7691 = vmatpush.msra.mxu0 0.0
      %7692 = vmatpush.msra.mxu0 0.0
      %v7693 = vand.u32 %v7374, 4294901760
      %7694 = vmatpush.msra.mxu0 %v7693
      %v7695 = vand.u32 %v7370, 4294901760
      %7696 = vmatpush.msra.mxu0 %v7695
      %v7697 = vand.u32 %v7382, 4294901760
      %7698 = vmatmul.f32.gmra.mxu0 %v7697
      %v7699 = vpop.f32.mrf.mxu0
      %v7700 = vadd.f32 %v7677, %v7699
      %7701 = vdwg.mxu0
      %v7702 = vadd.f32 %v7363, %v7541
      %v7703 = vadd.f32 %v7364, %v7700
      %s7704 = scalar_lea.vmem %s6, 16
      %v7705 = vld [vmem:[%s7704] sm:$0xf]
      %7706 = vrot.lane.b32.xlu0 %v6345, 74
      %v7707 = vpop.permute.xlu0 %7706
      %7708 = vrot.lane.b32.xlu0 %v6346, 74
      %v7709 = vpop.permute.xlu0 %7708
      %7710 = vrot.lane.b32.xlu0 %v6347, 74
      %v7711 = vpop.permute.xlu0 %7710
      %7712 = vrot.lane.b32.xlu0 %v6348, 74
      %v7713 = vpop.permute.xlu0 %7712
      %v7714 = vsel %vm5627, %v7707, %v7709
      %v7715 = vsel %vm5627, %v7711, %v7713
      %v7721 = vsel %vm6369, %v7705, 0
      %7723 = vmatpush.msra.mxu0 0.0
      %7724 = vmatpush.msra.mxu0 0.0
      %7725 = vmatpush.msra.mxu0 0.0
      %7726 = vmatpush.msra.mxu0 0.0
      %7727 = vmatpush.msra.mxu0 0.0
      %7728 = vmatpush.msra.mxu0 0.0
      %7729 = vmatpush.msra.mxu0 0.0
      %7730 = vmatpush.msra.mxu0 0.0
      %7731 = vmatpush.msra.mxu0 0.0
      %7732 = vmatpush.msra.mxu0 0.0
      %7733 = vmatpush.msra.mxu0 0.0
      %7734 = vmatpush.msra.mxu0 0.0
      %7735 = vmatpush.msra.mxu0 0.0
      %7736 = vmatpush.msra.mxu0 0.0
      %v7737 = vand.u32 %v7715, 4294901760
      %7738 = vmatpush.msra.mxu0 %v7737
      %v7739 = vand.u32 %v7714, 4294901760
      %7740 = vmatpush.msra.mxu0 %v7739
      %v7741 = vand.u32 %v7721, 4294901760
      %v7742 = vsub.f32 %v7721, %v7741
      %v7743 = vand.u32 %v7742, 4294901760
      %v7744 = vsub.f32 %v7742, %v7743
      %v7745 = vand.u32 %v7744, 4294901760
      %7746 = vmatmul.f32.gmra.mxu0 %v7745
      %v7747 = vpop.f32.mrf.mxu0
      %v7748 = vadd.f32 0.0, %v7747
      %7749 = vdwg.mxu0
      %7750 = vmatpush.msra.mxu0 0.0
      %7751 = vmatpush.msra.mxu0 0.0
      %7752 = vmatpush.msra.mxu0 0.0
      %7753 = vmatpush.msra.mxu0 0.0
      %7754 = vmatpush.msra.mxu0 0.0
      %7755 = vmatpush.msra.mxu0 0.0
      %7756 = vmatpush.msra.mxu0 0.0
      %7757 = vmatpush.msra.mxu0 0.0
      %7758 = vmatpush.msra.mxu0 0.0
      %7759 = vmatpush.msra.mxu0 0.0
      %7760 = vmatpush.msra.mxu0 0.0
      %7761 = vmatpush.msra.mxu0 0.0
      %7762 = vmatpush.msra.mxu0 0.0
      %7763 = vmatpush.msra.mxu0 0.0
      %v7764 = vand.u32 %v7715, 4294901760
      %v7765 = vsub.f32 %v7715, %v7764
      %v7766 = vand.u32 %v7765, 4294901760
      %v7767 = vsub.f32 %v7765, %v7766
      %v7768 = vand.u32 %v7767, 4294901760
      %7769 = vmatpush.msra.mxu0 %v7768
      %v7770 = vand.u32 %v7714, 4294901760
      %v7771 = vsub.f32 %v7714, %v7770
      %v7772 = vand.u32 %v7771, 4294901760
      %v7773 = vsub.f32 %v7771, %v7772
      %v7774 = vand.u32 %v7773, 4294901760
      %7775 = vmatpush.msra.mxu0 %v7774
      %v7776 = vand.u32 %v7721, 4294901760
      %7777 = vmatmul.f32.gmra.mxu0 %v7776
      %v7778 = vpop.f32.mrf.mxu0
      %v7779 = vadd.f32 %v7748, %v7778
      %7780 = vdwg.mxu0
      %7781 = vmatpush.msra.mxu0 0.0
      %7782 = vmatpush.msra.mxu0 0.0
      %7783 = vmatpush.msra.mxu0 0.0
      %7784 = vmatpush.msra.mxu0 0.0
      %7785 = vmatpush.msra.mxu0 0.0
      %7786 = vmatpush.msra.mxu0 0.0
      %7787 = vmatpush.msra.mxu0 0.0
      %7788 = vmatpush.msra.mxu0 0.0
      %7789 = vmatpush.msra.mxu0 0.0
      %7790 = vmatpush.msra.mxu0 0.0
      %7791 = vmatpush.msra.mxu0 0.0
      %7792 = vmatpush.msra.mxu0 0.0
      %7793 = vmatpush.msra.mxu0 0.0
      %7794 = vmatpush.msra.mxu0 0.0
      %v7795 = vand.u32 %v7715, 4294901760
      %v7796 = vsub.f32 %v7715, %v7795
      %7797 = vmatpush.msra.mxu0 %v7796
      %v7798 = vand.u32 %v7714, 4294901760
      %v7799 = vsub.f32 %v7714, %v7798
      %7800 = vmatpush.msra.mxu0 %v7799
      %v7801 = vand.u32 %v7721, 4294901760
      %v7802 = vsub.f32 %v7721, %v7801
      %7803 = vmatmul.f32.gmra.mxu0 %v7802
      %v7804 = vpop.f32.mrf.mxu0
      %v7805 = vadd.f32 %v7779, %v7804
      %7806 = vdwg.mxu0
      %7807 = vmatpush.msra.mxu0 0.0
      %7808 = vmatpush.msra.mxu0 0.0
      %7809 = vmatpush.msra.mxu0 0.0
      %7810 = vmatpush.msra.mxu0 0.0
      %7811 = vmatpush.msra.mxu0 0.0
      %7812 = vmatpush.msra.mxu0 0.0
      %7813 = vmatpush.msra.mxu0 0.0
      %7814 = vmatpush.msra.mxu0 0.0
      %7815 = vmatpush.msra.mxu0 0.0
      %7816 = vmatpush.msra.mxu0 0.0
      %7817 = vmatpush.msra.mxu0 0.0
      %7818 = vmatpush.msra.mxu0 0.0
      %7819 = vmatpush.msra.mxu0 0.0
      %7820 = vmatpush.msra.mxu0 0.0
      %v7821 = vand.u32 %v7715, 4294901760
      %7822 = vmatpush.msra.mxu0 %v7821
      %v7823 = vand.u32 %v7714, 4294901760
      %7824 = vmatpush.msra.mxu0 %v7823
      %v7825 = vand.u32 %v7721, 4294901760
      %v7826 = vsub.f32 %v7721, %v7825
      %v7827 = vand.u32 %v7826, 4294901760
      %7828 = vmatmul.f32.gmra.mxu0 %v7827
      %v7829 = vpop.f32.mrf.mxu0
      %v7830 = vadd.f32 %v7805, %v7829
      %7831 = vdwg.mxu0
      %7832 = vmatpush.msra.mxu0 0.0
      %7833 = vmatpush.msra.mxu0 0.0
      %7834 = vmatpush.msra.mxu0 0.0
      %7835 = vmatpush.msra.mxu0 0.0
      %7836 = vmatpush.msra.mxu0 0.0
      %7837 = vmatpush.msra.mxu0 0.0
      %7838 = vmatpush.msra.mxu0 0.0
      %7839 = vmatpush.msra.mxu0 0.0
      %7840 = vmatpush.msra.mxu0 0.0
      %7841 = vmatpush.msra.mxu0 0.0
      %7842 = vmatpush.msra.mxu0 0.0
      %7843 = vmatpush.msra.mxu0 0.0
      %7844 = vmatpush.msra.mxu0 0.0
      %7845 = vmatpush.msra.mxu0 0.0
      %v7846 = vand.u32 %v7715, 4294901760
      %v7847 = vsub.f32 %v7715, %v7846
      %v7848 = vand.u32 %v7847, 4294901760
      %7849 = vmatpush.msra.mxu0 %v7848
      %v7850 = vand.u32 %v7714, 4294901760
      %v7851 = vsub.f32 %v7714, %v7850
      %v7852 = vand.u32 %v7851, 4294901760
      %7853 = vmatpush.msra.mxu0 %v7852
      %v7854 = vand.u32 %v7721, 4294901760
      %7855 = vmatmul.f32.gmra.mxu0 %v7854
      %v7856 = vpop.f32.mrf.mxu0
      %v7857 = vadd.f32 %v7830, %v7856
      %7858 = vdwg.mxu0
      %7859 = vmatpush.msra.mxu0 0.0
      %7860 = vmatpush.msra.mxu0 0.0
      %7861 = vmatpush.msra.mxu0 0.0
      %7862 = vmatpush.msra.mxu0 0.0
      %7863 = vmatpush.msra.mxu0 0.0
      %7864 = vmatpush.msra.mxu0 0.0
      %7865 = vmatpush.msra.mxu0 0.0
      %7866 = vmatpush.msra.mxu0 0.0
      %7867 = vmatpush.msra.mxu0 0.0
      %7868 = vmatpush.msra.mxu0 0.0
      %7869 = vmatpush.msra.mxu0 0.0
      %7870 = vmatpush.msra.mxu0 0.0
      %7871 = vmatpush.msra.mxu0 0.0
      %7872 = vmatpush.msra.mxu0 0.0
      %v7873 = vand.u32 %v7715, 4294901760
      %7874 = vmatpush.msra.mxu0 %v7873
      %v7875 = vand.u32 %v7714, 4294901760
      %7876 = vmatpush.msra.mxu0 %v7875
      %v7877 = vand.u32 %v7721, 4294901760
      %7878 = vmatmul.f32.gmra.mxu0 %v7877
      %v7879 = vpop.f32.mrf.mxu0
      %v7880 = vadd.f32 %v7857, %v7879
      %7881 = vdwg.mxu0
      %7882 = vmatpush.msra.mxu0 0.0
      %7883 = vmatpush.msra.mxu0 0.0
      %7884 = vmatpush.msra.mxu0 0.0
      %7885 = vmatpush.msra.mxu0 0.0
      %7886 = vmatpush.msra.mxu0 0.0
      %7887 = vmatpush.msra.mxu0 0.0
      %7888 = vmatpush.msra.mxu0 0.0
      %7889 = vmatpush.msra.mxu0 0.0
      %7890 = vmatpush.msra.mxu0 0.0
      %7891 = vmatpush.msra.mxu0 0.0
      %7892 = vmatpush.msra.mxu0 0.0
      %7893 = vmatpush.msra.mxu0 0.0
      %7894 = vmatpush.msra.mxu0 0.0
      %7895 = vmatpush.msra.mxu0 0.0
      %v7896 = vand.u32 %v7713, 4294901760
      %7897 = vmatpush.msra.mxu0 %v7896
      %v7898 = vand.u32 %v7709, 4294901760
      %7899 = vmatpush.msra.mxu0 %v7898
      %v7900 = vand.u32 %v7721, 4294901760
      %v7901 = vsub.f32 %v7721, %v7900
      %v7902 = vand.u32 %v7901, 4294901760
      %v7903 = vsub.f32 %v7901, %v7902
      %v7904 = vand.u32 %v7903, 4294901760
      %7905 = vmatmul.f32.gmra.mxu0 %v7904
      %v7906 = vpop.f32.mrf.mxu0
      %v7907 = vadd.f32 0.0, %v7906
      %7908 = vdwg.mxu0
      %7909 = vmatpush.msra.mxu0 0.0
      %7910 = vmatpush.msra.mxu0 0.0
      %7911 = vmatpush.msra.mxu0 0.0
      %7912 = vmatpush.msra.mxu0 0.0
      %7913 = vmatpush.msra.mxu0 0.0
      %7914 = vmatpush.msra.mxu0 0.0
      %7915 = vmatpush.msra.mxu0 0.0
      %7916 = vmatpush.msra.mxu0 0.0
      %7917 = vmatpush.msra.mxu0 0.0
      %7918 = vmatpush.msra.mxu0 0.0
      %7919 = vmatpush.msra.mxu0 0.0
      %7920 = vmatpush.msra.mxu0 0.0
      %7921 = vmatpush.msra.mxu0 0.0
      %7922 = vmatpush.msra.mxu0 0.0
      %v7923 = vand.u32 %v7713, 4294901760
      %v7924 = vsub.f32 %v7713, %v7923
      %v7925 = vand.u32 %v7924, 4294901760
      %v7926 = vsub.f32 %v7924, %v7925
      %v7927 = vand.u32 %v7926, 4294901760
      %7928 = vmatpush.msra.mxu0 %v7927
      %v7929 = vand.u32 %v7709, 4294901760
      %v7930 = vsub.f32 %v7709, %v7929
      %v7931 = vand.u32 %v7930, 4294901760
      %v7932 = vsub.f32 %v7930, %v7931
      %v7933 = vand.u32 %v7932, 4294901760
      %7934 = vmatpush.msra.mxu0 %v7933
      %v7935 = vand.u32 %v7721, 4294901760
      %7936 = vmatmul.f32.gmra.mxu0 %v7935
      %v7937 = vpop.f32.mrf.mxu0
      %v7938 = vadd.f32 %v7907, %v7937
      %7939 = vdwg.mxu0
      %7940 = vmatpush.msra.mxu0 0.0
      %7941 = vmatpush.msra.mxu0 0.0
      %7942 = vmatpush.msra.mxu0 0.0
      %7943 = vmatpush.msra.mxu0 0.0
      %7944 = vmatpush.msra.mxu0 0.0
      %7945 = vmatpush.msra.mxu0 0.0
      %7946 = vmatpush.msra.mxu0 0.0
      %7947 = vmatpush.msra.mxu0 0.0
      %7948 = vmatpush.msra.mxu0 0.0
      %7949 = vmatpush.msra.mxu0 0.0
      %7950 = vmatpush.msra.mxu0 0.0
      %7951 = vmatpush.msra.mxu0 0.0
      %7952 = vmatpush.msra.mxu0 0.0
      %7953 = vmatpush.msra.mxu0 0.0
      %v7954 = vand.u32 %v7713, 4294901760
      %v7955 = vsub.f32 %v7713, %v7954
      %7956 = vmatpush.msra.mxu0 %v7955
      %v7957 = vand.u32 %v7709, 4294901760
      %v7958 = vsub.f32 %v7709, %v7957
      %7959 = vmatpush.msra.mxu0 %v7958
      %v7960 = vand.u32 %v7721, 4294901760
      %v7961 = vsub.f32 %v7721, %v7960
      %7962 = vmatmul.f32.gmra.mxu0 %v7961
      %v7963 = vpop.f32.mrf.mxu0
      %v7964 = vadd.f32 %v7938, %v7963
      %7965 = vdwg.mxu0
      %7966 = vmatpush.msra.mxu0 0.0
      %7967 = vmatpush.msra.mxu0 0.0
      %7968 = vmatpush.msra.mxu0 0.0
      %7969 = vmatpush.msra.mxu0 0.0
      %7970 = vmatpush.msra.mxu0 0.0
      %7971 = vmatpush.msra.mxu0 0.0
      %7972 = vmatpush.msra.mxu0 0.0
      %7973 = vmatpush.msra.mxu0 0.0
      %7974 = vmatpush.msra.mxu0 0.0
      %7975 = vmatpush.msra.mxu0 0.0
      %7976 = vmatpush.msra.mxu0 0.0
      %7977 = vmatpush.msra.mxu0 0.0
      %7978 = vmatpush.msra.mxu0 0.0
      %7979 = vmatpush.msra.mxu0 0.0
      %v7980 = vand.u32 %v7713, 4294901760
      %7981 = vmatpush.msra.mxu0 %v7980
      %v7982 = vand.u32 %v7709, 4294901760
      %7983 = vmatpush.msra.mxu0 %v7982
      %v7984 = vand.u32 %v7721, 4294901760
      %v7985 = vsub.f32 %v7721, %v7984
      %v7986 = vand.u32 %v7985, 4294901760
      %7987 = vmatmul.f32.gmra.mxu0 %v7986
      %v7988 = vpop.f32.mrf.mxu0
      %v7989 = vadd.f32 %v7964, %v7988
      %7990 = vdwg.mxu0
      %7991 = vmatpush.msra.mxu0 0.0
      %7992 = vmatpush.msra.mxu0 0.0
      %7993 = vmatpush.msra.mxu0 0.0
      %7994 = vmatpush.msra.mxu0 0.0
      %7995 = vmatpush.msra.mxu0 0.0
      %7996 = vmatpush.msra.mxu0 0.0
      %7997 = vmatpush.msra.mxu0 0.0
      %7998 = vmatpush.msra.mxu0 0.0
      %7999 = vmatpush.msra.mxu0 0.0
      %8000 = vmatpush.msra.mxu0 0.0
      %8001 = vmatpush.msra.mxu0 0.0
      %8002 = vmatpush.msra.mxu0 0.0
      %8003 = vmatpush.msra.mxu0 0.0
      %8004 = vmatpush.msra.mxu0 0.0
      %v8005 = vand.u32 %v7713, 4294901760
      %v8006 = vsub.f32 %v7713, %v8005
      %v8007 = vand.u32 %v8006, 4294901760
      %8008 = vmatpush.msra.mxu0 %v8007
      %v8009 = vand.u32 %v7709, 4294901760
      %v8010 = vsub.f32 %v7709, %v8009
      %v8011 = vand.u32 %v8010, 4294901760
      %8012 = vmatpush.msra.mxu0 %v8011
      %v8013 = vand.u32 %v7721, 4294901760
      %8014 = vmatmul.f32.gmra.mxu0 %v8013
      %v8015 = vpop.f32.mrf.mxu0
      %v8016 = vadd.f32 %v7989, %v8015
      %8017 = vdwg.mxu0
      %8018 = vmatpush.msra.mxu0 0.0
      %8019 = vmatpush.msra.mxu0 0.0
      %8020 = vmatpush.msra.mxu0 0.0
      %8021 = vmatpush.msra.mxu0 0.0
      %8022 = vmatpush.msra.mxu0 0.0
      %8023 = vmatpush.msra.mxu0 0.0
      %8024 = vmatpush.msra.mxu0 0.0
      %8025 = vmatpush.msra.mxu0 0.0
      %8026 = vmatpush.msra.mxu0 0.0
      %8027 = vmatpush.msra.mxu0 0.0
      %8028 = vmatpush.msra.mxu0 0.0
      %8029 = vmatpush.msra.mxu0 0.0
      %8030 = vmatpush.msra.mxu0 0.0
      %8031 = vmatpush.msra.mxu0 0.0
      %v8032 = vand.u32 %v7713, 4294901760
      %8033 = vmatpush.msra.mxu0 %v8032
      %v8034 = vand.u32 %v7709, 4294901760
      %8035 = vmatpush.msra.mxu0 %v8034
      %v8036 = vand.u32 %v7721, 4294901760
      %8037 = vmatmul.f32.gmra.mxu0 %v8036
      %v8038 = vpop.f32.mrf.mxu0
      %v8039 = vadd.f32 %v8016, %v8038
      %8040 = vdwg.mxu0
      %v8041 = vadd.f32 %v7702, %v7880
      %v8042 = vadd.f32 %v7703, %v8039
      %s8043 = scalar_lea.vmem %s6, 20
      %v8044 = vld [vmem:[%s8043] sm:$0xf]
      %8045 = vrot.lane.b32.xlu0 %v6345, 73
      %v8046 = vpop.permute.xlu0 %8045
      %8047 = vrot.lane.b32.xlu0 %v6346, 73
      %v8048 = vpop.permute.xlu0 %8047
      %8049 = vrot.lane.b32.xlu0 %v6347, 73
      %v8050 = vpop.permute.xlu0 %8049
      %8051 = vrot.lane.b32.xlu0 %v6348, 73
      %v8052 = vpop.permute.xlu0 %8051
      %v8053 = vsel %vm5969, %v8046, %v8048
      %v8054 = vsel %vm5969, %v8050, %v8052
      %v8060 = vsel %vm6369, %v8044, 0
      %8062 = vmatpush.msra.mxu0 0.0
      %8063 = vmatpush.msra.mxu0 0.0
      %8064 = vmatpush.msra.mxu0 0.0
      %8065 = vmatpush.msra.mxu0 0.0
      %8066 = vmatpush.msra.mxu0 0.0
      %8067 = vmatpush.msra.mxu0 0.0
      %8068 = vmatpush.msra.mxu0 0.0
      %8069 = vmatpush.msra.mxu0 0.0
      %8070 = vmatpush.msra.mxu0 0.0
      %8071 = vmatpush.msra.mxu0 0.0
      %8072 = vmatpush.msra.mxu0 0.0
      %8073 = vmatpush.msra.mxu0 0.0
      %8074 = vmatpush.msra.mxu0 0.0
      %8075 = vmatpush.msra.mxu0 0.0
      %v8076 = vand.u32 %v8054, 4294901760
      %8077 = vmatpush.msra.mxu0 %v8076
      %v8078 = vand.u32 %v8053, 4294901760
      %8079 = vmatpush.msra.mxu0 %v8078
      %v8080 = vand.u32 %v8060, 4294901760
      %v8081 = vsub.f32 %v8060, %v8080
      %v8082 = vand.u32 %v8081, 4294901760
      %v8083 = vsub.f32 %v8081, %v8082
      %v8084 = vand.u32 %v8083, 4294901760
      %8085 = vmatmul.f32.gmra.mxu0 %v8084
      %v8086 = vpop.f32.mrf.mxu0
      %v8087 = vadd.f32 0.0, %v8086
      %8088 = vdwg.mxu0
      %8089 = vmatpush.msra.mxu0 0.0
      %8090 = vmatpush.msra.mxu0 0.0
      %8091 = vmatpush.msra.mxu0 0.0
      %8092 = vmatpush.msra.mxu0 0.0
      %8093 = vmatpush.msra.mxu0 0.0
      %8094 = vmatpush.msra.mxu0 0.0
      %8095 = vmatpush.msra.mxu0 0.0
      %8096 = vmatpush.msra.mxu0 0.0
      %8097 = vmatpush.msra.mxu0 0.0
      %8098 = vmatpush.msra.mxu0 0.0
      %8099 = vmatpush.msra.mxu0 0.0
      %8100 = vmatpush.msra.mxu0 0.0
      %8101 = vmatpush.msra.mxu0 0.0
      %8102 = vmatpush.msra.mxu0 0.0
      %v8103 = vand.u32 %v8054, 4294901760
      %v8104 = vsub.f32 %v8054, %v8103
      %v8105 = vand.u32 %v8104, 4294901760
      %v8106 = vsub.f32 %v8104, %v8105
      %v8107 = vand.u32 %v8106, 4294901760
      %8108 = vmatpush.msra.mxu0 %v8107
      %v8109 = vand.u32 %v8053, 4294901760
      %v8110 = vsub.f32 %v8053, %v8109
      %v8111 = vand.u32 %v8110, 4294901760
      %v8112 = vsub.f32 %v8110, %v8111
      %v8113 = vand.u32 %v8112, 4294901760
      %8114 = vmatpush.msra.mxu0 %v8113
      %v8115 = vand.u32 %v8060, 4294901760
      %8116 = vmatmul.f32.gmra.mxu0 %v8115
      %v8117 = vpop.f32.mrf.mxu0
      %v8118 = vadd.f32 %v8087, %v8117
      %8119 = vdwg.mxu0
      %8120 = vmatpush.msra.mxu0 0.0
      %8121 = vmatpush.msra.mxu0 0.0
      %8122 = vmatpush.msra.mxu0 0.0
      %8123 = vmatpush.msra.mxu0 0.0
      %8124 = vmatpush.msra.mxu0 0.0
      %8125 = vmatpush.msra.mxu0 0.0
      %8126 = vmatpush.msra.mxu0 0.0
      %8127 = vmatpush.msra.mxu0 0.0
      %8128 = vmatpush.msra.mxu0 0.0
      %8129 = vmatpush.msra.mxu0 0.0
      %8130 = vmatpush.msra.mxu0 0.0
      %8131 = vmatpush.msra.mxu0 0.0
      %8132 = vmatpush.msra.mxu0 0.0
      %8133 = vmatpush.msra.mxu0 0.0
      %v8134 = vand.u32 %v8054, 4294901760
      %v8135 = vsub.f32 %v8054, %v8134
      %8136 = vmatpush.msra.mxu0 %v8135
      %v8137 = vand.u32 %v8053, 4294901760
      %v8138 = vsub.f32 %v8053, %v8137
      %8139 = vmatpush.msra.mxu0 %v8138
      %v8140 = vand.u32 %v8060, 4294901760
      %v8141 = vsub.f32 %v8060, %v8140
      %8142 = vmatmul.f32.gmra.mxu0 %v8141
      %v8143 = vpop.f32.mrf.mxu0
      %v8144 = vadd.f32 %v8118, %v8143
      %8145 = vdwg.mxu0
      %8146 = vmatpush.msra.mxu0 0.0
      %8147 = vmatpush.msra.mxu0 0.0
      %8148 = vmatpush.msra.mxu0 0.0
      %8149 = vmatpush.msra.mxu0 0.0
      %8150 = vmatpush.msra.mxu0 0.0
      %8151 = vmatpush.msra.mxu0 0.0
      %8152 = vmatpush.msra.mxu0 0.0
      %8153 = vmatpush.msra.mxu0 0.0
      %8154 = vmatpush.msra.mxu0 0.0
      %8155 = vmatpush.msra.mxu0 0.0
      %8156 = vmatpush.msra.mxu0 0.0
      %8157 = vmatpush.msra.mxu0 0.0
      %8158 = vmatpush.msra.mxu0 0.0
      %8159 = vmatpush.msra.mxu0 0.0
      %v8160 = vand.u32 %v8054, 4294901760
      %8161 = vmatpush.msra.mxu0 %v8160
      %v8162 = vand.u32 %v8053, 4294901760
      %8163 = vmatpush.msra.mxu0 %v8162
      %v8164 = vand.u32 %v8060, 4294901760
      %v8165 = vsub.f32 %v8060, %v8164
      %v8166 = vand.u32 %v8165, 4294901760
      %8167 = vmatmul.f32.gmra.mxu0 %v8166
      %v8168 = vpop.f32.mrf.mxu0
      %v8169 = vadd.f32 %v8144, %v8168
      %8170 = vdwg.mxu0
      %8171 = vmatpush.msra.mxu0 0.0
      %8172 = vmatpush.msra.mxu0 0.0
      %8173 = vmatpush.msra.mxu0 0.0
      %8174 = vmatpush.msra.mxu0 0.0
      %8175 = vmatpush.msra.mxu0 0.0
      %8176 = vmatpush.msra.mxu0 0.0
      %8177 = vmatpush.msra.mxu0 0.0
      %8178 = vmatpush.msra.mxu0 0.0
      %8179 = vmatpush.msra.mxu0 0.0
      %8180 = vmatpush.msra.mxu0 0.0
      %8181 = vmatpush.msra.mxu0 0.0
      %8182 = vmatpush.msra.mxu0 0.0
      %8183 = vmatpush.msra.mxu0 0.0
      %8184 = vmatpush.msra.mxu0 0.0
      %v8185 = vand.u32 %v8054, 4294901760
      %v8186 = vsub.f32 %v8054, %v8185
      %v8187 = vand.u32 %v8186, 4294901760
      %8188 = vmatpush.msra.mxu0 %v8187
      %v8189 = vand.u32 %v8053, 4294901760
      %v8190 = vsub.f32 %v8053, %v8189
      %v8191 = vand.u32 %v8190, 4294901760
      %8192 = vmatpush.msra.mxu0 %v8191
      %v8193 = vand.u32 %v8060, 4294901760
      %8194 = vmatmul.f32.gmra.mxu0 %v8193
      %v8195 = vpop.f32.mrf.mxu0
      %v8196 = vadd.f32 %v8169, %v8195
      %8197 = vdwg.mxu0
      %8198 = vmatpush.msra.mxu0 0.0
      %8199 = vmatpush.msra.mxu0 0.0
      %8200 = vmatpush.msra.mxu0 0.0
      %8201 = vmatpush.msra.mxu0 0.0
      %8202 = vmatpush.msra.mxu0 0.0
      %8203 = vmatpush.msra.mxu0 0.0
      %8204 = vmatpush.msra.mxu0 0.0
      %8205 = vmatpush.msra.mxu0 0.0
      %8206 = vmatpush.msra.mxu0 0.0
      %8207 = vmatpush.msra.mxu0 0.0
      %8208 = vmatpush.msra.mxu0 0.0
      %8209 = vmatpush.msra.mxu0 0.0
      %8210 = vmatpush.msra.mxu0 0.0
      %8211 = vmatpush.msra.mxu0 0.0
      %v8212 = vand.u32 %v8054, 4294901760
      %8213 = vmatpush.msra.mxu0 %v8212
      %v8214 = vand.u32 %v8053, 4294901760
      %8215 = vmatpush.msra.mxu0 %v8214
      %v8216 = vand.u32 %v8060, 4294901760
      %8217 = vmatmul.f32.gmra.mxu0 %v8216
      %v8218 = vpop.f32.mrf.mxu0
      %v8219 = vadd.f32 %v8196, %v8218
      %8220 = vdwg.mxu0
      %8221 = vmatpush.msra.mxu0 0.0
      %8222 = vmatpush.msra.mxu0 0.0
      %8223 = vmatpush.msra.mxu0 0.0
      %8224 = vmatpush.msra.mxu0 0.0
      %8225 = vmatpush.msra.mxu0 0.0
      %8226 = vmatpush.msra.mxu0 0.0
      %8227 = vmatpush.msra.mxu0 0.0
      %8228 = vmatpush.msra.mxu0 0.0
      %8229 = vmatpush.msra.mxu0 0.0
      %8230 = vmatpush.msra.mxu0 0.0
      %8231 = vmatpush.msra.mxu0 0.0
      %8232 = vmatpush.msra.mxu0 0.0
      %8233 = vmatpush.msra.mxu0 0.0
      %8234 = vmatpush.msra.mxu0 0.0
      %v8235 = vand.u32 %v8052, 4294901760
      %8236 = vmatpush.msra.mxu0 %v8235
      %v8237 = vand.u32 %v8048, 4294901760
      %8238 = vmatpush.msra.mxu0 %v8237
      %v8239 = vand.u32 %v8060, 4294901760
      %v8240 = vsub.f32 %v8060, %v8239
      %v8241 = vand.u32 %v8240, 4294901760
      %v8242 = vsub.f32 %v8240, %v8241
      %v8243 = vand.u32 %v8242, 4294901760
      %8244 = vmatmul.f32.gmra.mxu0 %v8243
      %v8245 = vpop.f32.mrf.mxu0
      %v8246 = vadd.f32 0.0, %v8245
      %8247 = vdwg.mxu0
      %8248 = vmatpush.msra.mxu0 0.0
      %8249 = vmatpush.msra.mxu0 0.0
      %8250 = vmatpush.msra.mxu0 0.0
      %8251 = vmatpush.msra.mxu0 0.0
      %8252 = vmatpush.msra.mxu0 0.0
      %8253 = vmatpush.msra.mxu0 0.0
      %8254 = vmatpush.msra.mxu0 0.0
      %8255 = vmatpush.msra.mxu0 0.0
      %8256 = vmatpush.msra.mxu0 0.0
      %8257 = vmatpush.msra.mxu0 0.0
      %8258 = vmatpush.msra.mxu0 0.0
      %8259 = vmatpush.msra.mxu0 0.0
      %8260 = vmatpush.msra.mxu0 0.0
      %8261 = vmatpush.msra.mxu0 0.0
      %v8262 = vand.u32 %v8052, 4294901760
      %v8263 = vsub.f32 %v8052, %v8262
      %v8264 = vand.u32 %v8263, 4294901760
      %v8265 = vsub.f32 %v8263, %v8264
      %v8266 = vand.u32 %v8265, 4294901760
      %8267 = vmatpush.msra.mxu0 %v8266
      %v8268 = vand.u32 %v8048, 4294901760
      %v8269 = vsub.f32 %v8048, %v8268
      %v8270 = vand.u32 %v8269, 4294901760
      %v8271 = vsub.f32 %v8269, %v8270
      %v8272 = vand.u32 %v8271, 4294901760
      %8273 = vmatpush.msra.mxu0 %v8272
      %v8274 = vand.u32 %v8060, 4294901760
      %8275 = vmatmul.f32.gmra.mxu0 %v8274
      %v8276 = vpop.f32.mrf.mxu0
      %v8277 = vadd.f32 %v8246, %v8276
      %8278 = vdwg.mxu0
      %8279 = vmatpush.msra.mxu0 0.0
      %8280 = vmatpush.msra.mxu0 0.0
      %8281 = vmatpush.msra.mxu0 0.0
      %8282 = vmatpush.msra.mxu0 0.0
      %8283 = vmatpush.msra.mxu0 0.0
      %8284 = vmatpush.msra.mxu0 0.0
      %8285 = vmatpush.msra.mxu0 0.0
      %8286 = vmatpush.msra.mxu0 0.0
      %8287 = vmatpush.msra.mxu0 0.0
      %8288 = vmatpush.msra.mxu0 0.0
      %8289 = vmatpush.msra.mxu0 0.0
      %8290 = vmatpush.msra.mxu0 0.0
      %8291 = vmatpush.msra.mxu0 0.0
      %8292 = vmatpush.msra.mxu0 0.0
      %v8293 = vand.u32 %v8052, 4294901760
      %v8294 = vsub.f32 %v8052, %v8293
      %8295 = vmatpush.msra.mxu0 %v8294
      %v8296 = vand.u32 %v8048, 4294901760
      %v8297 = vsub.f32 %v8048, %v8296
      %8298 = vmatpush.msra.mxu0 %v8297
      %v8299 = vand.u32 %v8060, 4294901760
      %v8300 = vsub.f32 %v8060, %v8299
      %8301 = vmatmul.f32.gmra.mxu0 %v8300
      %v8302 = vpop.f32.mrf.mxu0
      %v8303 = vadd.f32 %v8277, %v8302
      %8304 = vdwg.mxu0
      %8305 = vmatpush.msra.mxu0 0.0
      %8306 = vmatpush.msra.mxu0 0.0
      %8307 = vmatpush.msra.mxu0 0.0
      %8308 = vmatpush.msra.mxu0 0.0
      %8309 = vmatpush.msra.mxu0 0.0
      %8310 = vmatpush.msra.mxu0 0.0
      %8311 = vmatpush.msra.mxu0 0.0
      %8312 = vmatpush.msra.mxu0 0.0
      %8313 = vmatpush.msra.mxu0 0.0
      %8314 = vmatpush.msra.mxu0 0.0
      %8315 = vmatpush.msra.mxu0 0.0
      %8316 = vmatpush.msra.mxu0 0.0
      %8317 = vmatpush.msra.mxu0 0.0
      %8318 = vmatpush.msra.mxu0 0.0
      %v8319 = vand.u32 %v8052, 4294901760
      %8320 = vmatpush.msra.mxu0 %v8319
      %v8321 = vand.u32 %v8048, 4294901760
      %8322 = vmatpush.msra.mxu0 %v8321
      %v8323 = vand.u32 %v8060, 4294901760
      %v8324 = vsub.f32 %v8060, %v8323
      %v8325 = vand.u32 %v8324, 4294901760
      %8326 = vmatmul.f32.gmra.mxu0 %v8325
      %v8327 = vpop.f32.mrf.mxu0
      %v8328 = vadd.f32 %v8303, %v8327
      %8329 = vdwg.mxu0
      %8330 = vmatpush.msra.mxu0 0.0
      %8331 = vmatpush.msra.mxu0 0.0
      %8332 = vmatpush.msra.mxu0 0.0
      %8333 = vmatpush.msra.mxu0 0.0
      %8334 = vmatpush.msra.mxu0 0.0
      %8335 = vmatpush.msra.mxu0 0.0
      %8336 = vmatpush.msra.mxu0 0.0
      %8337 = vmatpush.msra.mxu0 0.0
      %8338 = vmatpush.msra.mxu0 0.0
      %8339 = vmatpush.msra.mxu0 0.0
      %8340 = vmatpush.msra.mxu0 0.0
      %8341 = vmatpush.msra.mxu0 0.0
      %8342 = vmatpush.msra.mxu0 0.0
      %8343 = vmatpush.msra.mxu0 0.0
      %v8344 = vand.u32 %v8052, 4294901760
      %v8345 = vsub.f32 %v8052, %v8344
      %v8346 = vand.u32 %v8345, 4294901760
      %8347 = vmatpush.msra.mxu0 %v8346
      %v8348 = vand.u32 %v8048, 4294901760
      %v8349 = vsub.f32 %v8048, %v8348
      %v8350 = vand.u32 %v8349, 4294901760
      %8351 = vmatpush.msra.mxu0 %v8350
      %v8352 = vand.u32 %v8060, 4294901760
      %8353 = vmatmul.f32.gmra.mxu0 %v8352
      %v8354 = vpop.f32.mrf.mxu0
      %v8355 = vadd.f32 %v8328, %v8354
      %8356 = vdwg.mxu0
      %8357 = vmatpush.msra.mxu0 0.0
      %8358 = vmatpush.msra.mxu0 0.0
      %8359 = vmatpush.msra.mxu0 0.0
      %8360 = vmatpush.msra.mxu0 0.0
      %8361 = vmatpush.msra.mxu0 0.0
      %8362 = vmatpush.msra.mxu0 0.0
      %8363 = vmatpush.msra.mxu0 0.0
      %8364 = vmatpush.msra.mxu0 0.0
      %8365 = vmatpush.msra.mxu0 0.0
      %8366 = vmatpush.msra.mxu0 0.0
      %8367 = vmatpush.msra.mxu0 0.0
      %8368 = vmatpush.msra.mxu0 0.0
      %8369 = vmatpush.msra.mxu0 0.0
      %8370 = vmatpush.msra.mxu0 0.0
      %v8371 = vand.u32 %v8052, 4294901760
      %8372 = vmatpush.msra.mxu0 %v8371
      %v8373 = vand.u32 %v8048, 4294901760
      %8374 = vmatpush.msra.mxu0 %v8373
      %v8375 = vand.u32 %v8060, 4294901760
      %8376 = vmatmul.f32.gmra.mxu0 %v8375
      %v8377 = vpop.f32.mrf.mxu0
      %v8378 = vadd.f32 %v8355, %v8377
      %8379 = vdwg.mxu0
      %v8380 = vadd.f32 %v8041, %v8219
      %v8381 = vadd.f32 %v8042, %v8378
      %s8382 = scalar_lea.vmem %s6, 24
      %v8383 = vld [vmem:[%s8382] sm:$0xf]
      %8384 = vrot.lane.b32.xlu0 %v6345, 57
      %v8385 = vpop.permute.xlu0 %8384
      %8386 = vrot.lane.b32.xlu0 %v6346, 57
      %v8387 = vpop.permute.xlu0 %8386
      %8388 = vrot.lane.b32.xlu0 %v6347, 57
      %v8389 = vpop.permute.xlu0 %8388
      %8390 = vrot.lane.b32.xlu0 %v6348, 57
      %v8391 = vpop.permute.xlu0 %8390
      %vm8392 = vcmask 465920
      %v8393 = vsel %vm8392, %v8385, %v8387
      %v8394 = vsel %vm8392, %v8389, %v8391
      %v8400 = vsel %vm6369, %v8383, 0
      %8402 = vmatpush.msra.mxu0 0.0
      %8403 = vmatpush.msra.mxu0 0.0
      %8404 = vmatpush.msra.mxu0 0.0
      %8405 = vmatpush.msra.mxu0 0.0
      %8406 = vmatpush.msra.mxu0 0.0
      %8407 = vmatpush.msra.mxu0 0.0
      %8408 = vmatpush.msra.mxu0 0.0
      %8409 = vmatpush.msra.mxu0 0.0
      %8410 = vmatpush.msra.mxu0 0.0
      %8411 = vmatpush.msra.mxu0 0.0
      %8412 = vmatpush.msra.mxu0 0.0
      %8413 = vmatpush.msra.mxu0 0.0
      %8414 = vmatpush.msra.mxu0 0.0
      %8415 = vmatpush.msra.mxu0 0.0
      %v8416 = vand.u32 %v8394, 4294901760
      %8417 = vmatpush.msra.mxu0 %v8416
      %v8418 = vand.u32 %v8393, 4294901760
      %8419 = vmatpush.msra.mxu0 %v8418
      %v8420 = vand.u32 %v8400, 4294901760
      %v8421 = vsub.f32 %v8400, %v8420
      %v8422 = vand.u32 %v8421, 4294901760
      %v8423 = vsub.f32 %v8421, %v8422
      %v8424 = vand.u32 %v8423, 4294901760
      %8425 = vmatmul.f32.gmra.mxu0 %v8424
      %v8426 = vpop.f32.mrf.mxu0
      %v8427 = vadd.f32 0.0, %v8426
      %8428 = vdwg.mxu0
      %8429 = vmatpush.msra.mxu0 0.0
      %8430 = vmatpush.msra.mxu0 0.0
      %8431 = vmatpush.msra.mxu0 0.0
      %8432 = vmatpush.msra.mxu0 0.0
      %8433 = vmatpush.msra.mxu0 0.0
      %8434 = vmatpush.msra.mxu0 0.0
      %8435 = vmatpush.msra.mxu0 0.0
      %8436 = vmatpush.msra.mxu0 0.0
      %8437 = vmatpush.msra.mxu0 0.0
      %8438 = vmatpush.msra.mxu0 0.0
      %8439 = vmatpush.msra.mxu0 0.0
      %8440 = vmatpush.msra.mxu0 0.0
      %8441 = vmatpush.msra.mxu0 0.0
      %8442 = vmatpush.msra.mxu0 0.0
      %v8443 = vand.u32 %v8394, 4294901760
      %v8444 = vsub.f32 %v8394, %v8443
      %v8445 = vand.u32 %v8444, 4294901760
      %v8446 = vsub.f32 %v8444, %v8445
      %v8447 = vand.u32 %v8446, 4294901760
      %8448 = vmatpush.msra.mxu0 %v8447
      %v8449 = vand.u32 %v8393, 4294901760
      %v8450 = vsub.f32 %v8393, %v8449
      %v8451 = vand.u32 %v8450, 4294901760
      %v8452 = vsub.f32 %v8450, %v8451
      %v8453 = vand.u32 %v8452, 4294901760
      %8454 = vmatpush.msra.mxu0 %v8453
      %v8455 = vand.u32 %v8400, 4294901760
      %8456 = vmatmul.f32.gmra.mxu0 %v8455
      %v8457 = vpop.f32.mrf.mxu0
      %v8458 = vadd.f32 %v8427, %v8457
      %8459 = vdwg.mxu0
      %8460 = vmatpush.msra.mxu0 0.0
      %8461 = vmatpush.msra.mxu0 0.0
      %8462 = vmatpush.msra.mxu0 0.0
      %8463 = vmatpush.msra.mxu0 0.0
      %8464 = vmatpush.msra.mxu0 0.0
      %8465 = vmatpush.msra.mxu0 0.0
      %8466 = vmatpush.msra.mxu0 0.0
      %8467 = vmatpush.msra.mxu0 0.0
      %8468 = vmatpush.msra.mxu0 0.0
      %8469 = vmatpush.msra.mxu0 0.0
      %8470 = vmatpush.msra.mxu0 0.0
      %8471 = vmatpush.msra.mxu0 0.0
      %8472 = vmatpush.msra.mxu0 0.0
      %8473 = vmatpush.msra.mxu0 0.0
      %v8474 = vand.u32 %v8394, 4294901760
      %v8475 = vsub.f32 %v8394, %v8474
      %8476 = vmatpush.msra.mxu0 %v8475
      %v8477 = vand.u32 %v8393, 4294901760
      %v8478 = vsub.f32 %v8393, %v8477
      %8479 = vmatpush.msra.mxu0 %v8478
      %v8480 = vand.u32 %v8400, 4294901760
      %v8481 = vsub.f32 %v8400, %v8480
      %8482 = vmatmul.f32.gmra.mxu0 %v8481
      %v8483 = vpop.f32.mrf.mxu0
      %v8484 = vadd.f32 %v8458, %v8483
      %8485 = vdwg.mxu0
      %8486 = vmatpush.msra.mxu0 0.0
      %8487 = vmatpush.msra.mxu0 0.0
      %8488 = vmatpush.msra.mxu0 0.0
      %8489 = vmatpush.msra.mxu0 0.0
      %8490 = vmatpush.msra.mxu0 0.0
      %8491 = vmatpush.msra.mxu0 0.0
      %8492 = vmatpush.msra.mxu0 0.0
      %8493 = vmatpush.msra.mxu0 0.0
      %8494 = vmatpush.msra.mxu0 0.0
      %8495 = vmatpush.msra.mxu0 0.0
      %8496 = vmatpush.msra.mxu0 0.0
      %8497 = vmatpush.msra.mxu0 0.0
      %8498 = vmatpush.msra.mxu0 0.0
      %8499 = vmatpush.msra.mxu0 0.0
      %v8500 = vand.u32 %v8394, 4294901760
      %8501 = vmatpush.msra.mxu0 %v8500
      %v8502 = vand.u32 %v8393, 4294901760
      %8503 = vmatpush.msra.mxu0 %v8502
      %v8504 = vand.u32 %v8400, 4294901760
      %v8505 = vsub.f32 %v8400, %v8504
      %v8506 = vand.u32 %v8505, 4294901760
      %8507 = vmatmul.f32.gmra.mxu0 %v8506
      %v8508 = vpop.f32.mrf.mxu0
      %v8509 = vadd.f32 %v8484, %v8508
      %8510 = vdwg.mxu0
      %8511 = vmatpush.msra.mxu0 0.0
      %8512 = vmatpush.msra.mxu0 0.0
      %8513 = vmatpush.msra.mxu0 0.0
      %8514 = vmatpush.msra.mxu0 0.0
      %8515 = vmatpush.msra.mxu0 0.0
      %8516 = vmatpush.msra.mxu0 0.0
      %8517 = vmatpush.msra.mxu0 0.0
      %8518 = vmatpush.msra.mxu0 0.0
      %8519 = vmatpush.msra.mxu0 0.0
      %8520 = vmatpush.msra.mxu0 0.0
      %8521 = vmatpush.msra.mxu0 0.0
      %8522 = vmatpush.msra.mxu0 0.0
      %8523 = vmatpush.msra.mxu0 0.0
      %8524 = vmatpush.msra.mxu0 0.0
      %v8525 = vand.u32 %v8394, 4294901760
      %v8526 = vsub.f32 %v8394, %v8525
      %v8527 = vand.u32 %v8526, 4294901760
      %8528 = vmatpush.msra.mxu0 %v8527
      %v8529 = vand.u32 %v8393, 4294901760
      %v8530 = vsub.f32 %v8393, %v8529
      %v8531 = vand.u32 %v8530, 4294901760
      %8532 = vmatpush.msra.mxu0 %v8531
      %v8533 = vand.u32 %v8400, 4294901760
      %8534 = vmatmul.f32.gmra.mxu0 %v8533
      %v8535 = vpop.f32.mrf.mxu0
      %v8536 = vadd.f32 %v8509, %v8535
      %8537 = vdwg.mxu0
      %8538 = vmatpush.msra.mxu0 0.0
      %8539 = vmatpush.msra.mxu0 0.0
      %8540 = vmatpush.msra.mxu0 0.0
      %8541 = vmatpush.msra.mxu0 0.0
      %8542 = vmatpush.msra.mxu0 0.0
      %8543 = vmatpush.msra.mxu0 0.0
      %8544 = vmatpush.msra.mxu0 0.0
      %8545 = vmatpush.msra.mxu0 0.0
      %8546 = vmatpush.msra.mxu0 0.0
      %8547 = vmatpush.msra.mxu0 0.0
      %8548 = vmatpush.msra.mxu0 0.0
      %8549 = vmatpush.msra.mxu0 0.0
      %8550 = vmatpush.msra.mxu0 0.0
      %8551 = vmatpush.msra.mxu0 0.0
      %v8552 = vand.u32 %v8394, 4294901760
      %8553 = vmatpush.msra.mxu0 %v8552
      %v8554 = vand.u32 %v8393, 4294901760
      %8555 = vmatpush.msra.mxu0 %v8554
      %v8556 = vand.u32 %v8400, 4294901760
      %8557 = vmatmul.f32.gmra.mxu0 %v8556
      %v8558 = vpop.f32.mrf.mxu0
      %v8559 = vadd.f32 %v8536, %v8558
      %8560 = vdwg.mxu0
      %8561 = vmatpush.msra.mxu0 0.0
      %8562 = vmatpush.msra.mxu0 0.0
      %8563 = vmatpush.msra.mxu0 0.0
      %8564 = vmatpush.msra.mxu0 0.0
      %8565 = vmatpush.msra.mxu0 0.0
      %8566 = vmatpush.msra.mxu0 0.0
      %8567 = vmatpush.msra.mxu0 0.0
      %8568 = vmatpush.msra.mxu0 0.0
      %8569 = vmatpush.msra.mxu0 0.0
      %8570 = vmatpush.msra.mxu0 0.0
      %8571 = vmatpush.msra.mxu0 0.0
      %8572 = vmatpush.msra.mxu0 0.0
      %8573 = vmatpush.msra.mxu0 0.0
      %8574 = vmatpush.msra.mxu0 0.0
      %v8575 = vand.u32 %v8391, 4294901760
      %8576 = vmatpush.msra.mxu0 %v8575
      %v8577 = vand.u32 %v8387, 4294901760
      %8578 = vmatpush.msra.mxu0 %v8577
      %v8579 = vand.u32 %v8400, 4294901760
      %v8580 = vsub.f32 %v8400, %v8579
      %v8581 = vand.u32 %v8580, 4294901760
      %v8582 = vsub.f32 %v8580, %v8581
      %v8583 = vand.u32 %v8582, 4294901760
      %8584 = vmatmul.f32.gmra.mxu0 %v8583
      %v8585 = vpop.f32.mrf.mxu0
      %v8586 = vadd.f32 0.0, %v8585
      %8587 = vdwg.mxu0
      %8588 = vmatpush.msra.mxu0 0.0
      %8589 = vmatpush.msra.mxu0 0.0
      %8590 = vmatpush.msra.mxu0 0.0
      %8591 = vmatpush.msra.mxu0 0.0
      %8592 = vmatpush.msra.mxu0 0.0
      %8593 = vmatpush.msra.mxu0 0.0
      %8594 = vmatpush.msra.mxu0 0.0
      %8595 = vmatpush.msra.mxu0 0.0
      %8596 = vmatpush.msra.mxu0 0.0
      %8597 = vmatpush.msra.mxu0 0.0
      %8598 = vmatpush.msra.mxu0 0.0
      %8599 = vmatpush.msra.mxu0 0.0
      %8600 = vmatpush.msra.mxu0 0.0
      %8601 = vmatpush.msra.mxu0 0.0
      %v8602 = vand.u32 %v8391, 4294901760
      %v8603 = vsub.f32 %v8391, %v8602
      %v8604 = vand.u32 %v8603, 4294901760
      %v8605 = vsub.f32 %v8603, %v8604
      %v8606 = vand.u32 %v8605, 4294901760
      %8607 = vmatpush.msra.mxu0 %v8606
      %v8608 = vand.u32 %v8387, 4294901760
      %v8609 = vsub.f32 %v8387, %v8608
      %v8610 = vand.u32 %v8609, 4294901760
      %v8611 = vsub.f32 %v8609, %v8610
      %v8612 = vand.u32 %v8611, 4294901760
      %8613 = vmatpush.msra.mxu0 %v8612
      %v8614 = vand.u32 %v8400, 4294901760
      %8615 = vmatmul.f32.gmra.mxu0 %v8614
      %v8616 = vpop.f32.mrf.mxu0
      %v8617 = vadd.f32 %v8586, %v8616
      %8618 = vdwg.mxu0
      %8619 = vmatpush.msra.mxu0 0.0
      %8620 = vmatpush.msra.mxu0 0.0
      %8621 = vmatpush.msra.mxu0 0.0
      %8622 = vmatpush.msra.mxu0 0.0
      %8623 = vmatpush.msra.mxu0 0.0
      %8624 = vmatpush.msra.mxu0 0.0
      %8625 = vmatpush.msra.mxu0 0.0
      %8626 = vmatpush.msra.mxu0 0.0
      %8627 = vmatpush.msra.mxu0 0.0
      %8628 = vmatpush.msra.mxu0 0.0
      %8629 = vmatpush.msra.mxu0 0.0
      %8630 = vmatpush.msra.mxu0 0.0
      %8631 = vmatpush.msra.mxu0 0.0
      %8632 = vmatpush.msra.mxu0 0.0
      %v8633 = vand.u32 %v8391, 4294901760
      %v8634 = vsub.f32 %v8391, %v8633
      %8635 = vmatpush.msra.mxu0 %v8634
      %v8636 = vand.u32 %v8387, 4294901760
      %v8637 = vsub.f32 %v8387, %v8636
      %8638 = vmatpush.msra.mxu0 %v8637
      %v8639 = vand.u32 %v8400, 4294901760
      %v8640 = vsub.f32 %v8400, %v8639
      %8641 = vmatmul.f32.gmra.mxu0 %v8640
      %v8642 = vpop.f32.mrf.mxu0
      %v8643 = vadd.f32 %v8617, %v8642
      %8644 = vdwg.mxu0
      %8645 = vmatpush.msra.mxu0 0.0
      %8646 = vmatpush.msra.mxu0 0.0
      %8647 = vmatpush.msra.mxu0 0.0
      %8648 = vmatpush.msra.mxu0 0.0
      %8649 = vmatpush.msra.mxu0 0.0
      %8650 = vmatpush.msra.mxu0 0.0
      %8651 = vmatpush.msra.mxu0 0.0
      %8652 = vmatpush.msra.mxu0 0.0
      %8653 = vmatpush.msra.mxu0 0.0
      %8654 = vmatpush.msra.mxu0 0.0
      %8655 = vmatpush.msra.mxu0 0.0
      %8656 = vmatpush.msra.mxu0 0.0
      %8657 = vmatpush.msra.mxu0 0.0
      %8658 = vmatpush.msra.mxu0 0.0
      %v8659 = vand.u32 %v8391, 4294901760
      %8660 = vmatpush.msra.mxu0 %v8659
      %v8661 = vand.u32 %v8387, 4294901760
      %8662 = vmatpush.msra.mxu0 %v8661
      %v8663 = vand.u32 %v8400, 4294901760
      %v8664 = vsub.f32 %v8400, %v8663
      %v8665 = vand.u32 %v8664, 4294901760
      %8666 = vmatmul.f32.gmra.mxu0 %v8665
      %v8667 = vpop.f32.mrf.mxu0
      %v8668 = vadd.f32 %v8643, %v8667
      %8669 = vdwg.mxu0
      %8670 = vmatpush.msra.mxu0 0.0
      %8671 = vmatpush.msra.mxu0 0.0
      %8672 = vmatpush.msra.mxu0 0.0
      %8673 = vmatpush.msra.mxu0 0.0
      %8674 = vmatpush.msra.mxu0 0.0
      %8675 = vmatpush.msra.mxu0 0.0
      %8676 = vmatpush.msra.mxu0 0.0
      %8677 = vmatpush.msra.mxu0 0.0
      %8678 = vmatpush.msra.mxu0 0.0
      %8679 = vmatpush.msra.mxu0 0.0
      %8680 = vmatpush.msra.mxu0 0.0
      %8681 = vmatpush.msra.mxu0 0.0
      %8682 = vmatpush.msra.mxu0 0.0
      %8683 = vmatpush.msra.mxu0 0.0
      %v8684 = vand.u32 %v8391, 4294901760
      %v8685 = vsub.f32 %v8391, %v8684
      %v8686 = vand.u32 %v8685, 4294901760
      %8687 = vmatpush.msra.mxu0 %v8686
      %v8688 = vand.u32 %v8387, 4294901760
      %v8689 = vsub.f32 %v8387, %v8688
      %v8690 = vand.u32 %v8689, 4294901760
      %8691 = vmatpush.msra.mxu0 %v8690
      %v8692 = vand.u32 %v8400, 4294901760
      %8693 = vmatmul.f32.gmra.mxu0 %v8692
      %v8694 = vpop.f32.mrf.mxu0
      %v8695 = vadd.f32 %v8668, %v8694
      %8696 = vdwg.mxu0
      %8697 = vmatpush.msra.mxu0 0.0
      %8698 = vmatpush.msra.mxu0 0.0
      %8699 = vmatpush.msra.mxu0 0.0
      %8700 = vmatpush.msra.mxu0 0.0
      %8701 = vmatpush.msra.mxu0 0.0
      %8702 = vmatpush.msra.mxu0 0.0
      %8703 = vmatpush.msra.mxu0 0.0
      %8704 = vmatpush.msra.mxu0 0.0
      %8705 = vmatpush.msra.mxu0 0.0
      %8706 = vmatpush.msra.mxu0 0.0
      %8707 = vmatpush.msra.mxu0 0.0
      %8708 = vmatpush.msra.mxu0 0.0
      %8709 = vmatpush.msra.mxu0 0.0
      %8710 = vmatpush.msra.mxu0 0.0
      %v8711 = vand.u32 %v8391, 4294901760
      %8712 = vmatpush.msra.mxu0 %v8711
      %v8713 = vand.u32 %v8387, 4294901760
      %8714 = vmatpush.msra.mxu0 %v8713
      %v8715 = vand.u32 %v8400, 4294901760
      %8716 = vmatmul.f32.gmra.mxu0 %v8715
      %v8717 = vpop.f32.mrf.mxu0
      %v8718 = vadd.f32 %v8695, %v8717
      %8719 = vdwg.mxu0
      %v8720 = vadd.f32 %v8380, %v8559
      %v8721 = vadd.f32 %v8381, %v8718
      %s8722 = scalar_lea.vmem %s6, 28
      %v8723 = vld [vmem:[%s8722] sm:$0xf]
      %8724 = vrot.lane.b32.xlu0 %v6345, 56
      %v8725 = vpop.permute.xlu0 %8724
      %8726 = vrot.lane.b32.xlu0 %v6346, 56
      %v8727 = vpop.permute.xlu0 %8726
      %8728 = vrot.lane.b32.xlu0 %v6347, 56
      %v8729 = vpop.permute.xlu0 %8728
      %8730 = vrot.lane.b32.xlu0 %v6348, 56
      %v8731 = vpop.permute.xlu0 %8730
      %vm8732 = vcmask 457728
      %v8733 = vsel %vm8732, %v8725, %v8727
      %v8734 = vsel %vm8732, %v8729, %v8731
      %v8740 = vsel %vm6369, %v8723, 0
      %8742 = vmatpush.msra.mxu0 0.0
      %8743 = vmatpush.msra.mxu0 0.0
      %8744 = vmatpush.msra.mxu0 0.0
      %8745 = vmatpush.msra.mxu0 0.0
      %8746 = vmatpush.msra.mxu0 0.0
      %8747 = vmatpush.msra.mxu0 0.0
      %8748 = vmatpush.msra.mxu0 0.0
      %8749 = vmatpush.msra.mxu0 0.0
      %8750 = vmatpush.msra.mxu0 0.0
      %8751 = vmatpush.msra.mxu0 0.0
      %8752 = vmatpush.msra.mxu0 0.0
      %8753 = vmatpush.msra.mxu0 0.0
      %8754 = vmatpush.msra.mxu0 0.0
      %8755 = vmatpush.msra.mxu0 0.0
      %v8756 = vand.u32 %v8734, 4294901760
      %8757 = vmatpush.msra.mxu0 %v8756
      %v8758 = vand.u32 %v8733, 4294901760
      %8759 = vmatpush.msra.mxu0 %v8758
      %v8760 = vand.u32 %v8740, 4294901760
      %v8761 = vsub.f32 %v8740, %v8760
      %v8762 = vand.u32 %v8761, 4294901760
      %v8763 = vsub.f32 %v8761, %v8762
      %v8764 = vand.u32 %v8763, 4294901760
      %8765 = vmatmul.f32.gmra.mxu0 %v8764
      %v8766 = vpop.f32.mrf.mxu0
      %v8767 = vadd.f32 0.0, %v8766
      %8768 = vdwg.mxu0
      %8769 = vmatpush.msra.mxu0 0.0
      %8770 = vmatpush.msra.mxu0 0.0
      %8771 = vmatpush.msra.mxu0 0.0
      %8772 = vmatpush.msra.mxu0 0.0
      %8773 = vmatpush.msra.mxu0 0.0
      %8774 = vmatpush.msra.mxu0 0.0
      %8775 = vmatpush.msra.mxu0 0.0
      %8776 = vmatpush.msra.mxu0 0.0
      %8777 = vmatpush.msra.mxu0 0.0
      %8778 = vmatpush.msra.mxu0 0.0
      %8779 = vmatpush.msra.mxu0 0.0
      %8780 = vmatpush.msra.mxu0 0.0
      %8781 = vmatpush.msra.mxu0 0.0
      %8782 = vmatpush.msra.mxu0 0.0
      %v8783 = vand.u32 %v8734, 4294901760
      %v8784 = vsub.f32 %v8734, %v8783
      %v8785 = vand.u32 %v8784, 4294901760
      %v8786 = vsub.f32 %v8784, %v8785
      %v8787 = vand.u32 %v8786, 4294901760
      %8788 = vmatpush.msra.mxu0 %v8787
      %v8789 = vand.u32 %v8733, 4294901760
      %v8790 = vsub.f32 %v8733, %v8789
      %v8791 = vand.u32 %v8790, 4294901760
      %v8792 = vsub.f32 %v8790, %v8791
      %v8793 = vand.u32 %v8792, 4294901760
      %8794 = vmatpush.msra.mxu0 %v8793
      %v8795 = vand.u32 %v8740, 4294901760
      %8796 = vmatmul.f32.gmra.mxu0 %v8795
      %v8797 = vpop.f32.mrf.mxu0
      %v8798 = vadd.f32 %v8767, %v8797
      %8799 = vdwg.mxu0
      %8800 = vmatpush.msra.mxu0 0.0
      %8801 = vmatpush.msra.mxu0 0.0
      %8802 = vmatpush.msra.mxu0 0.0
      %8803 = vmatpush.msra.mxu0 0.0
      %8804 = vmatpush.msra.mxu0 0.0
      %8805 = vmatpush.msra.mxu0 0.0
      %8806 = vmatpush.msra.mxu0 0.0
      %8807 = vmatpush.msra.mxu0 0.0
      %8808 = vmatpush.msra.mxu0 0.0
      %8809 = vmatpush.msra.mxu0 0.0
      %8810 = vmatpush.msra.mxu0 0.0
      %8811 = vmatpush.msra.mxu0 0.0
      %8812 = vmatpush.msra.mxu0 0.0
      %8813 = vmatpush.msra.mxu0 0.0
      %v8814 = vand.u32 %v8734, 4294901760
      %v8815 = vsub.f32 %v8734, %v8814
      %8816 = vmatpush.msra.mxu0 %v8815
      %v8817 = vand.u32 %v8733, 4294901760
      %v8818 = vsub.f32 %v8733, %v8817
      %8819 = vmatpush.msra.mxu0 %v8818
      %v8820 = vand.u32 %v8740, 4294901760
      %v8821 = vsub.f32 %v8740, %v8820
      %8822 = vmatmul.f32.gmra.mxu0 %v8821
      %v8823 = vpop.f32.mrf.mxu0
      %v8824 = vadd.f32 %v8798, %v8823
      %8825 = vdwg.mxu0
      %8826 = vmatpush.msra.mxu0 0.0
      %8827 = vmatpush.msra.mxu0 0.0
      %8828 = vmatpush.msra.mxu0 0.0
      %8829 = vmatpush.msra.mxu0 0.0
      %8830 = vmatpush.msra.mxu0 0.0
      %8831 = vmatpush.msra.mxu0 0.0
      %8832 = vmatpush.msra.mxu0 0.0
      %8833 = vmatpush.msra.mxu0 0.0
      %8834 = vmatpush.msra.mxu0 0.0
      %8835 = vmatpush.msra.mxu0 0.0
      %8836 = vmatpush.msra.mxu0 0.0
      %8837 = vmatpush.msra.mxu0 0.0
      %8838 = vmatpush.msra.mxu0 0.0
      %8839 = vmatpush.msra.mxu0 0.0
      %v8840 = vand.u32 %v8734, 4294901760
      %8841 = vmatpush.msra.mxu0 %v8840
      %v8842 = vand.u32 %v8733, 4294901760
      %8843 = vmatpush.msra.mxu0 %v8842
      %v8844 = vand.u32 %v8740, 4294901760
      %v8845 = vsub.f32 %v8740, %v8844
      %v8846 = vand.u32 %v8845, 4294901760
      %8847 = vmatmul.f32.gmra.mxu0 %v8846
      %v8848 = vpop.f32.mrf.mxu0
      %v8849 = vadd.f32 %v8824, %v8848
      %8850 = vdwg.mxu0
      %8851 = vmatpush.msra.mxu0 0.0
      %8852 = vmatpush.msra.mxu0 0.0
      %8853 = vmatpush.msra.mxu0 0.0
      %8854 = vmatpush.msra.mxu0 0.0
      %8855 = vmatpush.msra.mxu0 0.0
      %8856 = vmatpush.msra.mxu0 0.0
      %8857 = vmatpush.msra.mxu0 0.0
      %8858 = vmatpush.msra.mxu0 0.0
      %8859 = vmatpush.msra.mxu0 0.0
      %8860 = vmatpush.msra.mxu0 0.0
      %8861 = vmatpush.msra.mxu0 0.0
      %8862 = vmatpush.msra.mxu0 0.0
      %8863 = vmatpush.msra.mxu0 0.0
      %8864 = vmatpush.msra.mxu0 0.0
      %v8865 = vand.u32 %v8734, 4294901760
      %v8866 = vsub.f32 %v8734, %v8865
      %v8867 = vand.u32 %v8866, 4294901760
      %8868 = vmatpush.msra.mxu0 %v8867
      %v8869 = vand.u32 %v8733, 4294901760
      %v8870 = vsub.f32 %v8733, %v8869
      %v8871 = vand.u32 %v8870, 4294901760
      %8872 = vmatpush.msra.mxu0 %v8871
      %v8873 = vand.u32 %v8740, 4294901760
      %8874 = vmatmul.f32.gmra.mxu0 %v8873
      %v8875 = vpop.f32.mrf.mxu0
      %v8876 = vadd.f32 %v8849, %v8875
      %8877 = vdwg.mxu0
      %8878 = vmatpush.msra.mxu0 0.0
      %8879 = vmatpush.msra.mxu0 0.0
      %8880 = vmatpush.msra.mxu0 0.0
      %8881 = vmatpush.msra.mxu0 0.0
      %8882 = vmatpush.msra.mxu0 0.0
      %8883 = vmatpush.msra.mxu0 0.0
      %8884 = vmatpush.msra.mxu0 0.0
      %8885 = vmatpush.msra.mxu0 0.0
      %8886 = vmatpush.msra.mxu0 0.0
      %8887 = vmatpush.msra.mxu0 0.0
      %8888 = vmatpush.msra.mxu0 0.0
      %8889 = vmatpush.msra.mxu0 0.0
      %8890 = vmatpush.msra.mxu0 0.0
      %8891 = vmatpush.msra.mxu0 0.0
      %v8892 = vand.u32 %v8734, 4294901760
      %8893 = vmatpush.msra.mxu0 %v8892
      %v8894 = vand.u32 %v8733, 4294901760
      %8895 = vmatpush.msra.mxu0 %v8894
      %v8896 = vand.u32 %v8740, 4294901760
      %8897 = vmatmul.f32.gmra.mxu0 %v8896
      %v8898 = vpop.f32.mrf.mxu0
      %v8899 = vadd.f32 %v8876, %v8898
      %8900 = vdwg.mxu0
      %8901 = vmatpush.msra.mxu0 0.0
      %8902 = vmatpush.msra.mxu0 0.0
      %8903 = vmatpush.msra.mxu0 0.0
      %8904 = vmatpush.msra.mxu0 0.0
      %8905 = vmatpush.msra.mxu0 0.0
      %8906 = vmatpush.msra.mxu0 0.0
      %8907 = vmatpush.msra.mxu0 0.0
      %8908 = vmatpush.msra.mxu0 0.0
      %8909 = vmatpush.msra.mxu0 0.0
      %8910 = vmatpush.msra.mxu0 0.0
      %8911 = vmatpush.msra.mxu0 0.0
      %8912 = vmatpush.msra.mxu0 0.0
      %8913 = vmatpush.msra.mxu0 0.0
      %8914 = vmatpush.msra.mxu0 0.0
      %v8915 = vand.u32 %v8731, 4294901760
      %8916 = vmatpush.msra.mxu0 %v8915
      %v8917 = vand.u32 %v8727, 4294901760
      %8918 = vmatpush.msra.mxu0 %v8917
      %v8919 = vand.u32 %v8740, 4294901760
      %v8920 = vsub.f32 %v8740, %v8919
      %v8921 = vand.u32 %v8920, 4294901760
      %v8922 = vsub.f32 %v8920, %v8921
      %v8923 = vand.u32 %v8922, 4294901760
      %8924 = vmatmul.f32.gmra.mxu0 %v8923
      %v8925 = vpop.f32.mrf.mxu0
      %v8926 = vadd.f32 0.0, %v8925
      %8927 = vdwg.mxu0
      %8928 = vmatpush.msra.mxu0 0.0
      %8929 = vmatpush.msra.mxu0 0.0
      %8930 = vmatpush.msra.mxu0 0.0
      %8931 = vmatpush.msra.mxu0 0.0
      %8932 = vmatpush.msra.mxu0 0.0
      %8933 = vmatpush.msra.mxu0 0.0
      %8934 = vmatpush.msra.mxu0 0.0
      %8935 = vmatpush.msra.mxu0 0.0
      %8936 = vmatpush.msra.mxu0 0.0
      %8937 = vmatpush.msra.mxu0 0.0
      %8938 = vmatpush.msra.mxu0 0.0
      %8939 = vmatpush.msra.mxu0 0.0
      %8940 = vmatpush.msra.mxu0 0.0
      %8941 = vmatpush.msra.mxu0 0.0
      %v8942 = vand.u32 %v8731, 4294901760
      %v8943 = vsub.f32 %v8731, %v8942
      %v8944 = vand.u32 %v8943, 4294901760
      %v8945 = vsub.f32 %v8943, %v8944
      %v8946 = vand.u32 %v8945, 4294901760
      %8947 = vmatpush.msra.mxu0 %v8946
      %v8948 = vand.u32 %v8727, 4294901760
      %v8949 = vsub.f32 %v8727, %v8948
      %v8950 = vand.u32 %v8949, 4294901760
      %v8951 = vsub.f32 %v8949, %v8950
      %v8952 = vand.u32 %v8951, 4294901760
      %8953 = vmatpush.msra.mxu0 %v8952
      %v8954 = vand.u32 %v8740, 4294901760
      %8955 = vmatmul.f32.gmra.mxu0 %v8954
      %v8956 = vpop.f32.mrf.mxu0
      %v8957 = vadd.f32 %v8926, %v8956
      %8958 = vdwg.mxu0
      %8959 = vmatpush.msra.mxu0 0.0
      %8960 = vmatpush.msra.mxu0 0.0
      %8961 = vmatpush.msra.mxu0 0.0
      %8962 = vmatpush.msra.mxu0 0.0
      %8963 = vmatpush.msra.mxu0 0.0
      %8964 = vmatpush.msra.mxu0 0.0
      %8965 = vmatpush.msra.mxu0 0.0
      %8966 = vmatpush.msra.mxu0 0.0
      %8967 = vmatpush.msra.mxu0 0.0
      %8968 = vmatpush.msra.mxu0 0.0
      %8969 = vmatpush.msra.mxu0 0.0
      %8970 = vmatpush.msra.mxu0 0.0
      %8971 = vmatpush.msra.mxu0 0.0
      %8972 = vmatpush.msra.mxu0 0.0
      %v8973 = vand.u32 %v8731, 4294901760
      %v8974 = vsub.f32 %v8731, %v8973
      %8975 = vmatpush.msra.mxu0 %v8974
      %v8976 = vand.u32 %v8727, 4294901760
      %v8977 = vsub.f32 %v8727, %v8976
      %8978 = vmatpush.msra.mxu0 %v8977
      %v8979 = vand.u32 %v8740, 4294901760
      %v8980 = vsub.f32 %v8740, %v8979
      %8981 = vmatmul.f32.gmra.mxu0 %v8980
      %v8982 = vpop.f32.mrf.mxu0
      %v8983 = vadd.f32 %v8957, %v8982
      %8984 = vdwg.mxu0
      %8985 = vmatpush.msra.mxu0 0.0
      %8986 = vmatpush.msra.mxu0 0.0
      %8987 = vmatpush.msra.mxu0 0.0
      %8988 = vmatpush.msra.mxu0 0.0
      %8989 = vmatpush.msra.mxu0 0.0
      %8990 = vmatpush.msra.mxu0 0.0
      %8991 = vmatpush.msra.mxu0 0.0
      %8992 = vmatpush.msra.mxu0 0.0
      %8993 = vmatpush.msra.mxu0 0.0
      %8994 = vmatpush.msra.mxu0 0.0
      %8995 = vmatpush.msra.mxu0 0.0
      %8996 = vmatpush.msra.mxu0 0.0
      %8997 = vmatpush.msra.mxu0 0.0
      %8998 = vmatpush.msra.mxu0 0.0
      %v8999 = vand.u32 %v8731, 4294901760
      %9000 = vmatpush.msra.mxu0 %v8999
      %v9001 = vand.u32 %v8727, 4294901760
      %9002 = vmatpush.msra.mxu0 %v9001
      %v9003 = vand.u32 %v8740, 4294901760
      %v9004 = vsub.f32 %v8740, %v9003
      %v9005 = vand.u32 %v9004, 4294901760
      %9006 = vmatmul.f32.gmra.mxu0 %v9005
      %v9007 = vpop.f32.mrf.mxu0
      %v9008 = vadd.f32 %v8983, %v9007
      %9009 = vdwg.mxu0
      %9010 = vmatpush.msra.mxu0 0.0
      %9011 = vmatpush.msra.mxu0 0.0
      %9012 = vmatpush.msra.mxu0 0.0
      %9013 = vmatpush.msra.mxu0 0.0
      %9014 = vmatpush.msra.mxu0 0.0
      %9015 = vmatpush.msra.mxu0 0.0
      %9016 = vmatpush.msra.mxu0 0.0
      %9017 = vmatpush.msra.mxu0 0.0
      %9018 = vmatpush.msra.mxu0 0.0
      %9019 = vmatpush.msra.mxu0 0.0
      %9020 = vmatpush.msra.mxu0 0.0
      %9021 = vmatpush.msra.mxu0 0.0
      %9022 = vmatpush.msra.mxu0 0.0
      %9023 = vmatpush.msra.mxu0 0.0
      %v9024 = vand.u32 %v8731, 4294901760
      %v9025 = vsub.f32 %v8731, %v9024
      %v9026 = vand.u32 %v9025, 4294901760
      %9027 = vmatpush.msra.mxu0 %v9026
      %v9028 = vand.u32 %v8727, 4294901760
      %v9029 = vsub.f32 %v8727, %v9028
      %v9030 = vand.u32 %v9029, 4294901760
      %9031 = vmatpush.msra.mxu0 %v9030
      %v9032 = vand.u32 %v8740, 4294901760
      %9033 = vmatmul.f32.gmra.mxu0 %v9032
      %v9034 = vpop.f32.mrf.mxu0
      %v9035 = vadd.f32 %v9008, %v9034
      %9036 = vdwg.mxu0
      %9037 = vmatpush.msra.mxu0 0.0
      %9038 = vmatpush.msra.mxu0 0.0
      %9039 = vmatpush.msra.mxu0 0.0
      %9040 = vmatpush.msra.mxu0 0.0
      %9041 = vmatpush.msra.mxu0 0.0
      %9042 = vmatpush.msra.mxu0 0.0
      %9043 = vmatpush.msra.mxu0 0.0
      %9044 = vmatpush.msra.mxu0 0.0
      %9045 = vmatpush.msra.mxu0 0.0
      %9046 = vmatpush.msra.mxu0 0.0
      %9047 = vmatpush.msra.mxu0 0.0
      %9048 = vmatpush.msra.mxu0 0.0
      %9049 = vmatpush.msra.mxu0 0.0
      %9050 = vmatpush.msra.mxu0 0.0
      %v9051 = vand.u32 %v8731, 4294901760
      %9052 = vmatpush.msra.mxu0 %v9051
      %v9053 = vand.u32 %v8727, 4294901760
      %9054 = vmatpush.msra.mxu0 %v9053
      %v9055 = vand.u32 %v8740, 4294901760
      %9056 = vmatmul.f32.gmra.mxu0 %v9055
      %v9057 = vpop.f32.mrf.mxu0
      %v9058 = vadd.f32 %v9035, %v9057
      %9059 = vdwg.mxu0
      %v9060 = vadd.f32 %v8720, %v8899
      %v9061 = vadd.f32 %v8721, %v9058
      %s9062 = scalar_lea.vmem %s6, 32
      %v9063 = vld [vmem:[%s9062] sm:$0xf]
      %9064 = vrot.lane.b32.xlu0 %v6345, 55
      %v9065 = vpop.permute.xlu0 %9064
      %9066 = vrot.lane.b32.xlu0 %v6346, 55
      %v9067 = vpop.permute.xlu0 %9066
      %9068 = vrot.lane.b32.xlu0 %v6347, 55
      %v9069 = vpop.permute.xlu0 %9068
      %9070 = vrot.lane.b32.xlu0 %v6348, 55
      %v9071 = vpop.permute.xlu0 %9070
      %vm9072 = vcmask 449536
      %v9073 = vsel %vm9072, %v9065, %v9067
      %v9074 = vsel %vm9072, %v9069, %v9071
      %v9080 = vsel %vm6369, %v9063, 0
      %9082 = vmatpush.msra.mxu0 0.0
      %9083 = vmatpush.msra.mxu0 0.0
      %9084 = vmatpush.msra.mxu0 0.0
      %9085 = vmatpush.msra.mxu0 0.0
      %9086 = vmatpush.msra.mxu0 0.0
      %9087 = vmatpush.msra.mxu0 0.0
      %9088 = vmatpush.msra.mxu0 0.0
      %9089 = vmatpush.msra.mxu0 0.0
      %9090 = vmatpush.msra.mxu0 0.0
      %9091 = vmatpush.msra.mxu0 0.0
      %9092 = vmatpush.msra.mxu0 0.0
      %9093 = vmatpush.msra.mxu0 0.0
      %9094 = vmatpush.msra.mxu0 0.0
      %9095 = vmatpush.msra.mxu0 0.0
      %v9096 = vand.u32 %v9074, 4294901760
      %9097 = vmatpush.msra.mxu0 %v9096
      %v9098 = vand.u32 %v9073, 4294901760
      %9099 = vmatpush.msra.mxu0 %v9098
      %v9100 = vand.u32 %v9080, 4294901760
      %v9101 = vsub.f32 %v9080, %v9100
      %v9102 = vand.u32 %v9101, 4294901760
      %v9103 = vsub.f32 %v9101, %v9102
      %v9104 = vand.u32 %v9103, 4294901760
      %9105 = vmatmul.f32.gmra.mxu0 %v9104
      %v9106 = vpop.f32.mrf.mxu0
      %v9107 = vadd.f32 0.0, %v9106
      %9108 = vdwg.mxu0
      %9109 = vmatpush.msra.mxu0 0.0
      %9110 = vmatpush.msra.mxu0 0.0
      %9111 = vmatpush.msra.mxu0 0.0
      %9112 = vmatpush.msra.mxu0 0.0
      %9113 = vmatpush.msra.mxu0 0.0
      %9114 = vmatpush.msra.mxu0 0.0
      %9115 = vmatpush.msra.mxu0 0.0
      %9116 = vmatpush.msra.mxu0 0.0
      %9117 = vmatpush.msra.mxu0 0.0
      %9118 = vmatpush.msra.mxu0 0.0
      %9119 = vmatpush.msra.mxu0 0.0
      %9120 = vmatpush.msra.mxu0 0.0
      %9121 = vmatpush.msra.mxu0 0.0
      %9122 = vmatpush.msra.mxu0 0.0
      %v9123 = vand.u32 %v9074, 4294901760
      %v9124 = vsub.f32 %v9074, %v9123
      %v9125 = vand.u32 %v9124, 4294901760
      %v9126 = vsub.f32 %v9124, %v9125
      %v9127 = vand.u32 %v9126, 4294901760
      %9128 = vmatpush.msra.mxu0 %v9127
      %v9129 = vand.u32 %v9073, 4294901760
      %v9130 = vsub.f32 %v9073, %v9129
      %v9131 = vand.u32 %v9130, 4294901760
      %v9132 = vsub.f32 %v9130, %v9131
      %v9133 = vand.u32 %v9132, 4294901760
      %9134 = vmatpush.msra.mxu0 %v9133
      %v9135 = vand.u32 %v9080, 4294901760
      %9136 = vmatmul.f32.gmra.mxu0 %v9135
      %v9137 = vpop.f32.mrf.mxu0
      %v9138 = vadd.f32 %v9107, %v9137
      %9139 = vdwg.mxu0
      %9140 = vmatpush.msra.mxu0 0.0
      %9141 = vmatpush.msra.mxu0 0.0
      %9142 = vmatpush.msra.mxu0 0.0
      %9143 = vmatpush.msra.mxu0 0.0
      %9144 = vmatpush.msra.mxu0 0.0
      %9145 = vmatpush.msra.mxu0 0.0
      %9146 = vmatpush.msra.mxu0 0.0
      %9147 = vmatpush.msra.mxu0 0.0
      %9148 = vmatpush.msra.mxu0 0.0
      %9149 = vmatpush.msra.mxu0 0.0
      %9150 = vmatpush.msra.mxu0 0.0
      %9151 = vmatpush.msra.mxu0 0.0
      %9152 = vmatpush.msra.mxu0 0.0
      %9153 = vmatpush.msra.mxu0 0.0
      %v9154 = vand.u32 %v9074, 4294901760
      %v9155 = vsub.f32 %v9074, %v9154
      %9156 = vmatpush.msra.mxu0 %v9155
      %v9157 = vand.u32 %v9073, 4294901760
      %v9158 = vsub.f32 %v9073, %v9157
      %9159 = vmatpush.msra.mxu0 %v9158
      %v9160 = vand.u32 %v9080, 4294901760
      %v9161 = vsub.f32 %v9080, %v9160
      %9162 = vmatmul.f32.gmra.mxu0 %v9161
      %v9163 = vpop.f32.mrf.mxu0
      %v9164 = vadd.f32 %v9138, %v9163
      %9165 = vdwg.mxu0
      %9166 = vmatpush.msra.mxu0 0.0
      %9167 = vmatpush.msra.mxu0 0.0
      %9168 = vmatpush.msra.mxu0 0.0
      %9169 = vmatpush.msra.mxu0 0.0
      %9170 = vmatpush.msra.mxu0 0.0
      %9171 = vmatpush.msra.mxu0 0.0
      %9172 = vmatpush.msra.mxu0 0.0
      %9173 = vmatpush.msra.mxu0 0.0
      %9174 = vmatpush.msra.mxu0 0.0
      %9175 = vmatpush.msra.mxu0 0.0
      %9176 = vmatpush.msra.mxu0 0.0
      %9177 = vmatpush.msra.mxu0 0.0
      %9178 = vmatpush.msra.mxu0 0.0
      %9179 = vmatpush.msra.mxu0 0.0
      %v9180 = vand.u32 %v9074, 4294901760
      %9181 = vmatpush.msra.mxu0 %v9180
      %v9182 = vand.u32 %v9073, 4294901760
      %9183 = vmatpush.msra.mxu0 %v9182
      %v9184 = vand.u32 %v9080, 4294901760
      %v9185 = vsub.f32 %v9080, %v9184
      %v9186 = vand.u32 %v9185, 4294901760
      %9187 = vmatmul.f32.gmra.mxu0 %v9186
      %v9188 = vpop.f32.mrf.mxu0
      %v9189 = vadd.f32 %v9164, %v9188
      %9190 = vdwg.mxu0
      %9191 = vmatpush.msra.mxu0 0.0
      %9192 = vmatpush.msra.mxu0 0.0
      %9193 = vmatpush.msra.mxu0 0.0
      %9194 = vmatpush.msra.mxu0 0.0
      %9195 = vmatpush.msra.mxu0 0.0
      %9196 = vmatpush.msra.mxu0 0.0
      %9197 = vmatpush.msra.mxu0 0.0
      %9198 = vmatpush.msra.mxu0 0.0
      %9199 = vmatpush.msra.mxu0 0.0
      %9200 = vmatpush.msra.mxu0 0.0
      %9201 = vmatpush.msra.mxu0 0.0
      %9202 = vmatpush.msra.mxu0 0.0
      %9203 = vmatpush.msra.mxu0 0.0
      %9204 = vmatpush.msra.mxu0 0.0
      %v9205 = vand.u32 %v9074, 4294901760
      %v9206 = vsub.f32 %v9074, %v9205
      %v9207 = vand.u32 %v9206, 4294901760
      %9208 = vmatpush.msra.mxu0 %v9207
      %v9209 = vand.u32 %v9073, 4294901760
      %v9210 = vsub.f32 %v9073, %v9209
      %v9211 = vand.u32 %v9210, 4294901760
      %9212 = vmatpush.msra.mxu0 %v9211
      %v9213 = vand.u32 %v9080, 4294901760
      %9214 = vmatmul.f32.gmra.mxu0 %v9213
      %v9215 = vpop.f32.mrf.mxu0
      %v9216 = vadd.f32 %v9189, %v9215
      %9217 = vdwg.mxu0
      %9218 = vmatpush.msra.mxu0 0.0
      %9219 = vmatpush.msra.mxu0 0.0
      %9220 = vmatpush.msra.mxu0 0.0
      %9221 = vmatpush.msra.mxu0 0.0
      %9222 = vmatpush.msra.mxu0 0.0
      %9223 = vmatpush.msra.mxu0 0.0
      %9224 = vmatpush.msra.mxu0 0.0
      %9225 = vmatpush.msra.mxu0 0.0
      %9226 = vmatpush.msra.mxu0 0.0
      %9227 = vmatpush.msra.mxu0 0.0
      %9228 = vmatpush.msra.mxu0 0.0
      %9229 = vmatpush.msra.mxu0 0.0
      %9230 = vmatpush.msra.mxu0 0.0
      %9231 = vmatpush.msra.mxu0 0.0
      %v9232 = vand.u32 %v9074, 4294901760
      %9233 = vmatpush.msra.mxu0 %v9232
      %v9234 = vand.u32 %v9073, 4294901760
      %9235 = vmatpush.msra.mxu0 %v9234
      %v9236 = vand.u32 %v9080, 4294901760
      %9237 = vmatmul.f32.gmra.mxu0 %v9236
      %v9238 = vpop.f32.mrf.mxu0
      %v9239 = vadd.f32 %v9216, %v9238
      %9240 = vdwg.mxu0
      %9241 = vmatpush.msra.mxu0 0.0
      %9242 = vmatpush.msra.mxu0 0.0
      %9243 = vmatpush.msra.mxu0 0.0
      %9244 = vmatpush.msra.mxu0 0.0
      %9245 = vmatpush.msra.mxu0 0.0
      %9246 = vmatpush.msra.mxu0 0.0
      %9247 = vmatpush.msra.mxu0 0.0
      %9248 = vmatpush.msra.mxu0 0.0
      %9249 = vmatpush.msra.mxu0 0.0
      %9250 = vmatpush.msra.mxu0 0.0
      %9251 = vmatpush.msra.mxu0 0.0
      %9252 = vmatpush.msra.mxu0 0.0
      %9253 = vmatpush.msra.mxu0 0.0
      %9254 = vmatpush.msra.mxu0 0.0
      %v9255 = vand.u32 %v9071, 4294901760
      %9256 = vmatpush.msra.mxu0 %v9255
      %v9257 = vand.u32 %v9067, 4294901760
      %9258 = vmatpush.msra.mxu0 %v9257
      %v9259 = vand.u32 %v9080, 4294901760
      %v9260 = vsub.f32 %v9080, %v9259
      %v9261 = vand.u32 %v9260, 4294901760
      %v9262 = vsub.f32 %v9260, %v9261
      %v9263 = vand.u32 %v9262, 4294901760
      %9264 = vmatmul.f32.gmra.mxu0 %v9263
      %v9265 = vpop.f32.mrf.mxu0
      %v9266 = vadd.f32 0.0, %v9265
      %9267 = vdwg.mxu0
      %9268 = vmatpush.msra.mxu0 0.0
      %9269 = vmatpush.msra.mxu0 0.0
      %9270 = vmatpush.msra.mxu0 0.0
      %9271 = vmatpush.msra.mxu0 0.0
      %9272 = vmatpush.msra.mxu0 0.0
      %9273 = vmatpush.msra.mxu0 0.0
      %9274 = vmatpush.msra.mxu0 0.0
      %9275 = vmatpush.msra.mxu0 0.0
      %9276 = vmatpush.msra.mxu0 0.0
      %9277 = vmatpush.msra.mxu0 0.0
      %9278 = vmatpush.msra.mxu0 0.0
      %9279 = vmatpush.msra.mxu0 0.0
      %9280 = vmatpush.msra.mxu0 0.0
      %9281 = vmatpush.msra.mxu0 0.0
      %v9282 = vand.u32 %v9071, 4294901760
      %v9283 = vsub.f32 %v9071, %v9282
      %v9284 = vand.u32 %v9283, 4294901760
      %v9285 = vsub.f32 %v9283, %v9284
      %v9286 = vand.u32 %v9285, 4294901760
      %9287 = vmatpush.msra.mxu0 %v9286
      %v9288 = vand.u32 %v9067, 4294901760
      %v9289 = vsub.f32 %v9067, %v9288
      %v9290 = vand.u32 %v9289, 4294901760
      %v9291 = vsub.f32 %v9289, %v9290
      %v9292 = vand.u32 %v9291, 4294901760
      %9293 = vmatpush.msra.mxu0 %v9292
      %v9294 = vand.u32 %v9080, 4294901760
      %9295 = vmatmul.f32.gmra.mxu0 %v9294
      %v9296 = vpop.f32.mrf.mxu0
      %v9297 = vadd.f32 %v9266, %v9296
      %9298 = vdwg.mxu0
      %9299 = vmatpush.msra.mxu0 0.0
      %9300 = vmatpush.msra.mxu0 0.0
      %9301 = vmatpush.msra.mxu0 0.0
      %9302 = vmatpush.msra.mxu0 0.0
      %9303 = vmatpush.msra.mxu0 0.0
      %9304 = vmatpush.msra.mxu0 0.0
      %9305 = vmatpush.msra.mxu0 0.0
      %9306 = vmatpush.msra.mxu0 0.0
      %9307 = vmatpush.msra.mxu0 0.0
      %9308 = vmatpush.msra.mxu0 0.0
      %9309 = vmatpush.msra.mxu0 0.0
      %9310 = vmatpush.msra.mxu0 0.0
      %9311 = vmatpush.msra.mxu0 0.0
      %9312 = vmatpush.msra.mxu0 0.0
      %v9313 = vand.u32 %v9071, 4294901760
      %v9314 = vsub.f32 %v9071, %v9313
      %9315 = vmatpush.msra.mxu0 %v9314
      %v9316 = vand.u32 %v9067, 4294901760
      %v9317 = vsub.f32 %v9067, %v9316
      %9318 = vmatpush.msra.mxu0 %v9317
      %v9319 = vand.u32 %v9080, 4294901760
      %v9320 = vsub.f32 %v9080, %v9319
      %9321 = vmatmul.f32.gmra.mxu0 %v9320
      %v9322 = vpop.f32.mrf.mxu0
      %v9323 = vadd.f32 %v9297, %v9322
      %9324 = vdwg.mxu0
      %9325 = vmatpush.msra.mxu0 0.0
      %9326 = vmatpush.msra.mxu0 0.0
      %9327 = vmatpush.msra.mxu0 0.0
      %9328 = vmatpush.msra.mxu0 0.0
      %9329 = vmatpush.msra.mxu0 0.0
      %9330 = vmatpush.msra.mxu0 0.0
      %9331 = vmatpush.msra.mxu0 0.0
      %9332 = vmatpush.msra.mxu0 0.0
      %9333 = vmatpush.msra.mxu0 0.0
      %9334 = vmatpush.msra.mxu0 0.0
      %9335 = vmatpush.msra.mxu0 0.0
      %9336 = vmatpush.msra.mxu0 0.0
      %9337 = vmatpush.msra.mxu0 0.0
      %9338 = vmatpush.msra.mxu0 0.0
      %v9339 = vand.u32 %v9071, 4294901760
      %9340 = vmatpush.msra.mxu0 %v9339
      %v9341 = vand.u32 %v9067, 4294901760
      %9342 = vmatpush.msra.mxu0 %v9341
      %v9343 = vand.u32 %v9080, 4294901760
      %v9344 = vsub.f32 %v9080, %v9343
      %v9345 = vand.u32 %v9344, 4294901760
      %9346 = vmatmul.f32.gmra.mxu0 %v9345
      %v9347 = vpop.f32.mrf.mxu0
      %v9348 = vadd.f32 %v9323, %v9347
      %9349 = vdwg.mxu0
      %9350 = vmatpush.msra.mxu0 0.0
      %9351 = vmatpush.msra.mxu0 0.0
      %9352 = vmatpush.msra.mxu0 0.0
      %9353 = vmatpush.msra.mxu0 0.0
      %9354 = vmatpush.msra.mxu0 0.0
      %9355 = vmatpush.msra.mxu0 0.0
      %9356 = vmatpush.msra.mxu0 0.0
      %9357 = vmatpush.msra.mxu0 0.0
      %9358 = vmatpush.msra.mxu0 0.0
      %9359 = vmatpush.msra.mxu0 0.0
      %9360 = vmatpush.msra.mxu0 0.0
      %9361 = vmatpush.msra.mxu0 0.0
      %9362 = vmatpush.msra.mxu0 0.0
      %9363 = vmatpush.msra.mxu0 0.0
      %v9364 = vand.u32 %v9071, 4294901760
      %v9365 = vsub.f32 %v9071, %v9364
      %v9366 = vand.u32 %v9365, 4294901760
      %9367 = vmatpush.msra.mxu0 %v9366
      %v9368 = vand.u32 %v9067, 4294901760
      %v9369 = vsub.f32 %v9067, %v9368
      %v9370 = vand.u32 %v9369, 4294901760
      %9371 = vmatpush.msra.mxu0 %v9370
      %v9372 = vand.u32 %v9080, 4294901760
      %9373 = vmatmul.f32.gmra.mxu0 %v9372
      %v9374 = vpop.f32.mrf.mxu0
      %v9375 = vadd.f32 %v9348, %v9374
      %9376 = vdwg.mxu0
      %9377 = vmatpush.msra.mxu0 0.0
      %9378 = vmatpush.msra.mxu0 0.0
      %9379 = vmatpush.msra.mxu0 0.0
      %9380 = vmatpush.msra.mxu0 0.0
      %9381 = vmatpush.msra.mxu0 0.0
      %9382 = vmatpush.msra.mxu0 0.0
      %9383 = vmatpush.msra.mxu0 0.0
      %9384 = vmatpush.msra.mxu0 0.0
      %9385 = vmatpush.msra.mxu0 0.0
      %9386 = vmatpush.msra.mxu0 0.0
      %9387 = vmatpush.msra.mxu0 0.0
      %9388 = vmatpush.msra.mxu0 0.0
      %9389 = vmatpush.msra.mxu0 0.0
      %9390 = vmatpush.msra.mxu0 0.0
      %v9391 = vand.u32 %v9071, 4294901760
      %9392 = vmatpush.msra.mxu0 %v9391
      %v9393 = vand.u32 %v9067, 4294901760
      %9394 = vmatpush.msra.mxu0 %v9393
      %v9395 = vand.u32 %v9080, 4294901760
      %9396 = vmatmul.f32.gmra.mxu0 %v9395
      %v9397 = vpop.f32.mrf.mxu0
      %v9398 = vadd.f32 %v9375, %v9397
      %9399 = vdwg.mxu0
      %v9400 = vadd.f32 %v9060, %v9239
      %v9401 = vadd.f32 %v9061, %v9398
      %9403 = vset.pattern.permute.xlu0 0
      %9404 = vperm.xlu0 %9403, %v6343
      %v9405 = vpop.permute.xlu0 %9404
      %v9407 = vadd.f32 %v9400, %v9405
      %v9408 = vadd.f32 %v9401, %v9405
      %v9409 = vmax.f32 %v9407, 0.0
      %v9410 = vmax.f32 %v9408, 0.0
      %v9411 = vld [vmem:[%s403] sm:$0x3]
      %v9413 = vperm.slane %v9411, 0
      %v9414 = vperm.slane %v9411, 1
      %9415 = vrot.lane.b32.xlu0 %v9413, 74
      %v9416 = vpop.permute.xlu0 %9415
      %9417 = vrot.lane.b32.xlu0 %v9414, 74
      %v9418 = vpop.permute.xlu0 %9417
      %v9419 = vsel %vm5627, %v9416, %v9418
      %v9422 = vmul.f32 %v9409, %v9419
      %v9423 = vmul.f32 %v9410, %v9418
      %9426 = vrot.lane.b32.xlu0 %v9422, 54
      %v9427 = vpop.permute.xlu0 %9426
      %9428 = vrot.lane.b32.xlu0 %v9423, 54
      %v9429 = vpop.permute.xlu0 %9428
      %vm9430 = vcmask 441344
      %v9431 = vsel %vm9430, %v9427, %v9429
      %vm9434 = vcmask 1043888
      %9435 = vst.msk [vmem:[#allocation2 + $0x48] sm:$0xf] %vm9434, %v9427
      %vm9436 = vcmask 568320
      %9437 = vst.msk [vmem:[#allocation2 + $0x50] sm:$0xf] %vm9436, %v9431
      %vm9438 = vcmask 437672
      %9439 = vst.msk [vmem:[#allocation2 + $0x48] sm:$0xf] %vm9438, 0.0
      %vm9440 = vcmask 577072
      %9441 = vst.msk [vmem:[#allocation2 + $0x50] sm:$0xf] %vm9440, 0.0
      %v9442 = vld [vmem:[%s8] sm:$0xff]
      %v9443 = vld [vmem:[#allocation2 + $0x8] sm:$0xff]
      %v9444 = vld [vmem:[#allocation2 + $0x10] sm:$0xff]
      %v9445 = vld [vmem:[#allocation2 + $0x28] sm:$0xff]
      %v9446 = vld [vmem:[#allocation2 + $0x30] sm:$0xff]
      %v9447 = vld [vmem:[#allocation2 + $0x48] sm:$0xf]
      %v9448 = vld [vmem:[#allocation2 + $0x50] sm:$0xf]
      %v9449 = vld [vmem:[%s9] sm:$0xff]
      %9451 = vset.pattern.permute.xlu0 0
      %9452 = vperm.xlu0 %9451, %v9449
      %v9453 = vpop.permute.xlu0 %9452
      %9461 = vrot.lane.b32.xlu0 %v9443, 74
      %v9462 = vpop.permute.xlu0 %9461
      %9463 = vrot.lane.b32.xlu0 %v9444, 74
      %v9464 = vpop.permute.xlu0 %9463
      %9465 = vrot.lane.b32.xlu0 %v9445, 74
      %v9466 = vpop.permute.xlu0 %9465
      %9467 = vrot.lane.b32.xlu0 %v9446, 74
      %v9468 = vpop.permute.xlu0 %9467
      %9469 = vrot.lane.b32.xlu0 %v9447, 74
      %v9470 = vpop.permute.xlu0 %9469
      %9471 = vrot.lane.b32.xlu0 %v9448, 74
      %v9472 = vpop.permute.xlu0 %9471
      %v9473 = vsel %vm5627, %v9462, %v9464
      %v9474 = vsel %vm5627, %v9466, %v9468
      %v9475 = vsel %vm5627, %v9470, %v9472
      %vm9480 = vcmask 162816
      %v9482 = vsel %vm9480, %v9442, 0
      %v9484 = vsel %vm3251, %v9475, 0
      %v9486 = vsel %vm3251, %v9472, 0
      %9488 = vmatpush.msra.mxu0 0.0
      %9489 = vmatpush.msra.mxu0 0.0
      %9490 = vmatpush.msra.mxu0 0.0
      %9491 = vmatpush.msra.mxu0 0.0
      %9492 = vmatpush.msra.mxu0 0.0
      %9493 = vmatpush.msra.mxu0 0.0
      %9494 = vmatpush.msra.mxu0 0.0
      %9495 = vmatpush.msra.mxu0 0.0
      %9496 = vmatpush.msra.mxu0 0.0
      %9497 = vmatpush.msra.mxu0 0.0
      %9498 = vmatpush.msra.mxu0 0.0
      %9499 = vmatpush.msra.mxu0 0.0
      %9500 = vmatpush.msra.mxu0 0.0
      %v9501 = vand.u32 %v9484, 4294901760
      %9502 = vmatpush.msra.mxu0 %v9501
      %v9503 = vand.u32 %v9474, 4294901760
      %9504 = vmatpush.msra.mxu0 %v9503
      %v9505 = vand.u32 %v9473, 4294901760
      %9506 = vmatpush.msra.mxu0 %v9505
      %v9507 = vand.u32 %v9482, 4294901760
      %v9508 = vsub.f32 %v9482, %v9507
      %v9509 = vand.u32 %v9508, 4294901760
      %v9510 = vsub.f32 %v9508, %v9509
      %v9511 = vand.u32 %v9510, 4294901760
      %9512 = vmatmul.f32.gmra.mxu0 %v9511
      %v9513 = vpop.f32.mrf.mxu0
      %v9514 = vadd.f32 %v9453, %v9513
      %9515 = vdwg.mxu0
      %9516 = vmatpush.msra.mxu0 0.0
      %9517 = vmatpush.msra.mxu0 0.0
      %9518 = vmatpush.msra.mxu0 0.0
      %9519 = vmatpush.msra.mxu0 0.0
      %9520 = vmatpush.msra.mxu0 0.0
      %9521 = vmatpush.msra.mxu0 0.0
      %9522 = vmatpush.msra.mxu0 0.0
      %9523 = vmatpush.msra.mxu0 0.0
      %9524 = vmatpush.msra.mxu0 0.0
      %9525 = vmatpush.msra.mxu0 0.0
      %9526 = vmatpush.msra.mxu0 0.0
      %9527 = vmatpush.msra.mxu0 0.0
      %9528 = vmatpush.msra.mxu0 0.0
      %v9529 = vand.u32 %v9484, 4294901760
      %v9530 = vsub.f32 %v9484, %v9529
      %v9531 = vand.u32 %v9530, 4294901760
      %v9532 = vsub.f32 %v9530, %v9531
      %v9533 = vand.u32 %v9532, 4294901760
      %9534 = vmatpush.msra.mxu0 %v9533
      %v9535 = vand.u32 %v9474, 4294901760
      %v9536 = vsub.f32 %v9474, %v9535
      %v9537 = vand.u32 %v9536, 4294901760
      %v9538 = vsub.f32 %v9536, %v9537
      %v9539 = vand.u32 %v9538, 4294901760
      %9540 = vmatpush.msra.mxu0 %v9539
      %v9541 = vand.u32 %v9473, 4294901760
      %v9542 = vsub.f32 %v9473, %v9541
      %v9543 = vand.u32 %v9542, 4294901760
      %v9544 = vsub.f32 %v9542, %v9543
      %v9545 = vand.u32 %v9544, 4294901760
      %9546 = vmatpush.msra.mxu0 %v9545
      %v9547 = vand.u32 %v9482, 4294901760
      %9548 = vmatmul.f32.gmra.mxu0 %v9547
      %v9549 = vpop.f32.mrf.mxu0
      %v9550 = vadd.f32 %v9514, %v9549
      %9551 = vdwg.mxu0
      %9552 = vmatpush.msra.mxu0 0.0
      %9553 = vmatpush.msra.mxu0 0.0
      %9554 = vmatpush.msra.mxu0 0.0
      %9555 = vmatpush.msra.mxu0 0.0
      %9556 = vmatpush.msra.mxu0 0.0
      %9557 = vmatpush.msra.mxu0 0.0
      %9558 = vmatpush.msra.mxu0 0.0
      %9559 = vmatpush.msra.mxu0 0.0
      %9560 = vmatpush.msra.mxu0 0.0
      %9561 = vmatpush.msra.mxu0 0.0
      %9562 = vmatpush.msra.mxu0 0.0
      %9563 = vmatpush.msra.mxu0 0.0
      %9564 = vmatpush.msra.mxu0 0.0
      %v9565 = vand.u32 %v9484, 4294901760
      %v9566 = vsub.f32 %v9484, %v9565
      %9567 = vmatpush.msra.mxu0 %v9566
      %v9568 = vand.u32 %v9474, 4294901760
      %v9569 = vsub.f32 %v9474, %v9568
      %9570 = vmatpush.msra.mxu0 %v9569
      %v9571 = vand.u32 %v9473, 4294901760
      %v9572 = vsub.f32 %v9473, %v9571
      %9573 = vmatpush.msra.mxu0 %v9572
      %v9574 = vand.u32 %v9482, 4294901760
      %v9575 = vsub.f32 %v9482, %v9574
      %9576 = vmatmul.f32.gmra.mxu0 %v9575
      %v9577 = vpop.f32.mrf.mxu0
      %v9578 = vadd.f32 %v9550, %v9577
      %9579 = vdwg.mxu0
      %9580 = vmatpush.msra.mxu0 0.0
      %9581 = vmatpush.msra.mxu0 0.0
      %9582 = vmatpush.msra.mxu0 0.0
      %9583 = vmatpush.msra.mxu0 0.0
      %9584 = vmatpush.msra.mxu0 0.0
      %9585 = vmatpush.msra.mxu0 0.0
      %9586 = vmatpush.msra.mxu0 0.0
      %9587 = vmatpush.msra.mxu0 0.0
      %9588 = vmatpush.msra.mxu0 0.0
      %9589 = vmatpush.msra.mxu0 0.0
      %9590 = vmatpush.msra.mxu0 0.0
      %9591 = vmatpush.msra.mxu0 0.0
      %9592 = vmatpush.msra.mxu0 0.0
      %v9593 = vand.u32 %v9484, 4294901760
      %9594 = vmatpush.msra.mxu0 %v9593
      %v9595 = vand.u32 %v9474, 4294901760
      %9596 = vmatpush.msra.mxu0 %v9595
      %v9597 = vand.u32 %v9473, 4294901760
      %9598 = vmatpush.msra.mxu0 %v9597
      %v9599 = vand.u32 %v9482, 4294901760
      %v9600 = vsub.f32 %v9482, %v9599
      %v9601 = vand.u32 %v9600, 4294901760
      %9602 = vmatmul.f32.gmra.mxu0 %v9601
      %v9603 = vpop.f32.mrf.mxu0
      %v9604 = vadd.f32 %v9578, %v9603
      %9605 = vdwg.mxu0
      %9606 = vmatpush.msra.mxu0 0.0
      %9607 = vmatpush.msra.mxu0 0.0
      %9608 = vmatpush.msra.mxu0 0.0
      %9609 = vmatpush.msra.mxu0 0.0
      %9610 = vmatpush.msra.mxu0 0.0
      %9611 = vmatpush.msra.mxu0 0.0
      %9612 = vmatpush.msra.mxu0 0.0
      %9613 = vmatpush.msra.mxu0 0.0
      %9614 = vmatpush.msra.mxu0 0.0
      %9615 = vmatpush.msra.mxu0 0.0
      %9616 = vmatpush.msra.mxu0 0.0
      %9617 = vmatpush.msra.mxu0 0.0
      %9618 = vmatpush.msra.mxu0 0.0
      %v9619 = vand.u32 %v9484, 4294901760
      %v9620 = vsub.f32 %v9484, %v9619
      %v9621 = vand.u32 %v9620, 4294901760
      %9622 = vmatpush.msra.mxu0 %v9621
      %v9623 = vand.u32 %v9474, 4294901760
      %v9624 = vsub.f32 %v9474, %v9623
      %v9625 = vand.u32 %v9624, 4294901760
      %9626 = vmatpush.msra.mxu0 %v9625
      %v9627 = vand.u32 %v9473, 4294901760
      %v9628 = vsub.f32 %v9473, %v9627
      %v9629 = vand.u32 %v9628, 4294901760
      %9630 = vmatpush.msra.mxu0 %v9629
      %v9631 = vand.u32 %v9482, 4294901760
      %9632 = vmatmul.f32.gmra.mxu0 %v9631
      %v9633 = vpop.f32.mrf.mxu0
      %v9634 = vadd.f32 %v9604, %v9633
      %9635 = vdwg.mxu0
      %9636 = vmatpush.msra.mxu0 0.0
      %9637 = vmatpush.msra.mxu0 0.0
      %9638 = vmatpush.msra.mxu0 0.0
      %9639 = vmatpush.msra.mxu0 0.0
      %9640 = vmatpush.msra.mxu0 0.0
      %9641 = vmatpush.msra.mxu0 0.0
      %9642 = vmatpush.msra.mxu0 0.0
      %9643 = vmatpush.msra.mxu0 0.0
      %9644 = vmatpush.msra.mxu0 0.0
      %9645 = vmatpush.msra.mxu0 0.0
      %9646 = vmatpush.msra.mxu0 0.0
      %9647 = vmatpush.msra.mxu0 0.0
      %9648 = vmatpush.msra.mxu0 0.0
      %v9649 = vand.u32 %v9484, 4294901760
      %9650 = vmatpush.msra.mxu0 %v9649
      %v9651 = vand.u32 %v9474, 4294901760
      %9652 = vmatpush.msra.mxu0 %v9651
      %v9653 = vand.u32 %v9473, 4294901760
      %9654 = vmatpush.msra.mxu0 %v9653
      %v9655 = vand.u32 %v9482, 4294901760
      %9656 = vmatmul.f32.gmra.mxu0 %v9655
      %v9657 = vpop.f32.mrf.mxu0
      %v9658 = vadd.f32 %v9634, %v9657
      %9659 = vdwg.mxu0
      %9660 = vmatpush.msra.mxu0 0.0
      %9661 = vmatpush.msra.mxu0 0.0
      %9662 = vmatpush.msra.mxu0 0.0
      %9663 = vmatpush.msra.mxu0 0.0
      %9664 = vmatpush.msra.mxu0 0.0
      %9665 = vmatpush.msra.mxu0 0.0
      %9666 = vmatpush.msra.mxu0 0.0
      %9667 = vmatpush.msra.mxu0 0.0
      %9668 = vmatpush.msra.mxu0 0.0
      %9669 = vmatpush.msra.mxu0 0.0
      %9670 = vmatpush.msra.mxu0 0.0
      %9671 = vmatpush.msra.mxu0 0.0
      %9672 = vmatpush.msra.mxu0 0.0
      %v9673 = vand.u32 %v9486, 4294901760
      %9674 = vmatpush.msra.mxu0 %v9673
      %v9675 = vand.u32 %v9468, 4294901760
      %9676 = vmatpush.msra.mxu0 %v9675
      %v9677 = vand.u32 %v9464, 4294901760
      %9678 = vmatpush.msra.mxu0 %v9677
      %v9679 = vand.u32 %v9482, 4294901760
      %v9680 = vsub.f32 %v9482, %v9679
      %v9681 = vand.u32 %v9680, 4294901760
      %v9682 = vsub.f32 %v9680, %v9681
      %v9683 = vand.u32 %v9682, 4294901760
      %9684 = vmatmul.f32.gmra.mxu0 %v9683
      %v9685 = vpop.f32.mrf.mxu0
      %v9686 = vadd.f32 %v9453, %v9685
      %9687 = vdwg.mxu0
      %9688 = vmatpush.msra.mxu0 0.0
      %9689 = vmatpush.msra.mxu0 0.0
      %9690 = vmatpush.msra.mxu0 0.0
      %9691 = vmatpush.msra.mxu0 0.0
      %9692 = vmatpush.msra.mxu0 0.0
      %9693 = vmatpush.msra.mxu0 0.0
      %9694 = vmatpush.msra.mxu0 0.0
      %9695 = vmatpush.msra.mxu0 0.0
      %9696 = vmatpush.msra.mxu0 0.0
      %9697 = vmatpush.msra.mxu0 0.0
      %9698 = vmatpush.msra.mxu0 0.0
      %9699 = vmatpush.msra.mxu0 0.0
      %9700 = vmatpush.msra.mxu0 0.0
      %v9701 = vand.u32 %v9486, 4294901760
      %v9702 = vsub.f32 %v9486, %v9701
      %v9703 = vand.u32 %v9702, 4294901760
      %v9704 = vsub.f32 %v9702, %v9703
      %v9705 = vand.u32 %v9704, 4294901760
      %9706 = vmatpush.msra.mxu0 %v9705
      %v9707 = vand.u32 %v9468, 4294901760
      %v9708 = vsub.f32 %v9468, %v9707
      %v9709 = vand.u32 %v9708, 4294901760
      %v9710 = vsub.f32 %v9708, %v9709
      %v9711 = vand.u32 %v9710, 4294901760
      %9712 = vmatpush.msra.mxu0 %v9711
      %v9713 = vand.u32 %v9464, 4294901760
      %v9714 = vsub.f32 %v9464, %v9713
      %v9715 = vand.u32 %v9714, 4294901760
      %v9716 = vsub.f32 %v9714, %v9715
      %v9717 = vand.u32 %v9716, 4294901760
      %9718 = vmatpush.msra.mxu0 %v9717
      %v9719 = vand.u32 %v9482, 4294901760
      %9720 = vmatmul.f32.gmra.mxu0 %v9719
      %v9721 = vpop.f32.mrf.mxu0
      %v9722 = vadd.f32 %v9686, %v9721
      %9723 = vdwg.mxu0
      %9724 = vmatpush.msra.mxu0 0.0
      %9725 = vmatpush.msra.mxu0 0.0
      %9726 = vmatpush.msra.mxu0 0.0
      %9727 = vmatpush.msra.mxu0 0.0
      %9728 = vmatpush.msra.mxu0 0.0
      %9729 = vmatpush.msra.mxu0 0.0
      %9730 = vmatpush.msra.mxu0 0.0
      %9731 = vmatpush.msra.mxu0 0.0
      %9732 = vmatpush.msra.mxu0 0.0
      %9733 = vmatpush.msra.mxu0 0.0
      %9734 = vmatpush.msra.mxu0 0.0
      %9735 = vmatpush.msra.mxu0 0.0
      %9736 = vmatpush.msra.mxu0 0.0
      %v9737 = vand.u32 %v9486, 4294901760
      %v9738 = vsub.f32 %v9486, %v9737
      %9739 = vmatpush.msra.mxu0 %v9738
      %v9740 = vand.u32 %v9468, 4294901760
      %v9741 = vsub.f32 %v9468, %v9740
      %9742 = vmatpush.msra.mxu0 %v9741
      %v9743 = vand.u32 %v9464, 4294901760
      %v9744 = vsub.f32 %v9464, %v9743
      %9745 = vmatpush.msra.mxu0 %v9744
      %v9746 = vand.u32 %v9482, 4294901760
      %v9747 = vsub.f32 %v9482, %v9746
      %9748 = vmatmul.f32.gmra.mxu0 %v9747
      %v9749 = vpop.f32.mrf.mxu0
      %v9750 = vadd.f32 %v9722, %v9749
      %9751 = vdwg.mxu0
      %9752 = vmatpush.msra.mxu0 0.0
      %9753 = vmatpush.msra.mxu0 0.0
      %9754 = vmatpush.msra.mxu0 0.0
      %9755 = vmatpush.msra.mxu0 0.0
      %9756 = vmatpush.msra.mxu0 0.0
      %9757 = vmatpush.msra.mxu0 0.0
      %9758 = vmatpush.msra.mxu0 0.0
      %9759 = vmatpush.msra.mxu0 0.0
      %9760 = vmatpush.msra.mxu0 0.0
      %9761 = vmatpush.msra.mxu0 0.0
      %9762 = vmatpush.msra.mxu0 0.0
      %9763 = vmatpush.msra.mxu0 0.0
      %9764 = vmatpush.msra.mxu0 0.0
      %v9765 = vand.u32 %v9486, 4294901760
      %9766 = vmatpush.msra.mxu0 %v9765
      %v9767 = vand.u32 %v9468, 4294901760
      %9768 = vmatpush.msra.mxu0 %v9767
      %v9769 = vand.u32 %v9464, 4294901760
      %9770 = vmatpush.msra.mxu0 %v9769
      %v9771 = vand.u32 %v9482, 4294901760
      %v9772 = vsub.f32 %v9482, %v9771
      %v9773 = vand.u32 %v9772, 4294901760
      %9774 = vmatmul.f32.gmra.mxu0 %v9773
      %v9775 = vpop.f32.mrf.mxu0
      %v9776 = vadd.f32 %v9750, %v9775
      %9777 = vdwg.mxu0
      %9778 = vmatpush.msra.mxu0 0.0
      %9779 = vmatpush.msra.mxu0 0.0
      %9780 = vmatpush.msra.mxu0 0.0
      %9781 = vmatpush.msra.mxu0 0.0
      %9782 = vmatpush.msra.mxu0 0.0
      %9783 = vmatpush.msra.mxu0 0.0
      %9784 = vmatpush.msra.mxu0 0.0
      %9785 = vmatpush.msra.mxu0 0.0
      %9786 = vmatpush.msra.mxu0 0.0
      %9787 = vmatpush.msra.mxu0 0.0
      %9788 = vmatpush.msra.mxu0 0.0
      %9789 = vmatpush.msra.mxu0 0.0
      %9790 = vmatpush.msra.mxu0 0.0
      %v9791 = vand.u32 %v9486, 4294901760
      %v9792 = vsub.f32 %v9486, %v9791
      %v9793 = vand.u32 %v9792, 4294901760
      %9794 = vmatpush.msra.mxu0 %v9793
      %v9795 = vand.u32 %v9468, 4294901760
      %v9796 = vsub.f32 %v9468, %v9795
      %v9797 = vand.u32 %v9796, 4294901760
      %9798 = vmatpush.msra.mxu0 %v9797
      %v9799 = vand.u32 %v9464, 4294901760
      %v9800 = vsub.f32 %v9464, %v9799
      %v9801 = vand.u32 %v9800, 4294901760
      %9802 = vmatpush.msra.mxu0 %v9801
      %v9803 = vand.u32 %v9482, 4294901760
      %9804 = vmatmul.f32.gmra.mxu0 %v9803
      %v9805 = vpop.f32.mrf.mxu0
      %v9806 = vadd.f32 %v9776, %v9805
      %9807 = vdwg.mxu0
      %9808 = vmatpush.msra.mxu0 0.0
      %9809 = vmatpush.msra.mxu0 0.0
      %9810 = vmatpush.msra.mxu0 0.0
      %9811 = vmatpush.msra.mxu0 0.0
      %9812 = vmatpush.msra.mxu0 0.0
      %9813 = vmatpush.msra.mxu0 0.0
      %9814 = vmatpush.msra.mxu0 0.0
      %9815 = vmatpush.msra.mxu0 0.0
      %9816 = vmatpush.msra.mxu0 0.0
      %9817 = vmatpush.msra.mxu0 0.0
      %9818 = vmatpush.msra.mxu0 0.0
      %9819 = vmatpush.msra.mxu0 0.0
      %9820 = vmatpush.msra.mxu0 0.0
      %v9821 = vand.u32 %v9486, 4294901760
      %9822 = vmatpush.msra.mxu0 %v9821
      %v9823 = vand.u32 %v9468, 4294901760
      %9824 = vmatpush.msra.mxu0 %v9823
      %v9825 = vand.u32 %v9464, 4294901760
      %9826 = vmatpush.msra.mxu0 %v9825
      %v9827 = vand.u32 %v9482, 4294901760
      %9828 = vmatmul.f32.gmra.mxu0 %v9827
      %v9829 = vpop.f32.mrf.mxu0
      %v9830 = vadd.f32 %v9806, %v9829
      %9831 = vdwg.mxu0
      %v9832 = vld [vmem:[#allocation2 + $0x8] sm:$0xff]
      %v9833 = vld [vmem:[#allocation2 + $0x10] sm:$0xff]
      %9836 = vrot.lane.b32.xlu0 %v9832, 74
      %v9837 = vpop.permute.xlu0 %9836
      %9838 = vrot.lane.b32.xlu0 %v9833, 74
      %v9839 = vpop.permute.xlu0 %9838
      %v9840 = vsel %vm5627, %v9837, %v9839
      %v9843 = vadd.f32 %v9658, %v9840
      %v9844 = vadd.f32 %v9830, %v9839
      %9845 = vst [vmem:[%s412] sm:$0xff] %v9843
      %9846 = vst.msk [vmem:[%s412 + $0x8] sm:$0xff] %vm6369, %v9844
      %p9847 = scmp.lt.s32.totalorder %s25, 1
      %s9848 = scalar_select %p9847, %s25, 1
      %p9849 = scmp.lt.s32.totalorder %s26, 1
      %s9850 = scalar_select %p9849, %s26, 1
      %s9851 = smul.addr %s9850, 2
      %s9852 = smul.addr %s9848, 4
      %s9853 = sadd.s32 %s9851, %s9852
      %s9854 = smul.addr %s9853, 8
      %s9855 = scalar_lea.vmem %s10, %s9854
      // Predicated region
      $region61: #{rdb_forward.1} parent=59 // pred_check
        %p9856 = pneg %p275
      $region62: #{rdb_forward.1} parent=59 // pred_check_branch
        %9858 = sbr.rel (%p9856) target = $region64
      $region63: #{rdb_forward.1} parent=59 // pred_region
        _
      $region64: #{rdb_forward.1} parent=59 // pred_fallthru
        _
    $region60: #{rdb_forward.1} parent=5 // pred_fallthru
      _
    %p9859 = scmp.le.s32.totalorder 2, %s16
    // Predicated region
    $region65: #{rdb_forward.1} parent=5 // pred_check
      %p9860 = pneg %p9859
    $region66: #{rdb_forward.1} parent=5 // pred_check_branch
      %9862 = sbr.rel (%p9860) target = $region68
    $region67: #{rdb_forward.1} parent=5 // pred_region
      %s9863 = ssub.s32 %s16, 2
      // Predicated region
      $region69: #{rdb_forward.1} parent=67 // pred_check
        %p9864 = pneg %p281
      $region70: #{rdb_forward.1} parent=67 // pred_check_branch
        %9866 = sbr.rel (%p9864) target = $region72
      $region71: #{rdb_forward.1} parent=67 // pred_region
        %p9867 = scmp.lt.s32.totalorder %s27, 1
        %s9868 = scalar_select %p9867, %s27, 1
        %p9869 = scmp.lt.s32.totalorder %s28, 1
        %s9870 = scalar_select %p9869, %s28, 1
        %s9871 = smul.addr %s9870, 2
        %s9872 = smul.addr %s9868, 4
        %s9873 = sadd.s32 %s9871, %s9872
        %s9874 = smul.addr %s9873, 8
        %s9875 = scalar_lea.vmem %s10, %s9874
      $region72: #{rdb_forward.1} parent=67 // pred_fallthru
        _
    $region68: #{rdb_forward.1} parent=5 // pred_fallthru
      _
  $region6: #{rdb_forward.1} parent=0 // loop_footer
    %s20 = sadd.s32 1, %s16
  $region7: #{rdb_forward.1} parent=0 // loop_footer_branch
    %15 = sbr.rel target = $region3
  $region8: #{rdb_forward.1} parent=0 // loop_exit
    _

</llo_original>
